<compile_context>
chip_gen: v7x
topology: tpu7x:2x2x1
jax: 0.10.0
libtpu: 0.0.40
codegen_flags: <defaults>
</compile_context>

<pallas_src>
import functools

import numpy as np
import jax
import jax.numpy as jnp
from jax.experimental import pallas as pl
from jax.experimental.pallas import tpu as pltpu


NUM_EDGE_TYPES = 4                                   # +x, -x, +y, -y periodic neighbours
_EDGE_REL = np.eye(NUM_EDGE_TYPES, dtype=np.float32)  # one-hot direction edge features


# ----------------------------- fused MPNN kernel -----------------------------

def _mdot(a, b):
    """MXU matmul: bf16 inputs, f32 accumulation (fast path on v6e/v7x, fine on v5e)."""
    return jnp.dot(a.astype(jnp.bfloat16), b.astype(jnp.bfloat16),
                   preferred_element_type=jnp.float32)


def _mpnn_body(x_ref, pxp_ref, pxm_ref, kp1_ref, bp1_ref, kp2_ref, bp2_ref,
               kmsg_ref, bconv_ref, kwi_ref, bwi_ref, kwh_ref, bwh_ref,
               *, num_steps, yh):
    """Fused MPNNGNN on the lane-folded layout (rows = tiles*x, lanes = y*channels)."""
    rows = x_ref.shape[0]

    # project_node_features = Linear -> ReLU -> Linear (no trailing activation)
    h = jnp.maximum(_mdot(x_ref[...], kp1_ref[...]) + bp1_ref[...], 0.0)
    h = _mdot(h, kp2_ref[...]) + bp2_ref[...]

    pxp = pxp_ref[...].astype(jnp.bfloat16)          # +x neighbour row permutation
    pxm = pxm_ref[...].astype(jnp.bfloat16)          # -x neighbour row permutation
    kmsg = kmsg_ref[...].astype(jnp.bfloat16)        # (3*YH, YH) message weights
    k_xp, k_xm, k_y = kmsg[:yh], kmsg[yh:2 * yh], kmsg[2 * yh:]
    kwi = kwi_ref[...].astype(jnp.bfloat16)          # (YH, 3*YH) GRU input weights
    kwh = kwh_ref[...].astype(jnp.bfloat16)          # (YH, 3*YH) GRU hidden weights
    # Hoist bias broadcasts out of the unrolled loop (broadcast_in_dim is not CSE'd).
    bconv = jnp.broadcast_to(bconv_ref[...], (rows, yh))
    bwi = jnp.broadcast_to(bwi_ref[...], (rows, 3 * yh))
    bwh = jnp.broadcast_to(bwh_ref[...], (rows, 3 * yh))

    def step(_, h):
        hb = h.astype(jnp.bfloat16)
        # NNConv ('mean' over the 4 periodic neighbours; the 1/4 factor and the +/-y
        # lane shift are folded into k_y / k_xp / k_xm at build time), fused with ReLU.
        hp = jnp.dot(pxp, hb, preferred_element_type=jnp.float32)
        hm = jnp.dot(pxm, hb, preferred_element_type=jnp.float32)
        msg = (jnp.dot(hp.astype(jnp.bfloat16), k_xp, preferred_element_type=jnp.float32)
               + jnp.dot(hm.astype(jnp.bfloat16), k_xm, preferred_element_type=jnp.float32)
               + jnp.dot(hb, k_y, preferred_element_type=jnp.float32))
        m = jnp.maximum(msg + bconv, 0.0)
        # torch.nn.GRU, single layer / single step; 3 gates batched along lanes.
        gi = jnp.dot(m.astype(jnp.bfloat16), kwi, preferred_element_type=jnp.float32) + bwi
        gh = jnp.dot(hb, kwh, preferred_element_type=jnp.float32) + bwh
        r = jax.nn.sigmoid(gi[:, :yh] + gh[:, :yh])
        z = jax.nn.sigmoid(gi[:, yh:2 * yh] + gh[:, yh:2 * yh])
        n = jnp.tanh(gi[:, 2 * yh:] + r * gh[:, 2 * yh:])
        return (1.0 - z) * n + z * h                 # new node features == new hidden

    return jax.lax.fori_loop(0, num_steps, step, h, unroll=True)


def _mpnn_kernel(*refs, num_steps, yh):
    o_ref = refs[-1]
    o_ref[...] = _mpnn_body(*refs[:-1], num_steps=num_steps, yh=yh)


def _mpnn_up_kernel(*refs, num_steps, yh):
    # Same as above plus the Up ConvTranspose2d(k=2,s=2) fused as a single matmul
    # epilogue (pixel shuffle happens in the wrapper); output is 128-lane dense.
    kup_ref, bup_ref, o_ref = refs[-3], refs[-2], refs[-1]
    h = _mpnn_body(*refs[:-3], num_steps=num_steps, yh=yh)
    o_ref[...] = _mdot(h, kup_ref[...]) + bup_ref[...]


# ----------------------------- wrapper (per MPNN stage) -----------------------------

def _pick_blocks(n_tiles_total, x_dim):
    for nb in (2, 1):                 # 2 blocks -> "parallel" grid for v7x megacore
        if n_tiles_total % nb == 0 and ((n_tiles_total // nb) * x_dim) % 8 == 0:
            return nb
    return 1                          # full-extent block is always legal


def mpnn_fused(x, p, num_steps, up=None):
    """Fused MPNNGNN forward.  x: (B, T, X, Y, F).

    Returns (B*T*X, Y*H) folded output, or (B*T*X, Y*4*Cout) if `up` (ConvTranspose2d
    weights) is given.
    """
    B, T, X, Y, F = x.shape
    assert X > 2 and Y > 2, "periodic 4-neighbour graph assumes nx, ny > 2"
    H = p["proj2_w"].shape[1]
    YH = Y * H
    n_blocks = _pick_blocks(B * T, X)
    tiles_pb = (B * T) // n_blocks
    r_blk = tiles_pb * X

    # ---- edge network (4x4 -> 4xH^2): tiny, plain JAX (no kernel launch) ----
    e = jnp.maximum(_EDGE_REL @ p["edge1_w"] + p["edge1_b"], 0.0)
    e = e @ p["edge2_w"] + p["edge2_b"]
    W = e.reshape(NUM_EDGE_TYPES, H, H)              # per-direction NNConv weights

    # ---- fold per-node weights into the (rows = tiles*X, lanes = Y*H) layout ----
    i_y = jnp.eye(Y, dtype=jnp.float32)
    s_p = jnp.asarray(np.roll(np.eye(Y, dtype=np.float32), 1, axis=0))   # gather y+1
    s_m = jnp.asarray(np.roll(np.eye(Y, dtype=np.float32), -1, axis=0))  # gather y-1
    kp1 = jnp.kron(i_y, p["proj1_w"]); bp1 = jnp.tile(p["proj1_b"], (1, Y))
    kp2 = jnp.kron(i_y, p["proj2_w"]); bp2 = jnp.tile(p["proj2_b"], (1, Y))
    # 1/4 mean-aggregation and the +/-y neighbour shift folded into the weights.
    kmsg = 0.25 * jnp.concatenate([
        jnp.kron(i_y, W[0]),                         # +x messages (rows gathered by Pxp)
        jnp.kron(i_y, W[1]),                         # -x messages (rows gathered by Pxm)
        jnp.kron(s_p, W[2]) + jnp.kron(s_m, W[3]),   # +/-y messages (lane shift folded)
    ], axis=0)                                       # (3*Y*H, Y*H)
    bconv = jnp.tile(p["nnconv_b"], (1, Y))
    kwi = jnp.concatenate([jnp.kron(i_y, p["gru_wi"][g]) for g in range(3)], axis=1)
    kwh = jnp.concatenate([jnp.kron(i_y, p["gru_wh"][g]) for g in range(3)], axis=1)
    bwi = jnp.concatenate([jnp.tile(p["gru_bi"][g], (1, Y)) for g in range(3)], axis=1)
    bwh = jnp.concatenate([jnp.tile(p["gru_bh"][g], (1, Y)) for g in range(3)], axis=1)

    # +/-x neighbour gather: tiny block-diagonal row permutation (same for every block).
    pxp = jnp.asarray(np.kron(np.eye(tiles_pb, dtype=np.float32),
                              np.roll(np.eye(X, dtype=np.float32), -1, axis=0)))
    pxm = jnp.asarray(np.kron(np.eye(tiles_pb, dtype=np.float32),
                              np.roll(np.eye(X, dtype=np.float32), 1, axis=0)))

    xf = x.reshape(B * T * X, Y * F)                 # lane-folded node features

    full_spec = lambda a: pl.BlockSpec(a.shape, lambda i: (0, 0))
    args = [xf, pxp, pxm, kp1, bp1, kp2, bp2, kmsg, bconv, kwi, bwi, kwh, bwh]
    in_specs = [pl.BlockSpec((r_blk, Y * F), lambda i: (i, 0))]
    in_specs += [full_spec(a) for a in args[1:]]

    if up is None:
        kernel = functools.partial(_mpnn_kernel, num_steps=num_steps, yh=YH)
        out_lanes = YH
    else:
        w_up, b_up = up                              # (Cin, Cout, 2, 2), (1, Cout)
        cin, cout = w_up.shape[0], w_up.shape[1]
        w2 = jnp.transpose(w_up, (0, 2, 3, 1)).reshape(cin, 4 * cout)   # (di,dj,c') lanes
        kup = jnp.kron(i_y, w2)                      # (Y*H, Y*4*Cout)
        bup = jnp.tile(b_up, (1, 4 * Y))
        args += [kup, bup]
        in_specs += [full_spec(kup), full_spec(bup)]
        kernel = functools.partial(_mpnn_up_kernel, num_steps=num_steps, yh=YH)
        out_lanes = Y * 4 * cout

    return pl.pallas_call(
        kernel,
        out_shape=jax.ShapeDtypeStruct((B * T * X, out_lanes), jnp.float32),
        grid=(n_blocks,),
        in_specs=in_specs,
        out_specs=pl.BlockSpec((r_blk, out_lanes), lambda i: (i, 0)),
        compiler_params=pltpu.CompilerParams(dimension_semantics=("parallel",)),
    )(*args)


# ----------------------------- U-Net forward -----------------------------

@functools.partial(jax.jit, static_argnames=("num_steps",))
def unet_forward(x, params, num_steps):
    """UNet.forward (depth=1): conv1 -> Down -> lower -> Up -> concat -> conv2."""
    B, T, X, Y, _ = x.shape
    H1 = params["conv1"]["proj2_w"].shape[1]

    bp_f = mpnn_fused(x, params["conv1"], num_steps)                 # (B*T*X, Y*H1)
    before_pooling = bp_f.reshape(B, T, X, Y, H1)

    # Down: AvgPool2d(kernel=2, stride=2) over (x, y) — tiny; left to XLA to fuse.
    xd = before_pooling.reshape(B, T, X // 2, 2, Y // 2, 2, H1).mean(axis=(3, 5))

    # lower MPNN with the Up ConvTranspose2d fused in as a matmul epilogue.
    up_out = mpnn_fused(xd, params["lower"], num_steps,
                        up=(params["up_w"], params["up_b"]))         # (B*T*X/2, Y/2*4*Co)
    cout = params["up_w"].shape[1]
    xu = up_out.reshape(B, T, X // 2, Y // 2, 2, 2, cout)
    xu = jnp.transpose(xu, (0, 1, 2, 4, 3, 5, 6)).reshape(B, T, X, Y, cout)  # pixel shuffle

    xc = jnp.concatenate([before_pooling, xu], axis=-1)              # (B,T,X,Y,2*H1)
    out_f = mpnn_fused(xc, params["conv2"], num_steps)               # (B*T*X, Y*H1)
    return out_f.reshape(B, T, X, Y, H1)


# ----------------------------- parameter init -----------------------------

def _rnd(key, shape, scale=0.2):
    return jax.random.normal(key, shape, jnp.float32) * scale


def init_mpnn(key, in_f, hidden, edge_hidden):
    ks = jax.random.split(key, 13)
    return {
        "proj1_w": _rnd(ks[0], (in_f, hidden)),
        "proj1_b": _rnd(ks[1], (1, hidden)),
        "proj2_w": _rnd(ks[2], (hidden, hidden)),
        "proj2_b": _rnd(ks[3], (1, hidden)),
        "edge1_w": _rnd(ks[4], (NUM_EDGE_TYPES, edge_hidden)),
        "edge1_b": _rnd(ks[5], (1, edge_hidden)),
        "edge2_w": _rnd(ks[6], (edge_hidden, hidden * hidden)),
        "edge2_b": _rnd(ks[7], (1, hidden * hidden)),
        "nnconv_b": _rnd(ks[8], (1, hidden)),
        "gru_wi": _rnd(ks[9], (3, hidden, hidden)),
        "gru_wh": _rnd(ks[10], (3, hidden, hidden)),
        "gru_bi": _rnd(ks[11], (3, 1, hidden)),
        "gru_bh": _rnd(ks[12], (3, 1, hidden)),
    }


def init_params(key, in_channels, edge_hidden):
    node_lower = 2 * in_channels
    k1, k2, k3, k4, k5 = jax.random.split(key, 5)
    return {
        "conv1": init_mpnn(k1, in_channels, node_lower, edge_hidden),
        "conv2": init_mpnn(k2, 2 * node_lower, node_lower, edge_hidden),
        "lower": init_mpnn(k3, node_lower, 2 * node_lower, edge_hidden),
        # ConvTranspose2d(in=2*node_lower, out=node_lower, kernel=2, stride=2)
        "up_w": _rnd(k4, (2 * node_lower, node_lower, 2, 2)),
        "up_b": _rnd(k5, (1, node_lower)),
    }


# ----------------------------- main -----------------------------

if __name__ == "__main__":
    B, T, NX, IN_CH = 2, 6, 8, 4      # 6 tiles (cubed sphere), 8x8 points per tile
    EDGE_HIDDEN = 8
    NUM_STEPS = 2                     # num_step_message_passing

    key = jax.random.PRNGKey(0)
    kx, kp = jax.random.split(key)
    x = jax.random.normal(kx, (B, T, NX, NX, IN_CH), jnp.float32)
    params = init_params(kp, IN_CH, EDGE_HIDDEN)

    out = unet_forward(x, params, NUM_STEPS)
    out = jax.block_until_ready(out)

    assert out.shape == (B, T, NX, NX, 2 * IN_CH), out.shape
    assert bool(jnp.all(jnp.isfinite(out)))
    print("KERNEL_OK")
</pallas_src>

<mosaic_0001>
module attributes {stable_mosaic.version = 11 : i64} {
  func.func @_mpnn_kernel(%arg0: i32, %arg1: memref<48x32xf32, #tpu.memory_space<vmem>>, %arg2: memref<48x48xf32, #tpu.memory_space<vmem>>, %arg3: memref<48x48xf32, #tpu.memory_space<vmem>>, %arg4: memref<32x64xf32, #tpu.memory_space<vmem>>, %arg5: memref<1x64xf32, #tpu.memory_space<vmem>>, %arg6: memref<64x64xf32, #tpu.memory_space<vmem>>, %arg7: memref<1x64xf32, #tpu.memory_space<vmem>>, %arg8: memref<192x64xf32, #tpu.memory_space<vmem>>, %arg9: memref<1x64xf32, #tpu.memory_space<vmem>>, %arg10: memref<64x192xf32, #tpu.memory_space<vmem>>, %arg11: memref<1x192xf32, #tpu.memory_space<vmem>>, %arg12: memref<64x192xf32, #tpu.memory_space<vmem>>, %arg13: memref<1x192xf32, #tpu.memory_space<vmem>>, %arg14: memref<48x64xf32, #tpu.memory_space<vmem>>) attributes {dimension_semantics = [#tpu.dimension_semantics<parallel>], iteration_bounds = array<i64: 2>, scalar_prefetch = 0 : i64, scratch_operands = 0 : i64, tpu.core_type = #tpu.core_type<tc>, window_params = [{transform_indices = @transform_0, window_bounds = array<i64: 48, 32>}, {pipeline_mode = #tpu.pipeline_mode<synchronous>, transform_indices = @transform_1, window_bounds = array<i64: 48, 48>}, {pipeline_mode = #tpu.pipeline_mode<synchronous>, transform_indices = @transform_2, window_bounds = array<i64: 48, 48>}, {pipeline_mode = #tpu.pipeline_mode<synchronous>, transform_indices = @transform_3, window_bounds = array<i64: 32, 64>}, {pipeline_mode = #tpu.pipeline_mode<synchronous>, transform_indices = @transform_4, window_bounds = array<i64: 1, 64>}, {pipeline_mode = #tpu.pipeline_mode<synchronous>, transform_indices = @transform_5, window_bounds = array<i64: 64, 64>}, {pipeline_mode = #tpu.pipeline_mode<synchronous>, transform_indices = @transform_6, window_bounds = array<i64: 1, 64>}, {pipeline_mode = #tpu.pipeline_mode<synchronous>, transform_indices = @transform_7, window_bounds = array<i64: 192, 64>}, {pipeline_mode = #tpu.pipeline_mode<synchronous>, transform_indices = @transform_8, window_bounds = array<i64: 1, 64>}, {pipeline_mode = #tpu.pipeline_mode<synchronous>, transform_indices = @transform_9, window_bounds = array<i64: 64, 192>}, {pipeline_mode = #tpu.pipeline_mode<synchronous>, transform_indices = @transform_10, window_bounds = array<i64: 1, 192>}, {pipeline_mode = #tpu.pipeline_mode<synchronous>, transform_indices = @transform_11, window_bounds = array<i64: 64, 192>}, {pipeline_mode = #tpu.pipeline_mode<synchronous>, transform_indices = @transform_12, window_bounds = array<i64: 1, 192>}, {transform_indices = @transform_13, window_bounds = array<i64: 48, 64>}]} {
    %c0 = arith.constant 0 : index
    %c0_0 = arith.constant 0 : index
    %0 = vector.load %arg1[%c0, %c0_0] : memref<48x32xf32, #tpu.memory_space<vmem>>, vector<48x32xf32>
    %c0_1 = arith.constant 0 : index
    %c0_2 = arith.constant 0 : index
    %1 = vector.load %arg4[%c0_1, %c0_2] : memref<32x64xf32, #tpu.memory_space<vmem>>, vector<32x64xf32>
    %2 = arith.truncf %0 : vector<48x32xf32> to vector<48x32xbf16>
    %3 = arith.truncf %1 : vector<32x64xf32> to vector<32x64xbf16>
    %cst = arith.constant dense<0.000000e+00> : vector<48x64xf32>
    %4 = tpu.matmul %2, %3, %cst {dimension_numbers = #tpu.dot_dimension_numbers<[1], [0], [0], [1], [0, 0, 1, 1], [], []>} : vector<48x32xbf16>, vector<32x64xbf16>, vector<48x64xf32> -> vector<48x64xf32>
    %c0_3 = arith.constant 0 : index
    %c0_4 = arith.constant 0 : index
    %5 = vector.load %arg5[%c0_3, %c0_4] : memref<1x64xf32, #tpu.memory_space<vmem>>, vector<1x64xf32>
    %6 = vector.broadcast %5 : vector<1x64xf32> to vector<48x64xf32>
    %7 = arith.addf %4, %6 : vector<48x64xf32>
    %cst_5 = arith.constant 0.000000e+00 : f32
    %8 = vector.broadcast %cst_5 : f32 to vector<48x64xf32>
    %9 = arith.maximumf %7, %8 : vector<48x64xf32>
    %c0_6 = arith.constant 0 : index
    %c0_7 = arith.constant 0 : index
    %10 = vector.load %arg6[%c0_6, %c0_7] : memref<64x64xf32, #tpu.memory_space<vmem>>, vector<64x64xf32>
    %11 = arith.truncf %9 : vector<48x64xf32> to vector<48x64xbf16>
    %12 = arith.truncf %10 : vector<64x64xf32> to vector<64x64xbf16>
    %cst_8 = arith.constant dense<0.000000e+00> : vector<48x64xf32>
    %13 = tpu.matmul %11, %12, %cst_8 {dimension_numbers = #tpu.dot_dimension_numbers<[1], [0], [0], [1], [0, 0, 1, 1], [], []>} : vector<48x64xbf16>, vector<64x64xbf16>, vector<48x64xf32> -> vector<48x64xf32>
    %c0_9 = arith.constant 0 : index
    %c0_10 = arith.constant 0 : index
    %14 = vector.load %arg7[%c0_9, %c0_10] : memref<1x64xf32, #tpu.memory_space<vmem>>, vector<1x64xf32>
    %15 = vector.broadcast %14 : vector<1x64xf32> to vector<48x64xf32>
    %16 = arith.addf %13, %15 : vector<48x64xf32>
    %c0_11 = arith.constant 0 : index
    %c0_12 = arith.constant 0 : index
    %17 = vector.load %arg2[%c0_11, %c0_12] : memref<48x48xf32, #tpu.memory_space<vmem>>, vector<48x48xf32>
    %18 = arith.truncf %17 : vector<48x48xf32> to vector<48x48xbf16>
    %c0_13 = arith.constant 0 : index
    %c0_14 = arith.constant 0 : index
    %19 = vector.load %arg3[%c0_13, %c0_14] : memref<48x48xf32, #tpu.memory_space<vmem>>, vector<48x48xf32>
    %20 = arith.truncf %19 : vector<48x48xf32> to vector<48x48xbf16>
    %c0_15 = arith.constant 0 : index
    %c0_16 = arith.constant 0 : index
    %21 = vector.load %arg8[%c0_15, %c0_16] : memref<192x64xf32, #tpu.memory_space<vmem>>, vector<192x64xf32>
    %22 = arith.truncf %21 : vector<192x64xf32> to vector<192x64xbf16>
    %23 = vector.extract_strided_slice %22 {offsets = [0, 0], sizes = [64, 64], strides = [1, 1]} : vector<192x64xbf16> to vector<64x64xbf16>
    %24 = vector.extract_strided_slice %22 {offsets = [64, 0], sizes = [64, 64], strides = [1, 1]} : vector<192x64xbf16> to vector<64x64xbf16>
    %25 = vector.extract_strided_slice %22 {offsets = [128, 0], sizes = [64, 64], strides = [1, 1]} : vector<192x64xbf16> to vector<64x64xbf16>
    %c0_17 = arith.constant 0 : index
    %c0_18 = arith.constant 0 : index
    %26 = vector.load %arg10[%c0_17, %c0_18] : memref<64x192xf32, #tpu.memory_space<vmem>>, vector<64x192xf32>
    %27 = arith.truncf %26 : vector<64x192xf32> to vector<64x192xbf16>
    %c0_19 = arith.constant 0 : index
    %c0_20 = arith.constant 0 : index
    %28 = vector.load %arg12[%c0_19, %c0_20] : memref<64x192xf32, #tpu.memory_space<vmem>>, vector<64x192xf32>
    %29 = arith.truncf %28 : vector<64x192xf32> to vector<64x192xbf16>
    %c0_21 = arith.constant 0 : index
    %c0_22 = arith.constant 0 : index
    %30 = vector.load %arg9[%c0_21, %c0_22] : memref<1x64xf32, #tpu.memory_space<vmem>>, vector<1x64xf32>
    %31 = vector.shape_cast %30 : vector<1x64xf32> to vector<1x64xf32>
    %32 = vector.broadcast %31 : vector<1x64xf32> to vector<48x64xf32>
    %c0_23 = arith.constant 0 : index
    %c0_24 = arith.constant 0 : index
    %33 = vector.load %arg11[%c0_23, %c0_24] : memref<1x192xf32, #tpu.memory_space<vmem>>, vector<1x192xf32>
    %34 = vector.shape_cast %33 : vector<1x192xf32> to vector<1x192xf32>
    %35 = vector.broadcast %34 : vector<1x192xf32> to vector<48x192xf32>
    %c0_25 = arith.constant 0 : index
    %c0_26 = arith.constant 0 : index
    %36 = vector.load %arg13[%c0_25, %c0_26] : memref<1x192xf32, #tpu.memory_space<vmem>>, vector<1x192xf32>
    %37 = vector.shape_cast %36 : vector<1x192xf32> to vector<1x192xf32>
    %38 = vector.broadcast %37 : vector<1x192xf32> to vector<48x192xf32>
    %c0_i32 = arith.constant 0 : i32
    %39 = arith.truncf %16 : vector<48x64xf32> to vector<48x64xbf16>
    %cst_27 = arith.constant dense<0.000000e+00> : vector<48x64xf32>
    %40 = tpu.matmul %18, %39, %cst_27 {dimension_numbers = #tpu.dot_dimension_numbers<[1], [0], [0], [1], [0, 0, 1, 1], [], []>} : vector<48x48xbf16>, vector<48x64xbf16>, vector<48x64xf32> -> vector<48x64xf32>
    %cst_28 = arith.constant dense<0.000000e+00> : vector<48x64xf32>
    %41 = tpu.matmul %20, %39, %cst_28 {dimension_numbers = #tpu.dot_dimension_numbers<[1], [0], [0], [1], [0, 0, 1, 1], [], []>} : vector<48x48xbf16>, vector<48x64xbf16>, vector<48x64xf32> -> vector<48x64xf32>
    %42 = arith.truncf %40 : vector<48x64xf32> to vector<48x64xbf16>
    %cst_29 = arith.constant dense<0.000000e+00> : vector<48x64xf32>
    %43 = tpu.matmul %42, %23, %cst_29 {dimension_numbers = #tpu.dot_dimension_numbers<[1], [0], [0], [1], [0, 0, 1, 1], [], []>} : vector<48x64xbf16>, vector<64x64xbf16>, vector<48x64xf32> -> vector<48x64xf32>
    %44 = arith.truncf %41 : vector<48x64xf32> to vector<48x64xbf16>
    %cst_30 = arith.constant dense<0.000000e+00> : vector<48x64xf32>
    %45 = tpu.matmul %44, %24, %cst_30 {dimension_numbers = #tpu.dot_dimension_numbers<[1], [0], [0], [1], [0, 0, 1, 1], [], []>} : vector<48x64xbf16>, vector<64x64xbf16>, vector<48x64xf32> -> vector<48x64xf32>
    %46 = arith.addf %43, %45 : vector<48x64xf32>
    %cst_31 = arith.constant dense<0.000000e+00> : vector<48x64xf32>
    %47 = tpu.matmul %39, %25, %cst_31 {dimension_numbers = #tpu.dot_dimension_numbers<[1], [0], [0], [1], [0, 0, 1, 1], [], []>} : vector<48x64xbf16>, vector<64x64xbf16>, vector<48x64xf32> -> vector<48x64xf32>
    %48 = arith.addf %46, %47 : vector<48x64xf32>
    %49 = arith.addf %48, %32 : vector<48x64xf32>
    %cst_32 = arith.constant 0.000000e+00 : f32
    %50 = vector.broadcast %cst_32 : f32 to vector<48x64xf32>
    %51 = arith.maximumf %49, %50 : vector<48x64xf32>
    %52 = arith.truncf %51 : vector<48x64xf32> to vector<48x64xbf16>
    %cst_33 = arith.constant dense<0.000000e+00> : vector<48x192xf32>
    %53 = tpu.matmul %52, %27, %cst_33 {dimension_numbers = #tpu.dot_dimension_numbers<[1], [0], [0], [1], [0, 0, 1, 1], [], []>} : vector<48x64xbf16>, vector<64x192xbf16>, vector<48x192xf32> -> vector<48x192xf32>
    %54 = arith.addf %53, %35 : vector<48x192xf32>
    %cst_34 = arith.constant dense<0.000000e+00> : vector<48x192xf32>
    %55 = tpu.matmul %39, %29, %cst_34 {dimension_numbers = #tpu.dot_dimension_numbers<[1], [0], [0], [1], [0, 0, 1, 1], [], []>} : vector<48x64xbf16>, vector<64x192xbf16>, vector<48x192xf32> -> vector<48x192xf32>
    %56 = arith.addf %55, %38 : vector<48x192xf32>
    %57 = vector.extract_strided_slice %54 {offsets = [0, 0], sizes = [48, 64], strides = [1, 1]} : vector<48x192xf32> to vector<48x64xf32>
    %58 = vector.extract_strided_slice %56 {offsets = [0, 0], sizes = [48, 64], strides = [1, 1]} : vector<48x192xf32> to vector<48x64xf32>
    %59 = arith.addf %57, %58 : vector<48x64xf32>
    %60 = arith.negf %59 : vector<48x64xf32>
    %61 = math.exp %60 : vector<48x64xf32>
    %cst_35 = arith.constant 1.000000e+00 : f32
    %62 = vector.broadcast %cst_35 : f32 to vector<48x64xf32>
    %63 = arith.addf %62, %61 : vector<48x64xf32>
    %64 = arith.divf %62, %63 : vector<48x64xf32>
    %65 = vector.extract_strided_slice %54 {offsets = [0, 64], sizes = [48, 64], strides = [1, 1]} : vector<48x192xf32> to vector<48x64xf32>
    %66 = vector.extract_strided_slice %56 {offsets = [0, 64], sizes = [48, 64], strides = [1, 1]} : vector<48x192xf32> to vector<48x64xf32>
    %67 = arith.addf %65, %66 : vector<48x64xf32>
    %68 = arith.negf %67 : vector<48x64xf32>
    %69 = math.exp %68 : vector<48x64xf32>
    %cst_36 = arith.constant 1.000000e+00 : f32
    %70 = vector.broadcast %cst_36 : f32 to vector<48x64xf32>
    %71 = arith.addf %70, %69 : vector<48x64xf32>
    %72 = arith.divf %70, %71 : vector<48x64xf32>
    %73 = vector.extract_strided_slice %54 {offsets = [0, 128], sizes = [48, 64], strides = [1, 1]} : vector<48x192xf32> to vector<48x64xf32>
    %74 = vector.extract_strided_slice %56 {offsets = [0, 128], sizes = [48, 64], strides = [1, 1]} : vector<48x192xf32> to vector<48x64xf32>
    %75 = arith.mulf %64, %74 : vector<48x64xf32>
    %76 = arith.addf %73, %75 : vector<48x64xf32>
    %77 = math.tanh %76 : vector<48x64xf32>
    %cst_37 = arith.constant 1.000000e+00 : f32
    %78 = vector.broadcast %cst_37 : f32 to vector<48x64xf32>
    %79 = arith.subf %78, %72 : vector<48x64xf32>
    %80 = arith.mulf %79, %77 : vector<48x64xf32>
    %81 = arith.mulf %72, %16 : vector<48x64xf32>
    %82 = arith.addf %80, %81 : vector<48x64xf32>
    %c1_i32 = arith.constant 1 : i32
    %83 = arith.truncf %82 : vector<48x64xf32> to vector<48x64xbf16>
    %cst_38 = arith.constant dense<0.000000e+00> : vector<48x64xf32>
    %84 = tpu.matmul %18, %83, %cst_38 {dimension_numbers = #tpu.dot_dimension_numbers<[1], [0], [0], [1], [0, 0, 1, 1], [], []>} : vector<48x48xbf16>, vector<48x64xbf16>, vector<48x64xf32> -> vector<48x64xf32>
    %cst_39 = arith.constant dense<0.000000e+00> : vector<48x64xf32>
    %85 = tpu.matmul %20, %83, %cst_39 {dimension_numbers = #tpu.dot_dimension_numbers<[1], [0], [0], [1], [0, 0, 1, 1], [], []>} : vector<48x48xbf16>, vector<48x64xbf16>, vector<48x64xf32> -> vector<48x64xf32>
    %86 = arith.truncf %84 : vector<48x64xf32> to vector<48x64xbf16>
    %cst_40 = arith.constant dense<0.000000e+00> : vector<48x64xf32>
    %87 = tpu.matmul %86, %23, %cst_40 {dimension_numbers = #tpu.dot_dimension_numbers<[1], [0], [0], [1], [0, 0, 1, 1], [], []>} : vector<48x64xbf16>, vector<64x64xbf16>, vector<48x64xf32> -> vector<48x64xf32>
    %88 = arith.truncf %85 : vector<48x64xf32> to vector<48x64xbf16>
    %cst_41 = arith.constant dense<0.000000e+00> : vector<48x64xf32>
    %89 = tpu.matmul %88, %24, %cst_41 {dimension_numbers = #tpu.dot_dimension_numbers<[1], [0], [0], [1], [0, 0, 1, 1], [], []>} : vector<48x64xbf16>, vector<64x64xbf16>, vector<48x64xf32> -> vector<48x64xf32>
    %90 = arith.addf %87, %89 : vector<48x64xf32>
    %cst_42 = arith.constant dense<0.000000e+00> : vector<48x64xf32>
    %91 = tpu.matmul %83, %25, %cst_42 {dimension_numbers = #tpu.dot_dimension_numbers<[1], [0], [0], [1], [0, 0, 1, 1], [], []>} : vector<48x64xbf16>, vector<64x64xbf16>, vector<48x64xf32> -> vector<48x64xf32>
    %92 = arith.addf %90, %91 : vector<48x64xf32>
    %93 = arith.addf %92, %32 : vector<48x64xf32>
    %cst_43 = arith.constant 0.000000e+00 : f32
    %94 = vector.broadcast %cst_43 : f32 to vector<48x64xf32>
    %95 = arith.maximumf %93, %94 : vector<48x64xf32>
    %96 = arith.truncf %95 : vector<48x64xf32> to vector<48x64xbf16>
    %cst_44 = arith.constant dense<0.000000e+00> : vector<48x192xf32>
    %97 = tpu.matmul %96, %27, %cst_44 {dimension_numbers = #tpu.dot_dimension_numbers<[1], [0], [0], [1], [0, 0, 1, 1], [], []>} : vector<48x64xbf16>, vector<64x192xbf16>, vector<48x192xf32> -> vector<48x192xf32>
    %98 = arith.addf %97, %35 : vector<48x192xf32>
    %cst_45 = arith.constant dense<0.000000e+00> : vector<48x192xf32>
    %99 = tpu.matmul %83, %29, %cst_45 {dimension_numbers = #tpu.dot_dimension_numbers<[1], [0], [0], [1], [0, 0, 1, 1], [], []>} : vector<48x64xbf16>, vector<64x192xbf16>, vector<48x192xf32> -> vector<48x192xf32>
    %100 = arith.addf %99, %38 : vector<48x192xf32>
    %101 = vector.extract_strided_slice %98 {offsets = [0, 0], sizes = [48, 64], strides = [1, 1]} : vector<48x192xf32> to vector<48x64xf32>
    %102 = vector.extract_strided_slice %100 {offsets = [0, 0], sizes = [48, 64], strides = [1, 1]} : vector<48x192xf32> to vector<48x64xf32>
    %103 = arith.addf %101, %102 : vector<48x64xf32>
    %104 = arith.negf %103 : vector<48x64xf32>
    %105 = math.exp %104 : vector<48x64xf32>
    %cst_46 = arith.constant 1.000000e+00 : f32
    %106 = vector.broadcast %cst_46 : f32 to vector<48x64xf32>
    %107 = arith.addf %106, %105 : vector<48x64xf32>
    %108 = arith.divf %106, %107 : vector<48x64xf32>
    %109 = vector.extract_strided_slice %98 {offsets = [0, 64], sizes = [48, 64], strides = [1, 1]} : vector<48x192xf32> to vector<48x64xf32>
    %110 = vector.extract_strided_slice %100 {offsets = [0, 64], sizes = [48, 64], strides = [1, 1]} : vector<48x192xf32> to vector<48x64xf32>
    %111 = arith.addf %109, %110 : vector<48x64xf32>
    %112 = arith.negf %111 : vector<48x64xf32>
    %113 = math.exp %112 : vector<48x64xf32>
    %cst_47 = arith.constant 1.000000e+00 : f32
    %114 = vector.broadcast %cst_47 : f32 to vector<48x64xf32>
    %115 = arith.addf %114, %113 : vector<48x64xf32>
    %116 = arith.divf %114, %115 : vector<48x64xf32>
    %117 = vector.extract_strided_slice %98 {offsets = [0, 128], sizes = [48, 64], strides = [1, 1]} : vector<48x192xf32> to vector<48x64xf32>
    %118 = vector.extract_strided_slice %100 {offsets = [0, 128], sizes = [48, 64], strides = [1, 1]} : vector<48x192xf32> to vector<48x64xf32>
    %119 = arith.mulf %108, %118 : vector<48x64xf32>
    %120 = arith.addf %117, %119 : vector<48x64xf32>
    %121 = math.tanh %120 : vector<48x64xf32>
    %cst_48 = arith.constant 1.000000e+00 : f32
    %122 = vector.broadcast %cst_48 : f32 to vector<48x64xf32>
    %123 = arith.subf %122, %116 : vector<48x64xf32>
    %124 = arith.mulf %123, %121 : vector<48x64xf32>
    %125 = arith.mulf %116, %82 : vector<48x64xf32>
    %126 = arith.addf %124, %125 : vector<48x64xf32>
    %c0_49 = arith.constant 0 : index
    %c0_50 = arith.constant 0 : index
    %127 = vector.load %arg14[%c0_49, %c0_50] : memref<48x64xf32, #tpu.memory_space<vmem>>, vector<48x64xf32>
    tpu.vector_store %arg14[%c0_49, %c0_50], %126 {strides = array<i32>} : memref<48x64xf32, #tpu.memory_space<vmem>>, vector<48x64xf32>,
    return
  }
  func.func @transform_0(%arg0: i32) -> (i32, i32) {
    %c0_i32 = arith.constant 0 : i32
    %c0_i32_0 = arith.constant 0 : i32
    return %arg0, %c0_i32 : i32, i32
  }
  func.func @transform_1(%arg0: i32) -> (i32, i32) {
    %c0_i32 = arith.constant 0 : i32
    %c0_i32_0 = arith.constant 0 : i32
    %c0_i32_1 = arith.constant 0 : i32
    return %c0_i32, %c0_i32_0 : i32, i32
  }
  func.func @transform_2(%arg0: i32) -> (i32, i32) {
    %c0_i32 = arith.constant 0 : i32
    %c0_i32_0 = arith.constant 0 : i32
    %c0_i32_1 = arith.constant 0 : i32
    return %c0_i32, %c0_i32_0 : i32, i32
  }
  func.func @transform_3(%arg0: i32) -> (i32, i32) {
    %c0_i32 = arith.constant 0 : i32
    %c0_i32_0 = arith.constant 0 : i32
    %c0_i32_1 = arith.constant 0 : i32
    return %c0_i32, %c0_i32_0 : i32, i32
  }
  func.func @transform_4(%arg0: i32) -> (i32, i32) {
    %c0_i32 = arith.constant 0 : i32
    %c0_i32_0 = arith.constant 0 : i32
    %c0_i32_1 = arith.constant 0 : i32
    return %c0_i32, %c0_i32_0 : i32, i32
  }
  func.func @transform_5(%arg0: i32) -> (i32, i32) {
    %c0_i32 = arith.constant 0 : i32
    %c0_i32_0 = arith.constant 0 : i32
    %c0_i32_1 = arith.constant 0 : i32
    return %c0_i32, %c0_i32_0 : i32, i32
  }
  func.func @transform_6(%arg0: i32) -> (i32, i32) {
    %c0_i32 = arith.constant 0 : i32
    %c0_i32_0 = arith.constant 0 : i32
    %c0_i32_1 = arith.constant 0 : i32
    return %c0_i32, %c0_i32_0 : i32, i32
  }
  func.func @transform_7(%arg0: i32) -> (i32, i32) {
    %c0_i32 = arith.constant 0 : i32
    %c0_i32_0 = arith.constant 0 : i32
    %c0_i32_1 = arith.constant 0 : i32
    return %c0_i32, %c0_i32_0 : i32, i32
  }
  func.func @transform_8(%arg0: i32) -> (i32, i32) {
    %c0_i32 = arith.constant 0 : i32
    %c0_i32_0 = arith.constant 0 : i32
    %c0_i32_1 = arith.constant 0 : i32
    return %c0_i32, %c0_i32_0 : i32, i32
  }
  func.func @transform_9(%arg0: i32) -> (i32, i32) {
    %c0_i32 = arith.constant 0 : i32
    %c0_i32_0 = arith.constant 0 : i32
    %c0_i32_1 = arith.constant 0 : i32
    return %c0_i32, %c0_i32_0 : i32, i32
  }
  func.func @transform_10(%arg0: i32) -> (i32, i32) {
    %c0_i32 = arith.constant 0 : i32
    %c0_i32_0 = arith.constant 0 : i32
    %c0_i32_1 = arith.constant 0 : i32
    return %c0_i32, %c0_i32_0 : i32, i32
  }
  func.func @transform_11(%arg0: i32) -> (i32, i32) {
    %c0_i32 = arith.constant 0 : i32
    %c0_i32_0 = arith.constant 0 : i32
    %c0_i32_1 = arith.constant 0 : i32
    return %c0_i32, %c0_i32_0 : i32, i32
  }
  func.func @transform_12(%arg0: i32) -> (i32, i32) {
    %c0_i32 = arith.constant 0 : i32
    %c0_i32_0 = arith.constant 0 : i32
    %c0_i32_1 = arith.constant 0 : i32
    return %c0_i32, %c0_i32_0 : i32, i32
  }
  func.func @transform_13(%arg0: i32) -> (i32, i32) {
    %c0_i32 = arith.constant 0 : i32
    %c0_i32_0 = arith.constant 0 : i32
    return %arg0, %c0_i32 : i32, i32
  }
}

module attributes {stable_mosaic.version = 11 : i64} {
  func.func @_mpnn_up_kernel(%arg0: i32, %arg1: memref<24x32xf32, #tpu.memory_space<vmem>>, %arg2: memref<24x24xf32, #tpu.memory_space<vmem>>, %arg3: memref<24x24xf32, #tpu.memory_space<vmem>>, %arg4: memref<32x64xf32, #tpu.memory_space<vmem>>, %arg5: memref<1x64xf32, #tpu.memory_space<vmem>>, %arg6: memref<64x64xf32, #tpu.memory_space<vmem>>, %arg7: memref<1x64xf32, #tpu.memory_space<vmem>>, %arg8: memref<192x64xf32, #tpu.memory_space<vmem>>, %arg9: memref<1x64xf32, #tpu.memory_space<vmem>>, %arg10: memref<64x192xf32, #tpu.memory_space<vmem>>, %arg11: memref<1x192xf32, #tpu.memory_space<vmem>>, %arg12: memref<64x192xf32, #tpu.memory_space<vmem>>, %arg13: memref<1x192xf32, #tpu.memory_space<vmem>>, %arg14: memref<64x128xf32, #tpu.memory_space<vmem>>, %arg15: memref<1x128xf32, #tpu.memory_space<vmem>>, %arg16: memref<24x128xf32, #tpu.memory_space<vmem>>) attributes {dimension_semantics = [#tpu.dimension_semantics<parallel>], iteration_bounds = array<i64: 2>, scalar_prefetch = 0 : i64, scratch_operands = 0 : i64, tpu.core_type = #tpu.core_type<tc>, window_params = [{transform_indices = @transform_0, window_bounds = array<i64: 24, 32>}, {pipeline_mode = #tpu.pipeline_mode<synchronous>, transform_indices = @transform_1, window_bounds = array<i64: 24, 24>}, {pipeline_mode = #tpu.pipeline_mode<synchronous>, transform_indices = @transform_2, window_bounds = array<i64: 24, 24>}, {pipeline_mode = #tpu.pipeline_mode<synchronous>, transform_indices = @transform_3, window_bounds = array<i64: 32, 64>}, {pipeline_mode = #tpu.pipeline_mode<synchronous>, transform_indices = @transform_4, window_bounds = array<i64: 1, 64>}, {pipeline_mode = #tpu.pipeline_mode<synchronous>, transform_indices = @transform_5, window_bounds = array<i64: 64, 64>}, {pipeline_mode = #tpu.pipeline_mode<synchronous>, transform_indices = @transform_6, window_bounds = array<i64: 1, 64>}, {pipeline_mode = #tpu.pipeline_mode<synchronous>, transform_indices = @transform_7, window_bounds = array<i64: 192, 64>}, {pipeline_mode = #tpu.pipeline_mode<synchronous>, transform_indices = @transform_8, window_bounds = array<i64: 1, 64>}, {pipeline_mode = #tpu.pipeline_mode<synchronous>, transform_indices = @transform_9, window_bounds = array<i64: 64, 192>}, {pipeline_mode = #tpu.pipeline_mode<synchronous>, transform_indices = @transform_10, window_bounds = array<i64: 1, 192>}, {pipeline_mode = #tpu.pipeline_mode<synchronous>, transform_indices = @transform_11, window_bounds = array<i64: 64, 192>}, {pipeline_mode = #tpu.pipeline_mode<synchronous>, transform_indices = @transform_12, window_bounds = array<i64: 1, 192>}, {pipeline_mode = #tpu.pipeline_mode<synchronous>, transform_indices = @transform_13, window_bounds = array<i64: 64, 128>}, {pipeline_mode = #tpu.pipeline_mode<synchronous>, transform_indices = @transform_14, window_bounds = array<i64: 1, 128>}, {transform_indices = @transform_15, window_bounds = array<i64: 24, 128>}]} {
    %c0 = arith.constant 0 : index
    %c0_0 = arith.constant 0 : index
    %0 = vector.load %arg1[%c0, %c0_0] : memref<24x32xf32, #tpu.memory_space<vmem>>, vector<24x32xf32>
    %c0_1 = arith.constant 0 : index
    %c0_2 = arith.constant 0 : index
    %1 = vector.load %arg4[%c0_1, %c0_2] : memref<32x64xf32, #tpu.memory_space<vmem>>, vector<32x64xf32>
    %2 = arith.truncf %0 : vector<24x32xf32> to vector<24x32xbf16>
    %3 = arith.truncf %1 : vector<32x64xf32> to vector<32x64xbf16>
    %cst = arith.constant dense<0.000000e+00> : vector<24x64xf32>
    %4 = tpu.matmul %2, %3, %cst {dimension_numbers = #tpu.dot_dimension_numbers<[1], [0], [0], [1], [0, 0, 1, 1], [], []>} : vector<24x32xbf16>, vector<32x64xbf16>, vector<24x64xf32> -> vector<24x64xf32>
    %c0_3 = arith.constant 0 : index
    %c0_4 = arith.constant 0 : index
    %5 = vector.load %arg5[%c0_3, %c0_4] : memref<1x64xf32, #tpu.memory_space<vmem>>, vector<1x64xf32>
    %6 = vector.broadcast %5 : vector<1x64xf32> to vector<24x64xf32>
    %7 = arith.addf %4, %6 : vector<24x64xf32>
    %cst_5 = arith.constant 0.000000e+00 : f32
    %8 = vector.broadcast %cst_5 : f32 to vector<24x64xf32>
    %9 = arith.maximumf %7, %8 : vector<24x64xf32>
    %c0_6 = arith.constant 0 : index
    %c0_7 = arith.constant 0 : index
    %10 = vector.load %arg6[%c0_6, %c0_7] : memref<64x64xf32, #tpu.memory_space<vmem>>, vector<64x64xf32>
    %11 = arith.truncf %9 : vector<24x64xf32> to vector<24x64xbf16>
    %12 = arith.truncf %10 : vector<64x64xf32> to vector<64x64xbf16>
    %cst_8 = arith.constant dense<0.000000e+00> : vector<24x64xf32>
    %13 = tpu.matmul %11, %12, %cst_8 {dimension_numbers = #tpu.dot_dimension_numbers<[1], [0], [0], [1], [0, 0, 1, 1], [], []>} : vector<24x64xbf16>, vector<64x64xbf16>, vector<24x64xf32> -> vector<24x64xf32>
    %c0_9 = arith.constant 0 : index
    %c0_10 = arith.constant 0 : index
    %14 = vector.load %arg7[%c0_9, %c0_10] : memref<1x64xf32, #tpu.memory_space<vmem>>, vector<1x64xf32>
    %15 = vector.broadcast %14 : vector<1x64xf32> to vector<24x64xf32>
    %16 = arith.addf %13, %15 : vector<24x64xf32>
    %c0_11 = arith.constant 0 : index
    %c0_12 = arith.constant 0 : index
    %17 = vector.load %arg2[%c0_11, %c0_12] : memref<24x24xf32, #tpu.memory_space<vmem>>, vector<24x24xf32>
    %18 = arith.truncf %17 : vector<24x24xf32> to vector<24x24xbf16>
    %c0_13 = arith.constant 0 : index
    %c0_14 = arith.constant 0 : index
    %19 = vector.load %arg3[%c0_13, %c0_14] : memref<24x24xf32, #tpu.memory_space<vmem>>, vector<24x24xf32>
    %20 = arith.truncf %19 : vector<24x24xf32> to vector<24x24xbf16>
    %c0_15 = arith.constant 0 : index
    %c0_16 = arith.constant 0 : index
    %21 = vector.load %arg8[%c0_15, %c0_16] : memref<192x64xf32, #tpu.memory_space<vmem>>, vector<192x64xf32>
    %22 = arith.truncf %21 : vector<192x64xf32> to vector<192x64xbf16>
    %23 = vector.extract_strided_slice %22 {offsets = [0, 0], sizes = [64, 64], strides = [1, 1]} : vector<192x64xbf16> to vector<64x64xbf16>
    %24 = vector.extract_strided_slice %22 {offsets = [64, 0], sizes = [64, 64], strides = [1, 1]} : vector<192x64xbf16> to vector<64x64xbf16>
    %25 = vector.extract_strided_slice %22 {offsets = [128, 0], sizes = [64, 64], strides = [1, 1]} : vector<192x64xbf16> to vector<64x64xbf16>
    %c0_17 = arith.constant 0 : index
    %c0_18 = arith.constant 0 : index
    %26 = vector.load %arg10[%c0_17, %c0_18] : memref<64x192xf32, #tpu.memory_space<vmem>>, vector<64x192xf32>
    %27 = arith.truncf %26 : vector<64x192xf32> to vector<64x192xbf16>
    %c0_19 = arith.constant 0 : index
    %c0_20 = arith.constant 0 : index
    %28 = vector.load %arg12[%c0_19, %c0_20] : memref<64x192xf32, #tpu.memory_space<vmem>>, vector<64x192xf32>
    %29 = arith.truncf %28 : vector<64x192xf32> to vector<64x192xbf16>
    %c0_21 = arith.constant 0 : index
    %c0_22 = arith.constant 0 : index
    %30 = vector.load %arg9[%c0_21, %c0_22] : memref<1x64xf32, #tpu.memory_space<vmem>>, vector<1x64xf32>
    %31 = vector.shape_cast %30 : vector<1x64xf32> to vector<1x64xf32>
    %32 = vector.broadcast %31 : vector<1x64xf32> to vector<24x64xf32>
    %c0_23 = arith.constant 0 : index
    %c0_24 = arith.constant 0 : index
    %33 = vector.load %arg11[%c0_23, %c0_24] : memref<1x192xf32, #tpu.memory_space<vmem>>, vector<1x192xf32>
    %34 = vector.shape_cast %33 : vector<1x192xf32> to vector<1x192xf32>
    %35 = vector.broadcast %34 : vector<1x192xf32> to vector<24x192xf32>
    %c0_25 = arith.constant 0 : index
    %c0_26 = arith.constant 0 : index
    %36 = vector.load %arg13[%c0_25, %c0_26] : memref<1x192xf32, #tpu.memory_space<vmem>>, vector<1x192xf32>
    %37 = vector.shape_cast %36 : vector<1x192xf32> to vector<1x192xf32>
    %38 = vector.broadcast %37 : vector<1x192xf32> to vector<24x192xf32>
    %c0_i32 = arith.constant 0 : i32
    %39 = arith.truncf %16 : vector<24x64xf32> to vector<24x64xbf16>
    %cst_27 = arith.constant dense<0.000000e+00> : vector<24x64xf32>
    %40 = tpu.matmul %18, %39, %cst_27 {dimension_numbers = #tpu.dot_dimension_numbers<[1], [0], [0], [1], [0, 0, 1, 1], [], []>} : vector<24x24xbf16>, vector<24x64xbf16>, vector<24x64xf32> -> vector<24x64xf32>
    %cst_28 = arith.constant dense<0.000000e+00> : vector<24x64xf32>
    %41 = tpu.matmul %20, %39, %cst_28 {dimension_numbers = #tpu.dot_dimension_numbers<[1], [0], [0], [1], [0, 0, 1, 1], [], []>} : vector<24x24xbf16>, vector<24x64xbf16>, vector<24x64xf32> -> vector<24x64xf32>
    %42 = arith.truncf %40 : vector<24x64xf32> to vector<24x64xbf16>
    %cst_29 = arith.constant dense<0.000000e+00> : vector<24x64xf32>
    %43 = tpu.matmul %42, %23, %cst_29 {dimension_numbers = #tpu.dot_dimension_numbers<[1], [0], [0], [1], [0, 0, 1, 1], [], []>} : vector<24x64xbf16>, vector<64x64xbf16>, vector<24x64xf32> -> vector<24x64xf32>
    %44 = arith.truncf %41 : vector<24x64xf32> to vector<24x64xbf16>
    %cst_30 = arith.constant dense<0.000000e+00> : vector<24x64xf32>
    %45 = tpu.matmul %44, %24, %cst_30 {dimension_numbers = #tpu.dot_dimension_numbers<[1], [0], [0], [1], [0, 0, 1, 1], [], []>} : vector<24x64xbf16>, vector<64x64xbf16>, vector<24x64xf32> -> vector<24x64xf32>
    %46 = arith.addf %43, %45 : vector<24x64xf32>
    %cst_31 = arith.constant dense<0.000000e+00> : vector<24x64xf32>
    %47 = tpu.matmul %39, %25, %cst_31 {dimension_numbers = #tpu.dot_dimension_numbers<[1], [0], [0], [1], [0, 0, 1, 1], [], []>} : vector<24x64xbf16>, vector<64x64xbf16>, vector<24x64xf32> -> vector<24x64xf32>
    %48 = arith.addf %46, %47 : vector<24x64xf32>
    %49 = arith.addf %48, %32 : vector<24x64xf32>
    %cst_32 = arith.constant 0.000000e+00 : f32
    %50 = vector.broadcast %cst_32 : f32 to vector<24x64xf32>
    %51 = arith.maximumf %49, %50 : vector<24x64xf32>
    %52 = arith.truncf %51 : vector<24x64xf32> to vector<24x64xbf16>
    %cst_33 = arith.constant dense<0.000000e+00> : vector<24x192xf32>
    %53 = tpu.matmul %52, %27, %cst_33 {dimension_numbers = #tpu.dot_dimension_numbers<[1], [0], [0], [1], [0, 0, 1, 1], [], []>} : vector<24x64xbf16>, vector<64x192xbf16>, vector<24x192xf32> -> vector<24x192xf32>
    %54 = arith.addf %53, %35 : vector<24x192xf32>
    %cst_34 = arith.constant dense<0.000000e+00> : vector<24x192xf32>
    %55 = tpu.matmul %39, %29, %cst_34 {dimension_numbers = #tpu.dot_dimension_numbers<[1], [0], [0], [1], [0, 0, 1, 1], [], []>} : vector<24x64xbf16>, vector<64x192xbf16>, vector<24x192xf32> -> vector<24x192xf32>
    %56 = arith.addf %55, %38 : vector<24x192xf32>
    %57 = vector.extract_strided_slice %54 {offsets = [0, 0], sizes = [24, 64], strides = [1, 1]} : vector<24x192xf32> to vector<24x64xf32>
    %58 = vector.extract_strided_slice %56 {offsets = [0, 0], sizes = [24, 64], strides = [1, 1]} : vector<24x192xf32> to vector<24x64xf32>
    %59 = arith.addf %57, %58 : vector<24x64xf32>
    %60 = arith.negf %59 : vector<24x64xf32>
    %61 = math.exp %60 : vector<24x64xf32>
    %cst_35 = arith.constant 1.000000e+00 : f32
    %62 = vector.broadcast %cst_35 : f32 to vector<24x64xf32>
    %63 = arith.addf %62, %61 : vector<24x64xf32>
    %64 = arith.divf %62, %63 : vector<24x64xf32>
    %65 = vector.extract_strided_slice %54 {offsets = [0, 64], sizes = [24, 64], strides = [1, 1]} : vector<24x192xf32> to vector<24x64xf32>
    %66 = vector.extract_strided_slice %56 {offsets = [0, 64], sizes = [24, 64], strides = [1, 1]} : vector<24x192xf32> to vector<24x64xf32>
    %67 = arith.addf %65, %66 : vector<24x64xf32>
    %68 = arith.negf %67 : vector<24x64xf32>
    %69 = math.exp %68 : vector<24x64xf32>
    %cst_36 = arith.constant 1.000000e+00 : f32
    %70 = vector.broadcast %cst_36 : f32 to vector<24x64xf32>
    %71 = arith.addf %70, %69 : vector<24x64xf32>
    %72 = arith.divf %70, %71 : vector<24x64xf32>
    %73 = vector.extract_strided_slice %54 {offsets = [0, 128], sizes = [24, 64], strides = [1, 1]} : vector<24x192xf32> to vector<24x64xf32>
    %74 = vector.extract_strided_slice %56 {offsets = [0, 128], sizes = [24, 64], strides = [1, 1]} : vector<24x192xf32> to vector<24x64xf32>
    %75 = arith.mulf %64, %74 : vector<24x64xf32>
    %76 = arith.addf %73, %75 : vector<24x64xf32>
    %77 = math.tanh %76 : vector<24x64xf32>
    %cst_37 = arith.constant 1.000000e+00 : f32
    %78 = vector.broadcast %cst_37 : f32 to vector<24x64xf32>
    %79 = arith.subf %78, %72 : vector<24x64xf32>
    %80 = arith.mulf %79, %77 : vector<24x64xf32>
    %81 = arith.mulf %72, %16 : vector<24x64xf32>
    %82 = arith.addf %80, %81 : vector<24x64xf32>
    %c1_i32 = arith.constant 1 : i32
    %83 = arith.truncf %82 : vector<24x64xf32> to vector<24x64xbf16>
    %cst_38 = arith.constant dense<0.000000e+00> : vector<24x64xf32>
    %84 = tpu.matmul %18, %83, %cst_38 {dimension_numbers = #tpu.dot_dimension_numbers<[1], [0], [0], [1], [0, 0, 1, 1], [], []>} : vector<24x24xbf16>, vector<24x64xbf16>, vector<24x64xf32> -> vector<24x64xf32>
    %cst_39 = arith.constant dense<0.000000e+00> : vector<24x64xf32>
    %85 = tpu.matmul %20, %83, %cst_39 {dimension_numbers = #tpu.dot_dimension_numbers<[1], [0], [0], [1], [0, 0, 1, 1], [], []>} : vector<24x24xbf16>, vector<24x64xbf16>, vector<24x64xf32> -> vector<24x64xf32>
    %86 = arith.truncf %84 : vector<24x64xf32> to vector<24x64xbf16>
    %cst_40 = arith.constant dense<0.000000e+00> : vector<24x64xf32>
    %87 = tpu.matmul %86, %23, %cst_40 {dimension_numbers = #tpu.dot_dimension_numbers<[1], [0], [0], [1], [0, 0, 1, 1], [], []>} : vector<24x64xbf16>, vector<64x64xbf16>, vector<24x64xf32> -> vector<24x64xf32>
    %88 = arith.truncf %85 : vector<24x64xf32> to vector<24x64xbf16>
    %cst_41 = arith.constant dense<0.000000e+00> : vector<24x64xf32>
    %89 = tpu.matmul %88, %24, %cst_41 {dimension_numbers = #tpu.dot_dimension_numbers<[1], [0], [0], [1], [0, 0, 1, 1], [], []>} : vector<24x64xbf16>, vector<64x64xbf16>, vector<24x64xf32> -> vector<24x64xf32>
    %90 = arith.addf %87, %89 : vector<24x64xf32>
    %cst_42 = arith.constant dense<0.000000e+00> : vector<24x64xf32>
    %91 = tpu.matmul %83, %25, %cst_42 {dimension_numbers = #tpu.dot_dimension_numbers<[1], [0], [0], [1], [0, 0, 1, 1], [], []>} : vector<24x64xbf16>, vector<64x64xbf16>, vector<24x64xf32> -> vector<24x64xf32>
    %92 = arith.addf %90, %91 : vector<24x64xf32>
    %93 = arith.addf %92, %32 : vector<24x64xf32>
    %cst_43 = arith.constant 0.000000e+00 : f32
    %94 = vector.broadcast %cst_43 : f32 to vector<24x64xf32>
    %95 = arith.maximumf %93, %94 : vector<24x64xf32>
    %96 = arith.truncf %95 : vector<24x64xf32> to vector<24x64xbf16>
    %cst_44 = arith.constant dense<0.000000e+00> : vector<24x192xf32>
    %97 = tpu.matmul %96, %27, %cst_44 {dimension_numbers = #tpu.dot_dimension_numbers<[1], [0], [0], [1], [0, 0, 1, 1], [], []>} : vector<24x64xbf16>, vector<64x192xbf16>, vector<24x192xf32> -> vector<24x192xf32>
    %98 = arith.addf %97, %35 : vector<24x192xf32>
    %cst_45 = arith.constant dense<0.000000e+00> : vector<24x192xf32>
    %99 = tpu.matmul %83, %29, %cst_45 {dimension_numbers = #tpu.dot_dimension_numbers<[1], [0], [0], [1], [0, 0, 1, 1], [], []>} : vector<24x64xbf16>, vector<64x192xbf16>, vector<24x192xf32> -> vector<24x192xf32>
    %100 = arith.addf %99, %38 : vector<24x192xf32>
    %101 = vector.extract_strided_slice %98 {offsets = [0, 0], sizes = [24, 64], strides = [1, 1]} : vector<24x192xf32> to vector<24x64xf32>
    %102 = vector.extract_strided_slice %100 {offsets = [0, 0], sizes = [24, 64], strides = [1, 1]} : vector<24x192xf32> to vector<24x64xf32>
    %103 = arith.addf %101, %102 : vector<24x64xf32>
    %104 = arith.negf %103 : vector<24x64xf32>
    %105 = math.exp %104 : vector<24x64xf32>
    %cst_46 = arith.constant 1.000000e+00 : f32
    %106 = vector.broadcast %cst_46 : f32 to vector<24x64xf32>
    %107 = arith.addf %106, %105 : vector<24x64xf32>
    %108 = arith.divf %106, %107 : vector<24x64xf32>
    %109 = vector.extract_strided_slice %98 {offsets = [0, 64], sizes = [24, 64], strides = [1, 1]} : vector<24x192xf32> to vector<24x64xf32>
    %110 = vector.extract_strided_slice %100 {offsets = [0, 64], sizes = [24, 64], strides = [1, 1]} : vector<24x192xf32> to vector<24x64xf32>
    %111 = arith.addf %109, %110 : vector<24x64xf32>
    %112 = arith.negf %111 : vector<24x64xf32>
    %113 = math.exp %112 : vector<24x64xf32>
    %cst_47 = arith.constant 1.000000e+00 : f32
    %114 = vector.broadcast %cst_47 : f32 to vector<24x64xf32>
    %115 = arith.addf %114, %113 : vector<24x64xf32>
    %116 = arith.divf %114, %115 : vector<24x64xf32>
    %117 = vector.extract_strided_slice %98 {offsets = [0, 128], sizes = [24, 64], strides = [1, 1]} : vector<24x192xf32> to vector<24x64xf32>
    %118 = vector.extract_strided_slice %100 {offsets = [0, 128], sizes = [24, 64], strides = [1, 1]} : vector<24x192xf32> to vector<24x64xf32>
    %119 = arith.mulf %108, %118 : vector<24x64xf32>
    %120 = arith.addf %117, %119 : vector<24x64xf32>
    %121 = math.tanh %120 : vector<24x64xf32>
    %cst_48 = arith.constant 1.000000e+00 : f32
    %122 = vector.broadcast %cst_48 : f32 to vector<24x64xf32>
    %123 = arith.subf %122, %116 : vector<24x64xf32>
    %124 = arith.mulf %123, %121 : vector<24x64xf32>
    %125 = arith.mulf %116, %82 : vector<24x64xf32>
    %126 = arith.addf %124, %125 : vector<24x64xf32>
    %c0_49 = arith.constant 0 : index
    %c0_50 = arith.constant 0 : index
    %127 = vector.load %arg14[%c0_49, %c0_50] : memref<64x128xf32, #tpu.memory_space<vmem>>, vector<64x128xf32>
    %128 = arith.truncf %126 : vector<24x64xf32> to vector<24x64xbf16>
    %129 = arith.truncf %127 : vector<64x128xf32> to vector<64x128xbf16>
    %cst_51 = arith.constant dense<0.000000e+00> : vector<24x128xf32>
    %130 = tpu.matmul %128, %129, %cst_51 {dimension_numbers = #tpu.dot_dimension_numbers<[1], [0], [0], [1], [0, 0, 1, 1], [], []>} : vector<24x64xbf16>, vector<64x128xbf16>, vector<24x128xf32> -> vector<24x128xf32>
    %c0_52 = arith.constant 0 : index
    %c0_53 = arith.constant 0 : index
    %131 = vector.load %arg15[%c0_52, %c0_53] : memref<1x128xf32, #tpu.memory_space<vmem>>, vector<1x128xf32>
    %132 = vector.broadcast %131 : vector<1x128xf32> to vector<24x128xf32>
    %133 = arith.addf %130, %132 : vector<24x128xf32>
    %c0_54 = arith.constant 0 : index
    %c0_55 = arith.constant 0 : index
    %134 = vector.load %arg16[%c0_54, %c0_55] : memref<24x128xf32, #tpu.memory_space<vmem>>, vector<24x128xf32>
    tpu.vector_store %arg16[%c0_54, %c0_55], %133 {strides = array<i32>} : memref<24x128xf32, #tpu.memory_space<vmem>>, vector<24x128xf32>,
    return
  }
  func.func @transform_0(%arg0: i32) -> (i32, i32) {
    %c0_i32 = arith.constant 0 : i32
    %c0_i32_0 = arith.constant 0 : i32
    return %arg0, %c0_i32 : i32, i32
  }
  func.func @transform_1(%arg0: i32) -> (i32, i32) {
    %c0_i32 = arith.constant 0 : i32
    %c0_i32_0 = arith.constant 0 : i32
    %c0_i32_1 = arith.constant 0 : i32
    return %c0_i32, %c0_i32_0 : i32, i32
  }
  func.func @transform_2(%arg0: i32) -> (i32, i32) {
    %c0_i32 = arith.constant 0 : i32
    %c0_i32_0 = arith.constant 0 : i32
    %c0_i32_1 = arith.constant 0 : i32
    return %c0_i32, %c0_i32_0 : i32, i32
  }
  func.func @transform_3(%arg0: i32) -> (i32, i32) {
    %c0_i32 = arith.constant 0 : i32
    %c0_i32_0 = arith.constant 0 : i32
    %c0_i32_1 = arith.constant 0 : i32
    return %c0_i32, %c0_i32_0 : i32, i32
  }
  func.func @transform_4(%arg0: i32) -> (i32, i32) {
    %c0_i32 = arith.constant 0 : i32
    %c0_i32_0 = arith.constant 0 : i32
    %c0_i32_1 = arith.constant 0 : i32
    return %c0_i32, %c0_i32_0 : i32, i32
  }
  func.func @transform_5(%arg0: i32) -> (i32, i32) {
    %c0_i32 = arith.constant 0 : i32
    %c0_i32_0 = arith.constant 0 : i32
    %c0_i32_1 = arith.constant 0 : i32
    return %c0_i32, %c0_i32_0 : i32, i32
  }
  func.func @transform_6(%arg0: i32) -> (i32, i32) {
    %c0_i32 = arith.constant 0 : i32
    %c0_i32_0 = arith.constant 0 : i32
    %c0_i32_1 = arith.constant 0 : i32
    return %c0_i32, %c0_i32_0 : i32, i32
  }
  func.func @transform_7(%arg0: i32) -> (i32, i32) {
    %c0_i32 = arith.constant 0 : i32
    %c0_i32_0 = arith.constant 0 : i32
    %c0_i32_1 = arith.constant 0 : i32
    return %c0_i32, %c0_i32_0 : i32, i32
  }
  func.func @transform_8(%arg0: i32) -> (i32, i32) {
    %c0_i32 = arith.constant 0 : i32
    %c0_i32_0 = arith.constant 0 : i32
    %c0_i32_1 = arith.constant 0 : i32
    return %c0_i32, %c0_i32_0 : i32, i32
  }
  func.func @transform_9(%arg0: i32) -> (i32, i32) {
    %c0_i32 = arith.constant 0 : i32
    %c0_i32_0 = arith.constant 0 : i32
    %c0_i32_1 = arith.constant 0 : i32
    return %c0_i32, %c0_i32_0 : i32, i32
  }
  func.func @transform_10(%arg0: i32) -> (i32, i32) {
    %c0_i32 = arith.constant 0 : i32
    %c0_i32_0 = arith.constant 0 : i32
    %c0_i32_1 = arith.constant 0 : i32
    return %c0_i32, %c0_i32_0 : i32, i32
  }
  func.func @transform_11(%arg0: i32) -> (i32, i32) {
    %c0_i32 = arith.constant 0 : i32
    %c0_i32_0 = arith.constant 0 : i32
    %c0_i32_1 = arith.constant 0 : i32
    return %c0_i32, %c0_i32_0 : i32, i32
  }
  func.func @transform_12(%arg0: i32) -> (i32, i32) {
    %c0_i32 = arith.constant 0 : i32
    %c0_i32_0 = arith.constant 0 : i32
    %c0_i32_1 = arith.constant 0 : i32
    return %c0_i32, %c0_i32_0 : i32, i32
  }
  func.func @transform_13(%arg0: i32) -> (i32, i32) {
    %c0_i32 = arith.constant 0 : i32
    %c0_i32_0 = arith.constant 0 : i32
    %c0_i32_1 = arith.constant 0 : i32
    return %c0_i32, %c0_i32_0 : i32, i32
  }
  func.func @transform_14(%arg0: i32) -> (i32, i32) {
    %c0_i32 = arith.constant 0 : i32
    %c0_i32_0 = arith.constant 0 : i32
    %c0_i32_1 = arith.constant 0 : i32
    return %c0_i32, %c0_i32_0 : i32, i32
  }
  func.func @transform_15(%arg0: i32) -> (i32, i32) {
    %c0_i32 = arith.constant 0 : i32
    %c0_i32_0 = arith.constant 0 : i32
    return %arg0, %c0_i32 : i32, i32
  }
}

module attributes {stable_mosaic.version = 11 : i64} {
  func.func @_mpnn_kernel(%arg0: i32, %arg1: memref<48x128xf32, #tpu.memory_space<vmem>>, %arg2: memref<48x48xf32, #tpu.memory_space<vmem>>, %arg3: memref<48x48xf32, #tpu.memory_space<vmem>>, %arg4: memref<128x64xf32, #tpu.memory_space<vmem>>, %arg5: memref<1x64xf32, #tpu.memory_space<vmem>>, %arg6: memref<64x64xf32, #tpu.memory_space<vmem>>, %arg7: memref<1x64xf32, #tpu.memory_space<vmem>>, %arg8: memref<192x64xf32, #tpu.memory_space<vmem>>, %arg9: memref<1x64xf32, #tpu.memory_space<vmem>>, %arg10: memref<64x192xf32, #tpu.memory_space<vmem>>, %arg11: memref<1x192xf32, #tpu.memory_space<vmem>>, %arg12: memref<64x192xf32, #tpu.memory_space<vmem>>, %arg13: memref<1x192xf32, #tpu.memory_space<vmem>>, %arg14: memref<48x64xf32, #tpu.memory_space<vmem>>) attributes {dimension_semantics = [#tpu.dimension_semantics<parallel>], iteration_bounds = array<i64: 2>, scalar_prefetch = 0 : i64, scratch_operands = 0 : i64, tpu.core_type = #tpu.core_type<tc>, window_params = [{transform_indices = @transform_0, window_bounds = array<i64: 48, 128>}, {pipeline_mode = #tpu.pipeline_mode<synchronous>, transform_indices = @transform_1, window_bounds = array<i64: 48, 48>}, {pipeline_mode = #tpu.pipeline_mode<synchronous>, transform_indices = @transform_2, window_bounds = array<i64: 48, 48>}, {pipeline_mode = #tpu.pipeline_mode<synchronous>, transform_indices = @transform_3, window_bounds = array<i64: 128, 64>}, {pipeline_mode = #tpu.pipeline_mode<synchronous>, transform_indices = @transform_4, window_bounds = array<i64: 1, 64>}, {pipeline_mode = #tpu.pipeline_mode<synchronous>, transform_indices = @transform_5, window_bounds = array<i64: 64, 64>}, {pipeline_mode = #tpu.pipeline_mode<synchronous>, transform_indices = @transform_6, window_bounds = array<i64: 1, 64>}, {pipeline_mode = #tpu.pipeline_mode<synchronous>, transform_indices = @transform_7, window_bounds = array<i64: 192, 64>}, {pipeline_mode = #tpu.pipeline_mode<synchronous>, transform_indices = @transform_8, window_bounds = array<i64: 1, 64>}, {pipeline_mode = #tpu.pipeline_mode<synchronous>, transform_indices = @transform_9, window_bounds = array<i64: 64, 192>}, {pipeline_mode = #tpu.pipeline_mode<synchronous>, transform_indices = @transform_10, window_bounds = array<i64: 1, 192>}, {pipeline_mode = #tpu.pipeline_mode<synchronous>, transform_indices = @transform_11, window_bounds = array<i64: 64, 192>}, {pipeline_mode = #tpu.pipeline_mode<synchronous>, transform_indices = @transform_12, window_bounds = array<i64: 1, 192>}, {transform_indices = @transform_13, window_bounds = array<i64: 48, 64>}]} {
    %c0 = arith.constant 0 : index
    %c0_0 = arith.constant 0 : index
    %0 = vector.load %arg1[%c0, %c0_0] : memref<48x128xf32, #tpu.memory_space<vmem>>, vector<48x128xf32>
    %c0_1 = arith.constant 0 : index
    %c0_2 = arith.constant 0 : index
    %1 = vector.load %arg4[%c0_1, %c0_2] : memref<128x64xf32, #tpu.memory_space<vmem>>, vector<128x64xf32>
    %2 = arith.truncf %0 : vector<48x128xf32> to vector<48x128xbf16>
    %3 = arith.truncf %1 : vector<128x64xf32> to vector<128x64xbf16>
    %cst = arith.constant dense<0.000000e+00> : vector<48x64xf32>
    %4 = tpu.matmul %2, %3, %cst {dimension_numbers = #tpu.dot_dimension_numbers<[1], [0], [0], [1], [0, 0, 1, 1], [], []>} : vector<48x128xbf16>, vector<128x64xbf16>, vector<48x64xf32> -> vector<48x64xf32>
    %c0_3 = arith.constant 0 : index
    %c0_4 = arith.constant 0 : index
    %5 = vector.load %arg5[%c0_3, %c0_4] : memref<1x64xf32, #tpu.memory_space<vmem>>, vector<1x64xf32>
    %6 = vector.broadcast %5 : vector<1x64xf32> to vector<48x64xf32>
    %7 = arith.addf %4, %6 : vector<48x64xf32>
    %cst_5 = arith.constant 0.000000e+00 : f32
    %8 = vector.broadcast %cst_5 : f32 to vector<48x64xf32>
    %9 = arith.maximumf %7, %8 : vector<48x64xf32>
    %c0_6 = arith.constant 0 : index
    %c0_7 = arith.constant 0 : index
    %10 = vector.load %arg6[%c0_6, %c0_7] : memref<64x64xf32, #tpu.memory_space<vmem>>, vector<64x64xf32>
    %11 = arith.truncf %9 : vector<48x64xf32> to vector<48x64xbf16>
    %12 = arith.truncf %10 : vector<64x64xf32> to vector<64x64xbf16>
    %cst_8 = arith.constant dense<0.000000e+00> : vector<48x64xf32>
    %13 = tpu.matmul %11, %12, %cst_8 {dimension_numbers = #tpu.dot_dimension_numbers<[1], [0], [0], [1], [0, 0, 1, 1], [], []>} : vector<48x64xbf16>, vector<64x64xbf16>, vector<48x64xf32> -> vector<48x64xf32>
    %c0_9 = arith.constant 0 : index
    %c0_10 = arith.constant 0 : index
    %14 = vector.load %arg7[%c0_9, %c0_10] : memref<1x64xf32, #tpu.memory_space<vmem>>, vector<1x64xf32>
    %15 = vector.broadcast %14 : vector<1x64xf32> to vector<48x64xf32>
    %16 = arith.addf %13, %15 : vector<48x64xf32>
    %c0_11 = arith.constant 0 : index
    %c0_12 = arith.constant 0 : index
    %17 = vector.load %arg2[%c0_11, %c0_12] : memref<48x48xf32, #tpu.memory_space<vmem>>, vector<48x48xf32>
    %18 = arith.truncf %17 : vector<48x48xf32> to vector<48x48xbf16>
    %c0_13 = arith.constant 0 : index
    %c0_14 = arith.constant 0 : index
    %19 = vector.load %arg3[%c0_13, %c0_14] : memref<48x48xf32, #tpu.memory_space<vmem>>, vector<48x48xf32>
    %20 = arith.truncf %19 : vector<48x48xf32> to vector<48x48xbf16>
    %c0_15 = arith.constant 0 : index
    %c0_16 = arith.constant 0 : index
    %21 = vector.load %arg8[%c0_15, %c0_16] : memref<192x64xf32, #tpu.memory_space<vmem>>, vector<192x64xf32>
    %22 = arith.truncf %21 : vector<192x64xf32> to vector<192x64xbf16>
    %23 = vector.extract_strided_slice %22 {offsets = [0, 0], sizes = [64, 64], strides = [1, 1]} : vector<192x64xbf16> to vector<64x64xbf16>
    %24 = vector.extract_strided_slice %22 {offsets = [64, 0], sizes = [64, 64], strides = [1, 1]} : vector<192x64xbf16> to vector<64x64xbf16>
    %25 = vector.extract_strided_slice %22 {offsets = [128, 0], sizes = [64, 64], strides = [1, 1]} : vector<192x64xbf16> to vector<64x64xbf16>
    %c0_17 = arith.constant 0 : index
    %c0_18 = arith.constant 0 : index
    %26 = vector.load %arg10[%c0_17, %c0_18] : memref<64x192xf32, #tpu.memory_space<vmem>>, vector<64x192xf32>
    %27 = arith.truncf %26 : vector<64x192xf32> to vector<64x192xbf16>
    %c0_19 = arith.constant 0 : index
    %c0_20 = arith.constant 0 : index
    %28 = vector.load %arg12[%c0_19, %c0_20] : memref<64x192xf32, #tpu.memory_space<vmem>>, vector<64x192xf32>
    %29 = arith.truncf %28 : vector<64x192xf32> to vector<64x192xbf16>
    %c0_21 = arith.constant 0 : index
    %c0_22 = arith.constant 0 : index
    %30 = vector.load %arg9[%c0_21, %c0_22] : memref<1x64xf32, #tpu.memory_space<vmem>>, vector<1x64xf32>
    %31 = vector.shape_cast %30 : vector<1x64xf32> to vector<1x64xf32>
    %32 = vector.broadcast %31 : vector<1x64xf32> to vector<48x64xf32>
    %c0_23 = arith.constant 0 : index
    %c0_24 = arith.constant 0 : index
    %33 = vector.load %arg11[%c0_23, %c0_24] : memref<1x192xf32, #tpu.memory_space<vmem>>, vector<1x192xf32>
    %34 = vector.shape_cast %33 : vector<1x192xf32> to vector<1x192xf32>
    %35 = vector.broadcast %34 : vector<1x192xf32> to vector<48x192xf32>
    %c0_25 = arith.constant 0 : index
    %c0_26 = arith.constant 0 : index
    %36 = vector.load %arg13[%c0_25, %c0_26] : memref<1x192xf32, #tpu.memory_space<vmem>>, vector<1x192xf32>
    %37 = vector.shape_cast %36 : vector<1x192xf32> to vector<1x192xf32>
    %38 = vector.broadcast %37 : vector<1x192xf32> to vector<48x192xf32>
    %c0_i32 = arith.constant 0 : i32
    %39 = arith.truncf %16 : vector<48x64xf32> to vector<48x64xbf16>
    %cst_27 = arith.constant dense<0.000000e+00> : vector<48x64xf32>
    %40 = tpu.matmul %18, %39, %cst_27 {dimension_numbers = #tpu.dot_dimension_numbers<[1], [0], [0], [1], [0, 0, 1, 1], [], []>} : vector<48x48xbf16>, vector<48x64xbf16>, vector<48x64xf32> -> vector<48x64xf32>
    %cst_28 = arith.constant dense<0.000000e+00> : vector<48x64xf32>
    %41 = tpu.matmul %20, %39, %cst_28 {dimension_numbers = #tpu.dot_dimension_numbers<[1], [0], [0], [1], [0, 0, 1, 1], [], []>} : vector<48x48xbf16>, vector<48x64xbf16>, vector<48x64xf32> -> vector<48x64xf32>
    %42 = arith.truncf %40 : vector<48x64xf32> to vector<48x64xbf16>
    %cst_29 = arith.constant dense<0.000000e+00> : vector<48x64xf32>
    %43 = tpu.matmul %42, %23, %cst_29 {dimension_numbers = #tpu.dot_dimension_numbers<[1], [0], [0], [1], [0, 0, 1, 1], [], []>} : vector<48x64xbf16>, vector<64x64xbf16>, vector<48x64xf32> -> vector<48x64xf32>
    %44 = arith.truncf %41 : vector<48x64xf32> to vector<48x64xbf16>
    %cst_30 = arith.constant dense<0.000000e+00> : vector<48x64xf32>
    %45 = tpu.matmul %44, %24, %cst_30 {dimension_numbers = #tpu.dot_dimension_numbers<[1], [0], [0], [1], [0, 0, 1, 1], [], []>} : vector<48x64xbf16>, vector<64x64xbf16>, vector<48x64xf32> -> vector<48x64xf32>
    %46 = arith.addf %43, %45 : vector<48x64xf32>
    %cst_31 = arith.constant dense<0.000000e+00> : vector<48x64xf32>
    %47 = tpu.matmul %39, %25, %cst_31 {dimension_numbers = #tpu.dot_dimension_numbers<[1], [0], [0], [1], [0, 0, 1, 1], [], []>} : vector<48x64xbf16>, vector<64x64xbf16>, vector<48x64xf32> -> vector<48x64xf32>
    %48 = arith.addf %46, %47 : vector<48x64xf32>
    %49 = arith.addf %48, %32 : vector<48x64xf32>
    %cst_32 = arith.constant 0.000000e+00 : f32
    %50 = vector.broadcast %cst_32 : f32 to vector<48x64xf32>
    %51 = arith.maximumf %49, %50 : vector<48x64xf32>
    %52 = arith.truncf %51 : vector<48x64xf32> to vector<48x64xbf16>
    %cst_33 = arith.constant dense<0.000000e+00> : vector<48x192xf32>
    %53 = tpu.matmul %52, %27, %cst_33 {dimension_numbers = #tpu.dot_dimension_numbers<[1], [0], [0], [1], [0, 0, 1, 1], [], []>} : vector<48x64xbf16>, vector<64x192xbf16>, vector<48x192xf32> -> vector<48x192xf32>
    %54 = arith.addf %53, %35 : vector<48x192xf32>
    %cst_34 = arith.constant dense<0.000000e+00> : vector<48x192xf32>
    %55 = tpu.matmul %39, %29, %cst_34 {dimension_numbers = #tpu.dot_dimension_numbers<[1], [0], [0], [1], [0, 0, 1, 1], [], []>} : vector<48x64xbf16>, vector<64x192xbf16>, vector<48x192xf32> -> vector<48x192xf32>
    %56 = arith.addf %55, %38 : vector<48x192xf32>
    %57 = vector.extract_strided_slice %54 {offsets = [0, 0], sizes = [48, 64], strides = [1, 1]} : vector<48x192xf32> to vector<48x64xf32>
    %58 = vector.extract_strided_slice %56 {offsets = [0, 0], sizes = [48, 64], strides = [1, 1]} : vector<48x192xf32> to vector<48x64xf32>
    %59 = arith.addf %57, %58 : vector<48x64xf32>
    %60 = arith.negf %59 : vector<48x64xf32>
    %61 = math.exp %60 : vector<48x64xf32>
    %cst_35 = arith.constant 1.000000e+00 : f32
    %62 = vector.broadcast %cst_35 : f32 to vector<48x64xf32>
    %63 = arith.addf %62, %61 : vector<48x64xf32>
    %64 = arith.divf %62, %63 : vector<48x64xf32>
    %65 = vector.extract_strided_slice %54 {offsets = [0, 64], sizes = [48, 64], strides = [1, 1]} : vector<48x192xf32> to vector<48x64xf32>
    %66 = vector.extract_strided_slice %56 {offsets = [0, 64], sizes = [48, 64], strides = [1, 1]} : vector<48x192xf32> to vector<48x64xf32>
    %67 = arith.addf %65, %66 : vector<48x64xf32>
    %68 = arith.negf %67 : vector<48x64xf32>
    %69 = math.exp %68 : vector<48x64xf32>
    %cst_36 = arith.constant 1.000000e+00 : f32
    %70 = vector.broadcast %cst_36 : f32 to vector<48x64xf32>
    %71 = arith.addf %70, %69 : vector<48x64xf32>
    %72 = arith.divf %70, %71 : vector<48x64xf32>
    %73 = vector.extract_strided_slice %54 {offsets = [0, 128], sizes = [48, 64], strides = [1, 1]} : vector<48x192xf32> to vector<48x64xf32>
    %74 = vector.extract_strided_slice %56 {offsets = [0, 128], sizes = [48, 64], strides = [1, 1]} : vector<48x192xf32> to vector<48x64xf32>
    %75 = arith.mulf %64, %74 : vector<48x64xf32>
    %76 = arith.addf %73, %75 : vector<48x64xf32>
    %77 = math.tanh %76 : vector<48x64xf32>
    %cst_37 = arith.constant 1.000000e+00 : f32
    %78 = vector.broadcast %cst_37 : f32 to vector<48x64xf32>
    %79 = arith.subf %78, %72 : vector<48x64xf32>
    %80 = arith.mulf %79, %77 : vector<48x64xf32>
    %81 = arith.mulf %72, %16 : vector<48x64xf32>
    %82 = arith.addf %80, %81 : vector<48x64xf32>
    %c1_i32 = arith.constant 1 : i32
    %83 = arith.truncf %82 : vector<48x64xf32> to vector<48x64xbf16>
    %cst_38 = arith.constant dense<0.000000e+00> : vector<48x64xf32>
    %84 = tpu.matmul %18, %83, %cst_38 {dimension_numbers = #tpu.dot_dimension_numbers<[1], [0], [0], [1], [0, 0, 1, 1], [], []>} : vector<48x48xbf16>, vector<48x64xbf16>, vector<48x64xf32> -> vector<48x64xf32>
    %cst_39 = arith.constant dense<0.000000e+00> : vector<48x64xf32>
    %85 = tpu.matmul %20, %83, %cst_39 {dimension_numbers = #tpu.dot_dimension_numbers<[1], [0], [0], [1], [0, 0, 1, 1], [], []>} : vector<48x48xbf16>, vector<48x64xbf16>, vector<48x64xf32> -> vector<48x64xf32>
    %86 = arith.truncf %84 : vector<48x64xf32> to vector<48x64xbf16>
    %cst_40 = arith.constant dense<0.000000e+00> : vector<48x64xf32>
    %87 = tpu.matmul %86, %23, %cst_40 {dimension_numbers = #tpu.dot_dimension_numbers<[1], [0], [0], [1], [0, 0, 1, 1], [], []>} : vector<48x64xbf16>, vector<64x64xbf16>, vector<48x64xf32> -> vector<48x64xf32>
    %88 = arith.truncf %85 : vector<48x64xf32> to vector<48x64xbf16>
    %cst_41 = arith.constant dense<0.000000e+00> : vector<48x64xf32>
    %89 = tpu.matmul %88, %24, %cst_41 {dimension_numbers = #tpu.dot_dimension_numbers<[1], [0], [0], [1], [0, 0, 1, 1], [], []>} : vector<48x64xbf16>, vector<64x64xbf16>, vector<48x64xf32> -> vector<48x64xf32>
    %90 = arith.addf %87, %89 : vector<48x64xf32>
    %cst_42 = arith.constant dense<0.000000e+00> : vector<48x64xf32>
    %91 = tpu.matmul %83, %25, %cst_42 {dimension_numbers = #tpu.dot_dimension_numbers<[1], [0], [0], [1], [0, 0, 1, 1], [], []>} : vector<48x64xbf16>, vector<64x64xbf16>, vector<48x64xf32> -> vector<48x64xf32>
    %92 = arith.addf %90, %91 : vector<48x64xf32>
    %93 = arith.addf %92, %32 : vector<48x64xf32>
    %cst_43 = arith.constant 0.000000e+00 : f32
    %94 = vector.broadcast %cst_43 : f32 to vector<48x64xf32>
    %95 = arith.maximumf %93, %94 : vector<48x64xf32>
    %96 = arith.truncf %95 : vector<48x64xf32> to vector<48x64xbf16>
    %cst_44 = arith.constant dense<0.000000e+00> : vector<48x192xf32>
    %97 = tpu.matmul %96, %27, %cst_44 {dimension_numbers = #tpu.dot_dimension_numbers<[1], [0], [0], [1], [0, 0, 1, 1], [], []>} : vector<48x64xbf16>, vector<64x192xbf16>, vector<48x192xf32> -> vector<48x192xf32>
    %98 = arith.addf %97, %35 : vector<48x192xf32>
    %cst_45 = arith.constant dense<0.000000e+00> : vector<48x192xf32>
    %99 = tpu.matmul %83, %29, %cst_45 {dimension_numbers = #tpu.dot_dimension_numbers<[1], [0], [0], [1], [0, 0, 1, 1], [], []>} : vector<48x64xbf16>, vector<64x192xbf16>, vector<48x192xf32> -> vector<48x192xf32>
    %100 = arith.addf %99, %38 : vector<48x192xf32>
    %101 = vector.extract_strided_slice %98 {offsets = [0, 0], sizes = [48, 64], strides = [1, 1]} : vector<48x192xf32> to vector<48x64xf32>
    %102 = vector.extract_strided_slice %100 {offsets = [0, 0], sizes = [48, 64], strides = [1, 1]} : vector<48x192xf32> to vector<48x64xf32>
    %103 = arith.addf %101, %102 : vector<48x64xf32>
    %104 = arith.negf %103 : vector<48x64xf32>
    %105 = math.exp %104 : vector<48x64xf32>
    %cst_46 = arith.constant 1.000000e+00 : f32
    %106 = vector.broadcast %cst_46 : f32 to vector<48x64xf32>
    %107 = arith.addf %106, %105 : vector<48x64xf32>
    %108 = arith.divf %106, %107 : vector<48x64xf32>
    %109 = vector.extract_strided_slice %98 {offsets = [0, 64], sizes = [48, 64], strides = [1, 1]} : vector<48x192xf32> to vector<48x64xf32>
    %110 = vector.extract_strided_slice %100 {offsets = [0, 64], sizes = [48, 64], strides = [1, 1]} : vector<48x192xf32> to vector<48x64xf32>
    %111 = arith.addf %109, %110 : vector<48x64xf32>
    %112 = arith.negf %111 : vector<48x64xf32>
    %113 = math.exp %112 : vector<48x64xf32>
    %cst_47 = arith.constant 1.000000e+00 : f32
    %114 = vector.broadcast %cst_47 : f32 to vector<48x64xf32>
    %115 = arith.addf %114, %113 : vector<48x64xf32>
    %116 = arith.divf %114, %115 : vector<48x64xf32>
    %117 = vector.extract_strided_slice %98 {offsets = [0, 128], sizes = [48, 64], strides = [1, 1]} : vector<48x192xf32> to vector<48x64xf32>
    %118 = vector.extract_strided_slice %100 {offsets = [0, 128], sizes = [48, 64], strides = [1, 1]} : vector<48x192xf32> to vector<48x64xf32>
    %119 = arith.mulf %108, %118 : vector<48x64xf32>
    %120 = arith.addf %117, %119 : vector<48x64xf32>
    %121 = math.tanh %120 : vector<48x64xf32>
    %cst_48 = arith.constant 1.000000e+00 : f32
    %122 = vector.broadcast %cst_48 : f32 to vector<48x64xf32>
    %123 = arith.subf %122, %116 : vector<48x64xf32>
    %124 = arith.mulf %123, %121 : vector<48x64xf32>
    %125 = arith.mulf %116, %82 : vector<48x64xf32>
    %126 = arith.addf %124, %125 : vector<48x64xf32>
    %c0_49 = arith.constant 0 : index
    %c0_50 = arith.constant 0 : index
    %127 = vector.load %arg14[%c0_49, %c0_50] : memref<48x64xf32, #tpu.memory_space<vmem>>, vector<48x64xf32>
    tpu.vector_store %arg14[%c0_49, %c0_50], %126 {strides = array<i32>} : memref<48x64xf32, #tpu.memory_space<vmem>>, vector<48x64xf32>,
    return
  }
  func.func @transform_0(%arg0: i32) -> (i32, i32) {
    %c0_i32 = arith.constant 0 : i32
    %c0_i32_0 = arith.constant 0 : i32
    return %arg0, %c0_i32 : i32, i32
  }
  func.func @transform_1(%arg0: i32) -> (i32, i32) {
    %c0_i32 = arith.constant 0 : i32
    %c0_i32_0 = arith.constant 0 : i32
    %c0_i32_1 = arith.constant 0 : i32
    return %c0_i32, %c0_i32_0 : i32, i32
  }
  func.func @transform_2(%arg0: i32) -> (i32, i32) {
    %c0_i32 = arith.constant 0 : i32
    %c0_i32_0 = arith.constant 0 : i32
    %c0_i32_1 = arith.constant 0 : i32
    return %c0_i32, %c0_i32_0 : i32, i32
  }
  func.func @transform_3(%arg0: i32) -> (i32, i32) {
    %c0_i32 = arith.constant 0 : i32
    %c0_i32_0 = arith.constant 0 : i32
    %c0_i32_1 = arith.constant 0 : i32
    return %c0_i32, %c0_i32_0 : i32, i32
  }
  func.func @transform_4(%arg0: i32) -> (i32, i32) {
    %c0_i32 = arith.constant 0 : i32
    %c0_i32_0 = arith.constant 0 : i32
    %c0_i32_1 = arith.constant 0 : i32
    return %c0_i32, %c0_i32_0 : i32, i32
  }
  func.func @transform_5(%arg0: i32) -> (i32, i32) {
    %c0_i32 = arith.constant 0 : i32
    %c0_i32_0 = arith.constant 0 : i32
    %c0_i32_1 = arith.constant 0 : i32
    return %c0_i32, %c0_i32_0 : i32, i32
  }
  func.func @transform_6(%arg0: i32) -> (i32, i32) {
    %c0_i32 = arith.constant 0 : i32
    %c0_i32_0 = arith.constant 0 : i32
    %c0_i32_1 = arith.constant 0 : i32
    return %c0_i32, %c0_i32_0 : i32, i32
  }
  func.func @transform_7(%arg0: i32) -> (i32, i32) {
    %c0_i32 = arith.constant 0 : i32
    %c0_i32_0 = arith.constant 0 : i32
    %c0_i32_1 = arith.constant 0 : i32
    return %c0_i32, %c0_i32_0 : i32, i32
  }
  func.func @transform_8(%arg0: i32) -> (i32, i32) {
    %c0_i32 = arith.constant 0 : i32
    %c0_i32_0 = arith.constant 0 : i32
    %c0_i32_1 = arith.constant 0 : i32
    return %c0_i32, %c0_i32_0 : i32, i32
  }
  func.func @transform_9(%arg0: i32) -> (i32, i32) {
    %c0_i32 = arith.constant 0 : i32
    %c0_i32_0 = arith.constant 0 : i32
    %c0_i32_1 = arith.constant 0 : i32
    return %c0_i32, %c0_i32_0 : i32, i32
  }
  func.func @transform_10(%arg0: i32) -> (i32, i32) {
    %c0_i32 = arith.constant 0 : i32
    %c0_i32_0 = arith.constant 0 : i32
    %c0_i32_1 = arith.constant 0 : i32
    return %c0_i32, %c0_i32_0 : i32, i32
  }
  func.func @transform_11(%arg0: i32) -> (i32, i32) {
    %c0_i32 = arith.constant 0 : i32
    %c0_i32_0 = arith.constant 0 : i32
    %c0_i32_1 = arith.constant 0 : i32
    return %c0_i32, %c0_i32_0 : i32, i32
  }
  func.func @transform_12(%arg0: i32) -> (i32, i32) {
    %c0_i32 = arith.constant 0 : i32
    %c0_i32_0 = arith.constant 0 : i32
    %c0_i32_1 = arith.constant 0 : i32
    return %c0_i32, %c0_i32_0 : i32, i32
  }
  func.func @transform_13(%arg0: i32) -> (i32, i32) {
    %c0_i32 = arith.constant 0 : i32
    %c0_i32_0 = arith.constant 0 : i32
    return %arg0, %c0_i32 : i32, i32
  }
}

</mosaic_0001>

<llo_original>
// kernel: mul.238
$region0: #{mul.238}
  %s0 = inlined_call_operand.vmem [shape: f32[64], index: 0, kind: input, shape index: {}]
  %s1 = inlined_call_operand.vmem [shape: f32[8,8], index: 1, kind: output, shape index: {}]
  $region1: #{mul.238} parent=0
    #allocation0 [shape = 'u8[4096]{0}', space=vmem, size = 0x1000, scoped, tag = 'scoped mem for input reshape']
    %s3 = sshllo.u32 0, 1
    %v4 = vld [vmem:[%s0] sm:%s3]
    %5 = vst [vmem:[#allocation0] sm:%s3] %v4
    %v6 = vld [vmem:[#allocation0] sm:$0x1]
    %vm7 = vcmask 64512
    %8 = vst.msk [vmem:[%s1] sm:$0x1] %vm7, %v6
    %v9 = vld [vmem:[#allocation0] sm:$0x1]
    %10 = vrot.lane.b32.xlu0 %v9, 120
    %v11 = vpop.permute.xlu0 %10
    %vm12 = vcmask 64512
    %s13 = scalar_lea.vmem %s1, 1
    %14 = vst.msk [vmem:[%s13] sm:$0x1] %vm12, %v11
    %v15 = vld [vmem:[#allocation0] sm:$0x1]
    %16 = vrot.lane.b32.xlu0 %v15, 112
    %v17 = vpop.permute.xlu0 %16
    %vm18 = vcmask 64512
    %s19 = scalar_lea.vmem %s1, 2
    %20 = vst.msk [vmem:[%s19] sm:$0x1] %vm18, %v17
    %v21 = vld [vmem:[#allocation0] sm:$0x1]
    %22 = vrot.lane.b32.xlu0 %v21, 104
    %v23 = vpop.permute.xlu0 %22
    %vm24 = vcmask 64512
    %s25 = scalar_lea.vmem %s1, 3
    %26 = vst.msk [vmem:[%s25] sm:$0x1] %vm24, %v23
    %v27 = vld [vmem:[#allocation0] sm:$0x1]
    %28 = vrot.lane.b32.xlu0 %v27, 96
    %v29 = vpop.permute.xlu0 %28
    %vm30 = vcmask 64512
    %s31 = scalar_lea.vmem %s1, 4
    %32 = vst.msk [vmem:[%s31] sm:$0x1] %vm30, %v29
    %v33 = vld [vmem:[#allocation0] sm:$0x1]
    %34 = vrot.lane.b32.xlu0 %v33, 88
    %v35 = vpop.permute.xlu0 %34
    %vm36 = vcmask 64512
    %s37 = scalar_lea.vmem %s1, 5
    %38 = vst.msk [vmem:[%s37] sm:$0x1] %vm36, %v35
    %v39 = vld [vmem:[#allocation0] sm:$0x1]
    %40 = vrot.lane.b32.xlu0 %v39, 80
    %v41 = vpop.permute.xlu0 %40
    %vm42 = vcmask 64512
    %s43 = scalar_lea.vmem %s1, 6
    %44 = vst.msk [vmem:[%s43] sm:$0x1] %vm42, %v41
    %v45 = vld [vmem:[#allocation0] sm:$0x1]
    %46 = vrot.lane.b32.xlu0 %v45, 72
    %v47 = vpop.permute.xlu0 %46
    %vm48 = vcmask 64512
    %s49 = scalar_lea.vmem %s1, 7
    %50 = vst.msk [vmem:[%s49] sm:$0x1] %vm48, %v47

// kernel: unet_forward.3
$region0: #{unet_forward.3}
  #allocation0 [shape = 'u32[]', space=smem, size = 0x4, offset = 0x4, fixed_abs, tag = 'smem constant byte address 0x4 - core index']
  #allocation1 [shape = 'u32[144,128]{1,0:T(1,128)}', space=vmem, size = 0x12000, scoped, tag = 'internal scratch']
  %s0 = inlined_call_operand.vmem [shape: f32[96,32], index: 0, kind: input, shape index: {}]
  %s1 = inlined_call_operand.vmem [shape: f32[48,48], index: 1, kind: input, shape index: {}]
  %s2 = inlined_call_operand.vmem [shape: f32[48,48], index: 2, kind: input, shape index: {}]
  %s3 = inlined_call_operand.vmem [shape: f32[32,64], index: 3, kind: input, shape index: {}]
  %s4 = inlined_call_operand.vmem [shape: f32[1,64], index: 4, kind: input, shape index: {}]
  %s5 = inlined_call_operand.vmem [shape: f32[64,64], index: 5, kind: input, shape index: {}]
  %s6 = inlined_call_operand.vmem [shape: f32[1,64], index: 6, kind: input, shape index: {}]
  %s7 = inlined_call_operand.vmem [shape: f32[192,64], index: 7, kind: input, shape index: {}]
  %s8 = inlined_call_operand.vmem [shape: f32[1,64], index: 8, kind: input, shape index: {}]
  %s9 = inlined_call_operand.vmem [shape: f32[64,192], index: 9, kind: input, shape index: {}]
  %s10 = inlined_call_operand.vmem [shape: f32[1,192], index: 10, kind: input, shape index: {}]
  %s11 = inlined_call_operand.vmem [shape: f32[64,192], index: 11, kind: input, shape index: {}]
  %s12 = inlined_call_operand.vmem [shape: f32[1,192], index: 12, kind: input, shape index: {}]
  %s13 = inlined_call_operand.vmem [shape: f32[96,64], index: 13, kind: output, shape index: {}]
  %s14 = sld [smem:[#allocation0]]
  $region85: #{unet_forward.3} parent=0
    _
  %s16 = ssub.s32 1, %s14
  %s17 = scalar_select 0, %s16, %s14
  loop: start=0, step=1, limit=4
  $region2: #{unet_forward.3} parent=0 // loop_pre_header
    _
  $region3: #{unet_forward.3} parent=0 // loop_header
    %s19 = sphi 0, %s23
    %p20 = scmp.ge.s32.totalorder %s19, 4
    %s29 = sphi 0, %s31
    %s32 = sphi 0, %s29
    %s33 = sphi 0, %s32
    %s49 = sphi 0, %s33
    %s53 = sphi 0, %s53
    %s55 = sphi 0, %s53
    %s56 = sphi 0, %s55
    %s70 = sphi 0, %s56
    %s74 = sphi 0, %s74
    %s76 = sphi 0, %s74
    %s77 = sphi 0, %s76
    %s91 = sphi 0, %s77
    %s95 = sphi 0, %s95
    %s97 = sphi 0, %s95
    %s98 = sphi 0, %s97
    %s112 = sphi 0, %s98
    %s116 = sphi 0, %s116
    %s118 = sphi 0, %s116
    %s119 = sphi 0, %s118
    %s133 = sphi 0, %s119
    %s137 = sphi 0, %s137
    %s139 = sphi 0, %s137
    %s140 = sphi 0, %s139
    %s154 = sphi 0, %s140
    %s158 = sphi 0, %s158
    %s160 = sphi 0, %s158
    %s161 = sphi 0, %s160
    %s175 = sphi 0, %s161
    %s179 = sphi 0, %s179
    %s181 = sphi 0, %s179
    %s182 = sphi 0, %s181
    %s196 = sphi 0, %s182
    %s200 = sphi 0, %s200
    %s202 = sphi 0, %s200
    %s203 = sphi 0, %s202
    %s217 = sphi 0, %s203
    %s221 = sphi 0, %s221
    %s223 = sphi 0, %s221
    %s224 = sphi 0, %s223
    %s238 = sphi 0, %s224
    %s242 = sphi 0, %s242
    %s244 = sphi 0, %s242
    %s245 = sphi 0, %s244
    %s259 = sphi 0, %s245
    %s263 = sphi 0, %s263
    %s265 = sphi 0, %s263
    %s266 = sphi 0, %s265
    %s280 = sphi 0, %s266
    %s284 = sphi 0, %s284
    %s286 = sphi 0, %s284
    %s287 = sphi 0, %s286
    %s301 = sphi 0, %s287
    %s307 = sphi 0, %s309
    %s310 = sphi 0, %s307
    %s311 = sphi 0, %s310
    %s327 = sphi 0, %s311
  $region4: #{unet_forward.3} parent=0 // loop_header_branch
    %22 = sbr.rel (%p20) target = $region8
  $region5: #{unet_forward.3} parent=0 // loop_body
    %s24 = ssub.s32 %s19, 1
    %s25 = ssub.s32 %s19, 2
    %s26 = sadd.s32 %s19, 1
    %s27 = ssub.s32 %s19, %s26
    %p28 = scmp.eq.s32.totalorder %s27, 0
    %s30 = sadd.s32 %s29, 1
    %s31 = scalar_select %p28, %s29, %s30
    %p34 = pneg %p28
    %p35 = scmp.eq.s32.totalorder %s19, 1
    %p36 = por %p34, %p35
    %p37 = scmp.ne.s32.totalorder %s29, %s32
    %p38 = scmp.eq.s32.totalorder %s19, 0
    %p39 = por %p37, %p38
    %p40 = scmp.ne.s32.totalorder %s29, %s32
    %p41 = scmp.eq.s32.totalorder %s24, 1
    %p42 = por %p40, %p41
    %p43 = scmp.ne.s32.totalorder %s32, %s33
    %p44 = scmp.eq.s32.totalorder %s24, 0
    %p45 = por %p43, %p44
    %p46 = scmp.ne.s32.totalorder %s32, %s33
    %p47 = scmp.eq.s32.totalorder %s25, 1
    %p48 = por %p46, %p47
    %p50 = scmp.ne.s32.totalorder %s33, %s49
    %p51 = scmp.eq.s32.totalorder %s25, 0
    %p52 = por %p50, %p51
    %s54 = sadd.s32 %s53, 1
    %p57 = scmp.eq.s32.totalorder %s19, 1
    %p58 = scmp.ne.s32.totalorder %s53, %s55
    %p59 = scmp.eq.s32.totalorder %s19, 0
    %p60 = por %p58, %p59
    %p61 = scmp.ne.s32.totalorder %s53, %s55
    %p62 = scmp.eq.s32.totalorder %s24, 1
    %p63 = por %p61, %p62
    %p64 = scmp.ne.s32.totalorder %s55, %s56
    %p65 = scmp.eq.s32.totalorder %s24, 0
    %p66 = por %p64, %p65
    %p67 = scmp.ne.s32.totalorder %s55, %s56
    %p68 = scmp.eq.s32.totalorder %s25, 1
    %p69 = por %p67, %p68
    %p71 = scmp.ne.s32.totalorder %s56, %s70
    %p72 = scmp.eq.s32.totalorder %s25, 0
    %p73 = por %p71, %p72
    %s75 = sadd.s32 %s74, 1
    %p78 = scmp.eq.s32.totalorder %s19, 1
    %p79 = scmp.ne.s32.totalorder %s74, %s76
    %p80 = scmp.eq.s32.totalorder %s19, 0
    %p81 = por %p79, %p80
    %p82 = scmp.ne.s32.totalorder %s74, %s76
    %p83 = scmp.eq.s32.totalorder %s24, 1
    %p84 = por %p82, %p83
    %p85 = scmp.ne.s32.totalorder %s76, %s77
    %p86 = scmp.eq.s32.totalorder %s24, 0
    %p87 = por %p85, %p86
    %p88 = scmp.ne.s32.totalorder %s76, %s77
    %p89 = scmp.eq.s32.totalorder %s25, 1
    %p90 = por %p88, %p89
    %p92 = scmp.ne.s32.totalorder %s77, %s91
    %p93 = scmp.eq.s32.totalorder %s25, 0
    %p94 = por %p92, %p93
    %s96 = sadd.s32 %s95, 1
    %p99 = scmp.eq.s32.totalorder %s19, 1
    %p100 = scmp.ne.s32.totalorder %s95, %s97
    %p101 = scmp.eq.s32.totalorder %s19, 0
    %p102 = por %p100, %p101
    %p103 = scmp.ne.s32.totalorder %s95, %s97
    %p104 = scmp.eq.s32.totalorder %s24, 1
    %p105 = por %p103, %p104
    %p106 = scmp.ne.s32.totalorder %s97, %s98
    %p107 = scmp.eq.s32.totalorder %s24, 0
    %p108 = por %p106, %p107
    %p109 = scmp.ne.s32.totalorder %s97, %s98
    %p110 = scmp.eq.s32.totalorder %s25, 1
    %p111 = por %p109, %p110
    %p113 = scmp.ne.s32.totalorder %s98, %s112
    %p114 = scmp.eq.s32.totalorder %s25, 0
    %p115 = por %p113, %p114
    %s117 = sadd.s32 %s116, 1
    %p120 = scmp.eq.s32.totalorder %s19, 1
    %p121 = scmp.ne.s32.totalorder %s116, %s118
    %p122 = scmp.eq.s32.totalorder %s19, 0
    %p123 = por %p121, %p122
    %p124 = scmp.ne.s32.totalorder %s116, %s118
    %p125 = scmp.eq.s32.totalorder %s24, 1
    %p126 = por %p124, %p125
    %p127 = scmp.ne.s32.totalorder %s118, %s119
    %p128 = scmp.eq.s32.totalorder %s24, 0
    %p129 = por %p127, %p128
    %p130 = scmp.ne.s32.totalorder %s118, %s119
    %p131 = scmp.eq.s32.totalorder %s25, 1
    %p132 = por %p130, %p131
    %p134 = scmp.ne.s32.totalorder %s119, %s133
    %p135 = scmp.eq.s32.totalorder %s25, 0
    %p136 = por %p134, %p135
    %s138 = sadd.s32 %s137, 1
    %p141 = scmp.eq.s32.totalorder %s19, 1
    %p142 = scmp.ne.s32.totalorder %s137, %s139
    %p143 = scmp.eq.s32.totalorder %s19, 0
    %p144 = por %p142, %p143
    %p145 = scmp.ne.s32.totalorder %s137, %s139
    %p146 = scmp.eq.s32.totalorder %s24, 1
    %p147 = por %p145, %p146
    %p148 = scmp.ne.s32.totalorder %s139, %s140
    %p149 = scmp.eq.s32.totalorder %s24, 0
    %p150 = por %p148, %p149
    %p151 = scmp.ne.s32.totalorder %s139, %s140
    %p152 = scmp.eq.s32.totalorder %s25, 1
    %p153 = por %p151, %p152
    %p155 = scmp.ne.s32.totalorder %s140, %s154
    %p156 = scmp.eq.s32.totalorder %s25, 0
    %p157 = por %p155, %p156
    %s159 = sadd.s32 %s158, 1
    %p162 = scmp.eq.s32.totalorder %s19, 1
    %p163 = scmp.ne.s32.totalorder %s158, %s160
    %p164 = scmp.eq.s32.totalorder %s19, 0
    %p165 = por %p163, %p164
    %p166 = scmp.ne.s32.totalorder %s158, %s160
    %p167 = scmp.eq.s32.totalorder %s24, 1
    %p168 = por %p166, %p167
    %p169 = scmp.ne.s32.totalorder %s160, %s161
    %p170 = scmp.eq.s32.totalorder %s24, 0
    %p171 = por %p169, %p170
    %p172 = scmp.ne.s32.totalorder %s160, %s161
    %p173 = scmp.eq.s32.totalorder %s25, 1
    %p174 = por %p172, %p173
    %p176 = scmp.ne.s32.totalorder %s161, %s175
    %p177 = scmp.eq.s32.totalorder %s25, 0
    %p178 = por %p176, %p177
    %s180 = sadd.s32 %s179, 1
    %p183 = scmp.eq.s32.totalorder %s19, 1
    %p184 = scmp.ne.s32.totalorder %s179, %s181
    %p185 = scmp.eq.s32.totalorder %s19, 0
    %p186 = por %p184, %p185
    %p187 = scmp.ne.s32.totalorder %s179, %s181
    %p188 = scmp.eq.s32.totalorder %s24, 1
    %p189 = por %p187, %p188
    %p190 = scmp.ne.s32.totalorder %s181, %s182
    %p191 = scmp.eq.s32.totalorder %s24, 0
    %p192 = por %p190, %p191
    %p193 = scmp.ne.s32.totalorder %s181, %s182
    %p194 = scmp.eq.s32.totalorder %s25, 1
    %p195 = por %p193, %p194
    %p197 = scmp.ne.s32.totalorder %s182, %s196
    %p198 = scmp.eq.s32.totalorder %s25, 0
    %p199 = por %p197, %p198
    %s201 = sadd.s32 %s200, 1
    %p204 = scmp.eq.s32.totalorder %s19, 1
    %p205 = scmp.ne.s32.totalorder %s200, %s202
    %p206 = scmp.eq.s32.totalorder %s19, 0
    %p207 = por %p205, %p206
    %p208 = scmp.ne.s32.totalorder %s200, %s202
    %p209 = scmp.eq.s32.totalorder %s24, 1
    %p210 = por %p208, %p209
    %p211 = scmp.ne.s32.totalorder %s202, %s203
    %p212 = scmp.eq.s32.totalorder %s24, 0
    %p213 = por %p211, %p212
    %p214 = scmp.ne.s32.totalorder %s202, %s203
    %p215 = scmp.eq.s32.totalorder %s25, 1
    %p216 = por %p214, %p215
    %p218 = scmp.ne.s32.totalorder %s203, %s217
    %p219 = scmp.eq.s32.totalorder %s25, 0
    %p220 = por %p218, %p219
    %s222 = sadd.s32 %s221, 1
    %p225 = scmp.eq.s32.totalorder %s19, 1
    %p226 = scmp.ne.s32.totalorder %s221, %s223
    %p227 = scmp.eq.s32.totalorder %s19, 0
    %p228 = por %p226, %p227
    %p229 = scmp.ne.s32.totalorder %s221, %s223
    %p230 = scmp.eq.s32.totalorder %s24, 1
    %p231 = por %p229, %p230
    %p232 = scmp.ne.s32.totalorder %s223, %s224
    %p233 = scmp.eq.s32.totalorder %s24, 0
    %p234 = por %p232, %p233
    %p235 = scmp.ne.s32.totalorder %s223, %s224
    %p236 = scmp.eq.s32.totalorder %s25, 1
    %p237 = por %p235, %p236
    %p239 = scmp.ne.s32.totalorder %s224, %s238
    %p240 = scmp.eq.s32.totalorder %s25, 0
    %p241 = por %p239, %p240
    %s243 = sadd.s32 %s242, 1
    %p246 = scmp.eq.s32.totalorder %s19, 1
    %p247 = scmp.ne.s32.totalorder %s242, %s244
    %p248 = scmp.eq.s32.totalorder %s19, 0
    %p249 = por %p247, %p248
    %p250 = scmp.ne.s32.totalorder %s242, %s244
    %p251 = scmp.eq.s32.totalorder %s24, 1
    %p252 = por %p250, %p251
    %p253 = scmp.ne.s32.totalorder %s244, %s245
    %p254 = scmp.eq.s32.totalorder %s24, 0
    %p255 = por %p253, %p254
    %p256 = scmp.ne.s32.totalorder %s244, %s245
    %p257 = scmp.eq.s32.totalorder %s25, 1
    %p258 = por %p256, %p257
    %p260 = scmp.ne.s32.totalorder %s245, %s259
    %p261 = scmp.eq.s32.totalorder %s25, 0
    %p262 = por %p260, %p261
    %s264 = sadd.s32 %s263, 1
    %p267 = scmp.eq.s32.totalorder %s19, 1
    %p268 = scmp.ne.s32.totalorder %s263, %s265
    %p269 = scmp.eq.s32.totalorder %s19, 0
    %p270 = por %p268, %p269
    %p271 = scmp.ne.s32.totalorder %s263, %s265
    %p272 = scmp.eq.s32.totalorder %s24, 1
    %p273 = por %p271, %p272
    %p274 = scmp.ne.s32.totalorder %s265, %s266
    %p275 = scmp.eq.s32.totalorder %s24, 0
    %p276 = por %p274, %p275
    %p277 = scmp.ne.s32.totalorder %s265, %s266
    %p278 = scmp.eq.s32.totalorder %s25, 1
    %p279 = por %p277, %p278
    %p281 = scmp.ne.s32.totalorder %s266, %s280
    %p282 = scmp.eq.s32.totalorder %s25, 0
    %p283 = por %p281, %p282
    %s285 = sadd.s32 %s284, 1
    %p288 = scmp.eq.s32.totalorder %s19, 1
    %p289 = scmp.ne.s32.totalorder %s284, %s286
    %p290 = scmp.eq.s32.totalorder %s19, 0
    %p291 = por %p289, %p290
    %p292 = scmp.ne.s32.totalorder %s284, %s286
    %p293 = scmp.eq.s32.totalorder %s24, 1
    %p294 = por %p292, %p293
    %p295 = scmp.ne.s32.totalorder %s286, %s287
    %p296 = scmp.eq.s32.totalorder %s24, 0
    %p297 = por %p295, %p296
    %p298 = scmp.ne.s32.totalorder %s286, %s287
    %p299 = scmp.eq.s32.totalorder %s25, 1
    %p300 = por %p298, %p299
    %p302 = scmp.ne.s32.totalorder %s287, %s301
    %p303 = scmp.eq.s32.totalorder %s25, 0
    %p304 = por %p302, %p303
    %s305 = ssub.s32 %s19, %s26
    %p306 = scmp.eq.s32.totalorder %s305, 0
    %s308 = sadd.s32 %s307, 1
    %s309 = scalar_select %p306, %s307, %s308
    %p312 = pneg %p306
    %p313 = scmp.eq.s32.totalorder %s19, 1
    %p314 = por %p312, %p313
    %p315 = scmp.ne.s32.totalorder %s307, %s310
    %p316 = scmp.eq.s32.totalorder %s19, 0
    %p317 = por %p315, %p316
    %p318 = scmp.ne.s32.totalorder %s307, %s310
    %p319 = scmp.eq.s32.totalorder %s24, 1
    %p320 = por %p318, %p319
    %p321 = scmp.ne.s32.totalorder %s310, %s311
    %p322 = scmp.eq.s32.totalorder %s24, 0
    %p323 = por %p321, %p322
    %p324 = scmp.ne.s32.totalorder %s310, %s311
    %p325 = scmp.eq.s32.totalorder %s25, 1
    %p326 = por %p324, %p325
    %p328 = scmp.ne.s32.totalorder %s311, %s327
    %p329 = scmp.eq.s32.totalorder %s25, 0
    %p330 = por %p328, %p329
    %p331 = scmp.le.s32.totalorder 1, %s19
    %p332 = scmp.lt.s32.totalorder %s19, 3
    %p333 = pnand %p331, %p332
    %p334 = pneg %p333
    // Predicated region
    $region9: #{unet_forward.3} parent=5 // pred_check
      _
    $region10: #{unet_forward.3} parent=5 // pred_check_branch
      %336 = sbr.rel (%p333) target = $region12
    $region11: #{unet_forward.3} parent=5 // pred_region
      %s337 = ssub.s32 %s19, 1
      // Predicated region
      $region13: #{unet_forward.3} parent=11 // pred_check
        %p338 = pneg %p66
      $region14: #{unet_forward.3} parent=11 // pred_check_branch
        %340 = sbr.rel (%p338) target = $region16
      $region15: #{unet_forward.3} parent=11 // pred_region
        _
      $region16: #{unet_forward.3} parent=11 // pred_fallthru
        _
      // Predicated region
      $region17: #{unet_forward.3} parent=11 // pred_check
        %p341 = pneg %p87
      $region18: #{unet_forward.3} parent=11 // pred_check_branch
        %343 = sbr.rel (%p341) target = $region20
      $region19: #{unet_forward.3} parent=11 // pred_region
        _
      $region20: #{unet_forward.3} parent=11 // pred_fallthru
        _
      // Predicated region
      $region21: #{unet_forward.3} parent=11 // pred_check
        %p344 = pneg %p108
      $region22: #{unet_forward.3} parent=11 // pred_check_branch
        %346 = sbr.rel (%p344) target = $region24
      $region23: #{unet_forward.3} parent=11 // pred_region
        _
      $region24: #{unet_forward.3} parent=11 // pred_fallthru
        _
      // Predicated region
      $region25: #{unet_forward.3} parent=11 // pred_check
        %p347 = pneg %p129
      $region26: #{unet_forward.3} parent=11 // pred_check_branch
        %349 = sbr.rel (%p347) target = $region28
      $region27: #{unet_forward.3} parent=11 // pred_region
        _
      $region28: #{unet_forward.3} parent=11 // pred_fallthru
        _
      // Predicated region
      $region29: #{unet_forward.3} parent=11 // pred_check
        %p350 = pneg %p150
      $region30: #{unet_forward.3} parent=11 // pred_check_branch
        %352 = sbr.rel (%p350) target = $region32
      $region31: #{unet_forward.3} parent=11 // pred_region
        _
      $region32: #{unet_forward.3} parent=11 // pred_fallthru
        _
      // Predicated region
      $region33: #{unet_forward.3} parent=11 // pred_check
        %p353 = pneg %p171
      $region34: #{unet_forward.3} parent=11 // pred_check_branch
        %355 = sbr.rel (%p353) target = $region36
      $region35: #{unet_forward.3} parent=11 // pred_region
        _
      $region36: #{unet_forward.3} parent=11 // pred_fallthru
        _
      // Predicated region
      $region37: #{unet_forward.3} parent=11 // pred_check
        %p356 = pneg %p192
      $region38: #{unet_forward.3} parent=11 // pred_check_branch
        %358 = sbr.rel (%p356) target = $region40
      $region39: #{unet_forward.3} parent=11 // pred_region
        _
      $region40: #{unet_forward.3} parent=11 // pred_fallthru
        _
      // Predicated region
      $region41: #{unet_forward.3} parent=11 // pred_check
        %p359 = pneg %p213
      $region42: #{unet_forward.3} parent=11 // pred_check_branch
        %361 = sbr.rel (%p359) target = $region44
      $region43: #{unet_forward.3} parent=11 // pred_region
        _
      $region44: #{unet_forward.3} parent=11 // pred_fallthru
        _
      // Predicated region
      $region45: #{unet_forward.3} parent=11 // pred_check
        %p362 = pneg %p234
      $region46: #{unet_forward.3} parent=11 // pred_check_branch
        %364 = sbr.rel (%p362) target = $region48
      $region47: #{unet_forward.3} parent=11 // pred_region
        _
      $region48: #{unet_forward.3} parent=11 // pred_fallthru
        _
      // Predicated region
      $region49: #{unet_forward.3} parent=11 // pred_check
        %p365 = pneg %p255
      $region50: #{unet_forward.3} parent=11 // pred_check_branch
        %367 = sbr.rel (%p365) target = $region52
      $region51: #{unet_forward.3} parent=11 // pred_region
        _
      $region52: #{unet_forward.3} parent=11 // pred_fallthru
        _
      // Predicated region
      $region53: #{unet_forward.3} parent=11 // pred_check
        %p368 = pneg %p276
      $region54: #{unet_forward.3} parent=11 // pred_check_branch
        %370 = sbr.rel (%p368) target = $region56
      $region55: #{unet_forward.3} parent=11 // pred_region
        _
      $region56: #{unet_forward.3} parent=11 // pred_fallthru
        _
      // Predicated region
      $region57: #{unet_forward.3} parent=11 // pred_check
        %p371 = pneg %p297
      $region58: #{unet_forward.3} parent=11 // pred_check_branch
        %373 = sbr.rel (%p371) target = $region60
      $region59: #{unet_forward.3} parent=11 // pred_region
        _
      $region60: #{unet_forward.3} parent=11 // pred_fallthru
        _
    $region12: #{unet_forward.3} parent=5 // pred_fallthru
      _
    %p374 = scmp.lt.s32.totalorder %s19, 2
    // Predicated region
    $region61: #{unet_forward.3} parent=5 // pred_check
      %p375 = pneg %p374
    $region62: #{unet_forward.3} parent=5 // pred_check_branch
      %377 = sbr.rel (%p375) target = $region64
    $region63: #{unet_forward.3} parent=5 // pred_region
      // Predicated region
      $region65: #{unet_forward.3} parent=63 // pred_check
        %p378 = pneg %p39
      $region66: #{unet_forward.3} parent=63 // pred_check_branch
        %380 = sbr.rel (%p378) target = $region68
      $region67: #{unet_forward.3} parent=63 // pred_region
        %s381 = smul.u32 6, %s19
        %p382 = scmp.lt.s32.totalorder %s381, 11
        %s383 = scalar_select %p382, %s381, 11
        %s384 = smul.addr %s383, 8
        %s385 = scalar_lea.vmem %s0, %s384
        %s386 = smul.u32 6, %s19
      $region68: #{unet_forward.3} parent=63 // pred_fallthru
        _
    $region64: #{unet_forward.3} parent=5 // pred_fallthru
      _
    %p387 = scmp.le.s32.totalorder 1, %s19
    %p388 = scmp.lt.s32.totalorder %s19, 3
    %p389 = pnand %p387, %p388
    %p390 = pneg %p389
    // Predicated region
    $region69: #{unet_forward.3} parent=5 // pred_check
      _
    $region70: #{unet_forward.3} parent=5 // pred_check_branch
      %392 = sbr.rel (%p389) target = $region72
    $region71: #{unet_forward.3} parent=5 // pred_region
      %s393 = ssub.s32 %s19, 1
      %s394 = smul.u32 6, %s24
      %p395 = scmp.lt.s32.totalorder %s394, 11
      %s396 = scalar_select %p395, %s394, 11
      %s397 = smul.addr %s396, 8
      %s398 = scalar_lea.vmem %s0, %s397
      %p399 = pneg %p45
      %p400 = pneg %p42
      %p401 = pneg %p66
      %p402 = pneg %p63
      %p403 = pneg %p87
      %p404 = pneg %p84
      %p405 = pneg %p108
      %p406 = pneg %p105
      %p407 = pneg %p129
      %p408 = pneg %p126
      %p409 = pneg %p150
      %p410 = pneg %p147
      %p411 = pneg %p171
      %p412 = pneg %p168
      %p413 = pneg %p192
      %p414 = pneg %p189
      %p415 = pneg %p213
      %p416 = pneg %p210
      %p417 = pneg %p234
      %p418 = pneg %p231
      %p419 = pneg %p255
      %p420 = pneg %p252
      %p421 = pneg %p276
      %p422 = pneg %p273
      %p423 = pneg %p297
      %p424 = pneg %p294
      %p425 = pneg %p323
      %p426 = pneg %p320
      %s427 = smul.u32 6, %s24
      %p428 = scmp.lt.s32.totalorder %s427, 11
      %s429 = scalar_select %p428, %s427, 11
      %s430 = smul.addr %s429, 8
      %s431 = scalar_lea.vmem %s13, %s430
      %s432 = smul.u32 6, %s24
      %p433 = scmp.lt.s32.totalorder %s432, 11
      %s434 = scalar_select %p433, %s432, 11
      %s435 = smul.addr %s434, 8
      %s436 = scalar_lea.vmem %s0, %s435
      %s437 = smul.u32 6, %s24
      %s438 = smul.u32 6, %s24
      %p439 = scmp.lt.s32.totalorder %s438, 11
      %s440 = scalar_select %p439, %s438, 11
      %s441 = smul.addr %s440, 8
      %s442 = scalar_lea.vmem %s13, %s441
      %s443 = smul.u32 6, %s24
      %v445 = vld [vmem:[%s436] sm:$0xff]
      %v446 = vld [vmem:[%s436 + $0x8] sm:$0xff]
      %v447 = vld [vmem:[%s436 + $0x10] sm:$0xff]
      %v448 = vld [vmem:[%s436 + $0x18] sm:$0xff]
      %v449 = vld [vmem:[%s436 + $0x20] sm:$0xff]
      %v450 = vld [vmem:[%s436 + $0x28] sm:$0xff]
      %v451 = vld [vmem:[%s3] sm:$0xff]
      %v452 = vld [vmem:[%s3 + $0x8] sm:$0xff]
      %v453 = vld [vmem:[%s3 + $0x10] sm:$0xff]
      %v454 = vld [vmem:[%s3 + $0x18] sm:$0xff]
      %v455 = vpack.c.bf16 %v446, %v445
      %v456 = vpack.c.bf16 %v448, %v447
      %v457 = vpack.c.bf16 %v450, %v449
      %v458 = vpack.c.bf16 %v452, %v451
      %v459 = vpack.c.bf16 %v454, %v453
      %v460 = vld [vmem:[%s4] sm:$0x1]
      %v462 = vlaneseq
      %v463 = vshrl.u32 %v462, 7
      %v464 = vsub.s32 0, %v463
      %v465 = vrot.slane %v460, %v464
      %vm467 = vcmask 261120
      %v469 = vsel %vm467, %v455, 0
      %v472 = vsel %vm467, %v456, 0
      %v475 = vsel %vm467, %v457, 0
      %477 = vmatprep.subr.bf16.mxu0 0
      %478 = vmatpush1.bf16.msra.mxu0 %v458
      %479 = vmatprep.subr.bf16.mxu0 0
      %480 = vmatpush1.bf16.msra.mxu0 %v459
      %481 = vmatprep.subr.bf16.mxu0 0
      %482 = vmatpush1.bf16.msra.mxu0 0
      %483 = vmatprep.subr.bf16.mxu0 0
      %484 = vmatpush1.bf16.msra.mxu0 0
      %485 = vmatprep.subr.bf16.mxu0 0
      %486 = vmatpush1.bf16.msra.mxu0 0
      %487 = vmatprep.subr.bf16.mxu0 0
      %488 = vmatpush1.bf16.msra.mxu0 0
      %489 = vmatprep.subr.bf16.mxu0 0
      %490 = vmatpush1.bf16.msra.mxu0 0
      %491 = vmatprep.subr.bf16.mxu0 0
      %492 = vmatpush1.bf16.msra.mxu0 0
      %493 = vmatprep.subr.bf16.mxu0 0
      %494 = vmatpush1.bf16.msra.mxu0 0
      %495 = vmatprep.subr.bf16.mxu0 0
      %496 = vmatpush1.bf16.msra.mxu0 0
      %497 = vmatprep.subr.bf16.mxu0 0
      %498 = vmatpush1.bf16.msra.mxu0 0
      %499 = vmatprep.subr.bf16.mxu0 0
      %500 = vmatpush1.bf16.msra.mxu0 0
      %501 = vmatprep.subr.bf16.mxu0 0
      %502 = vmatpush1.bf16.msra.mxu0 0
      %503 = vmatprep.subr.bf16.mxu0 0
      %504 = vmatpush1.bf16.msra.mxu0 0
      %505 = vmatprep.subr.bf16.mxu0 0
      %506 = vmatpush1.bf16.msra.mxu0 0
      %507 = vmatprep.subr.bf16.mxu0 0
      %508 = vmatpush1.bf16.msra.mxu0 0
      %509 = vmatprep.mubr.bf16.mxu0 0
      %510 = vmatmul.mubr.bf16.gmra.mrb[0].mxu0 %v469
      %v511 = vpop.f32.mrb[0].mxu0
      %v512 = vadd.f32 %v465, %v511
      %v513 = vpop.f32.mrb[0].mxu0
      %v514 = vpop.f32.mrb[0].mxu0
      %v515 = vadd.f32 %v465, %v514
      %v516 = vpop.f32.mrb[0].mxu0
      %517 = vmatprep.mubr.bf16.mxu0 0
      %518 = vmatmul.mubr.bf16.gmra.mrb[0].mxu0 %v472
      %v519 = vpop.f32.mrb[0].mxu0
      %v520 = vadd.f32 %v465, %v519
      %v521 = vpop.f32.mrb[0].mxu0
      %v522 = vpop.f32.mrb[0].mxu0
      %v523 = vadd.f32 %v465, %v522
      %v524 = vpop.f32.mrb[0].mxu0
      %525 = vmatprep.mubr.bf16.mxu0 0
      %526 = vmatmul.mubr.bf16.gmra.mrb[0].mxu0 %v475
      %v527 = vpop.f32.mrb[0].mxu0
      %v528 = vadd.f32 %v465, %v527
      %v529 = vpop.f32.mrb[0].mxu0
      %v530 = vpop.f32.mrb[0].mxu0
      %v531 = vadd.f32 %v465, %v530
      %v532 = vpop.f32.mrb[0].mxu0
      %533 = vdwg.mxu0
      %v534 = vmax.f32 %v512, 0.0
      %v535 = vmax.f32 %v515, 0.0
      %v536 = vmax.f32 %v520, 0.0
      %v537 = vmax.f32 %v523, 0.0
      %v538 = vmax.f32 %v528, 0.0
      %v539 = vmax.f32 %v531, 0.0
      %v540 = vld [vmem:[%s5] sm:$0xff]
      %v541 = vld [vmem:[%s5 + $0x8] sm:$0xff]
      %v542 = vld [vmem:[%s5 + $0x10] sm:$0xff]
      %v543 = vld [vmem:[%s5 + $0x18] sm:$0xff]
      %v544 = vld [vmem:[%s5 + $0x20] sm:$0xff]
      %v545 = vld [vmem:[%s5 + $0x28] sm:$0xff]
      %v546 = vld [vmem:[%s5 + $0x30] sm:$0xff]
      %v547 = vld [vmem:[%s5 + $0x38] sm:$0xff]
      %v548 = vpack.c.bf16 %v535, %v534
      %v549 = vpack.c.bf16 %v537, %v536
      %v550 = vpack.c.bf16 %v539, %v538
      %v551 = vpack.c.bf16 %v541, %v540
      %v552 = vpack.c.bf16 %v543, %v542
      %v553 = vpack.c.bf16 %v545, %v544
      %v554 = vpack.c.bf16 %v547, %v546
      %v555 = vld [vmem:[%s6] sm:$0x1]
      %v557 = vlaneseq
      %v558 = vshrl.u32 %v557, 7
      %v559 = vsub.s32 0, %v558
      %v560 = vrot.slane %v555, %v559
      %vm562 = vcmask 523264
      %v564 = vsel %vm562, %v548, 0
      %v567 = vsel %vm562, %v549, 0
      %v570 = vsel %vm562, %v550, 0
      %572 = vmatprep.subr.bf16.mxu0 0
      %573 = vmatpush1.bf16.msra.mxu0 %v551
      %574 = vmatprep.subr.bf16.mxu0 0
      %575 = vmatpush1.bf16.msra.mxu0 %v552
      %576 = vmatprep.subr.bf16.mxu0 0
      %577 = vmatpush1.bf16.msra.mxu0 %v553
      %578 = vmatprep.subr.bf16.mxu0 0
      %579 = vmatpush1.bf16.msra.mxu0 %v554
      %580 = vmatprep.subr.bf16.mxu0 0
      %581 = vmatpush1.bf16.msra.mxu0 0
      %582 = vmatprep.subr.bf16.mxu0 0
      %583 = vmatpush1.bf16.msra.mxu0 0
      %584 = vmatprep.subr.bf16.mxu0 0
      %585 = vmatpush1.bf16.msra.mxu0 0
      %586 = vmatprep.subr.bf16.mxu0 0
      %587 = vmatpush1.bf16.msra.mxu0 0
      %588 = vmatprep.subr.bf16.mxu0 0
      %589 = vmatpush1.bf16.msra.mxu0 0
      %590 = vmatprep.subr.bf16.mxu0 0
      %591 = vmatpush1.bf16.msra.mxu0 0
      %592 = vmatprep.subr.bf16.mxu0 0
      %593 = vmatpush1.bf16.msra.mxu0 0
      %594 = vmatprep.subr.bf16.mxu0 0
      %595 = vmatpush1.bf16.msra.mxu0 0
      %596 = vmatprep.subr.bf16.mxu0 0
      %597 = vmatpush1.bf16.msra.mxu0 0
      %598 = vmatprep.subr.bf16.mxu0 0
      %599 = vmatpush1.bf16.msra.mxu0 0
      %600 = vmatprep.subr.bf16.mxu0 0
      %601 = vmatpush1.bf16.msra.mxu0 0
      %602 = vmatprep.subr.bf16.mxu0 0
      %603 = vmatpush1.bf16.msra.mxu0 0
      %604 = vmatprep.mubr.bf16.mxu0 0
      %605 = vmatmul.mubr.bf16.gmra.mrb[0].mxu0 %v564
      %v606 = vpop.f32.mrb[0].mxu0
      %v607 = vadd.f32 %v560, %v606
      %v608 = vpop.f32.mrb[0].mxu0
      %v609 = vpop.f32.mrb[0].mxu0
      %v610 = vadd.f32 %v560, %v609
      %v611 = vpop.f32.mrb[0].mxu0
      %612 = vmatprep.mubr.bf16.mxu0 0
      %613 = vmatmul.mubr.bf16.gmra.mrb[0].mxu0 %v567
      %v614 = vpop.f32.mrb[0].mxu0
      %v615 = vadd.f32 %v560, %v614
      %v616 = vpop.f32.mrb[0].mxu0
      %v617 = vpop.f32.mrb[0].mxu0
      %v618 = vadd.f32 %v560, %v617
      %v619 = vpop.f32.mrb[0].mxu0
      %620 = vmatprep.mubr.bf16.mxu0 0
      %621 = vmatmul.mubr.bf16.gmra.mrb[0].mxu0 %v570
      %v622 = vpop.f32.mrb[0].mxu0
      %v623 = vadd.f32 %v560, %v622
      %v624 = vpop.f32.mrb[0].mxu0
      %v625 = vpop.f32.mrb[0].mxu0
      %v626 = vadd.f32 %v560, %v625
      %v627 = vpop.f32.mrb[0].mxu0
      %628 = vdwg.mxu0
      %v629 = vld [vmem:[%s1] sm:$0xff]
      %v630 = vld [vmem:[%s1 + $0x8] sm:$0xff]
      %v631 = vld [vmem:[%s1 + $0x10] sm:$0xff]
      %v632 = vld [vmem:[%s1 + $0x18] sm:$0xff]
      %v633 = vld [vmem:[%s1 + $0x20] sm:$0xff]
      %v634 = vld [vmem:[%s1 + $0x28] sm:$0xff]
      %v635 = vpack.c.bf16 %v630, %v629
      %v636 = vpack.c.bf16 %v632, %v631
      %v637 = vpack.c.bf16 %v634, %v633
      %v638 = vld [vmem:[%s2] sm:$0xff]
      %v639 = vld [vmem:[%s2 + $0x8] sm:$0xff]
      %v640 = vld [vmem:[%s2 + $0x10] sm:$0xff]
      %v641 = vld [vmem:[%s2 + $0x18] sm:$0xff]
      %v642 = vld [vmem:[%s2 + $0x20] sm:$0xff]
      %v643 = vld [vmem:[%s2 + $0x28] sm:$0xff]
      %v644 = vpack.c.bf16 %v639, %v638
      %v645 = vpack.c.bf16 %v641, %v640
      %v646 = vpack.c.bf16 %v643, %v642
      %v647 = vld [vmem:[%s7] sm:$0xff]
      %v648 = vld [vmem:[%s7 + $0x8] sm:$0xff]
      %v649 = vld [vmem:[%s7 + $0x10] sm:$0xff]
      %v650 = vld [vmem:[%s7 + $0x18] sm:$0xff]
      %v651 = vld [vmem:[%s7 + $0x20] sm:$0xff]
      %v652 = vld [vmem:[%s7 + $0x28] sm:$0xff]
      %v653 = vld [vmem:[%s7 + $0x30] sm:$0xff]
      %v654 = vld [vmem:[%s7 + $0x38] sm:$0xff]
      %v655 = vld [vmem:[%s7 + $0x40] sm:$0xff]
      %v656 = vld [vmem:[%s7 + $0x48] sm:$0xff]
      %v657 = vld [vmem:[%s7 + $0x50] sm:$0xff]
      %v658 = vld [vmem:[%s7 + $0x58] sm:$0xff]
      %v659 = vld [vmem:[%s7 + $0x60] sm:$0xff]
      %v660 = vld [vmem:[%s7 + $0x68] sm:$0xff]
      %v661 = vld [vmem:[%s7 + $0x70] sm:$0xff]
      %v662 = vld [vmem:[%s7 + $0x78] sm:$0xff]
      %v663 = vld [vmem:[%s7 + $0x80] sm:$0xff]
      %v664 = vld [vmem:[%s7 + $0x88] sm:$0xff]
      %v665 = vld [vmem:[%s7 + $0x90] sm:$0xff]
      %v666 = vld [vmem:[%s7 + $0x98] sm:$0xff]
      %v667 = vld [vmem:[%s7 + $0xa0] sm:$0xff]
      %v668 = vld [vmem:[%s7 + $0xa8] sm:$0xff]
      %v669 = vld [vmem:[%s7 + $0xb0] sm:$0xff]
      %v670 = vld [vmem:[%s7 + $0xb8] sm:$0xff]
      %v671 = vpack.c.bf16 %v648, %v647
      %v672 = vpack.c.bf16 %v650, %v649
      %v673 = vpack.c.bf16 %v652, %v651
      %v674 = vpack.c.bf16 %v654, %v653
      %v675 = vpack.c.bf16 %v656, %v655
      %v676 = vpack.c.bf16 %v658, %v657
      %v677 = vpack.c.bf16 %v660, %v659
      %v678 = vpack.c.bf16 %v662, %v661
      %v679 = vpack.c.bf16 %v664, %v663
      %v680 = vpack.c.bf16 %v666, %v665
      %v681 = vpack.c.bf16 %v668, %v667
      %v682 = vpack.c.bf16 %v670, %v669
      %v683 = vld [vmem:[%s9] sm:$0xff]
      %v684 = vld [vmem:[%s9 + $0x8] sm:$0xff]
      %v685 = vld [vmem:[%s9 + $0x10] sm:$0xff]
      %v686 = vld [vmem:[%s9 + $0x18] sm:$0xff]
      %v687 = vld [vmem:[%s9 + $0x20] sm:$0xff]
      %v688 = vld [vmem:[%s9 + $0x28] sm:$0xff]
      %v689 = vld [vmem:[%s9 + $0x30] sm:$0xff]
      %v690 = vld [vmem:[%s9 + $0x38] sm:$0xff]
      %v691 = vld [vmem:[%s9 + $0x40] sm:$0xff]
      %v692 = vld [vmem:[%s9 + $0x48] sm:$0xff]
      %v693 = vld [vmem:[%s9 + $0x50] sm:$0xff]
      %v694 = vld [vmem:[%s9 + $0x58] sm:$0xff]
      %v695 = vld [vmem:[%s9 + $0x60] sm:$0xff]
      %v696 = vld [vmem:[%s9 + $0x68] sm:$0xff]
      %v697 = vld [vmem:[%s9 + $0x70] sm:$0xff]
      %v698 = vld [vmem:[%s9 + $0x78] sm:$0xff]
      %v699 = vpack.c.bf16 %v685, %v683
      %v700 = vpack.c.bf16 %v686, %v684
      %v701 = vpack.c.bf16 %v689, %v687
      %v702 = vpack.c.bf16 %v690, %v688
      %v703 = vpack.c.bf16 %v693, %v691
      %v704 = vpack.c.bf16 %v694, %v692
      %v705 = vpack.c.bf16 %v697, %v695
      %v706 = vpack.c.bf16 %v698, %v696
      %v707 = vld [vmem:[%s11] sm:$0xff]
      %v708 = vld [vmem:[%s11 + $0x8] sm:$0xff]
      %v709 = vld [vmem:[%s11 + $0x10] sm:$0xff]
      %v710 = vld [vmem:[%s11 + $0x18] sm:$0xff]
      %v711 = vld [vmem:[%s11 + $0x20] sm:$0xff]
      %v712 = vld [vmem:[%s11 + $0x28] sm:$0xff]
      %v713 = vld [vmem:[%s11 + $0x30] sm:$0xff]
      %v714 = vld [vmem:[%s11 + $0x38] sm:$0xff]
      %v715 = vld [vmem:[%s11 + $0x40] sm:$0xff]
      %v716 = vld [vmem:[%s11 + $0x48] sm:$0xff]
      %v717 = vld [vmem:[%s11 + $0x50] sm:$0xff]
      %v718 = vld [vmem:[%s11 + $0x58] sm:$0xff]
      %v719 = vld [vmem:[%s11 + $0x60] sm:$0xff]
      %v720 = vld [vmem:[%s11 + $0x68] sm:$0xff]
      %v721 = vld [vmem:[%s11 + $0x70] sm:$0xff]
      %v722 = vld [vmem:[%s11 + $0x78] sm:$0xff]
      %v723 = vpack.c.bf16 %v709, %v707
      %v724 = vpack.c.bf16 %v710, %v708
      %v725 = vpack.c.bf16 %v713, %v711
      %v726 = vpack.c.bf16 %v714, %v712
      %v727 = vpack.c.bf16 %v717, %v715
      %v728 = vpack.c.bf16 %v718, %v716
      %v729 = vpack.c.bf16 %v721, %v719
      %v730 = vpack.c.bf16 %v722, %v720
      %v731 = vld [vmem:[%s8] sm:$0x1]
      %v733 = vlaneseq
      %v734 = vshrl.u32 %v733, 7
      %v735 = vsub.s32 0, %v734
      %v736 = vrot.slane %v731, %v735
      %v738 = vld [vmem:[%s10] sm:$0x3]
      %v740 = vlaneseq
      %v741 = vshrl.u32 %v740, 7
      %v742 = vsub.s32 0, %v741
      %v743 = vrot.slane %v738, %v742
      %v744 = vlaneseq
      %v745 = vshrl.u32 %v744, 7
      %v746 = vsub.s32 1, %v745
      %v747 = vrot.slane %v738, %v746
      %v750 = vld [vmem:[%s12] sm:$0x3]
      %v752 = vlaneseq
      %v753 = vshrl.u32 %v752, 7
      %v754 = vsub.s32 0, %v753
      %v755 = vrot.slane %v750, %v754
      %v756 = vlaneseq
      %v757 = vshrl.u32 %v756, 7
      %v758 = vsub.s32 1, %v757
      %v759 = vrot.slane %v750, %v758
      %v762 = vpack.c.bf16 %v610, %v607
      %v763 = vpack.c.bf16 %v618, %v615
      %v764 = vpack.c.bf16 %v626, %v623
      %vm765 = vcmask 392192
      %v767 = vsel %vm765, %v635, 0
      %v770 = vsel %vm765, %v636, 0
      %v773 = vsel %vm765, %v637, 0
      %775 = vmatprep.subr.bf16.mxu0 0
      %776 = vmatpush1.bf16.msra.mxu0 %v762
      %777 = vmatprep.subr.bf16.mxu0 0
      %778 = vmatpush1.bf16.msra.mxu0 %v763
      %779 = vmatprep.subr.bf16.mxu0 0
      %780 = vmatpush1.bf16.msra.mxu0 %v764
      %781 = vmatprep.subr.bf16.mxu0 0
      %782 = vmatpush1.bf16.msra.mxu0 0
      %783 = vmatprep.subr.bf16.mxu0 0
      %784 = vmatpush1.bf16.msra.mxu0 0
      %785 = vmatprep.subr.bf16.mxu0 0
      %786 = vmatpush1.bf16.msra.mxu0 0
      %787 = vmatprep.subr.bf16.mxu0 0
      %788 = vmatpush1.bf16.msra.mxu0 0
      %789 = vmatprep.subr.bf16.mxu0 0
      %790 = vmatpush1.bf16.msra.mxu0 0
      %791 = vmatprep.subr.bf16.mxu0 0
      %792 = vmatpush1.bf16.msra.mxu0 0
      %793 = vmatprep.subr.bf16.mxu0 0
      %794 = vmatpush1.bf16.msra.mxu0 0
      %795 = vmatprep.subr.bf16.mxu0 0
      %796 = vmatpush1.bf16.msra.mxu0 0
      %797 = vmatprep.subr.bf16.mxu0 0
      %798 = vmatpush1.bf16.msra.mxu0 0
      %799 = vmatprep.subr.bf16.mxu0 0
      %800 = vmatpush1.bf16.msra.mxu0 0
      %801 = vmatprep.subr.bf16.mxu0 0
      %802 = vmatpush1.bf16.msra.mxu0 0
      %803 = vmatprep.subr.bf16.mxu0 0
      %804 = vmatpush1.bf16.msra.mxu0 0
      %805 = vmatprep.subr.bf16.mxu0 0
      %806 = vmatpush1.bf16.msra.mxu0 0
      %807 = vmatprep.mubr.bf16.mxu0 0
      %808 = vmatmul.mubr.bf16.gmra.mrb[0].mxu0 %v767
      %v809 = vpop.f32.mrb[0].mxu0
      %v810 = vadd.f32 0.0, %v809
      %v811 = vpop.f32.mrb[0].mxu0
      %v812 = vpop.f32.mrb[0].mxu0
      %v813 = vadd.f32 0.0, %v812
      %v814 = vpop.f32.mrb[0].mxu0
      %815 = vmatprep.mubr.bf16.mxu0 0
      %816 = vmatmul.mubr.bf16.gmra.mrb[0].mxu0 %v770
      %v817 = vpop.f32.mrb[0].mxu0
      %v818 = vadd.f32 0.0, %v817
      %v819 = vpop.f32.mrb[0].mxu0
      %v820 = vpop.f32.mrb[0].mxu0
      %v821 = vadd.f32 0.0, %v820
      %v822 = vpop.f32.mrb[0].mxu0
      %823 = vmatprep.mubr.bf16.mxu0 0
      %824 = vmatmul.mubr.bf16.gmra.mrb[0].mxu0 %v773
      %v825 = vpop.f32.mrb[0].mxu0
      %v826 = vadd.f32 0.0, %v825
      %v827 = vpop.f32.mrb[0].mxu0
      %v828 = vpop.f32.mrb[0].mxu0
      %v829 = vadd.f32 0.0, %v828
      %v830 = vpop.f32.mrb[0].mxu0
      %831 = vdwg.mxu0
      %v833 = vsel %vm765, %v644, 0
      %v836 = vsel %vm765, %v645, 0
      %v839 = vsel %vm765, %v646, 0
      %841 = vmatprep.subr.bf16.mxu0 0
      %842 = vmatpush1.bf16.msra.mxu0 %v762
      %843 = vmatprep.subr.bf16.mxu0 0
      %844 = vmatpush1.bf16.msra.mxu0 %v763
      %845 = vmatprep.subr.bf16.mxu0 0
      %846 = vmatpush1.bf16.msra.mxu0 %v764
      %847 = vmatprep.subr.bf16.mxu0 0
      %848 = vmatpush1.bf16.msra.mxu0 0
      %849 = vmatprep.subr.bf16.mxu0 0
      %850 = vmatpush1.bf16.msra.mxu0 0
      %851 = vmatprep.subr.bf16.mxu0 0
      %852 = vmatpush1.bf16.msra.mxu0 0
      %853 = vmatprep.subr.bf16.mxu0 0
      %854 = vmatpush1.bf16.msra.mxu0 0
      %855 = vmatprep.subr.bf16.mxu0 0
      %856 = vmatpush1.bf16.msra.mxu0 0
      %857 = vmatprep.subr.bf16.mxu0 0
      %858 = vmatpush1.bf16.msra.mxu0 0
      %859 = vmatprep.subr.bf16.mxu0 0
      %860 = vmatpush1.bf16.msra.mxu0 0
      %861 = vmatprep.subr.bf16.mxu0 0
      %862 = vmatpush1.bf16.msra.mxu0 0
      %863 = vmatprep.subr.bf16.mxu0 0
      %864 = vmatpush1.bf16.msra.mxu0 0
      %865 = vmatprep.subr.bf16.mxu0 0
      %866 = vmatpush1.bf16.msra.mxu0 0
      %867 = vmatprep.subr.bf16.mxu0 0
      %868 = vmatpush1.bf16.msra.mxu0 0
      %869 = vmatprep.subr.bf16.mxu0 0
      %870 = vmatpush1.bf16.msra.mxu0 0
      %871 = vmatprep.subr.bf16.mxu0 0
      %872 = vmatpush1.bf16.msra.mxu0 0
      %873 = vmatprep.mubr.bf16.mxu0 0
      %874 = vmatmul.mubr.bf16.gmra.mrb[0].mxu0 %v833
      %v875 = vpop.f32.mrb[0].mxu0
      %v876 = vadd.f32 0.0, %v875
      %v877 = vpop.f32.mrb[0].mxu0
      %v878 = vpop.f32.mrb[0].mxu0
      %v879 = vadd.f32 0.0, %v878
      %v880 = vpop.f32.mrb[0].mxu0
      %881 = vmatprep.mubr.bf16.mxu0 0
      %882 = vmatmul.mubr.bf16.gmra.mrb[0].mxu0 %v836
      %v883 = vpop.f32.mrb[0].mxu0
      %v884 = vadd.f32 0.0, %v883
      %v885 = vpop.f32.mrb[0].mxu0
      %v886 = vpop.f32.mrb[0].mxu0
      %v887 = vadd.f32 0.0, %v886
      %v888 = vpop.f32.mrb[0].mxu0
      %889 = vmatprep.mubr.bf16.mxu0 0
      %890 = vmatmul.mubr.bf16.gmra.mrb[0].mxu0 %v839
      %v891 = vpop.f32.mrb[0].mxu0
      %v892 = vadd.f32 0.0, %v891
      %v893 = vpop.f32.mrb[0].mxu0
      %v894 = vpop.f32.mrb[0].mxu0
      %v895 = vadd.f32 0.0, %v894
      %v896 = vpop.f32.mrb[0].mxu0
      %897 = vdwg.mxu0
      %v898 = vpack.c.bf16 %v813, %v810
      %v899 = vpack.c.bf16 %v821, %v818
      %v900 = vpack.c.bf16 %v829, %v826
      %v901 = vpack.c.bf16 %v879, %v876
      %v902 = vpack.c.bf16 %v887, %v884
      %v903 = vpack.c.bf16 %v895, %v892
      %v905 = vsel %vm562, %v901, 0
      %v908 = vsel %vm562, %v902, 0
      %v911 = vsel %vm562, %v903, 0
      %913 = vmatprep.subr.bf16.mxu0 0
      %914 = vmatpush1.bf16.msra.mxu0 %v675
      %915 = vmatprep.subr.bf16.mxu0 0
      %916 = vmatpush1.bf16.msra.mxu0 %v676
      %917 = vmatprep.subr.bf16.mxu0 0
      %918 = vmatpush1.bf16.msra.mxu0 %v677
      %919 = vmatprep.subr.bf16.mxu0 0
      %920 = vmatpush1.bf16.msra.mxu0 %v678
      %921 = vmatprep.subr.bf16.mxu0 0
      %922 = vmatpush1.bf16.msra.mxu0 0
      %923 = vmatprep.subr.bf16.mxu0 0
      %924 = vmatpush1.bf16.msra.mxu0 0
      %925 = vmatprep.subr.bf16.mxu0 0
      %926 = vmatpush1.bf16.msra.mxu0 0
      %927 = vmatprep.subr.bf16.mxu0 0
      %928 = vmatpush1.bf16.msra.mxu0 0
      %929 = vmatprep.subr.bf16.mxu0 0
      %930 = vmatpush1.bf16.msra.mxu0 0
      %931 = vmatprep.subr.bf16.mxu0 0
      %932 = vmatpush1.bf16.msra.mxu0 0
      %933 = vmatprep.subr.bf16.mxu0 0
      %934 = vmatpush1.bf16.msra.mxu0 0
      %935 = vmatprep.subr.bf16.mxu0 0
      %936 = vmatpush1.bf16.msra.mxu0 0
      %937 = vmatprep.subr.bf16.mxu0 0
      %938 = vmatpush1.bf16.msra.mxu0 0
      %939 = vmatprep.subr.bf16.mxu0 0
      %940 = vmatpush1.bf16.msra.mxu0 0
      %941 = vmatprep.subr.bf16.mxu0 0
      %942 = vmatpush1.bf16.msra.mxu0 0
      %943 = vmatprep.subr.bf16.mxu0 0
      %944 = vmatpush1.bf16.msra.mxu0 0
      %945 = vmatprep.mubr.bf16.mxu0 0
      %946 = vmatmul.mubr.bf16.gmra.mrb[0].mxu0 %v905
      %v947 = vpop.f32.mrb[0].mxu0
      %v948 = vadd.f32 0.0, %v947
      %v949 = vpop.f32.mrb[0].mxu0
      %v950 = vpop.f32.mrb[0].mxu0
      %v951 = vadd.f32 0.0, %v950
      %v952 = vpop.f32.mrb[0].mxu0
      %953 = vmatprep.mubr.bf16.mxu0 0
      %954 = vmatmul.mubr.bf16.gmra.mrb[0].mxu0 %v908
      %v955 = vpop.f32.mrb[0].mxu0
      %v956 = vadd.f32 0.0, %v955
      %v957 = vpop.f32.mrb[0].mxu0
      %v958 = vpop.f32.mrb[0].mxu0
      %v959 = vadd.f32 0.0, %v958
      %v960 = vpop.f32.mrb[0].mxu0
      %961 = vmatprep.mubr.bf16.mxu0 0
      %962 = vmatmul.mubr.bf16.gmra.mrb[0].mxu0 %v911
      %v963 = vpop.f32.mrb[0].mxu0
      %v964 = vadd.f32 0.0, %v963
      %v965 = vpop.f32.mrb[0].mxu0
      %v966 = vpop.f32.mrb[0].mxu0
      %v967 = vadd.f32 0.0, %v966
      %v968 = vpop.f32.mrb[0].mxu0
      %969 = vdwg.mxu0
      %v971 = vsel %vm562, %v898, 0
      %v974 = vsel %vm562, %v899, 0
      %v977 = vsel %vm562, %v900, 0
      %979 = vmatprep.subr.bf16.mxu0 0
      %980 = vmatpush1.bf16.msra.mxu0 %v671
      %981 = vmatprep.subr.bf16.mxu0 0
      %982 = vmatpush1.bf16.msra.mxu0 %v672
      %983 = vmatprep.subr.bf16.mxu0 0
      %984 = vmatpush1.bf16.msra.mxu0 %v673
      %985 = vmatprep.subr.bf16.mxu0 0
      %986 = vmatpush1.bf16.msra.mxu0 %v674
      %987 = vmatprep.subr.bf16.mxu0 0
      %988 = vmatpush1.bf16.msra.mxu0 0
      %989 = vmatprep.subr.bf16.mxu0 0
      %990 = vmatpush1.bf16.msra.mxu0 0
      %991 = vmatprep.subr.bf16.mxu0 0
      %992 = vmatpush1.bf16.msra.mxu0 0
      %993 = vmatprep.subr.bf16.mxu0 0
      %994 = vmatpush1.bf16.msra.mxu0 0
      %995 = vmatprep.subr.bf16.mxu0 0
      %996 = vmatpush1.bf16.msra.mxu0 0
      %997 = vmatprep.subr.bf16.mxu0 0
      %998 = vmatpush1.bf16.msra.mxu0 0
      %999 = vmatprep.subr.bf16.mxu0 0
      %1000 = vmatpush1.bf16.msra.mxu0 0
      %1001 = vmatprep.subr.bf16.mxu0 0
      %1002 = vmatpush1.bf16.msra.mxu0 0
      %1003 = vmatprep.subr.bf16.mxu0 0
      %1004 = vmatpush1.bf16.msra.mxu0 0
      %1005 = vmatprep.subr.bf16.mxu0 0
      %1006 = vmatpush1.bf16.msra.mxu0 0
      %1007 = vmatprep.subr.bf16.mxu0 0
      %1008 = vmatpush1.bf16.msra.mxu0 0
      %1009 = vmatprep.subr.bf16.mxu0 0
      %1010 = vmatpush1.bf16.msra.mxu0 0
      %1011 = vmatprep.mubr.bf16.mxu0 0
      %1012 = vmatmul.mubr.bf16.gmra.mrb[0].mxu0 %v971
      %v1013 = vpop.f32.mrb[0].mxu0
      %v1014 = vadd.f32 %v948, %v1013
      %v1015 = vpop.f32.mrb[0].mxu0
      %v1016 = vpop.f32.mrb[0].mxu0
      %v1017 = vadd.f32 %v951, %v1016
      %v1018 = vpop.f32.mrb[0].mxu0
      %1019 = vmatprep.mubr.bf16.mxu0 0
      %1020 = vmatmul.mubr.bf16.gmra.mrb[0].mxu0 %v974
      %v1021 = vpop.f32.mrb[0].mxu0
      %v1022 = vadd.f32 %v956, %v1021
      %v1023 = vpop.f32.mrb[0].mxu0
      %v1024 = vpop.f32.mrb[0].mxu0
      %v1025 = vadd.f32 %v959, %v1024
      %v1026 = vpop.f32.mrb[0].mxu0
      %1027 = vmatprep.mubr.bf16.mxu0 0
      %1028 = vmatmul.mubr.bf16.gmra.mrb[0].mxu0 %v977
      %v1029 = vpop.f32.mrb[0].mxu0
      %v1030 = vadd.f32 %v964, %v1029
      %v1031 = vpop.f32.mrb[0].mxu0
      %v1032 = vpop.f32.mrb[0].mxu0
      %v1033 = vadd.f32 %v967, %v1032
      %v1034 = vpop.f32.mrb[0].mxu0
      %1035 = vdwg.mxu0
      %v1037 = vsel %vm562, %v762, 0
      %v1040 = vsel %vm562, %v763, 0
      %v1043 = vsel %vm562, %v764, 0
      %1045 = vmatprep.subr.bf16.mxu0 0
      %1046 = vmatpush1.bf16.msra.mxu0 %v679
      %1047 = vmatprep.subr.bf16.mxu0 0
      %1048 = vmatpush1.bf16.msra.mxu0 %v680
      %1049 = vmatprep.subr.bf16.mxu0 0
      %1050 = vmatpush1.bf16.msra.mxu0 %v681
      %1051 = vmatprep.subr.bf16.mxu0 0
      %1052 = vmatpush1.bf16.msra.mxu0 %v682
      %1053 = vmatprep.subr.bf16.mxu0 0
      %1054 = vmatpush1.bf16.msra.mxu0 0
      %1055 = vmatprep.subr.bf16.mxu0 0
      %1056 = vmatpush1.bf16.msra.mxu0 0
      %1057 = vmatprep.subr.bf16.mxu0 0
      %1058 = vmatpush1.bf16.msra.mxu0 0
      %1059 = vmatprep.subr.bf16.mxu0 0
      %1060 = vmatpush1.bf16.msra.mxu0 0
      %1061 = vmatprep.subr.bf16.mxu0 0
      %1062 = vmatpush1.bf16.msra.mxu0 0
      %1063 = vmatprep.subr.bf16.mxu0 0
      %1064 = vmatpush1.bf16.msra.mxu0 0
      %1065 = vmatprep.subr.bf16.mxu0 0
      %1066 = vmatpush1.bf16.msra.mxu0 0
      %1067 = vmatprep.subr.bf16.mxu0 0
      %1068 = vmatpush1.bf16.msra.mxu0 0
      %1069 = vmatprep.subr.bf16.mxu0 0
      %1070 = vmatpush1.bf16.msra.mxu0 0
      %1071 = vmatprep.subr.bf16.mxu0 0
      %1072 = vmatpush1.bf16.msra.mxu0 0
      %1073 = vmatprep.subr.bf16.mxu0 0
      %1074 = vmatpush1.bf16.msra.mxu0 0
      %1075 = vmatprep.subr.bf16.mxu0 0
      %1076 = vmatpush1.bf16.msra.mxu0 0
      %1077 = vmatprep.mubr.bf16.mxu0 0
      %1078 = vmatmul.mubr.bf16.gmra.mrb[0].mxu0 %v1037
      %v1079 = vpop.f32.mrb[0].mxu0
      %v1080 = vadd.f32 0.0, %v1079
      %v1081 = vpop.f32.mrb[0].mxu0
      %v1082 = vpop.f32.mrb[0].mxu0
      %v1083 = vadd.f32 0.0, %v1082
      %v1084 = vpop.f32.mrb[0].mxu0
      %1085 = vmatprep.mubr.bf16.mxu0 0
      %1086 = vmatmul.mubr.bf16.gmra.mrb[0].mxu0 %v1040
      %v1087 = vpop.f32.mrb[0].mxu0
      %v1088 = vadd.f32 0.0, %v1087
      %v1089 = vpop.f32.mrb[0].mxu0
      %v1090 = vpop.f32.mrb[0].mxu0
      %v1091 = vadd.f32 0.0, %v1090
      %v1092 = vpop.f32.mrb[0].mxu0
      %1093 = vmatprep.mubr.bf16.mxu0 0
      %1094 = vmatmul.mubr.bf16.gmra.mrb[0].mxu0 %v1043
      %v1095 = vpop.f32.mrb[0].mxu0
      %v1096 = vadd.f32 0.0, %v1095
      %v1097 = vpop.f32.mrb[0].mxu0
      %v1098 = vpop.f32.mrb[0].mxu0
      %v1099 = vadd.f32 0.0, %v1098
      %v1100 = vpop.f32.mrb[0].mxu0
      %1101 = vdwg.mxu0
      %v1102 = vadd.f32 %v1014, %v1080
      %v1103 = vadd.f32 %v1017, %v1083
      %v1104 = vadd.f32 %v1022, %v1088
      %v1105 = vadd.f32 %v1025, %v1091
      %v1106 = vadd.f32 %v1030, %v1096
      %v1107 = vadd.f32 %v1033, %v1099
      %v1108 = vadd.f32 %v1102, %v736
      %v1109 = vadd.f32 %v1103, %v736
      %v1110 = vadd.f32 %v1104, %v736
      %v1111 = vadd.f32 %v1105, %v736
      %v1112 = vadd.f32 %v1106, %v736
      %v1113 = vadd.f32 %v1107, %v736
      %v1114 = vmax.f32 %v1108, 0.0
      %v1115 = vmax.f32 %v1109, 0.0
      %v1116 = vmax.f32 %v1110, 0.0
      %v1117 = vmax.f32 %v1111, 0.0
      %v1118 = vmax.f32 %v1112, 0.0
      %v1119 = vmax.f32 %v1113, 0.0
      %v1120 = vpack.c.bf16 %v1115, %v1114
      %v1121 = vpack.c.bf16 %v1117, %v1116
      %v1122 = vpack.c.bf16 %v1119, %v1118
      %v1124 = vsel %vm562, %v1120, 0
      %v1127 = vsel %vm562, %v1121, 0
      %v1130 = vsel %vm562, %v1122, 0
      %1132 = vmatprep.subr.bf16.mxu0 %v700
      %1133 = vmatpush1.bf16.msra.mxu0 %v699
      %1134 = vmatprep.subr.bf16.mxu0 %v702
      %1135 = vmatpush1.bf16.msra.mxu0 %v701
      %1136 = vmatprep.subr.bf16.mxu0 %v704
      %1137 = vmatpush1.bf16.msra.mxu0 %v703
      %1138 = vmatprep.subr.bf16.mxu0 %v706
      %1139 = vmatpush1.bf16.msra.mxu0 %v705
      %1140 = vmatprep.subr.bf16.mxu0 0
      %1141 = vmatpush1.bf16.msra.mxu0 0
      %1142 = vmatprep.subr.bf16.mxu0 0
      %1143 = vmatpush1.bf16.msra.mxu0 0
      %1144 = vmatprep.subr.bf16.mxu0 0
      %1145 = vmatpush1.bf16.msra.mxu0 0
      %1146 = vmatprep.subr.bf16.mxu0 0
      %1147 = vmatpush1.bf16.msra.mxu0 0
      %1148 = vmatprep.subr.bf16.mxu0 0
      %1149 = vmatpush1.bf16.msra.mxu0 0
      %1150 = vmatprep.subr.bf16.mxu0 0
      %1151 = vmatpush1.bf16.msra.mxu0 0
      %1152 = vmatprep.subr.bf16.mxu0 0
      %1153 = vmatpush1.bf16.msra.mxu0 0
      %1154 = vmatprep.subr.bf16.mxu0 0
      %1155 = vmatpush1.bf16.msra.mxu0 0
      %1156 = vmatprep.subr.bf16.mxu0 0
      %1157 = vmatpush1.bf16.msra.mxu0 0
      %1158 = vmatprep.subr.bf16.mxu0 0
      %1159 = vmatpush1.bf16.msra.mxu0 0
      %1160 = vmatprep.subr.bf16.mxu0 0
      %1161 = vmatpush1.bf16.msra.mxu0 0
      %1162 = vmatprep.subr.bf16.mxu0 0
      %1163 = vmatpush1.bf16.msra.mxu0 0
      %1164 = vmatprep.mubr.bf16.mxu0 0
      %1165 = vmatmul.mubr.bf16.gmra.mrb[0].mxu0 %v1124
      %v1166 = vpop.f32.mrb[0].mxu0
      %v1167 = vadd.f32 %v743, %v1166
      %v1168 = vpop.f32.mrb[0].mxu0
      %v1169 = vadd.f32 %v747, %v1168
      %v1170 = vpop.f32.mrb[0].mxu0
      %v1171 = vadd.f32 %v743, %v1170
      %v1172 = vpop.f32.mrb[0].mxu0
      %v1173 = vadd.f32 %v747, %v1172
      %1174 = vmatprep.mubr.bf16.mxu0 0
      %1175 = vmatmul.mubr.bf16.gmra.mrb[0].mxu0 %v1127
      %v1176 = vpop.f32.mrb[0].mxu0
      %v1177 = vadd.f32 %v743, %v1176
      %v1178 = vpop.f32.mrb[0].mxu0
      %v1179 = vadd.f32 %v747, %v1178
      %v1180 = vpop.f32.mrb[0].mxu0
      %v1181 = vadd.f32 %v743, %v1180
      %v1182 = vpop.f32.mrb[0].mxu0
      %v1183 = vadd.f32 %v747, %v1182
      %1184 = vmatprep.mubr.bf16.mxu0 0
      %1185 = vmatmul.mubr.bf16.gmra.mrb[0].mxu0 %v1130
      %v1186 = vpop.f32.mrb[0].mxu0
      %v1187 = vadd.f32 %v743, %v1186
      %v1188 = vpop.f32.mrb[0].mxu0
      %v1189 = vadd.f32 %v747, %v1188
      %v1190 = vpop.f32.mrb[0].mxu0
      %v1191 = vadd.f32 %v743, %v1190
      %v1192 = vpop.f32.mrb[0].mxu0
      %v1193 = vadd.f32 %v747, %v1192
      %1194 = vdwg.mxu0
      %1195 = vmatprep.subr.bf16.mxu0 %v724
      %1196 = vmatpush1.bf16.msra.mxu0 %v723
      %1197 = vmatprep.subr.bf16.mxu0 %v726
      %1198 = vmatpush1.bf16.msra.mxu0 %v725
      %1199 = vmatprep.subr.bf16.mxu0 %v728
      %1200 = vmatpush1.bf16.msra.mxu0 %v727
      %1201 = vmatprep.subr.bf16.mxu0 %v730
      %1202 = vmatpush1.bf16.msra.mxu0 %v729
      %1203 = vmatprep.subr.bf16.mxu0 0
      %1204 = vmatpush1.bf16.msra.mxu0 0
      %1205 = vmatprep.subr.bf16.mxu0 0
      %1206 = vmatpush1.bf16.msra.mxu0 0
      %1207 = vmatprep.subr.bf16.mxu0 0
      %1208 = vmatpush1.bf16.msra.mxu0 0
      %1209 = vmatprep.subr.bf16.mxu0 0
      %1210 = vmatpush1.bf16.msra.mxu0 0
      %1211 = vmatprep.subr.bf16.mxu0 0
      %1212 = vmatpush1.bf16.msra.mxu0 0
      %1213 = vmatprep.subr.bf16.mxu0 0
      %1214 = vmatpush1.bf16.msra.mxu0 0
      %1215 = vmatprep.subr.bf16.mxu0 0
      %1216 = vmatpush1.bf16.msra.mxu0 0
      %1217 = vmatprep.subr.bf16.mxu0 0
      %1218 = vmatpush1.bf16.msra.mxu0 0
      %1219 = vmatprep.subr.bf16.mxu0 0
      %1220 = vmatpush1.bf16.msra.mxu0 0
      %1221 = vmatprep.subr.bf16.mxu0 0
      %1222 = vmatpush1.bf16.msra.mxu0 0
      %1223 = vmatprep.subr.bf16.mxu0 0
      %1224 = vmatpush1.bf16.msra.mxu0 0
      %1225 = vmatprep.subr.bf16.mxu0 0
      %1226 = vmatpush1.bf16.msra.mxu0 0
      %1227 = vmatprep.mubr.bf16.mxu0 0
      %1228 = vmatmul.mubr.bf16.gmra.mrb[0].mxu0 %v1037
      %v1229 = vpop.f32.mrb[0].mxu0
      %v1230 = vadd.f32 %v755, %v1229
      %v1231 = vpop.f32.mrb[0].mxu0
      %v1232 = vadd.f32 %v759, %v1231
      %v1233 = vpop.f32.mrb[0].mxu0
      %v1234 = vadd.f32 %v755, %v1233
      %v1235 = vpop.f32.mrb[0].mxu0
      %v1236 = vadd.f32 %v759, %v1235
      %1237 = vmatprep.mubr.bf16.mxu0 0
      %1238 = vmatmul.mubr.bf16.gmra.mrb[0].mxu0 %v1040
      %v1239 = vpop.f32.mrb[0].mxu0
      %v1240 = vadd.f32 %v755, %v1239
      %v1241 = vpop.f32.mrb[0].mxu0
      %v1242 = vadd.f32 %v759, %v1241
      %v1243 = vpop.f32.mrb[0].mxu0
      %v1244 = vadd.f32 %v755, %v1243
      %v1245 = vpop.f32.mrb[0].mxu0
      %v1246 = vadd.f32 %v759, %v1245
      %1247 = vmatprep.mubr.bf16.mxu0 0
      %1248 = vmatmul.mubr.bf16.gmra.mrb[0].mxu0 %v1043
      %v1249 = vpop.f32.mrb[0].mxu0
      %v1250 = vadd.f32 %v755, %v1249
      %v1251 = vpop.f32.mrb[0].mxu0
      %v1252 = vadd.f32 %v759, %v1251
      %v1253 = vpop.f32.mrb[0].mxu0
      %v1254 = vadd.f32 %v755, %v1253
      %v1255 = vpop.f32.mrb[0].mxu0
      %v1256 = vadd.f32 %v759, %v1255
      %1257 = vdwg.mxu0
      %v1258 = vadd.f32 %v1167, %v1230
      %v1259 = vadd.f32 %v1171, %v1234
      %v1260 = vadd.f32 %v1177, %v1240
      %v1261 = vadd.f32 %v1181, %v1244
      %v1262 = vadd.f32 %v1187, %v1250
      %v1263 = vadd.f32 %v1191, %v1254
      %v1264 = vxor.u32 %v1258, 2147483648
      %v1265 = vxor.u32 %v1259, 2147483648
      %v1266 = vxor.u32 %v1260, 2147483648
      %v1267 = vxor.u32 %v1261, 2147483648
      %v1268 = vxor.u32 %v1262, 2147483648
      %v1269 = vxor.u32 %v1263, 2147483648
      %v1270 = vmul.f32 %v1264, 1.442695
      %v1271 = vpow.pop %v1270
      %v1272 = vmul.f32 %v1265, 1.442695
      %v1273 = vpow.pop %v1272
      %v1274 = vmul.f32 %v1266, 1.442695
      %v1275 = vpow.pop %v1274
      %v1276 = vmul.f32 %v1267, 1.442695
      %v1277 = vpow.pop %v1276
      %v1278 = vmul.f32 %v1268, 1.442695
      %v1279 = vpow.pop %v1278
      %v1280 = vmul.f32 %v1269, 1.442695
      %v1281 = vpow.pop %v1280
      %v1282 = vadd.f32 %v1271, 1.0
      %v1283 = vadd.f32 %v1273, 1.0
      %v1284 = vadd.f32 %v1275, 1.0
      %v1285 = vadd.f32 %v1277, 1.0
      %v1286 = vadd.f32 %v1279, 1.0
      %v1287 = vadd.f32 %v1281, 1.0
      %v1288 = vrcp.pop %v1282
      %v1289 = vmul.f32 1.0, %v1288
      %v1290 = vrcp.pop %v1283
      %v1291 = vmul.f32 1.0, %v1290
      %v1292 = vrcp.pop %v1284
      %v1293 = vmul.f32 1.0, %v1292
      %v1294 = vrcp.pop %v1285
      %v1295 = vmul.f32 1.0, %v1294
      %v1296 = vrcp.pop %v1286
      %v1297 = vmul.f32 1.0, %v1296
      %v1298 = vrcp.pop %v1287
      %v1299 = vmul.f32 1.0, %v1298
      %v1300 = vmul.f32 %v1289, %v1232
      %v1301 = vmul.f32 %v1291, %v1236
      %v1302 = vmul.f32 %v1293, %v1242
      %v1303 = vmul.f32 %v1295, %v1246
      %v1304 = vmul.f32 %v1297, %v1252
      %v1305 = vmul.f32 %v1299, %v1256
      %v1306 = vadd.f32 %v1169, %v1300
      %v1307 = vadd.f32 %v1173, %v1301
      %v1308 = vadd.f32 %v1179, %v1302
      %v1309 = vadd.f32 %v1183, %v1303
      %v1310 = vadd.f32 %v1189, %v1304
      %v1311 = vadd.f32 %v1193, %v1305
      %v1312 = vtanh.pop %v1306
      %v1313 = vtanh.pop %v1307
      %v1314 = vtanh.pop %v1308
      %v1315 = vtanh.pop %v1309
      %v1316 = vtanh.pop %v1310
      %v1317 = vtanh.pop %v1311
      %v1318 = vsub.f32 1.0, %v1289
      %v1319 = vsub.f32 1.0, %v1291
      %v1320 = vsub.f32 1.0, %v1293
      %v1321 = vsub.f32 1.0, %v1295
      %v1322 = vsub.f32 1.0, %v1297
      %v1323 = vsub.f32 1.0, %v1299
      %1330 = vrot.lane.b32.xlu0 %v1312, 64
      %v1331 = vpop.permute.xlu0 %1330
      %1332 = vrot.lane.b32.xlu0 %v1313, 64
      %v1333 = vpop.permute.xlu0 %1332
      %1334 = vrot.lane.b32.xlu0 %v1314, 64
      %v1335 = vpop.permute.xlu0 %1334
      %1336 = vrot.lane.b32.xlu0 %v1315, 64
      %v1337 = vpop.permute.xlu0 %1336
      %1338 = vrot.lane.b32.xlu0 %v1316, 64
      %v1339 = vpop.permute.xlu0 %1338
      %1340 = vrot.lane.b32.xlu0 %v1317, 64
      %v1341 = vpop.permute.xlu0 %1340
      %v1348 = vmul.f32 %v1318, %v1331
      %v1349 = vmul.f32 %v1319, %v1333
      %v1350 = vmul.f32 %v1320, %v1335
      %v1351 = vmul.f32 %v1321, %v1337
      %v1352 = vmul.f32 %v1322, %v1339
      %v1353 = vmul.f32 %v1323, %v1341
      %1360 = vrot.lane.b32.xlu0 %v607, 64
      %v1361 = vpop.permute.xlu0 %1360
      %1362 = vrot.lane.b32.xlu0 %v610, 64
      %v1363 = vpop.permute.xlu0 %1362
      %1364 = vrot.lane.b32.xlu0 %v615, 64
      %v1365 = vpop.permute.xlu0 %1364
      %1366 = vrot.lane.b32.xlu0 %v618, 64
      %v1367 = vpop.permute.xlu0 %1366
      %1368 = vrot.lane.b32.xlu0 %v623, 64
      %v1369 = vpop.permute.xlu0 %1368
      %1370 = vrot.lane.b32.xlu0 %v626, 64
      %v1371 = vpop.permute.xlu0 %1370
      %v1378 = vmul.f32 %v1289, %v1361
      %v1379 = vmul.f32 %v1291, %v1363
      %v1380 = vmul.f32 %v1293, %v1365
      %v1381 = vmul.f32 %v1295, %v1367
      %v1382 = vmul.f32 %v1297, %v1369
      %v1383 = vmul.f32 %v1299, %v1371
      %v1384 = vadd.f32 %v1348, %v1378
      %v1385 = vadd.f32 %v1349, %v1379
      %v1386 = vadd.f32 %v1350, %v1380
      %v1387 = vadd.f32 %v1351, %v1381
      %v1388 = vadd.f32 %v1352, %v1382
      %v1389 = vadd.f32 %v1353, %v1383
      %v1390 = vpack.c.bf16 %v1385, %v1384
      %v1391 = vpack.c.bf16 %v1387, %v1386
      %v1392 = vpack.c.bf16 %v1389, %v1388
      %1396 = vrot.lane.b32.xlu0 %v1390, 64
      %v1397 = vpop.permute.xlu0 %1396
      %1398 = vrot.lane.b32.xlu0 %v1391, 64
      %v1399 = vpop.permute.xlu0 %1398
      %1400 = vrot.lane.b32.xlu0 %v1392, 64
      %v1401 = vpop.permute.xlu0 %1400
      %1405 = vmatprep.subr.bf16.mxu0 0
      %1406 = vmatpush1.bf16.msra.mxu0 %v1397
      %1407 = vmatprep.subr.bf16.mxu0 0
      %1408 = vmatpush1.bf16.msra.mxu0 %v1399
      %1409 = vmatprep.subr.bf16.mxu0 0
      %1410 = vmatpush1.bf16.msra.mxu0 %v1401
      %1411 = vmatprep.subr.bf16.mxu0 0
      %1412 = vmatpush1.bf16.msra.mxu0 0
      %1413 = vmatprep.subr.bf16.mxu0 0
      %1414 = vmatpush1.bf16.msra.mxu0 0
      %1415 = vmatprep.subr.bf16.mxu0 0
      %1416 = vmatpush1.bf16.msra.mxu0 0
      %1417 = vmatprep.subr.bf16.mxu0 0
      %1418 = vmatpush1.bf16.msra.mxu0 0
      %1419 = vmatprep.subr.bf16.mxu0 0
      %1420 = vmatpush1.bf16.msra.mxu0 0
      %1421 = vmatprep.subr.bf16.mxu0 0
      %1422 = vmatpush1.bf16.msra.mxu0 0
      %1423 = vmatprep.subr.bf16.mxu0 0
      %1424 = vmatpush1.bf16.msra.mxu0 0
      %1425 = vmatprep.subr.bf16.mxu0 0
      %1426 = vmatpush1.bf16.msra.mxu0 0
      %1427 = vmatprep.subr.bf16.mxu0 0
      %1428 = vmatpush1.bf16.msra.mxu0 0
      %1429 = vmatprep.subr.bf16.mxu0 0
      %1430 = vmatpush1.bf16.msra.mxu0 0
      %1431 = vmatprep.subr.bf16.mxu0 0
      %1432 = vmatpush1.bf16.msra.mxu0 0
      %1433 = vmatprep.subr.bf16.mxu0 0
      %1434 = vmatpush1.bf16.msra.mxu0 0
      %1435 = vmatprep.subr.bf16.mxu0 0
      %1436 = vmatpush1.bf16.msra.mxu0 0
      %1437 = vmatprep.mubr.bf16.mxu0 0
      %1438 = vmatmul.mubr.bf16.gmra.mrb[0].mxu0 %v767
      %v1439 = vpop.f32.mrb[0].mxu0
      %v1440 = vadd.f32 0.0, %v1439
      %v1441 = vpop.f32.mrb[0].mxu0
      %v1442 = vpop.f32.mrb[0].mxu0
      %v1443 = vadd.f32 0.0, %v1442
      %v1444 = vpop.f32.mrb[0].mxu0
      %1445 = vmatprep.mubr.bf16.mxu0 0
      %1446 = vmatmul.mubr.bf16.gmra.mrb[0].mxu0 %v770
      %v1447 = vpop.f32.mrb[0].mxu0
      %v1448 = vadd.f32 0.0, %v1447
      %v1449 = vpop.f32.mrb[0].mxu0
      %v1450 = vpop.f32.mrb[0].mxu0
      %v1451 = vadd.f32 0.0, %v1450
      %v1452 = vpop.f32.mrb[0].mxu0
      %1453 = vmatprep.mubr.bf16.mxu0 0
      %1454 = vmatmul.mubr.bf16.gmra.mrb[0].mxu0 %v773
      %v1455 = vpop.f32.mrb[0].mxu0
      %v1456 = vadd.f32 0.0, %v1455
      %v1457 = vpop.f32.mrb[0].mxu0
      %v1458 = vpop.f32.mrb[0].mxu0
      %v1459 = vadd.f32 0.0, %v1458
      %v1460 = vpop.f32.mrb[0].mxu0
      %1461 = vdwg.mxu0
      %1462 = vmatprep.subr.bf16.mxu0 0
      %1463 = vmatpush1.bf16.msra.mxu0 %v1397
      %1464 = vmatprep.subr.bf16.mxu0 0
      %1465 = vmatpush1.bf16.msra.mxu0 %v1399
      %1466 = vmatprep.subr.bf16.mxu0 0
      %1467 = vmatpush1.bf16.msra.mxu0 %v1401
      %1468 = vmatprep.subr.bf16.mxu0 0
      %1469 = vmatpush1.bf16.msra.mxu0 0
      %1470 = vmatprep.subr.bf16.mxu0 0
      %1471 = vmatpush1.bf16.msra.mxu0 0
      %1472 = vmatprep.subr.bf16.mxu0 0
      %1473 = vmatpush1.bf16.msra.mxu0 0
      %1474 = vmatprep.subr.bf16.mxu0 0
      %1475 = vmatpush1.bf16.msra.mxu0 0
      %1476 = vmatprep.subr.bf16.mxu0 0
      %1477 = vmatpush1.bf16.msra.mxu0 0
      %1478 = vmatprep.subr.bf16.mxu0 0
      %1479 = vmatpush1.bf16.msra.mxu0 0
      %1480 = vmatprep.subr.bf16.mxu0 0
      %1481 = vmatpush1.bf16.msra.mxu0 0
      %1482 = vmatprep.subr.bf16.mxu0 0
      %1483 = vmatpush1.bf16.msra.mxu0 0
      %1484 = vmatprep.subr.bf16.mxu0 0
      %1485 = vmatpush1.bf16.msra.mxu0 0
      %1486 = vmatprep.subr.bf16.mxu0 0
      %1487 = vmatpush1.bf16.msra.mxu0 0
      %1488 = vmatprep.subr.bf16.mxu0 0
      %1489 = vmatpush1.bf16.msra.mxu0 0
      %1490 = vmatprep.subr.bf16.mxu0 0
      %1491 = vmatpush1.bf16.msra.mxu0 0
      %1492 = vmatprep.subr.bf16.mxu0 0
      %1493 = vmatpush1.bf16.msra.mxu0 0
      %1494 = vmatprep.mubr.bf16.mxu0 0
      %1495 = vmatmul.mubr.bf16.gmra.mrb[0].mxu0 %v833
      %v1496 = vpop.f32.mrb[0].mxu0
      %v1497 = vadd.f32 0.0, %v1496
      %v1498 = vpop.f32.mrb[0].mxu0
      %v1499 = vpop.f32.mrb[0].mxu0
      %v1500 = vadd.f32 0.0, %v1499
      %v1501 = vpop.f32.mrb[0].mxu0
      %1502 = vmatprep.mubr.bf16.mxu0 0
      %1503 = vmatmul.mubr.bf16.gmra.mrb[0].mxu0 %v836
      %v1504 = vpop.f32.mrb[0].mxu0
      %v1505 = vadd.f32 0.0, %v1504
      %v1506 = vpop.f32.mrb[0].mxu0
      %v1507 = vpop.f32.mrb[0].mxu0
      %v1508 = vadd.f32 0.0, %v1507
      %v1509 = vpop.f32.mrb[0].mxu0
      %1510 = vmatprep.mubr.bf16.mxu0 0
      %1511 = vmatmul.mubr.bf16.gmra.mrb[0].mxu0 %v839
      %v1512 = vpop.f32.mrb[0].mxu0
      %v1513 = vadd.f32 0.0, %v1512
      %v1514 = vpop.f32.mrb[0].mxu0
      %v1515 = vpop.f32.mrb[0].mxu0
      %v1516 = vadd.f32 0.0, %v1515
      %v1517 = vpop.f32.mrb[0].mxu0
      %1518 = vdwg.mxu0
      %v1519 = vpack.c.bf16 %v1443, %v1440
      %v1520 = vpack.c.bf16 %v1451, %v1448
      %v1521 = vpack.c.bf16 %v1459, %v1456
      %v1522 = vpack.c.bf16 %v1500, %v1497
      %v1523 = vpack.c.bf16 %v1508, %v1505
      %v1524 = vpack.c.bf16 %v1516, %v1513
      %v1526 = vsel %vm562, %v1522, 0
      %v1529 = vsel %vm562, %v1523, 0
      %v1532 = vsel %vm562, %v1524, 0
      %1534 = vmatprep.subr.bf16.mxu0 0
      %1535 = vmatpush1.bf16.msra.mxu0 %v675
      %1536 = vmatprep.subr.bf16.mxu0 0
      %1537 = vmatpush1.bf16.msra.mxu0 %v676
      %1538 = vmatprep.subr.bf16.mxu0 0
      %1539 = vmatpush1.bf16.msra.mxu0 %v677
      %1540 = vmatprep.subr.bf16.mxu0 0
      %1541 = vmatpush1.bf16.msra.mxu0 %v678
      %1542 = vmatprep.subr.bf16.mxu0 0
      %1543 = vmatpush1.bf16.msra.mxu0 0
      %1544 = vmatprep.subr.bf16.mxu0 0
      %1545 = vmatpush1.bf16.msra.mxu0 0
      %1546 = vmatprep.subr.bf16.mxu0 0
      %1547 = vmatpush1.bf16.msra.mxu0 0
      %1548 = vmatprep.subr.bf16.mxu0 0
      %1549 = vmatpush1.bf16.msra.mxu0 0
      %1550 = vmatprep.subr.bf16.mxu0 0
      %1551 = vmatpush1.bf16.msra.mxu0 0
      %1552 = vmatprep.subr.bf16.mxu0 0
      %1553 = vmatpush1.bf16.msra.mxu0 0
      %1554 = vmatprep.subr.bf16.mxu0 0
      %1555 = vmatpush1.bf16.msra.mxu0 0
      %1556 = vmatprep.subr.bf16.mxu0 0
      %1557 = vmatpush1.bf16.msra.mxu0 0
      %1558 = vmatprep.subr.bf16.mxu0 0
      %1559 = vmatpush1.bf16.msra.mxu0 0
      %1560 = vmatprep.subr.bf16.mxu0 0
      %1561 = vmatpush1.bf16.msra.mxu0 0
      %1562 = vmatprep.subr.bf16.mxu0 0
      %1563 = vmatpush1.bf16.msra.mxu0 0
      %1564 = vmatprep.subr.bf16.mxu0 0
      %1565 = vmatpush1.bf16.msra.mxu0 0
      %1566 = vmatprep.mubr.bf16.mxu0 0
      %1567 = vmatmul.mubr.bf16.gmra.mrb[0].mxu0 %v1526
      %v1568 = vpop.f32.mrb[0].mxu0
      %v1569 = vadd.f32 0.0, %v1568
      %v1570 = vpop.f32.mrb[0].mxu0
      %v1571 = vpop.f32.mrb[0].mxu0
      %v1572 = vadd.f32 0.0, %v1571
      %v1573 = vpop.f32.mrb[0].mxu0
      %1574 = vmatprep.mubr.bf16.mxu0 0
      %1575 = vmatmul.mubr.bf16.gmra.mrb[0].mxu0 %v1529
      %v1576 = vpop.f32.mrb[0].mxu0
      %v1577 = vadd.f32 0.0, %v1576
      %v1578 = vpop.f32.mrb[0].mxu0
      %v1579 = vpop.f32.mrb[0].mxu0
      %v1580 = vadd.f32 0.0, %v1579
      %v1581 = vpop.f32.mrb[0].mxu0
      %1582 = vmatprep.mubr.bf16.mxu0 0
      %1583 = vmatmul.mubr.bf16.gmra.mrb[0].mxu0 %v1532
      %v1584 = vpop.f32.mrb[0].mxu0
      %v1585 = vadd.f32 0.0, %v1584
      %v1586 = vpop.f32.mrb[0].mxu0
      %v1587 = vpop.f32.mrb[0].mxu0
      %v1588 = vadd.f32 0.0, %v1587
      %v1589 = vpop.f32.mrb[0].mxu0
      %1590 = vdwg.mxu0
      %v1592 = vsel %vm562, %v1519, 0
      %v1595 = vsel %vm562, %v1520, 0
      %v1598 = vsel %vm562, %v1521, 0
      %1600 = vmatprep.subr.bf16.mxu0 0
      %1601 = vmatpush1.bf16.msra.mxu0 %v671
      %1602 = vmatprep.subr.bf16.mxu0 0
      %1603 = vmatpush1.bf16.msra.mxu0 %v672
      %1604 = vmatprep.subr.bf16.mxu0 0
      %1605 = vmatpush1.bf16.msra.mxu0 %v673
      %1606 = vmatprep.subr.bf16.mxu0 0
      %1607 = vmatpush1.bf16.msra.mxu0 %v674
      %1608 = vmatprep.subr.bf16.mxu0 0
      %1609 = vmatpush1.bf16.msra.mxu0 0
      %1610 = vmatprep.subr.bf16.mxu0 0
      %1611 = vmatpush1.bf16.msra.mxu0 0
      %1612 = vmatprep.subr.bf16.mxu0 0
      %1613 = vmatpush1.bf16.msra.mxu0 0
      %1614 = vmatprep.subr.bf16.mxu0 0
      %1615 = vmatpush1.bf16.msra.mxu0 0
      %1616 = vmatprep.subr.bf16.mxu0 0
      %1617 = vmatpush1.bf16.msra.mxu0 0
      %1618 = vmatprep.subr.bf16.mxu0 0
      %1619 = vmatpush1.bf16.msra.mxu0 0
      %1620 = vmatprep.subr.bf16.mxu0 0
      %1621 = vmatpush1.bf16.msra.mxu0 0
      %1622 = vmatprep.subr.bf16.mxu0 0
      %1623 = vmatpush1.bf16.msra.mxu0 0
      %1624 = vmatprep.subr.bf16.mxu0 0
      %1625 = vmatpush1.bf16.msra.mxu0 0
      %1626 = vmatprep.subr.bf16.mxu0 0
      %1627 = vmatpush1.bf16.msra.mxu0 0
      %1628 = vmatprep.subr.bf16.mxu0 0
      %1629 = vmatpush1.bf16.msra.mxu0 0
      %1630 = vmatprep.subr.bf16.mxu0 0
      %1631 = vmatpush1.bf16.msra.mxu0 0
      %1632 = vmatprep.mubr.bf16.mxu0 0
      %1633 = vmatmul.mubr.bf16.gmra.mrb[0].mxu0 %v1592
      %v1634 = vpop.f32.mrb[0].mxu0
      %v1635 = vadd.f32 %v1569, %v1634
      %v1636 = vpop.f32.mrb[0].mxu0
      %v1637 = vpop.f32.mrb[0].mxu0
      %v1638 = vadd.f32 %v1572, %v1637
      %v1639 = vpop.f32.mrb[0].mxu0
      %1640 = vmatprep.mubr.bf16.mxu0 0
      %1641 = vmatmul.mubr.bf16.gmra.mrb[0].mxu0 %v1595
      %v1642 = vpop.f32.mrb[0].mxu0
      %v1643 = vadd.f32 %v1577, %v1642
      %v1644 = vpop.f32.mrb[0].mxu0
      %v1645 = vpop.f32.mrb[0].mxu0
      %v1646 = vadd.f32 %v1580, %v1645
      %v1647 = vpop.f32.mrb[0].mxu0
      %1648 = vmatprep.mubr.bf16.mxu0 0
      %1649 = vmatmul.mubr.bf16.gmra.mrb[0].mxu0 %v1598
      %v1650 = vpop.f32.mrb[0].mxu0
      %v1651 = vadd.f32 %v1585, %v1650
      %v1652 = vpop.f32.mrb[0].mxu0
      %v1653 = vpop.f32.mrb[0].mxu0
      %v1654 = vadd.f32 %v1588, %v1653
      %v1655 = vpop.f32.mrb[0].mxu0
      %1656 = vdwg.mxu0
      %v1658 = vsel %vm562, %v1397, 0
      %v1661 = vsel %vm562, %v1399, 0
      %v1664 = vsel %vm562, %v1401, 0
      %1666 = vmatprep.subr.bf16.mxu0 0
      %1667 = vmatpush1.bf16.msra.mxu0 %v679
      %1668 = vmatprep.subr.bf16.mxu0 0
      %1669 = vmatpush1.bf16.msra.mxu0 %v680
      %1670 = vmatprep.subr.bf16.mxu0 0
      %1671 = vmatpush1.bf16.msra.mxu0 %v681
      %1672 = vmatprep.subr.bf16.mxu0 0
      %1673 = vmatpush1.bf16.msra.mxu0 %v682
      %1674 = vmatprep.subr.bf16.mxu0 0
      %1675 = vmatpush1.bf16.msra.mxu0 0
      %1676 = vmatprep.subr.bf16.mxu0 0
      %1677 = vmatpush1.bf16.msra.mxu0 0
      %1678 = vmatprep.subr.bf16.mxu0 0
      %1679 = vmatpush1.bf16.msra.mxu0 0
      %1680 = vmatprep.subr.bf16.mxu0 0
      %1681 = vmatpush1.bf16.msra.mxu0 0
      %1682 = vmatprep.subr.bf16.mxu0 0
      %1683 = vmatpush1.bf16.msra.mxu0 0
      %1684 = vmatprep.subr.bf16.mxu0 0
      %1685 = vmatpush1.bf16.msra.mxu0 0
      %1686 = vmatprep.subr.bf16.mxu0 0
      %1687 = vmatpush1.bf16.msra.mxu0 0
      %1688 = vmatprep.subr.bf16.mxu0 0
      %1689 = vmatpush1.bf16.msra.mxu0 0
      %1690 = vmatprep.subr.bf16.mxu0 0
      %1691 = vmatpush1.bf16.msra.mxu0 0
      %1692 = vmatprep.subr.bf16.mxu0 0
      %1693 = vmatpush1.bf16.msra.mxu0 0
      %1694 = vmatprep.subr.bf16.mxu0 0
      %1695 = vmatpush1.bf16.msra.mxu0 0
      %1696 = vmatprep.subr.bf16.mxu0 0
      %1697 = vmatpush1.bf16.msra.mxu0 0
      %1698 = vmatprep.mubr.bf16.mxu0 0
      %1699 = vmatmul.mubr.bf16.gmra.mrb[0].mxu0 %v1658
      %v1700 = vpop.f32.mrb[0].mxu0
      %v1701 = vadd.f32 0.0, %v1700
      %v1702 = vpop.f32.mrb[0].mxu0
      %v1703 = vpop.f32.mrb[0].mxu0
      %v1704 = vadd.f32 0.0, %v1703
      %v1705 = vpop.f32.mrb[0].mxu0
      %1706 = vmatprep.mubr.bf16.mxu0 0
      %1707 = vmatmul.mubr.bf16.gmra.mrb[0].mxu0 %v1661
      %v1708 = vpop.f32.mrb[0].mxu0
      %v1709 = vadd.f32 0.0, %v1708
      %v1710 = vpop.f32.mrb[0].mxu0
      %v1711 = vpop.f32.mrb[0].mxu0
      %v1712 = vadd.f32 0.0, %v1711
      %v1713 = vpop.f32.mrb[0].mxu0
      %1714 = vmatprep.mubr.bf16.mxu0 0
      %1715 = vmatmul.mubr.bf16.gmra.mrb[0].mxu0 %v1664
      %v1716 = vpop.f32.mrb[0].mxu0
      %v1717 = vadd.f32 0.0, %v1716
      %v1718 = vpop.f32.mrb[0].mxu0
      %v1719 = vpop.f32.mrb[0].mxu0
      %v1720 = vadd.f32 0.0, %v1719
      %v1721 = vpop.f32.mrb[0].mxu0
      %1722 = vdwg.mxu0
      %v1723 = vadd.f32 %v1635, %v1701
      %v1724 = vadd.f32 %v1638, %v1704
      %v1725 = vadd.f32 %v1643, %v1709
      %v1726 = vadd.f32 %v1646, %v1712
      %v1727 = vadd.f32 %v1651, %v1717
      %v1728 = vadd.f32 %v1654, %v1720
      %v1729 = vadd.f32 %v1723, %v736
      %v1730 = vadd.f32 %v1724, %v736
      %v1731 = vadd.f32 %v1725, %v736
      %v1732 = vadd.f32 %v1726, %v736
      %v1733 = vadd.f32 %v1727, %v736
      %v1734 = vadd.f32 %v1728, %v736
      %v1735 = vmax.f32 %v1729, 0.0
      %v1736 = vmax.f32 %v1730, 0.0
      %v1737 = vmax.f32 %v1731, 0.0
      %v1738 = vmax.f32 %v1732, 0.0
      %v1739 = vmax.f32 %v1733, 0.0
      %v1740 = vmax.f32 %v1734, 0.0
      %v1741 = vpack.c.bf16 %v1736, %v1735
      %v1742 = vpack.c.bf16 %v1738, %v1737
      %v1743 = vpack.c.bf16 %v1740, %v1739
      %v1745 = vsel %vm562, %v1741, 0
      %v1748 = vsel %vm562, %v1742, 0
      %v1751 = vsel %vm562, %v1743, 0
      %1753 = vmatprep.subr.bf16.mxu0 %v700
      %1754 = vmatpush1.bf16.msra.mxu0 %v699
      %1755 = vmatprep.subr.bf16.mxu0 %v702
      %1756 = vmatpush1.bf16.msra.mxu0 %v701
      %1757 = vmatprep.subr.bf16.mxu0 %v704
      %1758 = vmatpush1.bf16.msra.mxu0 %v703
      %1759 = vmatprep.subr.bf16.mxu0 %v706
      %1760 = vmatpush1.bf16.msra.mxu0 %v705
      %1761 = vmatprep.subr.bf16.mxu0 0
      %1762 = vmatpush1.bf16.msra.mxu0 0
      %1763 = vmatprep.subr.bf16.mxu0 0
      %1764 = vmatpush1.bf16.msra.mxu0 0
      %1765 = vmatprep.subr.bf16.mxu0 0
      %1766 = vmatpush1.bf16.msra.mxu0 0
      %1767 = vmatprep.subr.bf16.mxu0 0
      %1768 = vmatpush1.bf16.msra.mxu0 0
      %1769 = vmatprep.subr.bf16.mxu0 0
      %1770 = vmatpush1.bf16.msra.mxu0 0
      %1771 = vmatprep.subr.bf16.mxu0 0
      %1772 = vmatpush1.bf16.msra.mxu0 0
      %1773 = vmatprep.subr.bf16.mxu0 0
      %1774 = vmatpush1.bf16.msra.mxu0 0
      %1775 = vmatprep.subr.bf16.mxu0 0
      %1776 = vmatpush1.bf16.msra.mxu0 0
      %1777 = vmatprep.subr.bf16.mxu0 0
      %1778 = vmatpush1.bf16.msra.mxu0 0
      %1779 = vmatprep.subr.bf16.mxu0 0
      %1780 = vmatpush1.bf16.msra.mxu0 0
      %1781 = vmatprep.subr.bf16.mxu0 0
      %1782 = vmatpush1.bf16.msra.mxu0 0
      %1783 = vmatprep.subr.bf16.mxu0 0
      %1784 = vmatpush1.bf16.msra.mxu0 0
      %1785 = vmatprep.mubr.bf16.mxu0 0
      %1786 = vmatmul.mubr.bf16.gmra.mrb[0].mxu0 %v1745
      %v1787 = vpop.f32.mrb[0].mxu0
      %v1788 = vadd.f32 %v743, %v1787
      %v1789 = vpop.f32.mrb[0].mxu0
      %v1790 = vadd.f32 %v747, %v1789
      %v1791 = vpop.f32.mrb[0].mxu0
      %v1792 = vadd.f32 %v743, %v1791
      %v1793 = vpop.f32.mrb[0].mxu0
      %v1794 = vadd.f32 %v747, %v1793
      %1795 = vmatprep.mubr.bf16.mxu0 0
      %1796 = vmatmul.mubr.bf16.gmra.mrb[0].mxu0 %v1748
      %v1797 = vpop.f32.mrb[0].mxu0
      %v1798 = vadd.f32 %v743, %v1797
      %v1799 = vpop.f32.mrb[0].mxu0
      %v1800 = vadd.f32 %v747, %v1799
      %v1801 = vpop.f32.mrb[0].mxu0
      %v1802 = vadd.f32 %v743, %v1801
      %v1803 = vpop.f32.mrb[0].mxu0
      %v1804 = vadd.f32 %v747, %v1803
      %1805 = vmatprep.mubr.bf16.mxu0 0
      %1806 = vmatmul.mubr.bf16.gmra.mrb[0].mxu0 %v1751
      %v1807 = vpop.f32.mrb[0].mxu0
      %v1808 = vadd.f32 %v743, %v1807
      %v1809 = vpop.f32.mrb[0].mxu0
      %v1810 = vadd.f32 %v747, %v1809
      %v1811 = vpop.f32.mrb[0].mxu0
      %v1812 = vadd.f32 %v743, %v1811
      %v1813 = vpop.f32.mrb[0].mxu0
      %v1814 = vadd.f32 %v747, %v1813
      %1815 = vdwg.mxu0
      %1816 = vmatprep.subr.bf16.mxu0 %v724
      %1817 = vmatpush1.bf16.msra.mxu0 %v723
      %1818 = vmatprep.subr.bf16.mxu0 %v726
      %1819 = vmatpush1.bf16.msra.mxu0 %v725
      %1820 = vmatprep.subr.bf16.mxu0 %v728
      %1821 = vmatpush1.bf16.msra.mxu0 %v727
      %1822 = vmatprep.subr.bf16.mxu0 %v730
      %1823 = vmatpush1.bf16.msra.mxu0 %v729
      %1824 = vmatprep.subr.bf16.mxu0 0
      %1825 = vmatpush1.bf16.msra.mxu0 0
      %1826 = vmatprep.subr.bf16.mxu0 0
      %1827 = vmatpush1.bf16.msra.mxu0 0
      %1828 = vmatprep.subr.bf16.mxu0 0
      %1829 = vmatpush1.bf16.msra.mxu0 0
      %1830 = vmatprep.subr.bf16.mxu0 0
      %1831 = vmatpush1.bf16.msra.mxu0 0
      %1832 = vmatprep.subr.bf16.mxu0 0
      %1833 = vmatpush1.bf16.msra.mxu0 0
      %1834 = vmatprep.subr.bf16.mxu0 0
      %1835 = vmatpush1.bf16.msra.mxu0 0
      %1836 = vmatprep.subr.bf16.mxu0 0
      %1837 = vmatpush1.bf16.msra.mxu0 0
      %1838 = vmatprep.subr.bf16.mxu0 0
      %1839 = vmatpush1.bf16.msra.mxu0 0
      %1840 = vmatprep.subr.bf16.mxu0 0
      %1841 = vmatpush1.bf16.msra.mxu0 0
      %1842 = vmatprep.subr.bf16.mxu0 0
      %1843 = vmatpush1.bf16.msra.mxu0 0
      %1844 = vmatprep.subr.bf16.mxu0 0
      %1845 = vmatpush1.bf16.msra.mxu0 0
      %1846 = vmatprep.subr.bf16.mxu0 0
      %1847 = vmatpush1.bf16.msra.mxu0 0
      %1848 = vmatprep.mubr.bf16.mxu0 0
      %1849 = vmatmul.mubr.bf16.gmra.mrb[0].mxu0 %v1658
      %v1850 = vpop.f32.mrb[0].mxu0
      %v1851 = vadd.f32 %v755, %v1850
      %v1852 = vpop.f32.mrb[0].mxu0
      %v1853 = vadd.f32 %v759, %v1852
      %v1854 = vpop.f32.mrb[0].mxu0
      %v1855 = vadd.f32 %v755, %v1854
      %v1856 = vpop.f32.mrb[0].mxu0
      %v1857 = vadd.f32 %v759, %v1856
      %1858 = vmatprep.mubr.bf16.mxu0 0
      %1859 = vmatmul.mubr.bf16.gmra.mrb[0].mxu0 %v1661
      %v1860 = vpop.f32.mrb[0].mxu0
      %v1861 = vadd.f32 %v755, %v1860
      %v1862 = vpop.f32.mrb[0].mxu0
      %v1863 = vadd.f32 %v759, %v1862
      %v1864 = vpop.f32.mrb[0].mxu0
      %v1865 = vadd.f32 %v755, %v1864
      %v1866 = vpop.f32.mrb[0].mxu0
      %v1867 = vadd.f32 %v759, %v1866
      %1868 = vmatprep.mubr.bf16.mxu0 0
      %1869 = vmatmul.mubr.bf16.gmra.mrb[0].mxu0 %v1664
      %v1870 = vpop.f32.mrb[0].mxu0
      %v1871 = vadd.f32 %v755, %v1870
      %v1872 = vpop.f32.mrb[0].mxu0
      %v1873 = vadd.f32 %v759, %v1872
      %v1874 = vpop.f32.mrb[0].mxu0
      %v1875 = vadd.f32 %v755, %v1874
      %v1876 = vpop.f32.mrb[0].mxu0
      %v1877 = vadd.f32 %v759, %v1876
      %1878 = vdwg.mxu0
      %v1879 = vadd.f32 %v1788, %v1851
      %v1880 = vadd.f32 %v1792, %v1855
      %v1881 = vadd.f32 %v1798, %v1861
      %v1882 = vadd.f32 %v1802, %v1865
      %v1883 = vadd.f32 %v1808, %v1871
      %v1884 = vadd.f32 %v1812, %v1875
      %v1885 = vxor.u32 %v1879, 2147483648
      %v1886 = vxor.u32 %v1880, 2147483648
      %v1887 = vxor.u32 %v1881, 2147483648
      %v1888 = vxor.u32 %v1882, 2147483648
      %v1889 = vxor.u32 %v1883, 2147483648
      %v1890 = vxor.u32 %v1884, 2147483648
      %v1891 = vmul.f32 %v1885, 1.442695
      %v1892 = vpow.pop %v1891
      %v1893 = vmul.f32 %v1886, 1.442695
      %v1894 = vpow.pop %v1893
      %v1895 = vmul.f32 %v1887, 1.442695
      %v1896 = vpow.pop %v1895
      %v1897 = vmul.f32 %v1888, 1.442695
      %v1898 = vpow.pop %v1897
      %v1899 = vmul.f32 %v1889, 1.442695
      %v1900 = vpow.pop %v1899
      %v1901 = vmul.f32 %v1890, 1.442695
      %v1902 = vpow.pop %v1901
      %v1903 = vadd.f32 %v1892, 1.0
      %v1904 = vadd.f32 %v1894, 1.0
      %v1905 = vadd.f32 %v1896, 1.0
      %v1906 = vadd.f32 %v1898, 1.0
      %v1907 = vadd.f32 %v1900, 1.0
      %v1908 = vadd.f32 %v1902, 1.0
      %v1909 = vrcp.pop %v1903
      %v1910 = vmul.f32 1.0, %v1909
      %v1911 = vrcp.pop %v1904
      %v1912 = vmul.f32 1.0, %v1911
      %v1913 = vrcp.pop %v1905
      %v1914 = vmul.f32 1.0, %v1913
      %v1915 = vrcp.pop %v1906
      %v1916 = vmul.f32 1.0, %v1915
      %v1917 = vrcp.pop %v1907
      %v1918 = vmul.f32 1.0, %v1917
      %v1919 = vrcp.pop %v1908
      %v1920 = vmul.f32 1.0, %v1919
      %v1921 = vmul.f32 %v1910, %v1853
      %v1922 = vmul.f32 %v1912, %v1857
      %v1923 = vmul.f32 %v1914, %v1863
      %v1924 = vmul.f32 %v1916, %v1867
      %v1925 = vmul.f32 %v1918, %v1873
      %v1926 = vmul.f32 %v1920, %v1877
      %v1927 = vadd.f32 %v1790, %v1921
      %v1928 = vadd.f32 %v1794, %v1922
      %v1929 = vadd.f32 %v1800, %v1923
      %v1930 = vadd.f32 %v1804, %v1924
      %v1931 = vadd.f32 %v1810, %v1925
      %v1932 = vadd.f32 %v1814, %v1926
      %v1933 = vtanh.pop %v1927
      %v1934 = vtanh.pop %v1928
      %v1935 = vtanh.pop %v1929
      %v1936 = vtanh.pop %v1930
      %v1937 = vtanh.pop %v1931
      %v1938 = vtanh.pop %v1932
      %v1939 = vsub.f32 1.0, %v1910
      %v1940 = vsub.f32 1.0, %v1912
      %v1941 = vsub.f32 1.0, %v1914
      %v1942 = vsub.f32 1.0, %v1916
      %v1943 = vsub.f32 1.0, %v1918
      %v1944 = vsub.f32 1.0, %v1920
      %1951 = vrot.lane.b32.xlu0 %v1933, 64
      %v1952 = vpop.permute.xlu0 %1951
      %1953 = vrot.lane.b32.xlu0 %v1934, 64
      %v1954 = vpop.permute.xlu0 %1953
      %1955 = vrot.lane.b32.xlu0 %v1935, 64
      %v1956 = vpop.permute.xlu0 %1955
      %1957 = vrot.lane.b32.xlu0 %v1936, 64
      %v1958 = vpop.permute.xlu0 %1957
      %1959 = vrot.lane.b32.xlu0 %v1937, 64
      %v1960 = vpop.permute.xlu0 %1959
      %1961 = vrot.lane.b32.xlu0 %v1938, 64
      %v1962 = vpop.permute.xlu0 %1961
      %v1969 = vmul.f32 %v1939, %v1952
      %v1970 = vmul.f32 %v1940, %v1954
      %v1971 = vmul.f32 %v1941, %v1956
      %v1972 = vmul.f32 %v1942, %v1958
      %v1973 = vmul.f32 %v1943, %v1960
      %v1974 = vmul.f32 %v1944, %v1962
      %v1975 = vmul.f32 %v1910, %v1384
      %v1976 = vmul.f32 %v1912, %v1385
      %v1977 = vmul.f32 %v1914, %v1386
      %v1978 = vmul.f32 %v1916, %v1387
      %v1979 = vmul.f32 %v1918, %v1388
      %v1980 = vmul.f32 %v1920, %v1389
      %v1981 = vadd.f32 %v1969, %v1975
      %v1982 = vadd.f32 %v1970, %v1976
      %v1983 = vadd.f32 %v1971, %v1977
      %v1984 = vadd.f32 %v1972, %v1978
      %v1985 = vadd.f32 %v1973, %v1979
      %v1986 = vadd.f32 %v1974, %v1980
      %1993 = vrot.lane.b32.xlu0 %v1981, 64
      %v1994 = vpop.permute.xlu0 %1993
      %1995 = vrot.lane.b32.xlu0 %v1982, 64
      %v1996 = vpop.permute.xlu0 %1995
      %1997 = vrot.lane.b32.xlu0 %v1983, 64
      %v1998 = vpop.permute.xlu0 %1997
      %1999 = vrot.lane.b32.xlu0 %v1984, 64
      %v2000 = vpop.permute.xlu0 %1999
      %2001 = vrot.lane.b32.xlu0 %v1985, 64
      %v2002 = vpop.permute.xlu0 %2001
      %2003 = vrot.lane.b32.xlu0 %v1986, 64
      %v2004 = vpop.permute.xlu0 %2003
      %2011 = vst.msk [vmem:[%s442] sm:$0xff] %vm562, %v1994
      %2012 = vst.msk [vmem:[%s442 + $0x8] sm:$0xff] %vm562, %v1996
      %2013 = vst.msk [vmem:[%s442 + $0x10] sm:$0xff] %vm562, %v1998
      %2014 = vst.msk [vmem:[%s442 + $0x18] sm:$0xff] %vm562, %v2000
      %2015 = vst.msk [vmem:[%s442 + $0x20] sm:$0xff] %vm562, %v2002
      %2016 = vst.msk [vmem:[%s442 + $0x28] sm:$0xff] %vm562, %v2004
      %s2017 = smul.u32 6, %s24
      %p2018 = scmp.lt.s32.totalorder %s2017, 11
      %s2019 = scalar_select %p2018, %s2017, 11
      %s2020 = smul.addr %s2019, 8
      %s2021 = scalar_lea.vmem %s13, %s2020
      // Predicated region
      $region73: #{unet_forward.3} parent=71 // pred_check
        %p2022 = pneg %p320
      $region74: #{unet_forward.3} parent=71 // pred_check_branch
        %2024 = sbr.rel (%p2022) target = $region76
      $region75: #{unet_forward.3} parent=71 // pred_region
        %s2025 = smul.u32 6, %s24
      $region76: #{unet_forward.3} parent=71 // pred_fallthru
        _
    $region72: #{unet_forward.3} parent=5 // pred_fallthru
      _
    %p2026 = scmp.le.s32.totalorder 2, %s19
    // Predicated region
    $region77: #{unet_forward.3} parent=5 // pred_check
      %p2027 = pneg %p2026
    $region78: #{unet_forward.3} parent=5 // pred_check_branch
      %2029 = sbr.rel (%p2027) target = $region80
    $region79: #{unet_forward.3} parent=5 // pred_region
      %s2030 = ssub.s32 %s19, 2
      // Predicated region
      $region81: #{unet_forward.3} parent=79 // pred_check
        %p2031 = pneg %p326
      $region82: #{unet_forward.3} parent=79 // pred_check_branch
        %2033 = sbr.rel (%p2031) target = $region84
      $region83: #{unet_forward.3} parent=79 // pred_region
        %s2034 = smul.u32 6, %s25
        %p2035 = scmp.lt.s32.totalorder %s2034, 11
        %s2036 = scalar_select %p2035, %s2034, 11
        %s2037 = smul.addr %s2036, 8
        %s2038 = scalar_lea.vmem %s13, %s2037
      $region84: #{unet_forward.3} parent=79 // pred_fallthru
        _
    $region80: #{unet_forward.3} parent=5 // pred_fallthru
      _
  $region6: #{unet_forward.3} parent=0 // loop_footer
    %s23 = sadd.s32 1, %s19
  $region7: #{unet_forward.3} parent=0 // loop_footer_branch
    %18 = sbr.rel target = $region3
  $region8: #{unet_forward.3} parent=0 // loop_exit
    _

// kernel: mul.147
$region0: #{mul.147}
  %s0 = inlined_call_operand.vmem [shape: f32[256], index: 0, kind: input, shape index: {}]
  %s1 = inlined_call_operand.vmem [shape: f32[16,16], index: 1, kind: output, shape index: {}]
  $region1: #{mul.147} parent=0
    #allocation0 [shape = 'u8[4096]{0}', space=vmem, size = 0x1000, scoped, tag = 'scoped mem for input reshape']
    %s3 = sshllo.u32 0, 2
    %v4 = vld [vmem:[%s0] sm:%s3]
    %5 = vst [vmem:[#allocation0] sm:%s3] %v4
    %v6 = vld [vmem:[#allocation0] sm:$0x3]
    %vm7 = vcmask 130048
    %8 = vst.msk [vmem:[%s1] ss:$8 sm:$0x3] %vm7, %v6
    %v9 = vld [vmem:[#allocation0] sm:$0x3]
    %10 = vrot.lane.b32.xlu0 %v9, 112
    %v11 = vpop.permute.xlu0 %10
    %vm12 = vcmask 130048
    %s13 = scalar_lea.vmem %s1, 1
    %14 = vst.msk [vmem:[%s13] ss:$8 sm:$0x3] %vm12, %v11
    %v15 = vld [vmem:[#allocation0] sm:$0x3]
    %16 = vrot.lane.b32.xlu0 %v15, 96
    %v17 = vpop.permute.xlu0 %16
    %vm18 = vcmask 130048
    %s19 = scalar_lea.vmem %s1, 2
    %20 = vst.msk [vmem:[%s19] ss:$8 sm:$0x3] %vm18, %v17
    %v21 = vld [vmem:[#allocation0] sm:$0x3]
    %22 = vrot.lane.b32.xlu0 %v21, 80
    %v23 = vpop.permute.xlu0 %22
    %vm24 = vcmask 130048
    %s25 = scalar_lea.vmem %s1, 3
    %26 = vst.msk [vmem:[%s25] ss:$8 sm:$0x3] %vm24, %v23
    %v27 = vld [vmem:[#allocation0] sm:$0x3]
    %28 = vrot.lane.b32.xlu0 %v27, 64
    %v29 = vpop.permute.xlu0 %28
    %vm30 = vcmask 130048
    %s31 = scalar_lea.vmem %s1, 4
    %32 = vst.msk [vmem:[%s31] ss:$8 sm:$0x3] %vm30, %v29
    %v33 = vld [vmem:[#allocation0] sm:$0x3]
    %34 = vrot.lane.b32.xlu0 %v33, 48
    %v35 = vpop.permute.xlu0 %34
    %vm36 = vcmask 130048
    %s37 = scalar_lea.vmem %s1, 5
    %38 = vst.msk [vmem:[%s37] ss:$8 sm:$0x3] %vm36, %v35
    %v39 = vld [vmem:[#allocation0] sm:$0x3]
    %40 = vrot.lane.b32.xlu0 %v39, 32
    %v41 = vpop.permute.xlu0 %40
    %vm42 = vcmask 130048
    %s43 = scalar_lea.vmem %s1, 6
    %44 = vst.msk [vmem:[%s43] ss:$8 sm:$0x3] %vm42, %v41
    %v45 = vld [vmem:[#allocation0] sm:$0x3]
    %46 = vrot.lane.b32.xlu0 %v45, 16
    %v47 = vpop.permute.xlu0 %46
    %vm48 = vcmask 130048
    %s49 = scalar_lea.vmem %s1, 7
    %50 = vst.msk [vmem:[%s49] ss:$8 sm:$0x3] %vm48, %v47

// kernel: unet_forward.4
$region0: #{unet_forward.4}
  #allocation0 [shape = 'u32[]', space=smem, size = 0x4, offset = 0x4, fixed_abs, tag = 'smem constant byte address 0x4 - core index']
  #allocation1 [shape = 'u32[144,128]{1,0:T(1,128)}', space=vmem, size = 0x12000, scoped, tag = 'internal scratch']
  %s0 = inlined_call_operand.vmem [shape: f32[48,32], index: 0, kind: input, shape index: {}]
  %s1 = inlined_call_operand.vmem [shape: f32[24,24], index: 1, kind: input, shape index: {}]
  %s2 = inlined_call_operand.vmem [shape: f32[24,24], index: 2, kind: input, shape index: {}]
  %s3 = inlined_call_operand.vmem [shape: f32[32,64], index: 3, kind: input, shape index: {}]
  %s4 = inlined_call_operand.vmem [shape: f32[1,64], index: 4, kind: input, shape index: {}]
  %s5 = inlined_call_operand.vmem [shape: f32[64,64], index: 5, kind: input, shape index: {}]
  %s6 = inlined_call_operand.vmem [shape: f32[1,64], index: 6, kind: input, shape index: {}]
  %s7 = inlined_call_operand.vmem [shape: f32[192,64], index: 7, kind: input, shape index: {}]
  %s8 = inlined_call_operand.vmem [shape: f32[1,64], index: 8, kind: input, shape index: {}]
  %s9 = inlined_call_operand.vmem [shape: f32[64,192], index: 9, kind: input, shape index: {}]
  %s10 = inlined_call_operand.vmem [shape: f32[1,192], index: 10, kind: input, shape index: {}]
  %s11 = inlined_call_operand.vmem [shape: f32[64,192], index: 11, kind: input, shape index: {}]
  %s12 = inlined_call_operand.vmem [shape: f32[1,192], index: 12, kind: input, shape index: {}]
  %s13 = inlined_call_operand.vmem [shape: f32[64,128], index: 13, kind: input, shape index: {}]
  %s14 = inlined_call_operand.vmem [shape: f32[1,128], index: 14, kind: input, shape index: {}]
  %s15 = inlined_call_operand.vmem [shape: f32[48,128], index: 15, kind: output, shape index: {}]
  %s16 = sld [smem:[#allocation0]]
  $region93: #{unet_forward.4} parent=0
    _
  %s18 = ssub.s32 1, %s16
  %s19 = scalar_select 0, %s18, %s16
  loop: start=0, step=1, limit=4
  $region2: #{unet_forward.4} parent=0 // loop_pre_header
    _
  $region3: #{unet_forward.4} parent=0 // loop_header
    %s21 = sphi 0, %s25
    %p22 = scmp.ge.s32.totalorder %s21, 4
    %s31 = sphi 0, %s33
    %s34 = sphi 0, %s31
    %s35 = sphi 0, %s34
    %s51 = sphi 0, %s35
    %s55 = sphi 0, %s55
    %s57 = sphi 0, %s55
    %s58 = sphi 0, %s57
    %s72 = sphi 0, %s58
    %s76 = sphi 0, %s76
    %s78 = sphi 0, %s76
    %s79 = sphi 0, %s78
    %s93 = sphi 0, %s79
    %s97 = sphi 0, %s97
    %s99 = sphi 0, %s97
    %s100 = sphi 0, %s99
    %s114 = sphi 0, %s100
    %s118 = sphi 0, %s118
    %s120 = sphi 0, %s118
    %s121 = sphi 0, %s120
    %s135 = sphi 0, %s121
    %s139 = sphi 0, %s139
    %s141 = sphi 0, %s139
    %s142 = sphi 0, %s141
    %s156 = sphi 0, %s142
    %s160 = sphi 0, %s160
    %s162 = sphi 0, %s160
    %s163 = sphi 0, %s162
    %s177 = sphi 0, %s163
    %s181 = sphi 0, %s181
    %s183 = sphi 0, %s181
    %s184 = sphi 0, %s183
    %s198 = sphi 0, %s184
    %s202 = sphi 0, %s202
    %s204 = sphi 0, %s202
    %s205 = sphi 0, %s204
    %s219 = sphi 0, %s205
    %s223 = sphi 0, %s223
    %s225 = sphi 0, %s223
    %s226 = sphi 0, %s225
    %s240 = sphi 0, %s226
    %s244 = sphi 0, %s244
    %s246 = sphi 0, %s244
    %s247 = sphi 0, %s246
    %s261 = sphi 0, %s247
    %s265 = sphi 0, %s265
    %s267 = sphi 0, %s265
    %s268 = sphi 0, %s267
    %s282 = sphi 0, %s268
    %s286 = sphi 0, %s286
    %s288 = sphi 0, %s286
    %s289 = sphi 0, %s288
    %s303 = sphi 0, %s289
    %s307 = sphi 0, %s307
    %s309 = sphi 0, %s307
    %s310 = sphi 0, %s309
    %s324 = sphi 0, %s310
    %s328 = sphi 0, %s328
    %s330 = sphi 0, %s328
    %s331 = sphi 0, %s330
    %s345 = sphi 0, %s331
    %s351 = sphi 0, %s353
    %s354 = sphi 0, %s351
    %s355 = sphi 0, %s354
    %s371 = sphi 0, %s355
  $region4: #{unet_forward.4} parent=0 // loop_header_branch
    %24 = sbr.rel (%p22) target = $region8
  $region5: #{unet_forward.4} parent=0 // loop_body
    %s26 = ssub.s32 %s21, 1
    %s27 = ssub.s32 %s21, 2
    %s28 = sadd.s32 %s21, 1
    %s29 = ssub.s32 %s21, %s28
    %p30 = scmp.eq.s32.totalorder %s29, 0
    %s32 = sadd.s32 %s31, 1
    %s33 = scalar_select %p30, %s31, %s32
    %p36 = pneg %p30
    %p37 = scmp.eq.s32.totalorder %s21, 1
    %p38 = por %p36, %p37
    %p39 = scmp.ne.s32.totalorder %s31, %s34
    %p40 = scmp.eq.s32.totalorder %s21, 0
    %p41 = por %p39, %p40
    %p42 = scmp.ne.s32.totalorder %s31, %s34
    %p43 = scmp.eq.s32.totalorder %s26, 1
    %p44 = por %p42, %p43
    %p45 = scmp.ne.s32.totalorder %s34, %s35
    %p46 = scmp.eq.s32.totalorder %s26, 0
    %p47 = por %p45, %p46
    %p48 = scmp.ne.s32.totalorder %s34, %s35
    %p49 = scmp.eq.s32.totalorder %s27, 1
    %p50 = por %p48, %p49
    %p52 = scmp.ne.s32.totalorder %s35, %s51
    %p53 = scmp.eq.s32.totalorder %s27, 0
    %p54 = por %p52, %p53
    %s56 = sadd.s32 %s55, 1
    %p59 = scmp.eq.s32.totalorder %s21, 1
    %p60 = scmp.ne.s32.totalorder %s55, %s57
    %p61 = scmp.eq.s32.totalorder %s21, 0
    %p62 = por %p60, %p61
    %p63 = scmp.ne.s32.totalorder %s55, %s57
    %p64 = scmp.eq.s32.totalorder %s26, 1
    %p65 = por %p63, %p64
    %p66 = scmp.ne.s32.totalorder %s57, %s58
    %p67 = scmp.eq.s32.totalorder %s26, 0
    %p68 = por %p66, %p67
    %p69 = scmp.ne.s32.totalorder %s57, %s58
    %p70 = scmp.eq.s32.totalorder %s27, 1
    %p71 = por %p69, %p70
    %p73 = scmp.ne.s32.totalorder %s58, %s72
    %p74 = scmp.eq.s32.totalorder %s27, 0
    %p75 = por %p73, %p74
    %s77 = sadd.s32 %s76, 1
    %p80 = scmp.eq.s32.totalorder %s21, 1
    %p81 = scmp.ne.s32.totalorder %s76, %s78
    %p82 = scmp.eq.s32.totalorder %s21, 0
    %p83 = por %p81, %p82
    %p84 = scmp.ne.s32.totalorder %s76, %s78
    %p85 = scmp.eq.s32.totalorder %s26, 1
    %p86 = por %p84, %p85
    %p87 = scmp.ne.s32.totalorder %s78, %s79
    %p88 = scmp.eq.s32.totalorder %s26, 0
    %p89 = por %p87, %p88
    %p90 = scmp.ne.s32.totalorder %s78, %s79
    %p91 = scmp.eq.s32.totalorder %s27, 1
    %p92 = por %p90, %p91
    %p94 = scmp.ne.s32.totalorder %s79, %s93
    %p95 = scmp.eq.s32.totalorder %s27, 0
    %p96 = por %p94, %p95
    %s98 = sadd.s32 %s97, 1
    %p101 = scmp.eq.s32.totalorder %s21, 1
    %p102 = scmp.ne.s32.totalorder %s97, %s99
    %p103 = scmp.eq.s32.totalorder %s21, 0
    %p104 = por %p102, %p103
    %p105 = scmp.ne.s32.totalorder %s97, %s99
    %p106 = scmp.eq.s32.totalorder %s26, 1
    %p107 = por %p105, %p106
    %p108 = scmp.ne.s32.totalorder %s99, %s100
    %p109 = scmp.eq.s32.totalorder %s26, 0
    %p110 = por %p108, %p109
    %p111 = scmp.ne.s32.totalorder %s99, %s100
    %p112 = scmp.eq.s32.totalorder %s27, 1
    %p113 = por %p111, %p112
    %p115 = scmp.ne.s32.totalorder %s100, %s114
    %p116 = scmp.eq.s32.totalorder %s27, 0
    %p117 = por %p115, %p116
    %s119 = sadd.s32 %s118, 1
    %p122 = scmp.eq.s32.totalorder %s21, 1
    %p123 = scmp.ne.s32.totalorder %s118, %s120
    %p124 = scmp.eq.s32.totalorder %s21, 0
    %p125 = por %p123, %p124
    %p126 = scmp.ne.s32.totalorder %s118, %s120
    %p127 = scmp.eq.s32.totalorder %s26, 1
    %p128 = por %p126, %p127
    %p129 = scmp.ne.s32.totalorder %s120, %s121
    %p130 = scmp.eq.s32.totalorder %s26, 0
    %p131 = por %p129, %p130
    %p132 = scmp.ne.s32.totalorder %s120, %s121
    %p133 = scmp.eq.s32.totalorder %s27, 1
    %p134 = por %p132, %p133
    %p136 = scmp.ne.s32.totalorder %s121, %s135
    %p137 = scmp.eq.s32.totalorder %s27, 0
    %p138 = por %p136, %p137
    %s140 = sadd.s32 %s139, 1
    %p143 = scmp.eq.s32.totalorder %s21, 1
    %p144 = scmp.ne.s32.totalorder %s139, %s141
    %p145 = scmp.eq.s32.totalorder %s21, 0
    %p146 = por %p144, %p145
    %p147 = scmp.ne.s32.totalorder %s139, %s141
    %p148 = scmp.eq.s32.totalorder %s26, 1
    %p149 = por %p147, %p148
    %p150 = scmp.ne.s32.totalorder %s141, %s142
    %p151 = scmp.eq.s32.totalorder %s26, 0
    %p152 = por %p150, %p151
    %p153 = scmp.ne.s32.totalorder %s141, %s142
    %p154 = scmp.eq.s32.totalorder %s27, 1
    %p155 = por %p153, %p154
    %p157 = scmp.ne.s32.totalorder %s142, %s156
    %p158 = scmp.eq.s32.totalorder %s27, 0
    %p159 = por %p157, %p158
    %s161 = sadd.s32 %s160, 1
    %p164 = scmp.eq.s32.totalorder %s21, 1
    %p165 = scmp.ne.s32.totalorder %s160, %s162
    %p166 = scmp.eq.s32.totalorder %s21, 0
    %p167 = por %p165, %p166
    %p168 = scmp.ne.s32.totalorder %s160, %s162
    %p169 = scmp.eq.s32.totalorder %s26, 1
    %p170 = por %p168, %p169
    %p171 = scmp.ne.s32.totalorder %s162, %s163
    %p172 = scmp.eq.s32.totalorder %s26, 0
    %p173 = por %p171, %p172
    %p174 = scmp.ne.s32.totalorder %s162, %s163
    %p175 = scmp.eq.s32.totalorder %s27, 1
    %p176 = por %p174, %p175
    %p178 = scmp.ne.s32.totalorder %s163, %s177
    %p179 = scmp.eq.s32.totalorder %s27, 0
    %p180 = por %p178, %p179
    %s182 = sadd.s32 %s181, 1
    %p185 = scmp.eq.s32.totalorder %s21, 1
    %p186 = scmp.ne.s32.totalorder %s181, %s183
    %p187 = scmp.eq.s32.totalorder %s21, 0
    %p188 = por %p186, %p187
    %p189 = scmp.ne.s32.totalorder %s181, %s183
    %p190 = scmp.eq.s32.totalorder %s26, 1
    %p191 = por %p189, %p190
    %p192 = scmp.ne.s32.totalorder %s183, %s184
    %p193 = scmp.eq.s32.totalorder %s26, 0
    %p194 = por %p192, %p193
    %p195 = scmp.ne.s32.totalorder %s183, %s184
    %p196 = scmp.eq.s32.totalorder %s27, 1
    %p197 = por %p195, %p196
    %p199 = scmp.ne.s32.totalorder %s184, %s198
    %p200 = scmp.eq.s32.totalorder %s27, 0
    %p201 = por %p199, %p200
    %s203 = sadd.s32 %s202, 1
    %p206 = scmp.eq.s32.totalorder %s21, 1
    %p207 = scmp.ne.s32.totalorder %s202, %s204
    %p208 = scmp.eq.s32.totalorder %s21, 0
    %p209 = por %p207, %p208
    %p210 = scmp.ne.s32.totalorder %s202, %s204
    %p211 = scmp.eq.s32.totalorder %s26, 1
    %p212 = por %p210, %p211
    %p213 = scmp.ne.s32.totalorder %s204, %s205
    %p214 = scmp.eq.s32.totalorder %s26, 0
    %p215 = por %p213, %p214
    %p216 = scmp.ne.s32.totalorder %s204, %s205
    %p217 = scmp.eq.s32.totalorder %s27, 1
    %p218 = por %p216, %p217
    %p220 = scmp.ne.s32.totalorder %s205, %s219
    %p221 = scmp.eq.s32.totalorder %s27, 0
    %p222 = por %p220, %p221
    %s224 = sadd.s32 %s223, 1
    %p227 = scmp.eq.s32.totalorder %s21, 1
    %p228 = scmp.ne.s32.totalorder %s223, %s225
    %p229 = scmp.eq.s32.totalorder %s21, 0
    %p230 = por %p228, %p229
    %p231 = scmp.ne.s32.totalorder %s223, %s225
    %p232 = scmp.eq.s32.totalorder %s26, 1
    %p233 = por %p231, %p232
    %p234 = scmp.ne.s32.totalorder %s225, %s226
    %p235 = scmp.eq.s32.totalorder %s26, 0
    %p236 = por %p234, %p235
    %p237 = scmp.ne.s32.totalorder %s225, %s226
    %p238 = scmp.eq.s32.totalorder %s27, 1
    %p239 = por %p237, %p238
    %p241 = scmp.ne.s32.totalorder %s226, %s240
    %p242 = scmp.eq.s32.totalorder %s27, 0
    %p243 = por %p241, %p242
    %s245 = sadd.s32 %s244, 1
    %p248 = scmp.eq.s32.totalorder %s21, 1
    %p249 = scmp.ne.s32.totalorder %s244, %s246
    %p250 = scmp.eq.s32.totalorder %s21, 0
    %p251 = por %p249, %p250
    %p252 = scmp.ne.s32.totalorder %s244, %s246
    %p253 = scmp.eq.s32.totalorder %s26, 1
    %p254 = por %p252, %p253
    %p255 = scmp.ne.s32.totalorder %s246, %s247
    %p256 = scmp.eq.s32.totalorder %s26, 0
    %p257 = por %p255, %p256
    %p258 = scmp.ne.s32.totalorder %s246, %s247
    %p259 = scmp.eq.s32.totalorder %s27, 1
    %p260 = por %p258, %p259
    %p262 = scmp.ne.s32.totalorder %s247, %s261
    %p263 = scmp.eq.s32.totalorder %s27, 0
    %p264 = por %p262, %p263
    %s266 = sadd.s32 %s265, 1
    %p269 = scmp.eq.s32.totalorder %s21, 1
    %p270 = scmp.ne.s32.totalorder %s265, %s267
    %p271 = scmp.eq.s32.totalorder %s21, 0
    %p272 = por %p270, %p271
    %p273 = scmp.ne.s32.totalorder %s265, %s267
    %p274 = scmp.eq.s32.totalorder %s26, 1
    %p275 = por %p273, %p274
    %p276 = scmp.ne.s32.totalorder %s267, %s268
    %p277 = scmp.eq.s32.totalorder %s26, 0
    %p278 = por %p276, %p277
    %p279 = scmp.ne.s32.totalorder %s267, %s268
    %p280 = scmp.eq.s32.totalorder %s27, 1
    %p281 = por %p279, %p280
    %p283 = scmp.ne.s32.totalorder %s268, %s282
    %p284 = scmp.eq.s32.totalorder %s27, 0
    %p285 = por %p283, %p284
    %s287 = sadd.s32 %s286, 1
    %p290 = scmp.eq.s32.totalorder %s21, 1
    %p291 = scmp.ne.s32.totalorder %s286, %s288
    %p292 = scmp.eq.s32.totalorder %s21, 0
    %p293 = por %p291, %p292
    %p294 = scmp.ne.s32.totalorder %s286, %s288
    %p295 = scmp.eq.s32.totalorder %s26, 1
    %p296 = por %p294, %p295
    %p297 = scmp.ne.s32.totalorder %s288, %s289
    %p298 = scmp.eq.s32.totalorder %s26, 0
    %p299 = por %p297, %p298
    %p300 = scmp.ne.s32.totalorder %s288, %s289
    %p301 = scmp.eq.s32.totalorder %s27, 1
    %p302 = por %p300, %p301
    %p304 = scmp.ne.s32.totalorder %s289, %s303
    %p305 = scmp.eq.s32.totalorder %s27, 0
    %p306 = por %p304, %p305
    %s308 = sadd.s32 %s307, 1
    %p311 = scmp.eq.s32.totalorder %s21, 1
    %p312 = scmp.ne.s32.totalorder %s307, %s309
    %p313 = scmp.eq.s32.totalorder %s21, 0
    %p314 = por %p312, %p313
    %p315 = scmp.ne.s32.totalorder %s307, %s309
    %p316 = scmp.eq.s32.totalorder %s26, 1
    %p317 = por %p315, %p316
    %p318 = scmp.ne.s32.totalorder %s309, %s310
    %p319 = scmp.eq.s32.totalorder %s26, 0
    %p320 = por %p318, %p319
    %p321 = scmp.ne.s32.totalorder %s309, %s310
    %p322 = scmp.eq.s32.totalorder %s27, 1
    %p323 = por %p321, %p322
    %p325 = scmp.ne.s32.totalorder %s310, %s324
    %p326 = scmp.eq.s32.totalorder %s27, 0
    %p327 = por %p325, %p326
    %s329 = sadd.s32 %s328, 1
    %p332 = scmp.eq.s32.totalorder %s21, 1
    %p333 = scmp.ne.s32.totalorder %s328, %s330
    %p334 = scmp.eq.s32.totalorder %s21, 0
    %p335 = por %p333, %p334
    %p336 = scmp.ne.s32.totalorder %s328, %s330
    %p337 = scmp.eq.s32.totalorder %s26, 1
    %p338 = por %p336, %p337
    %p339 = scmp.ne.s32.totalorder %s330, %s331
    %p340 = scmp.eq.s32.totalorder %s26, 0
    %p341 = por %p339, %p340
    %p342 = scmp.ne.s32.totalorder %s330, %s331
    %p343 = scmp.eq.s32.totalorder %s27, 1
    %p344 = por %p342, %p343
    %p346 = scmp.ne.s32.totalorder %s331, %s345
    %p347 = scmp.eq.s32.totalorder %s27, 0
    %p348 = por %p346, %p347
    %s349 = ssub.s32 %s21, %s28
    %p350 = scmp.eq.s32.totalorder %s349, 0
    %s352 = sadd.s32 %s351, 1
    %s353 = scalar_select %p350, %s351, %s352
    %p356 = pneg %p350
    %p357 = scmp.eq.s32.totalorder %s21, 1
    %p358 = por %p356, %p357
    %p359 = scmp.ne.s32.totalorder %s351, %s354
    %p360 = scmp.eq.s32.totalorder %s21, 0
    %p361 = por %p359, %p360
    %p362 = scmp.ne.s32.totalorder %s351, %s354
    %p363 = scmp.eq.s32.totalorder %s26, 1
    %p364 = por %p362, %p363
    %p365 = scmp.ne.s32.totalorder %s354, %s355
    %p366 = scmp.eq.s32.totalorder %s26, 0
    %p367 = por %p365, %p366
    %p368 = scmp.ne.s32.totalorder %s354, %s355
    %p369 = scmp.eq.s32.totalorder %s27, 1
    %p370 = por %p368, %p369
    %p372 = scmp.ne.s32.totalorder %s355, %s371
    %p373 = scmp.eq.s32.totalorder %s27, 0
    %p374 = por %p372, %p373
    %p375 = scmp.le.s32.totalorder 1, %s21
    %p376 = scmp.lt.s32.totalorder %s21, 3
    %p377 = pnand %p375, %p376
    %p378 = pneg %p377
    // Predicated region
    $region9: #{unet_forward.4} parent=5 // pred_check
      _
    $region10: #{unet_forward.4} parent=5 // pred_check_branch
      %380 = sbr.rel (%p377) target = $region12
    $region11: #{unet_forward.4} parent=5 // pred_region
      %s381 = ssub.s32 %s21, 1
      // Predicated region
      $region13: #{unet_forward.4} parent=11 // pred_check
        %p382 = pneg %p68
      $region14: #{unet_forward.4} parent=11 // pred_check_branch
        %384 = sbr.rel (%p382) target = $region16
      $region15: #{unet_forward.4} parent=11 // pred_region
        _
      $region16: #{unet_forward.4} parent=11 // pred_fallthru
        _
      // Predicated region
      $region17: #{unet_forward.4} parent=11 // pred_check
        %p385 = pneg %p89
      $region18: #{unet_forward.4} parent=11 // pred_check_branch
        %387 = sbr.rel (%p385) target = $region20
      $region19: #{unet_forward.4} parent=11 // pred_region
        _
      $region20: #{unet_forward.4} parent=11 // pred_fallthru
        _
      // Predicated region
      $region21: #{unet_forward.4} parent=11 // pred_check
        %p388 = pneg %p110
      $region22: #{unet_forward.4} parent=11 // pred_check_branch
        %390 = sbr.rel (%p388) target = $region24
      $region23: #{unet_forward.4} parent=11 // pred_region
        _
      $region24: #{unet_forward.4} parent=11 // pred_fallthru
        _
      // Predicated region
      $region25: #{unet_forward.4} parent=11 // pred_check
        %p391 = pneg %p131
      $region26: #{unet_forward.4} parent=11 // pred_check_branch
        %393 = sbr.rel (%p391) target = $region28
      $region27: #{unet_forward.4} parent=11 // pred_region
        _
      $region28: #{unet_forward.4} parent=11 // pred_fallthru
        _
      // Predicated region
      $region29: #{unet_forward.4} parent=11 // pred_check
        %p394 = pneg %p152
      $region30: #{unet_forward.4} parent=11 // pred_check_branch
        %396 = sbr.rel (%p394) target = $region32
      $region31: #{unet_forward.4} parent=11 // pred_region
        _
      $region32: #{unet_forward.4} parent=11 // pred_fallthru
        _
      // Predicated region
      $region33: #{unet_forward.4} parent=11 // pred_check
        %p397 = pneg %p173
      $region34: #{unet_forward.4} parent=11 // pred_check_branch
        %399 = sbr.rel (%p397) target = $region36
      $region35: #{unet_forward.4} parent=11 // pred_region
        _
      $region36: #{unet_forward.4} parent=11 // pred_fallthru
        _
      // Predicated region
      $region37: #{unet_forward.4} parent=11 // pred_check
        %p400 = pneg %p194
      $region38: #{unet_forward.4} parent=11 // pred_check_branch
        %402 = sbr.rel (%p400) target = $region40
      $region39: #{unet_forward.4} parent=11 // pred_region
        _
      $region40: #{unet_forward.4} parent=11 // pred_fallthru
        _
      // Predicated region
      $region41: #{unet_forward.4} parent=11 // pred_check
        %p403 = pneg %p215
      $region42: #{unet_forward.4} parent=11 // pred_check_branch
        %405 = sbr.rel (%p403) target = $region44
      $region43: #{unet_forward.4} parent=11 // pred_region
        _
      $region44: #{unet_forward.4} parent=11 // pred_fallthru
        _
      // Predicated region
      $region45: #{unet_forward.4} parent=11 // pred_check
        %p406 = pneg %p236
      $region46: #{unet_forward.4} parent=11 // pred_check_branch
        %408 = sbr.rel (%p406) target = $region48
      $region47: #{unet_forward.4} parent=11 // pred_region
        _
      $region48: #{unet_forward.4} parent=11 // pred_fallthru
        _
      // Predicated region
      $region49: #{unet_forward.4} parent=11 // pred_check
        %p409 = pneg %p257
      $region50: #{unet_forward.4} parent=11 // pred_check_branch
        %411 = sbr.rel (%p409) target = $region52
      $region51: #{unet_forward.4} parent=11 // pred_region
        _
      $region52: #{unet_forward.4} parent=11 // pred_fallthru
        _
      // Predicated region
      $region53: #{unet_forward.4} parent=11 // pred_check
        %p412 = pneg %p278
      $region54: #{unet_forward.4} parent=11 // pred_check_branch
        %414 = sbr.rel (%p412) target = $region56
      $region55: #{unet_forward.4} parent=11 // pred_region
        _
      $region56: #{unet_forward.4} parent=11 // pred_fallthru
        _
      // Predicated region
      $region57: #{unet_forward.4} parent=11 // pred_check
        %p415 = pneg %p299
      $region58: #{unet_forward.4} parent=11 // pred_check_branch
        %417 = sbr.rel (%p415) target = $region60
      $region59: #{unet_forward.4} parent=11 // pred_region
        _
      $region60: #{unet_forward.4} parent=11 // pred_fallthru
        _
      // Predicated region
      $region61: #{unet_forward.4} parent=11 // pred_check
        %p418 = pneg %p320
      $region62: #{unet_forward.4} parent=11 // pred_check_branch
        %420 = sbr.rel (%p418) target = $region64
      $region63: #{unet_forward.4} parent=11 // pred_region
        _
      $region64: #{unet_forward.4} parent=11 // pred_fallthru
        _
      // Predicated region
      $region65: #{unet_forward.4} parent=11 // pred_check
        %p421 = pneg %p341
      $region66: #{unet_forward.4} parent=11 // pred_check_branch
        %423 = sbr.rel (%p421) target = $region68
      $region67: #{unet_forward.4} parent=11 // pred_region
        _
      $region68: #{unet_forward.4} parent=11 // pred_fallthru
        _
    $region12: #{unet_forward.4} parent=5 // pred_fallthru
      _
    %p424 = scmp.lt.s32.totalorder %s21, 2
    // Predicated region
    $region69: #{unet_forward.4} parent=5 // pred_check
      %p425 = pneg %p424
    $region70: #{unet_forward.4} parent=5 // pred_check_branch
      %427 = sbr.rel (%p425) target = $region72
    $region71: #{unet_forward.4} parent=5 // pred_region
      // Predicated region
      $region73: #{unet_forward.4} parent=71 // pred_check
        %p428 = pneg %p41
      $region74: #{unet_forward.4} parent=71 // pred_check_branch
        %430 = sbr.rel (%p428) target = $region76
      $region75: #{unet_forward.4} parent=71 // pred_region
        %s431 = smul.u32 3, %s21
        %p432 = scmp.lt.s32.totalorder %s431, 5
        %s433 = scalar_select %p432, %s431, 5
        %s434 = smul.addr %s433, 8
        %s435 = scalar_lea.vmem %s0, %s434
        %s436 = smul.u32 3, %s21
      $region76: #{unet_forward.4} parent=71 // pred_fallthru
        _
    $region72: #{unet_forward.4} parent=5 // pred_fallthru
      _
    %p437 = scmp.le.s32.totalorder 1, %s21
    %p438 = scmp.lt.s32.totalorder %s21, 3
    %p439 = pnand %p437, %p438
    %p440 = pneg %p439
    // Predicated region
    $region77: #{unet_forward.4} parent=5 // pred_check
      _
    $region78: #{unet_forward.4} parent=5 // pred_check_branch
      %442 = sbr.rel (%p439) target = $region80
    $region79: #{unet_forward.4} parent=5 // pred_region
      %s443 = ssub.s32 %s21, 1
      %s444 = smul.u32 3, %s26
      %p445 = scmp.lt.s32.totalorder %s444, 5
      %s446 = scalar_select %p445, %s444, 5
      %s447 = smul.addr %s446, 8
      %s448 = scalar_lea.vmem %s0, %s447
      %p449 = pneg %p47
      %p450 = pneg %p44
      %p451 = pneg %p68
      %p452 = pneg %p65
      %p453 = pneg %p89
      %p454 = pneg %p86
      %p455 = pneg %p110
      %p456 = pneg %p107
      %p457 = pneg %p131
      %p458 = pneg %p128
      %p459 = pneg %p152
      %p460 = pneg %p149
      %p461 = pneg %p173
      %p462 = pneg %p170
      %p463 = pneg %p194
      %p464 = pneg %p191
      %p465 = pneg %p215
      %p466 = pneg %p212
      %p467 = pneg %p236
      %p468 = pneg %p233
      %p469 = pneg %p257
      %p470 = pneg %p254
      %p471 = pneg %p278
      %p472 = pneg %p275
      %p473 = pneg %p299
      %p474 = pneg %p296
      %p475 = pneg %p320
      %p476 = pneg %p317
      %p477 = pneg %p341
      %p478 = pneg %p338
      %p479 = pneg %p367
      %p480 = pneg %p364
      %s481 = smul.u32 3, %s26
      %p482 = scmp.lt.s32.totalorder %s481, 5
      %s483 = scalar_select %p482, %s481, 5
      %s484 = smul.addr %s483, 8
      %s485 = scalar_lea.vmem %s15, %s484
      %s486 = smul.u32 3, %s26
      %p487 = scmp.lt.s32.totalorder %s486, 5
      %s488 = scalar_select %p487, %s486, 5
      %s489 = smul.addr %s488, 8
      %s490 = scalar_lea.vmem %s0, %s489
      %s491 = smul.u32 3, %s26
      %s492 = smul.u32 3, %s26
      %p493 = scmp.lt.s32.totalorder %s492, 5
      %s494 = scalar_select %p493, %s492, 5
      %s495 = smul.addr %s494, 8
      %s496 = scalar_lea.vmem %s15, %s495
      %s497 = smul.u32 3, %s26
      %v499 = vld [vmem:[%s490] sm:$0xff]
      %v500 = vld [vmem:[%s490 + $0x8] sm:$0xff]
      %v501 = vld [vmem:[%s490 + $0x10] sm:$0xff]
      %v502 = vld [vmem:[%s3] sm:$0xff]
      %v503 = vld [vmem:[%s3 + $0x8] sm:$0xff]
      %v504 = vld [vmem:[%s3 + $0x10] sm:$0xff]
      %v505 = vld [vmem:[%s3 + $0x18] sm:$0xff]
      %v506 = vpack.c.bf16 %v500, %v499
      %v507 = vpack.c.bf16 %v501, %v501
      %v508 = vpack.c.bf16 %v503, %v502
      %v509 = vpack.c.bf16 %v505, %v504
      %v510 = vld [vmem:[%s4] sm:$0x1]
      %v512 = vlaneseq
      %v513 = vshrl.u32 %v512, 7
      %v514 = vsub.s32 0, %v513
      %v515 = vrot.slane %v510, %v514
      %vm517 = vcmask 261120
      %v519 = vsel %vm517, %v506, 0
      %v522 = vsel %vm517, %v507, 0
      %524 = vmatprep.subr.bf16.mxu0 0
      %525 = vmatpush1.bf16.msra.mxu0 %v508
      %526 = vmatprep.subr.bf16.mxu0 0
      %527 = vmatpush1.bf16.msra.mxu0 %v509
      %528 = vmatprep.subr.bf16.mxu0 0
      %529 = vmatpush1.bf16.msra.mxu0 0
      %530 = vmatprep.subr.bf16.mxu0 0
      %531 = vmatpush1.bf16.msra.mxu0 0
      %532 = vmatprep.subr.bf16.mxu0 0
      %533 = vmatpush1.bf16.msra.mxu0 0
      %534 = vmatprep.subr.bf16.mxu0 0
      %535 = vmatpush1.bf16.msra.mxu0 0
      %536 = vmatprep.subr.bf16.mxu0 0
      %537 = vmatpush1.bf16.msra.mxu0 0
      %538 = vmatprep.subr.bf16.mxu0 0
      %539 = vmatpush1.bf16.msra.mxu0 0
      %540 = vmatprep.subr.bf16.mxu0 0
      %541 = vmatpush1.bf16.msra.mxu0 0
      %542 = vmatprep.subr.bf16.mxu0 0
      %543 = vmatpush1.bf16.msra.mxu0 0
      %544 = vmatprep.subr.bf16.mxu0 0
      %545 = vmatpush1.bf16.msra.mxu0 0
      %546 = vmatprep.subr.bf16.mxu0 0
      %547 = vmatpush1.bf16.msra.mxu0 0
      %548 = vmatprep.subr.bf16.mxu0 0
      %549 = vmatpush1.bf16.msra.mxu0 0
      %550 = vmatprep.subr.bf16.mxu0 0
      %551 = vmatpush1.bf16.msra.mxu0 0
      %552 = vmatprep.subr.bf16.mxu0 0
      %553 = vmatpush1.bf16.msra.mxu0 0
      %554 = vmatprep.subr.bf16.mxu0 0
      %555 = vmatpush1.bf16.msra.mxu0 0
      %556 = vmatprep.mubr.bf16.mxu0 0
      %557 = vmatmul.mubr.bf16.gmra.mrb[0].mxu0 %v519
      %v558 = vpop.f32.mrb[0].mxu0
      %v559 = vadd.f32 %v515, %v558
      %v560 = vpop.f32.mrb[0].mxu0
      %v561 = vpop.f32.mrb[0].mxu0
      %v562 = vadd.f32 %v515, %v561
      %v563 = vpop.f32.mrb[0].mxu0
      %564 = vmatprep.mubr.bf16.mxu0 0
      %565 = vmatmul.mubr.bf16.gmra.mrb[0].mxu0 %v522
      %v566 = vpop.f32.mrb[0].mxu0
      %v567 = vadd.f32 %v515, %v566
      %v568 = vpop.f32.mrb[0].mxu0
      %v569 = vpop.f32.mrb[0].mxu0
      %v570 = vpop.f32.mrb[0].mxu0
      %571 = vdwg.mxu0
      %v572 = vmax.f32 %v559, 0.0
      %v573 = vmax.f32 %v562, 0.0
      %v574 = vmax.f32 %v567, 0.0
      %v575 = vld [vmem:[%s5] sm:$0xff]
      %v576 = vld [vmem:[%s5 + $0x8] sm:$0xff]
      %v577 = vld [vmem:[%s5 + $0x10] sm:$0xff]
      %v578 = vld [vmem:[%s5 + $0x18] sm:$0xff]
      %v579 = vld [vmem:[%s5 + $0x20] sm:$0xff]
      %v580 = vld [vmem:[%s5 + $0x28] sm:$0xff]
      %v581 = vld [vmem:[%s5 + $0x30] sm:$0xff]
      %v582 = vld [vmem:[%s5 + $0x38] sm:$0xff]
      %v583 = vpack.c.bf16 %v573, %v572
      %v584 = vpack.c.bf16 %v574, %v574
      %v585 = vpack.c.bf16 %v576, %v575
      %v586 = vpack.c.bf16 %v578, %v577
      %v587 = vpack.c.bf16 %v580, %v579
      %v588 = vpack.c.bf16 %v582, %v581
      %v589 = vld [vmem:[%s6] sm:$0x1]
      %v591 = vlaneseq
      %v592 = vshrl.u32 %v591, 7
      %v593 = vsub.s32 0, %v592
      %v594 = vrot.slane %v589, %v593
      %vm596 = vcmask 523264
      %v598 = vsel %vm596, %v583, 0
      %v601 = vsel %vm596, %v584, 0
      %603 = vmatprep.subr.bf16.mxu0 0
      %604 = vmatpush1.bf16.msra.mxu0 %v585
      %605 = vmatprep.subr.bf16.mxu0 0
      %606 = vmatpush1.bf16.msra.mxu0 %v586
      %607 = vmatprep.subr.bf16.mxu0 0
      %608 = vmatpush1.bf16.msra.mxu0 %v587
      %609 = vmatprep.subr.bf16.mxu0 0
      %610 = vmatpush1.bf16.msra.mxu0 %v588
      %611 = vmatprep.subr.bf16.mxu0 0
      %612 = vmatpush1.bf16.msra.mxu0 0
      %613 = vmatprep.subr.bf16.mxu0 0
      %614 = vmatpush1.bf16.msra.mxu0 0
      %615 = vmatprep.subr.bf16.mxu0 0
      %616 = vmatpush1.bf16.msra.mxu0 0
      %617 = vmatprep.subr.bf16.mxu0 0
      %618 = vmatpush1.bf16.msra.mxu0 0
      %619 = vmatprep.subr.bf16.mxu0 0
      %620 = vmatpush1.bf16.msra.mxu0 0
      %621 = vmatprep.subr.bf16.mxu0 0
      %622 = vmatpush1.bf16.msra.mxu0 0
      %623 = vmatprep.subr.bf16.mxu0 0
      %624 = vmatpush1.bf16.msra.mxu0 0
      %625 = vmatprep.subr.bf16.mxu0 0
      %626 = vmatpush1.bf16.msra.mxu0 0
      %627 = vmatprep.subr.bf16.mxu0 0
      %628 = vmatpush1.bf16.msra.mxu0 0
      %629 = vmatprep.subr.bf16.mxu0 0
      %630 = vmatpush1.bf16.msra.mxu0 0
      %631 = vmatprep.subr.bf16.mxu0 0
      %632 = vmatpush1.bf16.msra.mxu0 0
      %633 = vmatprep.subr.bf16.mxu0 0
      %634 = vmatpush1.bf16.msra.mxu0 0
      %635 = vmatprep.mubr.bf16.mxu0 0
      %636 = vmatmul.mubr.bf16.gmra.mrb[0].mxu0 %v598
      %v637 = vpop.f32.mrb[0].mxu0
      %v638 = vadd.f32 %v594, %v637
      %v639 = vpop.f32.mrb[0].mxu0
      %v640 = vpop.f32.mrb[0].mxu0
      %v641 = vadd.f32 %v594, %v640
      %v642 = vpop.f32.mrb[0].mxu0
      %643 = vmatprep.mubr.bf16.mxu0 0
      %644 = vmatmul.mubr.bf16.gmra.mrb[0].mxu0 %v601
      %v645 = vpop.f32.mrb[0].mxu0
      %v646 = vadd.f32 %v594, %v645
      %v647 = vpop.f32.mrb[0].mxu0
      %v648 = vpop.f32.mrb[0].mxu0
      %v649 = vpop.f32.mrb[0].mxu0
      %650 = vdwg.mxu0
      %v651 = vld [vmem:[%s1] sm:$0xff]
      %v652 = vld [vmem:[%s1 + $0x8] sm:$0xff]
      %v653 = vld [vmem:[%s1 + $0x10] sm:$0xff]
      %v654 = vpack.c.bf16 %v652, %v651
      %v655 = vpack.c.bf16 %v653, %v653
      %v656 = vld [vmem:[%s2] sm:$0xff]
      %v657 = vld [vmem:[%s2 + $0x8] sm:$0xff]
      %v658 = vld [vmem:[%s2 + $0x10] sm:$0xff]
      %v659 = vpack.c.bf16 %v657, %v656
      %v660 = vpack.c.bf16 %v658, %v658
      %v661 = vld [vmem:[%s7] sm:$0xff]
      %v662 = vld [vmem:[%s7 + $0x8] sm:$0xff]
      %v663 = vld [vmem:[%s7 + $0x10] sm:$0xff]
      %v664 = vld [vmem:[%s7 + $0x18] sm:$0xff]
      %v665 = vld [vmem:[%s7 + $0x20] sm:$0xff]
      %v666 = vld [vmem:[%s7 + $0x28] sm:$0xff]
      %v667 = vld [vmem:[%s7 + $0x30] sm:$0xff]
      %v668 = vld [vmem:[%s7 + $0x38] sm:$0xff]
      %v669 = vld [vmem:[%s7 + $0x40] sm:$0xff]
      %v670 = vld [vmem:[%s7 + $0x48] sm:$0xff]
      %v671 = vld [vmem:[%s7 + $0x50] sm:$0xff]
      %v672 = vld [vmem:[%s7 + $0x58] sm:$0xff]
      %v673 = vld [vmem:[%s7 + $0x60] sm:$0xff]
      %v674 = vld [vmem:[%s7 + $0x68] sm:$0xff]
      %v675 = vld [vmem:[%s7 + $0x70] sm:$0xff]
      %v676 = vld [vmem:[%s7 + $0x78] sm:$0xff]
      %v677 = vld [vmem:[%s7 + $0x80] sm:$0xff]
      %v678 = vld [vmem:[%s7 + $0x88] sm:$0xff]
      %v679 = vld [vmem:[%s7 + $0x90] sm:$0xff]
      %v680 = vld [vmem:[%s7 + $0x98] sm:$0xff]
      %v681 = vld [vmem:[%s7 + $0xa0] sm:$0xff]
      %v682 = vld [vmem:[%s7 + $0xa8] sm:$0xff]
      %v683 = vld [vmem:[%s7 + $0xb0] sm:$0xff]
      %v684 = vld [vmem:[%s7 + $0xb8] sm:$0xff]
      %v685 = vpack.c.bf16 %v662, %v661
      %v686 = vpack.c.bf16 %v664, %v663
      %v687 = vpack.c.bf16 %v666, %v665
      %v688 = vpack.c.bf16 %v668, %v667
      %v689 = vpack.c.bf16 %v670, %v669
      %v690 = vpack.c.bf16 %v672, %v671
      %v691 = vpack.c.bf16 %v674, %v673
      %v692 = vpack.c.bf16 %v676, %v675
      %v693 = vpack.c.bf16 %v678, %v677
      %v694 = vpack.c.bf16 %v680, %v679
      %v695 = vpack.c.bf16 %v682, %v681
      %v696 = vpack.c.bf16 %v684, %v683
      %v697 = vld [vmem:[%s9] sm:$0xff]
      %v698 = vld [vmem:[%s9 + $0x8] sm:$0xff]
      %v699 = vld [vmem:[%s9 + $0x10] sm:$0xff]
      %v700 = vld [vmem:[%s9 + $0x18] sm:$0xff]
      %v701 = vld [vmem:[%s9 + $0x20] sm:$0xff]
      %v702 = vld [vmem:[%s9 + $0x28] sm:$0xff]
      %v703 = vld [vmem:[%s9 + $0x30] sm:$0xff]
      %v704 = vld [vmem:[%s9 + $0x38] sm:$0xff]
      %v705 = vld [vmem:[%s9 + $0x40] sm:$0xff]
      %v706 = vld [vmem:[%s9 + $0x48] sm:$0xff]
      %v707 = vld [vmem:[%s9 + $0x50] sm:$0xff]
      %v708 = vld [vmem:[%s9 + $0x58] sm:$0xff]
      %v709 = vld [vmem:[%s9 + $0x60] sm:$0xff]
      %v710 = vld [vmem:[%s9 + $0x68] sm:$0xff]
      %v711 = vld [vmem:[%s9 + $0x70] sm:$0xff]
      %v712 = vld [vmem:[%s9 + $0x78] sm:$0xff]
      %v713 = vpack.c.bf16 %v699, %v697
      %v714 = vpack.c.bf16 %v700, %v698
      %v715 = vpack.c.bf16 %v703, %v701
      %v716 = vpack.c.bf16 %v704, %v702
      %v717 = vpack.c.bf16 %v707, %v705
      %v718 = vpack.c.bf16 %v708, %v706
      %v719 = vpack.c.bf16 %v711, %v709
      %v720 = vpack.c.bf16 %v712, %v710
      %v721 = vld [vmem:[%s11] sm:$0xff]
      %v722 = vld [vmem:[%s11 + $0x8] sm:$0xff]
      %v723 = vld [vmem:[%s11 + $0x10] sm:$0xff]
      %v724 = vld [vmem:[%s11 + $0x18] sm:$0xff]
      %v725 = vld [vmem:[%s11 + $0x20] sm:$0xff]
      %v726 = vld [vmem:[%s11 + $0x28] sm:$0xff]
      %v727 = vld [vmem:[%s11 + $0x30] sm:$0xff]
      %v728 = vld [vmem:[%s11 + $0x38] sm:$0xff]
      %v729 = vld [vmem:[%s11 + $0x40] sm:$0xff]
      %v730 = vld [vmem:[%s11 + $0x48] sm:$0xff]
      %v731 = vld [vmem:[%s11 + $0x50] sm:$0xff]
      %v732 = vld [vmem:[%s11 + $0x58] sm:$0xff]
      %v733 = vld [vmem:[%s11 + $0x60] sm:$0xff]
      %v734 = vld [vmem:[%s11 + $0x68] sm:$0xff]
      %v735 = vld [vmem:[%s11 + $0x70] sm:$0xff]
      %v736 = vld [vmem:[%s11 + $0x78] sm:$0xff]
      %v737 = vpack.c.bf16 %v723, %v721
      %v738 = vpack.c.bf16 %v724, %v722
      %v739 = vpack.c.bf16 %v727, %v725
      %v740 = vpack.c.bf16 %v728, %v726
      %v741 = vpack.c.bf16 %v731, %v729
      %v742 = vpack.c.bf16 %v732, %v730
      %v743 = vpack.c.bf16 %v735, %v733
      %v744 = vpack.c.bf16 %v736, %v734
      %v745 = vld [vmem:[%s8] sm:$0x1]
      %v747 = vlaneseq
      %v748 = vshrl.u32 %v747, 7
      %v749 = vsub.s32 0, %v748
      %v750 = vrot.slane %v745, %v749
      %v752 = vld [vmem:[%s10] sm:$0x3]
      %v754 = vlaneseq
      %v755 = vshrl.u32 %v754, 7
      %v756 = vsub.s32 0, %v755
      %v757 = vrot.slane %v752, %v756
      %v758 = vlaneseq
      %v759 = vshrl.u32 %v758, 7
      %v760 = vsub.s32 1, %v759
      %v761 = vrot.slane %v752, %v760
      %v764 = vld [vmem:[%s12] sm:$0x3]
      %v766 = vlaneseq
      %v767 = vshrl.u32 %v766, 7
      %v768 = vsub.s32 0, %v767
      %v769 = vrot.slane %v764, %v768
      %v770 = vlaneseq
      %v771 = vshrl.u32 %v770, 7
      %v772 = vsub.s32 1, %v771
      %v773 = vrot.slane %v764, %v772
      %v776 = vpack.c.bf16 %v641, %v638
      %v777 = vpack.c.bf16 %v646, %v646
      %vm778 = vcmask 195584
      %v780 = vsel %vm778, %v654, 0
      %v783 = vsel %vm778, %v655, 0
      %vm785 = vcmask 1043456
      %v787 = vsel %vm785, %v777, 0
      %789 = vmatprep.subr.bf16.mxu0 0
      %790 = vmatpush1.bf16.msra.mxu0 %v776
      %791 = vmatprep.subr.bf16.mxu0 0
      %792 = vmatpush1.bf16.msra.mxu0 %v787
      %793 = vmatprep.subr.bf16.mxu0 0
      %794 = vmatpush1.bf16.msra.mxu0 0
      %795 = vmatprep.subr.bf16.mxu0 0
      %796 = vmatpush1.bf16.msra.mxu0 0
      %797 = vmatprep.subr.bf16.mxu0 0
      %798 = vmatpush1.bf16.msra.mxu0 0
      %799 = vmatprep.subr.bf16.mxu0 0
      %800 = vmatpush1.bf16.msra.mxu0 0
      %801 = vmatprep.subr.bf16.mxu0 0
      %802 = vmatpush1.bf16.msra.mxu0 0
      %803 = vmatprep.subr.bf16.mxu0 0
      %804 = vmatpush1.bf16.msra.mxu0 0
      %805 = vmatprep.subr.bf16.mxu0 0
      %806 = vmatpush1.bf16.msra.mxu0 0
      %807 = vmatprep.subr.bf16.mxu0 0
      %808 = vmatpush1.bf16.msra.mxu0 0
      %809 = vmatprep.subr.bf16.mxu0 0
      %810 = vmatpush1.bf16.msra.mxu0 0
      %811 = vmatprep.subr.bf16.mxu0 0
      %812 = vmatpush1.bf16.msra.mxu0 0
      %813 = vmatprep.subr.bf16.mxu0 0
      %814 = vmatpush1.bf16.msra.mxu0 0
      %815 = vmatprep.subr.bf16.mxu0 0
      %816 = vmatpush1.bf16.msra.mxu0 0
      %817 = vmatprep.subr.bf16.mxu0 0
      %818 = vmatpush1.bf16.msra.mxu0 0
      %819 = vmatprep.subr.bf16.mxu0 0
      %820 = vmatpush1.bf16.msra.mxu0 0
      %821 = vmatprep.mubr.bf16.mxu0 0
      %822 = vmatmul.mubr.bf16.gmra.mrb[0].mxu0 %v780
      %v823 = vpop.f32.mrb[0].mxu0
      %v824 = vadd.f32 0.0, %v823
      %v825 = vpop.f32.mrb[0].mxu0
      %v826 = vpop.f32.mrb[0].mxu0
      %v827 = vadd.f32 0.0, %v826
      %v828 = vpop.f32.mrb[0].mxu0
      %829 = vmatprep.mubr.bf16.mxu0 0
      %830 = vmatmul.mubr.bf16.gmra.mrb[0].mxu0 %v783
      %v831 = vpop.f32.mrb[0].mxu0
      %v832 = vadd.f32 0.0, %v831
      %v833 = vpop.f32.mrb[0].mxu0
      %v834 = vpop.f32.mrb[0].mxu0
      %v835 = vpop.f32.mrb[0].mxu0
      %836 = vdwg.mxu0
      %v838 = vsel %vm778, %v659, 0
      %v841 = vsel %vm778, %v660, 0
      %843 = vmatprep.subr.bf16.mxu0 0
      %844 = vmatpush1.bf16.msra.mxu0 %v776
      %845 = vmatprep.subr.bf16.mxu0 0
      %846 = vmatpush1.bf16.msra.mxu0 %v787
      %847 = vmatprep.subr.bf16.mxu0 0
      %848 = vmatpush1.bf16.msra.mxu0 0
      %849 = vmatprep.subr.bf16.mxu0 0
      %850 = vmatpush1.bf16.msra.mxu0 0
      %851 = vmatprep.subr.bf16.mxu0 0
      %852 = vmatpush1.bf16.msra.mxu0 0
      %853 = vmatprep.subr.bf16.mxu0 0
      %854 = vmatpush1.bf16.msra.mxu0 0
      %855 = vmatprep.subr.bf16.mxu0 0
      %856 = vmatpush1.bf16.msra.mxu0 0
      %857 = vmatprep.subr.bf16.mxu0 0
      %858 = vmatpush1.bf16.msra.mxu0 0
      %859 = vmatprep.subr.bf16.mxu0 0
      %860 = vmatpush1.bf16.msra.mxu0 0
      %861 = vmatprep.subr.bf16.mxu0 0
      %862 = vmatpush1.bf16.msra.mxu0 0
      %863 = vmatprep.subr.bf16.mxu0 0
      %864 = vmatpush1.bf16.msra.mxu0 0
      %865 = vmatprep.subr.bf16.mxu0 0
      %866 = vmatpush1.bf16.msra.mxu0 0
      %867 = vmatprep.subr.bf16.mxu0 0
      %868 = vmatpush1.bf16.msra.mxu0 0
      %869 = vmatprep.subr.bf16.mxu0 0
      %870 = vmatpush1.bf16.msra.mxu0 0
      %871 = vmatprep.subr.bf16.mxu0 0
      %872 = vmatpush1.bf16.msra.mxu0 0
      %873 = vmatprep.subr.bf16.mxu0 0
      %874 = vmatpush1.bf16.msra.mxu0 0
      %875 = vmatprep.mubr.bf16.mxu0 0
      %876 = vmatmul.mubr.bf16.gmra.mrb[0].mxu0 %v838
      %v877 = vpop.f32.mrb[0].mxu0
      %v878 = vadd.f32 0.0, %v877
      %v879 = vpop.f32.mrb[0].mxu0
      %v880 = vpop.f32.mrb[0].mxu0
      %v881 = vadd.f32 0.0, %v880
      %v882 = vpop.f32.mrb[0].mxu0
      %883 = vmatprep.mubr.bf16.mxu0 0
      %884 = vmatmul.mubr.bf16.gmra.mrb[0].mxu0 %v841
      %v885 = vpop.f32.mrb[0].mxu0
      %v886 = vadd.f32 0.0, %v885
      %v887 = vpop.f32.mrb[0].mxu0
      %v888 = vpop.f32.mrb[0].mxu0
      %v889 = vpop.f32.mrb[0].mxu0
      %890 = vdwg.mxu0
      %v891 = vpack.c.bf16 %v827, %v824
      %v892 = vpack.c.bf16 %v832, %v832
      %v893 = vpack.c.bf16 %v881, %v878
      %v894 = vpack.c.bf16 %v886, %v886
      %v896 = vsel %vm596, %v893, 0
      %v899 = vsel %vm596, %v894, 0
      %901 = vmatprep.subr.bf16.mxu0 0
      %902 = vmatpush1.bf16.msra.mxu0 %v689
      %903 = vmatprep.subr.bf16.mxu0 0
      %904 = vmatpush1.bf16.msra.mxu0 %v690
      %905 = vmatprep.subr.bf16.mxu0 0
      %906 = vmatpush1.bf16.msra.mxu0 %v691
      %907 = vmatprep.subr.bf16.mxu0 0
      %908 = vmatpush1.bf16.msra.mxu0 %v692
      %909 = vmatprep.subr.bf16.mxu0 0
      %910 = vmatpush1.bf16.msra.mxu0 0
      %911 = vmatprep.subr.bf16.mxu0 0
      %912 = vmatpush1.bf16.msra.mxu0 0
      %913 = vmatprep.subr.bf16.mxu0 0
      %914 = vmatpush1.bf16.msra.mxu0 0
      %915 = vmatprep.subr.bf16.mxu0 0
      %916 = vmatpush1.bf16.msra.mxu0 0
      %917 = vmatprep.subr.bf16.mxu0 0
      %918 = vmatpush1.bf16.msra.mxu0 0
      %919 = vmatprep.subr.bf16.mxu0 0
      %920 = vmatpush1.bf16.msra.mxu0 0
      %921 = vmatprep.subr.bf16.mxu0 0
      %922 = vmatpush1.bf16.msra.mxu0 0
      %923 = vmatprep.subr.bf16.mxu0 0
      %924 = vmatpush1.bf16.msra.mxu0 0
      %925 = vmatprep.subr.bf16.mxu0 0
      %926 = vmatpush1.bf16.msra.mxu0 0
      %927 = vmatprep.subr.bf16.mxu0 0
      %928 = vmatpush1.bf16.msra.mxu0 0
      %929 = vmatprep.subr.bf16.mxu0 0
      %930 = vmatpush1.bf16.msra.mxu0 0
      %931 = vmatprep.subr.bf16.mxu0 0
      %932 = vmatpush1.bf16.msra.mxu0 0
      %933 = vmatprep.mubr.bf16.mxu0 0
      %934 = vmatmul.mubr.bf16.gmra.mrb[0].mxu0 %v896
      %v935 = vpop.f32.mrb[0].mxu0
      %v936 = vadd.f32 0.0, %v935
      %v937 = vpop.f32.mrb[0].mxu0
      %v938 = vpop.f32.mrb[0].mxu0
      %v939 = vadd.f32 0.0, %v938
      %v940 = vpop.f32.mrb[0].mxu0
      %941 = vmatprep.mubr.bf16.mxu0 0
      %942 = vmatmul.mubr.bf16.gmra.mrb[0].mxu0 %v899
      %v943 = vpop.f32.mrb[0].mxu0
      %v944 = vadd.f32 0.0, %v943
      %v945 = vpop.f32.mrb[0].mxu0
      %v946 = vpop.f32.mrb[0].mxu0
      %v947 = vpop.f32.mrb[0].mxu0
      %948 = vdwg.mxu0
      %v950 = vsel %vm596, %v891, 0
      %v953 = vsel %vm596, %v892, 0
      %955 = vmatprep.subr.bf16.mxu0 0
      %956 = vmatpush1.bf16.msra.mxu0 %v685
      %957 = vmatprep.subr.bf16.mxu0 0
      %958 = vmatpush1.bf16.msra.mxu0 %v686
      %959 = vmatprep.subr.bf16.mxu0 0
      %960 = vmatpush1.bf16.msra.mxu0 %v687
      %961 = vmatprep.subr.bf16.mxu0 0
      %962 = vmatpush1.bf16.msra.mxu0 %v688
      %963 = vmatprep.subr.bf16.mxu0 0
      %964 = vmatpush1.bf16.msra.mxu0 0
      %965 = vmatprep.subr.bf16.mxu0 0
      %966 = vmatpush1.bf16.msra.mxu0 0
      %967 = vmatprep.subr.bf16.mxu0 0
      %968 = vmatpush1.bf16.msra.mxu0 0
      %969 = vmatprep.subr.bf16.mxu0 0
      %970 = vmatpush1.bf16.msra.mxu0 0
      %971 = vmatprep.subr.bf16.mxu0 0
      %972 = vmatpush1.bf16.msra.mxu0 0
      %973 = vmatprep.subr.bf16.mxu0 0
      %974 = vmatpush1.bf16.msra.mxu0 0
      %975 = vmatprep.subr.bf16.mxu0 0
      %976 = vmatpush1.bf16.msra.mxu0 0
      %977 = vmatprep.subr.bf16.mxu0 0
      %978 = vmatpush1.bf16.msra.mxu0 0
      %979 = vmatprep.subr.bf16.mxu0 0
      %980 = vmatpush1.bf16.msra.mxu0 0
      %981 = vmatprep.subr.bf16.mxu0 0
      %982 = vmatpush1.bf16.msra.mxu0 0
      %983 = vmatprep.subr.bf16.mxu0 0
      %984 = vmatpush1.bf16.msra.mxu0 0
      %985 = vmatprep.subr.bf16.mxu0 0
      %986 = vmatpush1.bf16.msra.mxu0 0
      %987 = vmatprep.mubr.bf16.mxu0 0
      %988 = vmatmul.mubr.bf16.gmra.mrb[0].mxu0 %v950
      %v989 = vpop.f32.mrb[0].mxu0
      %v990 = vadd.f32 %v936, %v989
      %v991 = vpop.f32.mrb[0].mxu0
      %v992 = vpop.f32.mrb[0].mxu0
      %v993 = vadd.f32 %v939, %v992
      %v994 = vpop.f32.mrb[0].mxu0
      %995 = vmatprep.mubr.bf16.mxu0 0
      %996 = vmatmul.mubr.bf16.gmra.mrb[0].mxu0 %v953
      %v997 = vpop.f32.mrb[0].mxu0
      %v998 = vadd.f32 %v944, %v997
      %v999 = vpop.f32.mrb[0].mxu0
      %v1000 = vpop.f32.mrb[0].mxu0
      %v1001 = vpop.f32.mrb[0].mxu0
      %1002 = vdwg.mxu0
      %v1004 = vsel %vm596, %v776, 0
      %v1006 = vsel %vm596, %v777, 0
      %1008 = vmatprep.subr.bf16.mxu0 0
      %1009 = vmatpush1.bf16.msra.mxu0 %v693
      %1010 = vmatprep.subr.bf16.mxu0 0
      %1011 = vmatpush1.bf16.msra.mxu0 %v694
      %1012 = vmatprep.subr.bf16.mxu0 0
      %1013 = vmatpush1.bf16.msra.mxu0 %v695
      %1014 = vmatprep.subr.bf16.mxu0 0
      %1015 = vmatpush1.bf16.msra.mxu0 %v696
      %1016 = vmatprep.subr.bf16.mxu0 0
      %1017 = vmatpush1.bf16.msra.mxu0 0
      %1018 = vmatprep.subr.bf16.mxu0 0
      %1019 = vmatpush1.bf16.msra.mxu0 0
      %1020 = vmatprep.subr.bf16.mxu0 0
      %1021 = vmatpush1.bf16.msra.mxu0 0
      %1022 = vmatprep.subr.bf16.mxu0 0
      %1023 = vmatpush1.bf16.msra.mxu0 0
      %1024 = vmatprep.subr.bf16.mxu0 0
      %1025 = vmatpush1.bf16.msra.mxu0 0
      %1026 = vmatprep.subr.bf16.mxu0 0
      %1027 = vmatpush1.bf16.msra.mxu0 0
      %1028 = vmatprep.subr.bf16.mxu0 0
      %1029 = vmatpush1.bf16.msra.mxu0 0
      %1030 = vmatprep.subr.bf16.mxu0 0
      %1031 = vmatpush1.bf16.msra.mxu0 0
      %1032 = vmatprep.subr.bf16.mxu0 0
      %1033 = vmatpush1.bf16.msra.mxu0 0
      %1034 = vmatprep.subr.bf16.mxu0 0
      %1035 = vmatpush1.bf16.msra.mxu0 0
      %1036 = vmatprep.subr.bf16.mxu0 0
      %1037 = vmatpush1.bf16.msra.mxu0 0
      %1038 = vmatprep.subr.bf16.mxu0 0
      %1039 = vmatpush1.bf16.msra.mxu0 0
      %1040 = vmatprep.mubr.bf16.mxu0 0
      %1041 = vmatmul.mubr.bf16.gmra.mrb[0].mxu0 %v1004
      %v1042 = vpop.f32.mrb[0].mxu0
      %v1043 = vadd.f32 0.0, %v1042
      %v1044 = vpop.f32.mrb[0].mxu0
      %v1045 = vpop.f32.mrb[0].mxu0
      %v1046 = vadd.f32 0.0, %v1045
      %v1047 = vpop.f32.mrb[0].mxu0
      %1048 = vmatprep.mubr.bf16.mxu0 0
      %1049 = vmatmul.mubr.bf16.gmra.mrb[0].mxu0 %v1006
      %v1050 = vpop.f32.mrb[0].mxu0
      %v1051 = vadd.f32 0.0, %v1050
      %v1052 = vpop.f32.mrb[0].mxu0
      %v1053 = vpop.f32.mrb[0].mxu0
      %v1054 = vpop.f32.mrb[0].mxu0
      %1055 = vdwg.mxu0
      %v1056 = vadd.f32 %v990, %v1043
      %v1057 = vadd.f32 %v993, %v1046
      %v1058 = vadd.f32 %v998, %v1051
      %v1059 = vadd.f32 %v1056, %v750
      %v1060 = vadd.f32 %v1057, %v750
      %v1061 = vadd.f32 %v1058, %v750
      %v1062 = vmax.f32 %v1059, 0.0
      %v1063 = vmax.f32 %v1060, 0.0
      %v1064 = vmax.f32 %v1061, 0.0
      %v1065 = vpack.c.bf16 %v1063, %v1062
      %v1066 = vpack.c.bf16 %v1064, %v1064
      %v1068 = vsel %vm596, %v1065, 0
      %v1071 = vsel %vm596, %v1066, 0
      %1073 = vmatprep.subr.bf16.mxu0 %v714
      %1074 = vmatpush1.bf16.msra.mxu0 %v713
      %1075 = vmatprep.subr.bf16.mxu0 %v716
      %1076 = vmatpush1.bf16.msra.mxu0 %v715
      %1077 = vmatprep.subr.bf16.mxu0 %v718
      %1078 = vmatpush1.bf16.msra.mxu0 %v717
      %1079 = vmatprep.subr.bf16.mxu0 %v720
      %1080 = vmatpush1.bf16.msra.mxu0 %v719
      %1081 = vmatprep.subr.bf16.mxu0 0
      %1082 = vmatpush1.bf16.msra.mxu0 0
      %1083 = vmatprep.subr.bf16.mxu0 0
      %1084 = vmatpush1.bf16.msra.mxu0 0
      %1085 = vmatprep.subr.bf16.mxu0 0
      %1086 = vmatpush1.bf16.msra.mxu0 0
      %1087 = vmatprep.subr.bf16.mxu0 0
      %1088 = vmatpush1.bf16.msra.mxu0 0
      %1089 = vmatprep.subr.bf16.mxu0 0
      %1090 = vmatpush1.bf16.msra.mxu0 0
      %1091 = vmatprep.subr.bf16.mxu0 0
      %1092 = vmatpush1.bf16.msra.mxu0 0
      %1093 = vmatprep.subr.bf16.mxu0 0
      %1094 = vmatpush1.bf16.msra.mxu0 0
      %1095 = vmatprep.subr.bf16.mxu0 0
      %1096 = vmatpush1.bf16.msra.mxu0 0
      %1097 = vmatprep.subr.bf16.mxu0 0
      %1098 = vmatpush1.bf16.msra.mxu0 0
      %1099 = vmatprep.subr.bf16.mxu0 0
      %1100 = vmatpush1.bf16.msra.mxu0 0
      %1101 = vmatprep.subr.bf16.mxu0 0
      %1102 = vmatpush1.bf16.msra.mxu0 0
      %1103 = vmatprep.subr.bf16.mxu0 0
      %1104 = vmatpush1.bf16.msra.mxu0 0
      %1105 = vmatprep.mubr.bf16.mxu0 0
      %1106 = vmatmul.mubr.bf16.gmra.mrb[0].mxu0 %v1068
      %v1107 = vpop.f32.mrb[0].mxu0
      %v1108 = vadd.f32 %v757, %v1107
      %v1109 = vpop.f32.mrb[0].mxu0
      %v1110 = vadd.f32 %v761, %v1109
      %v1111 = vpop.f32.mrb[0].mxu0
      %v1112 = vadd.f32 %v757, %v1111
      %v1113 = vpop.f32.mrb[0].mxu0
      %v1114 = vadd.f32 %v761, %v1113
      %1115 = vmatprep.mubr.bf16.mxu0 0
      %1116 = vmatmul.mubr.bf16.gmra.mrb[0].mxu0 %v1071
      %v1117 = vpop.f32.mrb[0].mxu0
      %v1118 = vadd.f32 %v757, %v1117
      %v1119 = vpop.f32.mrb[0].mxu0
      %v1120 = vadd.f32 %v761, %v1119
      %v1121 = vpop.f32.mrb[0].mxu0
      %v1122 = vpop.f32.mrb[0].mxu0
      %1123 = vdwg.mxu0
      %1124 = vmatprep.subr.bf16.mxu0 %v738
      %1125 = vmatpush1.bf16.msra.mxu0 %v737
      %1126 = vmatprep.subr.bf16.mxu0 %v740
      %1127 = vmatpush1.bf16.msra.mxu0 %v739
      %1128 = vmatprep.subr.bf16.mxu0 %v742
      %1129 = vmatpush1.bf16.msra.mxu0 %v741
      %1130 = vmatprep.subr.bf16.mxu0 %v744
      %1131 = vmatpush1.bf16.msra.mxu0 %v743
      %1132 = vmatprep.subr.bf16.mxu0 0
      %1133 = vmatpush1.bf16.msra.mxu0 0
      %1134 = vmatprep.subr.bf16.mxu0 0
      %1135 = vmatpush1.bf16.msra.mxu0 0
      %1136 = vmatprep.subr.bf16.mxu0 0
      %1137 = vmatpush1.bf16.msra.mxu0 0
      %1138 = vmatprep.subr.bf16.mxu0 0
      %1139 = vmatpush1.bf16.msra.mxu0 0
      %1140 = vmatprep.subr.bf16.mxu0 0
      %1141 = vmatpush1.bf16.msra.mxu0 0
      %1142 = vmatprep.subr.bf16.mxu0 0
      %1143 = vmatpush1.bf16.msra.mxu0 0
      %1144 = vmatprep.subr.bf16.mxu0 0
      %1145 = vmatpush1.bf16.msra.mxu0 0
      %1146 = vmatprep.subr.bf16.mxu0 0
      %1147 = vmatpush1.bf16.msra.mxu0 0
      %1148 = vmatprep.subr.bf16.mxu0 0
      %1149 = vmatpush1.bf16.msra.mxu0 0
      %1150 = vmatprep.subr.bf16.mxu0 0
      %1151 = vmatpush1.bf16.msra.mxu0 0
      %1152 = vmatprep.subr.bf16.mxu0 0
      %1153 = vmatpush1.bf16.msra.mxu0 0
      %1154 = vmatprep.subr.bf16.mxu0 0
      %1155 = vmatpush1.bf16.msra.mxu0 0
      %1156 = vmatprep.mubr.bf16.mxu0 0
      %1157 = vmatmul.mubr.bf16.gmra.mrb[0].mxu0 %v1004
      %v1158 = vpop.f32.mrb[0].mxu0
      %v1159 = vadd.f32 %v769, %v1158
      %v1160 = vpop.f32.mrb[0].mxu0
      %v1161 = vadd.f32 %v773, %v1160
      %v1162 = vpop.f32.mrb[0].mxu0
      %v1163 = vadd.f32 %v769, %v1162
      %v1164 = vpop.f32.mrb[0].mxu0
      %v1165 = vadd.f32 %v773, %v1164
      %1166 = vmatprep.mubr.bf16.mxu0 0
      %1167 = vmatmul.mubr.bf16.gmra.mrb[0].mxu0 %v1006
      %v1168 = vpop.f32.mrb[0].mxu0
      %v1169 = vadd.f32 %v769, %v1168
      %v1170 = vpop.f32.mrb[0].mxu0
      %v1171 = vadd.f32 %v773, %v1170
      %v1172 = vpop.f32.mrb[0].mxu0
      %v1173 = vpop.f32.mrb[0].mxu0
      %1174 = vdwg.mxu0
      %v1175 = vadd.f32 %v1108, %v1159
      %v1176 = vadd.f32 %v1112, %v1163
      %v1177 = vadd.f32 %v1118, %v1169
      %v1178 = vxor.u32 %v1175, 2147483648
      %v1179 = vxor.u32 %v1176, 2147483648
      %v1180 = vxor.u32 %v1177, 2147483648
      %v1181 = vmul.f32 %v1178, 1.442695
      %v1182 = vpow.pop %v1181
      %v1183 = vmul.f32 %v1179, 1.442695
      %v1184 = vpow.pop %v1183
      %v1185 = vmul.f32 %v1180, 1.442695
      %v1186 = vpow.pop %v1185
      %v1187 = vadd.f32 %v1182, 1.0
      %v1188 = vadd.f32 %v1184, 1.0
      %v1189 = vadd.f32 %v1186, 1.0
      %v1190 = vrcp.pop %v1187
      %v1191 = vmul.f32 1.0, %v1190
      %v1192 = vrcp.pop %v1188
      %v1193 = vmul.f32 1.0, %v1192
      %v1194 = vrcp.pop %v1189
      %v1195 = vmul.f32 1.0, %v1194
      %v1196 = vmul.f32 %v1191, %v1161
      %v1197 = vmul.f32 %v1193, %v1165
      %v1198 = vmul.f32 %v1195, %v1171
      %v1199 = vadd.f32 %v1110, %v1196
      %v1200 = vadd.f32 %v1114, %v1197
      %v1201 = vadd.f32 %v1120, %v1198
      %v1202 = vtanh.pop %v1199
      %v1203 = vtanh.pop %v1200
      %v1204 = vtanh.pop %v1201
      %v1205 = vsub.f32 1.0, %v1191
      %v1206 = vsub.f32 1.0, %v1193
      %v1207 = vsub.f32 1.0, %v1195
      %1211 = vrot.lane.b32.xlu0 %v1202, 64
      %v1212 = vpop.permute.xlu0 %1211
      %1213 = vrot.lane.b32.xlu0 %v1203, 64
      %v1214 = vpop.permute.xlu0 %1213
      %1215 = vrot.lane.b32.xlu0 %v1204, 64
      %v1216 = vpop.permute.xlu0 %1215
      %v1220 = vmul.f32 %v1205, %v1212
      %v1221 = vmul.f32 %v1206, %v1214
      %v1222 = vmul.f32 %v1207, %v1216
      %1226 = vrot.lane.b32.xlu0 %v638, 64
      %v1227 = vpop.permute.xlu0 %1226
      %1228 = vrot.lane.b32.xlu0 %v641, 64
      %v1229 = vpop.permute.xlu0 %1228
      %1230 = vrot.lane.b32.xlu0 %v646, 64
      %v1231 = vpop.permute.xlu0 %1230
      %v1235 = vmul.f32 %v1191, %v1227
      %v1236 = vmul.f32 %v1193, %v1229
      %v1237 = vmul.f32 %v1195, %v1231
      %v1238 = vadd.f32 %v1220, %v1235
      %v1239 = vadd.f32 %v1221, %v1236
      %v1240 = vadd.f32 %v1222, %v1237
      %v1241 = vpack.c.bf16 %v1239, %v1238
      %v1242 = vpack.c.bf16 %v1240, %v1240
      %1245 = vrot.lane.b32.xlu0 %v1241, 64
      %v1246 = vpop.permute.xlu0 %1245
      %1247 = vrot.lane.b32.xlu0 %v1242, 64
      %v1248 = vpop.permute.xlu0 %1247
      %v1251 = vsel %vm785, %v1248, 0
      %1253 = vmatprep.subr.bf16.mxu0 0
      %1254 = vmatpush1.bf16.msra.mxu0 %v1246
      %1255 = vmatprep.subr.bf16.mxu0 0
      %1256 = vmatpush1.bf16.msra.mxu0 %v1251
      %1257 = vmatprep.subr.bf16.mxu0 0
      %1258 = vmatpush1.bf16.msra.mxu0 0
      %1259 = vmatprep.subr.bf16.mxu0 0
      %1260 = vmatpush1.bf16.msra.mxu0 0
      %1261 = vmatprep.subr.bf16.mxu0 0
      %1262 = vmatpush1.bf16.msra.mxu0 0
      %1263 = vmatprep.subr.bf16.mxu0 0
      %1264 = vmatpush1.bf16.msra.mxu0 0
      %1265 = vmatprep.subr.bf16.mxu0 0
      %1266 = vmatpush1.bf16.msra.mxu0 0
      %1267 = vmatprep.subr.bf16.mxu0 0
      %1268 = vmatpush1.bf16.msra.mxu0 0
      %1269 = vmatprep.subr.bf16.mxu0 0
      %1270 = vmatpush1.bf16.msra.mxu0 0
      %1271 = vmatprep.subr.bf16.mxu0 0
      %1272 = vmatpush1.bf16.msra.mxu0 0
      %1273 = vmatprep.subr.bf16.mxu0 0
      %1274 = vmatpush1.bf16.msra.mxu0 0
      %1275 = vmatprep.subr.bf16.mxu0 0
      %1276 = vmatpush1.bf16.msra.mxu0 0
      %1277 = vmatprep.subr.bf16.mxu0 0
      %1278 = vmatpush1.bf16.msra.mxu0 0
      %1279 = vmatprep.subr.bf16.mxu0 0
      %1280 = vmatpush1.bf16.msra.mxu0 0
      %1281 = vmatprep.subr.bf16.mxu0 0
      %1282 = vmatpush1.bf16.msra.mxu0 0
      %1283 = vmatprep.subr.bf16.mxu0 0
      %1284 = vmatpush1.bf16.msra.mxu0 0
      %1285 = vmatprep.mubr.bf16.mxu0 0
      %1286 = vmatmul.mubr.bf16.gmra.mrb[0].mxu0 %v780
      %v1287 = vpop.f32.mrb[0].mxu0
      %v1288 = vadd.f32 0.0, %v1287
      %v1289 = vpop.f32.mrb[0].mxu0
      %v1290 = vpop.f32.mrb[0].mxu0
      %v1291 = vadd.f32 0.0, %v1290
      %v1292 = vpop.f32.mrb[0].mxu0
      %1293 = vmatprep.mubr.bf16.mxu0 0
      %1294 = vmatmul.mubr.bf16.gmra.mrb[0].mxu0 %v783
      %v1295 = vpop.f32.mrb[0].mxu0
      %v1296 = vadd.f32 0.0, %v1295
      %v1297 = vpop.f32.mrb[0].mxu0
      %v1298 = vpop.f32.mrb[0].mxu0
      %v1299 = vpop.f32.mrb[0].mxu0
      %1300 = vdwg.mxu0
      %1301 = vmatprep.subr.bf16.mxu0 0
      %1302 = vmatpush1.bf16.msra.mxu0 %v1246
      %1303 = vmatprep.subr.bf16.mxu0 0
      %1304 = vmatpush1.bf16.msra.mxu0 %v1251
      %1305 = vmatprep.subr.bf16.mxu0 0
      %1306 = vmatpush1.bf16.msra.mxu0 0
      %1307 = vmatprep.subr.bf16.mxu0 0
      %1308 = vmatpush1.bf16.msra.mxu0 0
      %1309 = vmatprep.subr.bf16.mxu0 0
      %1310 = vmatpush1.bf16.msra.mxu0 0
      %1311 = vmatprep.subr.bf16.mxu0 0
      %1312 = vmatpush1.bf16.msra.mxu0 0
      %1313 = vmatprep.subr.bf16.mxu0 0
      %1314 = vmatpush1.bf16.msra.mxu0 0
      %1315 = vmatprep.subr.bf16.mxu0 0
      %1316 = vmatpush1.bf16.msra.mxu0 0
      %1317 = vmatprep.subr.bf16.mxu0 0
      %1318 = vmatpush1.bf16.msra.mxu0 0
      %1319 = vmatprep.subr.bf16.mxu0 0
      %1320 = vmatpush1.bf16.msra.mxu0 0
      %1321 = vmatprep.subr.bf16.mxu0 0
      %1322 = vmatpush1.bf16.msra.mxu0 0
      %1323 = vmatprep.subr.bf16.mxu0 0
      %1324 = vmatpush1.bf16.msra.mxu0 0
      %1325 = vmatprep.subr.bf16.mxu0 0
      %1326 = vmatpush1.bf16.msra.mxu0 0
      %1327 = vmatprep.subr.bf16.mxu0 0
      %1328 = vmatpush1.bf16.msra.mxu0 0
      %1329 = vmatprep.subr.bf16.mxu0 0
      %1330 = vmatpush1.bf16.msra.mxu0 0
      %1331 = vmatprep.subr.bf16.mxu0 0
      %1332 = vmatpush1.bf16.msra.mxu0 0
      %1333 = vmatprep.mubr.bf16.mxu0 0
      %1334 = vmatmul.mubr.bf16.gmra.mrb[0].mxu0 %v838
      %v1335 = vpop.f32.mrb[0].mxu0
      %v1336 = vadd.f32 0.0, %v1335
      %v1337 = vpop.f32.mrb[0].mxu0
      %v1338 = vpop.f32.mrb[0].mxu0
      %v1339 = vadd.f32 0.0, %v1338
      %v1340 = vpop.f32.mrb[0].mxu0
      %1341 = vmatprep.mubr.bf16.mxu0 0
      %1342 = vmatmul.mubr.bf16.gmra.mrb[0].mxu0 %v841
      %v1343 = vpop.f32.mrb[0].mxu0
      %v1344 = vadd.f32 0.0, %v1343
      %v1345 = vpop.f32.mrb[0].mxu0
      %v1346 = vpop.f32.mrb[0].mxu0
      %v1347 = vpop.f32.mrb[0].mxu0
      %1348 = vdwg.mxu0
      %v1349 = vpack.c.bf16 %v1291, %v1288
      %v1350 = vpack.c.bf16 %v1296, %v1296
      %v1351 = vpack.c.bf16 %v1339, %v1336
      %v1352 = vpack.c.bf16 %v1344, %v1344
      %v1354 = vsel %vm596, %v1351, 0
      %v1357 = vsel %vm596, %v1352, 0
      %1359 = vmatprep.subr.bf16.mxu0 0
      %1360 = vmatpush1.bf16.msra.mxu0 %v689
      %1361 = vmatprep.subr.bf16.mxu0 0
      %1362 = vmatpush1.bf16.msra.mxu0 %v690
      %1363 = vmatprep.subr.bf16.mxu0 0
      %1364 = vmatpush1.bf16.msra.mxu0 %v691
      %1365 = vmatprep.subr.bf16.mxu0 0
      %1366 = vmatpush1.bf16.msra.mxu0 %v692
      %1367 = vmatprep.subr.bf16.mxu0 0
      %1368 = vmatpush1.bf16.msra.mxu0 0
      %1369 = vmatprep.subr.bf16.mxu0 0
      %1370 = vmatpush1.bf16.msra.mxu0 0
      %1371 = vmatprep.subr.bf16.mxu0 0
      %1372 = vmatpush1.bf16.msra.mxu0 0
      %1373 = vmatprep.subr.bf16.mxu0 0
      %1374 = vmatpush1.bf16.msra.mxu0 0
      %1375 = vmatprep.subr.bf16.mxu0 0
      %1376 = vmatpush1.bf16.msra.mxu0 0
      %1377 = vmatprep.subr.bf16.mxu0 0
      %1378 = vmatpush1.bf16.msra.mxu0 0
      %1379 = vmatprep.subr.bf16.mxu0 0
      %1380 = vmatpush1.bf16.msra.mxu0 0
      %1381 = vmatprep.subr.bf16.mxu0 0
      %1382 = vmatpush1.bf16.msra.mxu0 0
      %1383 = vmatprep.subr.bf16.mxu0 0
      %1384 = vmatpush1.bf16.msra.mxu0 0
      %1385 = vmatprep.subr.bf16.mxu0 0
      %1386 = vmatpush1.bf16.msra.mxu0 0
      %1387 = vmatprep.subr.bf16.mxu0 0
      %1388 = vmatpush1.bf16.msra.mxu0 0
      %1389 = vmatprep.subr.bf16.mxu0 0
      %1390 = vmatpush1.bf16.msra.mxu0 0
      %1391 = vmatprep.mubr.bf16.mxu0 0
      %1392 = vmatmul.mubr.bf16.gmra.mrb[0].mxu0 %v1354
      %v1393 = vpop.f32.mrb[0].mxu0
      %v1394 = vadd.f32 0.0, %v1393
      %v1395 = vpop.f32.mrb[0].mxu0
      %v1396 = vpop.f32.mrb[0].mxu0
      %v1397 = vadd.f32 0.0, %v1396
      %v1398 = vpop.f32.mrb[0].mxu0
      %1399 = vmatprep.mubr.bf16.mxu0 0
      %1400 = vmatmul.mubr.bf16.gmra.mrb[0].mxu0 %v1357
      %v1401 = vpop.f32.mrb[0].mxu0
      %v1402 = vadd.f32 0.0, %v1401
      %v1403 = vpop.f32.mrb[0].mxu0
      %v1404 = vpop.f32.mrb[0].mxu0
      %v1405 = vpop.f32.mrb[0].mxu0
      %1406 = vdwg.mxu0
      %v1408 = vsel %vm596, %v1349, 0
      %v1411 = vsel %vm596, %v1350, 0
      %1413 = vmatprep.subr.bf16.mxu0 0
      %1414 = vmatpush1.bf16.msra.mxu0 %v685
      %1415 = vmatprep.subr.bf16.mxu0 0
      %1416 = vmatpush1.bf16.msra.mxu0 %v686
      %1417 = vmatprep.subr.bf16.mxu0 0
      %1418 = vmatpush1.bf16.msra.mxu0 %v687
      %1419 = vmatprep.subr.bf16.mxu0 0
      %1420 = vmatpush1.bf16.msra.mxu0 %v688
      %1421 = vmatprep.subr.bf16.mxu0 0
      %1422 = vmatpush1.bf16.msra.mxu0 0
      %1423 = vmatprep.subr.bf16.mxu0 0
      %1424 = vmatpush1.bf16.msra.mxu0 0
      %1425 = vmatprep.subr.bf16.mxu0 0
      %1426 = vmatpush1.bf16.msra.mxu0 0
      %1427 = vmatprep.subr.bf16.mxu0 0
      %1428 = vmatpush1.bf16.msra.mxu0 0
      %1429 = vmatprep.subr.bf16.mxu0 0
      %1430 = vmatpush1.bf16.msra.mxu0 0
      %1431 = vmatprep.subr.bf16.mxu0 0
      %1432 = vmatpush1.bf16.msra.mxu0 0
      %1433 = vmatprep.subr.bf16.mxu0 0
      %1434 = vmatpush1.bf16.msra.mxu0 0
      %1435 = vmatprep.subr.bf16.mxu0 0
      %1436 = vmatpush1.bf16.msra.mxu0 0
      %1437 = vmatprep.subr.bf16.mxu0 0
      %1438 = vmatpush1.bf16.msra.mxu0 0
      %1439 = vmatprep.subr.bf16.mxu0 0
      %1440 = vmatpush1.bf16.msra.mxu0 0
      %1441 = vmatprep.subr.bf16.mxu0 0
      %1442 = vmatpush1.bf16.msra.mxu0 0
      %1443 = vmatprep.subr.bf16.mxu0 0
      %1444 = vmatpush1.bf16.msra.mxu0 0
      %1445 = vmatprep.mubr.bf16.mxu0 0
      %1446 = vmatmul.mubr.bf16.gmra.mrb[0].mxu0 %v1408
      %v1447 = vpop.f32.mrb[0].mxu0
      %v1448 = vadd.f32 %v1394, %v1447
      %v1449 = vpop.f32.mrb[0].mxu0
      %v1450 = vpop.f32.mrb[0].mxu0
      %v1451 = vadd.f32 %v1397, %v1450
      %v1452 = vpop.f32.mrb[0].mxu0
      %1453 = vmatprep.mubr.bf16.mxu0 0
      %1454 = vmatmul.mubr.bf16.gmra.mrb[0].mxu0 %v1411
      %v1455 = vpop.f32.mrb[0].mxu0
      %v1456 = vadd.f32 %v1402, %v1455
      %v1457 = vpop.f32.mrb[0].mxu0
      %v1458 = vpop.f32.mrb[0].mxu0
      %v1459 = vpop.f32.mrb[0].mxu0
      %1460 = vdwg.mxu0
      %v1462 = vsel %vm596, %v1246, 0
      %v1464 = vsel %vm596, %v1248, 0
      %1466 = vmatprep.subr.bf16.mxu0 0
      %1467 = vmatpush1.bf16.msra.mxu0 %v693
      %1468 = vmatprep.subr.bf16.mxu0 0
      %1469 = vmatpush1.bf16.msra.mxu0 %v694
      %1470 = vmatprep.subr.bf16.mxu0 0
      %1471 = vmatpush1.bf16.msra.mxu0 %v695
      %1472 = vmatprep.subr.bf16.mxu0 0
      %1473 = vmatpush1.bf16.msra.mxu0 %v696
      %1474 = vmatprep.subr.bf16.mxu0 0
      %1475 = vmatpush1.bf16.msra.mxu0 0
      %1476 = vmatprep.subr.bf16.mxu0 0
      %1477 = vmatpush1.bf16.msra.mxu0 0
      %1478 = vmatprep.subr.bf16.mxu0 0
      %1479 = vmatpush1.bf16.msra.mxu0 0
      %1480 = vmatprep.subr.bf16.mxu0 0
      %1481 = vmatpush1.bf16.msra.mxu0 0
      %1482 = vmatprep.subr.bf16.mxu0 0
      %1483 = vmatpush1.bf16.msra.mxu0 0
      %1484 = vmatprep.subr.bf16.mxu0 0
      %1485 = vmatpush1.bf16.msra.mxu0 0
      %1486 = vmatprep.subr.bf16.mxu0 0
      %1487 = vmatpush1.bf16.msra.mxu0 0
      %1488 = vmatprep.subr.bf16.mxu0 0
      %1489 = vmatpush1.bf16.msra.mxu0 0
      %1490 = vmatprep.subr.bf16.mxu0 0
      %1491 = vmatpush1.bf16.msra.mxu0 0
      %1492 = vmatprep.subr.bf16.mxu0 0
      %1493 = vmatpush1.bf16.msra.mxu0 0
      %1494 = vmatprep.subr.bf16.mxu0 0
      %1495 = vmatpush1.bf16.msra.mxu0 0
      %1496 = vmatprep.subr.bf16.mxu0 0
      %1497 = vmatpush1.bf16.msra.mxu0 0
      %1498 = vmatprep.mubr.bf16.mxu0 0
      %1499 = vmatmul.mubr.bf16.gmra.mrb[0].mxu0 %v1462
      %v1500 = vpop.f32.mrb[0].mxu0
      %v1501 = vadd.f32 0.0, %v1500
      %v1502 = vpop.f32.mrb[0].mxu0
      %v1503 = vpop.f32.mrb[0].mxu0
      %v1504 = vadd.f32 0.0, %v1503
      %v1505 = vpop.f32.mrb[0].mxu0
      %1506 = vmatprep.mubr.bf16.mxu0 0
      %1507 = vmatmul.mubr.bf16.gmra.mrb[0].mxu0 %v1464
      %v1508 = vpop.f32.mrb[0].mxu0
      %v1509 = vadd.f32 0.0, %v1508
      %v1510 = vpop.f32.mrb[0].mxu0
      %v1511 = vpop.f32.mrb[0].mxu0
      %v1512 = vpop.f32.mrb[0].mxu0
      %1513 = vdwg.mxu0
      %v1514 = vadd.f32 %v1448, %v1501
      %v1515 = vadd.f32 %v1451, %v1504
      %v1516 = vadd.f32 %v1456, %v1509
      %v1517 = vadd.f32 %v1514, %v750
      %v1518 = vadd.f32 %v1515, %v750
      %v1519 = vadd.f32 %v1516, %v750
      %v1520 = vmax.f32 %v1517, 0.0
      %v1521 = vmax.f32 %v1518, 0.0
      %v1522 = vmax.f32 %v1519, 0.0
      %v1523 = vpack.c.bf16 %v1521, %v1520
      %v1524 = vpack.c.bf16 %v1522, %v1522
      %v1526 = vsel %vm596, %v1523, 0
      %v1529 = vsel %vm596, %v1524, 0
      %1531 = vmatprep.subr.bf16.mxu0 %v714
      %1532 = vmatpush1.bf16.msra.mxu0 %v713
      %1533 = vmatprep.subr.bf16.mxu0 %v716
      %1534 = vmatpush1.bf16.msra.mxu0 %v715
      %1535 = vmatprep.subr.bf16.mxu0 %v718
      %1536 = vmatpush1.bf16.msra.mxu0 %v717
      %1537 = vmatprep.subr.bf16.mxu0 %v720
      %1538 = vmatpush1.bf16.msra.mxu0 %v719
      %1539 = vmatprep.subr.bf16.mxu0 0
      %1540 = vmatpush1.bf16.msra.mxu0 0
      %1541 = vmatprep.subr.bf16.mxu0 0
      %1542 = vmatpush1.bf16.msra.mxu0 0
      %1543 = vmatprep.subr.bf16.mxu0 0
      %1544 = vmatpush1.bf16.msra.mxu0 0
      %1545 = vmatprep.subr.bf16.mxu0 0
      %1546 = vmatpush1.bf16.msra.mxu0 0
      %1547 = vmatprep.subr.bf16.mxu0 0
      %1548 = vmatpush1.bf16.msra.mxu0 0
      %1549 = vmatprep.subr.bf16.mxu0 0
      %1550 = vmatpush1.bf16.msra.mxu0 0
      %1551 = vmatprep.subr.bf16.mxu0 0
      %1552 = vmatpush1.bf16.msra.mxu0 0
      %1553 = vmatprep.subr.bf16.mxu0 0
      %1554 = vmatpush1.bf16.msra.mxu0 0
      %1555 = vmatprep.subr.bf16.mxu0 0
      %1556 = vmatpush1.bf16.msra.mxu0 0
      %1557 = vmatprep.subr.bf16.mxu0 0
      %1558 = vmatpush1.bf16.msra.mxu0 0
      %1559 = vmatprep.subr.bf16.mxu0 0
      %1560 = vmatpush1.bf16.msra.mxu0 0
      %1561 = vmatprep.subr.bf16.mxu0 0
      %1562 = vmatpush1.bf16.msra.mxu0 0
      %1563 = vmatprep.mubr.bf16.mxu0 0
      %1564 = vmatmul.mubr.bf16.gmra.mrb[0].mxu0 %v1526
      %v1565 = vpop.f32.mrb[0].mxu0
      %v1566 = vadd.f32 %v757, %v1565
      %v1567 = vpop.f32.mrb[0].mxu0
      %v1568 = vadd.f32 %v761, %v1567
      %v1569 = vpop.f32.mrb[0].mxu0
      %v1570 = vadd.f32 %v757, %v1569
      %v1571 = vpop.f32.mrb[0].mxu0
      %v1572 = vadd.f32 %v761, %v1571
      %1573 = vmatprep.mubr.bf16.mxu0 0
      %1574 = vmatmul.mubr.bf16.gmra.mrb[0].mxu0 %v1529
      %v1575 = vpop.f32.mrb[0].mxu0
      %v1576 = vadd.f32 %v757, %v1575
      %v1577 = vpop.f32.mrb[0].mxu0
      %v1578 = vadd.f32 %v761, %v1577
      %v1579 = vpop.f32.mrb[0].mxu0
      %v1580 = vpop.f32.mrb[0].mxu0
      %1581 = vdwg.mxu0
      %1582 = vmatprep.subr.bf16.mxu0 %v738
      %1583 = vmatpush1.bf16.msra.mxu0 %v737
      %1584 = vmatprep.subr.bf16.mxu0 %v740
      %1585 = vmatpush1.bf16.msra.mxu0 %v739
      %1586 = vmatprep.subr.bf16.mxu0 %v742
      %1587 = vmatpush1.bf16.msra.mxu0 %v741
      %1588 = vmatprep.subr.bf16.mxu0 %v744
      %1589 = vmatpush1.bf16.msra.mxu0 %v743
      %1590 = vmatprep.subr.bf16.mxu0 0
      %1591 = vmatpush1.bf16.msra.mxu0 0
      %1592 = vmatprep.subr.bf16.mxu0 0
      %1593 = vmatpush1.bf16.msra.mxu0 0
      %1594 = vmatprep.subr.bf16.mxu0 0
      %1595 = vmatpush1.bf16.msra.mxu0 0
      %1596 = vmatprep.subr.bf16.mxu0 0
      %1597 = vmatpush1.bf16.msra.mxu0 0
      %1598 = vmatprep.subr.bf16.mxu0 0
      %1599 = vmatpush1.bf16.msra.mxu0 0
      %1600 = vmatprep.subr.bf16.mxu0 0
      %1601 = vmatpush1.bf16.msra.mxu0 0
      %1602 = vmatprep.subr.bf16.mxu0 0
      %1603 = vmatpush1.bf16.msra.mxu0 0
      %1604 = vmatprep.subr.bf16.mxu0 0
      %1605 = vmatpush1.bf16.msra.mxu0 0
      %1606 = vmatprep.subr.bf16.mxu0 0
      %1607 = vmatpush1.bf16.msra.mxu0 0
      %1608 = vmatprep.subr.bf16.mxu0 0
      %1609 = vmatpush1.bf16.msra.mxu0 0
      %1610 = vmatprep.subr.bf16.mxu0 0
      %1611 = vmatpush1.bf16.msra.mxu0 0
      %1612 = vmatprep.subr.bf16.mxu0 0
      %1613 = vmatpush1.bf16.msra.mxu0 0
      %1614 = vmatprep.mubr.bf16.mxu0 0
      %1615 = vmatmul.mubr.bf16.gmra.mrb[0].mxu0 %v1462
      %v1616 = vpop.f32.mrb[0].mxu0
      %v1617 = vadd.f32 %v769, %v1616
      %v1618 = vpop.f32.mrb[0].mxu0
      %v1619 = vadd.f32 %v773, %v1618
      %v1620 = vpop.f32.mrb[0].mxu0
      %v1621 = vadd.f32 %v769, %v1620
      %v1622 = vpop.f32.mrb[0].mxu0
      %v1623 = vadd.f32 %v773, %v1622
      %1624 = vmatprep.mubr.bf16.mxu0 0
      %1625 = vmatmul.mubr.bf16.gmra.mrb[0].mxu0 %v1464
      %v1626 = vpop.f32.mrb[0].mxu0
      %v1627 = vadd.f32 %v769, %v1626
      %v1628 = vpop.f32.mrb[0].mxu0
      %v1629 = vadd.f32 %v773, %v1628
      %v1630 = vpop.f32.mrb[0].mxu0
      %v1631 = vpop.f32.mrb[0].mxu0
      %1632 = vdwg.mxu0
      %v1633 = vadd.f32 %v1566, %v1617
      %v1634 = vadd.f32 %v1570, %v1621
      %v1635 = vadd.f32 %v1576, %v1627
      %v1636 = vxor.u32 %v1633, 2147483648
      %v1637 = vxor.u32 %v1634, 2147483648
      %v1638 = vxor.u32 %v1635, 2147483648
      %v1639 = vmul.f32 %v1636, 1.442695
      %v1640 = vpow.pop %v1639
      %v1641 = vmul.f32 %v1637, 1.442695
      %v1642 = vpow.pop %v1641
      %v1643 = vmul.f32 %v1638, 1.442695
      %v1644 = vpow.pop %v1643
      %v1645 = vadd.f32 %v1640, 1.0
      %v1646 = vadd.f32 %v1642, 1.0
      %v1647 = vadd.f32 %v1644, 1.0
      %v1648 = vrcp.pop %v1645
      %v1649 = vmul.f32 1.0, %v1648
      %v1650 = vrcp.pop %v1646
      %v1651 = vmul.f32 1.0, %v1650
      %v1652 = vrcp.pop %v1647
      %v1653 = vmul.f32 1.0, %v1652
      %v1654 = vmul.f32 %v1649, %v1619
      %v1655 = vmul.f32 %v1651, %v1623
      %v1656 = vmul.f32 %v1653, %v1629
      %v1657 = vadd.f32 %v1568, %v1654
      %v1658 = vadd.f32 %v1572, %v1655
      %v1659 = vadd.f32 %v1578, %v1656
      %v1660 = vtanh.pop %v1657
      %v1661 = vtanh.pop %v1658
      %v1662 = vtanh.pop %v1659
      %v1663 = vsub.f32 1.0, %v1649
      %v1664 = vsub.f32 1.0, %v1651
      %v1665 = vsub.f32 1.0, %v1653
      %1669 = vrot.lane.b32.xlu0 %v1660, 64
      %v1670 = vpop.permute.xlu0 %1669
      %1671 = vrot.lane.b32.xlu0 %v1661, 64
      %v1672 = vpop.permute.xlu0 %1671
      %1673 = vrot.lane.b32.xlu0 %v1662, 64
      %v1674 = vpop.permute.xlu0 %1673
      %v1678 = vmul.f32 %v1663, %v1670
      %v1679 = vmul.f32 %v1664, %v1672
      %v1680 = vmul.f32 %v1665, %v1674
      %v1681 = vmul.f32 %v1649, %v1238
      %v1682 = vmul.f32 %v1651, %v1239
      %v1683 = vmul.f32 %v1653, %v1240
      %v1684 = vadd.f32 %v1678, %v1681
      %v1685 = vadd.f32 %v1679, %v1682
      %v1686 = vadd.f32 %v1680, %v1683
      %v1687 = vld [vmem:[%s13] sm:$0xff]
      %v1688 = vld [vmem:[%s13 + $0x8] sm:$0xff]
      %v1689 = vld [vmem:[%s13 + $0x10] sm:$0xff]
      %v1690 = vld [vmem:[%s13 + $0x18] sm:$0xff]
      %v1691 = vld [vmem:[%s13 + $0x20] sm:$0xff]
      %v1692 = vld [vmem:[%s13 + $0x28] sm:$0xff]
      %v1693 = vld [vmem:[%s13 + $0x30] sm:$0xff]
      %v1694 = vld [vmem:[%s13 + $0x38] sm:$0xff]
      %v1695 = vpack.c.bf16 %v1685, %v1684
      %v1696 = vpack.c.bf16 %v1686, %v1686
      %v1697 = vpack.c.bf16 %v1688, %v1687
      %v1698 = vpack.c.bf16 %v1690, %v1689
      %v1699 = vpack.c.bf16 %v1692, %v1691
      %v1700 = vpack.c.bf16 %v1694, %v1693
      %v1701 = vld [vmem:[%s14] sm:$0x1]
      %v1703 = vlaneseq
      %v1704 = vshrl.u32 %v1703, 7
      %v1705 = vsub.s32 0, %v1704
      %v1706 = vrot.slane %v1701, %v1705
      %1710 = vrot.lane.b32.xlu0 %v1695, 64
      %v1711 = vpop.permute.xlu0 %1710
      %1712 = vrot.lane.b32.xlu0 %v1696, 64
      %v1713 = vpop.permute.xlu0 %1712
      %v1715 = vsel %vm596, %v1711, 0
      %v1718 = vsel %vm596, %v1713, 0
      %1720 = vmatprep.subr.bf16.mxu0 0
      %1721 = vmatpush1.bf16.msra.mxu0 %v1697
      %1722 = vmatprep.subr.bf16.mxu0 0
      %1723 = vmatpush1.bf16.msra.mxu0 %v1698
      %1724 = vmatprep.subr.bf16.mxu0 0
      %1725 = vmatpush1.bf16.msra.mxu0 %v1699
      %1726 = vmatprep.subr.bf16.mxu0 0
      %1727 = vmatpush1.bf16.msra.mxu0 %v1700
      %1728 = vmatprep.subr.bf16.mxu0 0
      %1729 = vmatpush1.bf16.msra.mxu0 0
      %1730 = vmatprep.subr.bf16.mxu0 0
      %1731 = vmatpush1.bf16.msra.mxu0 0
      %1732 = vmatprep.subr.bf16.mxu0 0
      %1733 = vmatpush1.bf16.msra.mxu0 0
      %1734 = vmatprep.subr.bf16.mxu0 0
      %1735 = vmatpush1.bf16.msra.mxu0 0
      %1736 = vmatprep.subr.bf16.mxu0 0
      %1737 = vmatpush1.bf16.msra.mxu0 0
      %1738 = vmatprep.subr.bf16.mxu0 0
      %1739 = vmatpush1.bf16.msra.mxu0 0
      %1740 = vmatprep.subr.bf16.mxu0 0
      %1741 = vmatpush1.bf16.msra.mxu0 0
      %1742 = vmatprep.subr.bf16.mxu0 0
      %1743 = vmatpush1.bf16.msra.mxu0 0
      %1744 = vmatprep.subr.bf16.mxu0 0
      %1745 = vmatpush1.bf16.msra.mxu0 0
      %1746 = vmatprep.subr.bf16.mxu0 0
      %1747 = vmatpush1.bf16.msra.mxu0 0
      %1748 = vmatprep.subr.bf16.mxu0 0
      %1749 = vmatpush1.bf16.msra.mxu0 0
      %1750 = vmatprep.subr.bf16.mxu0 0
      %1751 = vmatpush1.bf16.msra.mxu0 0
      %1752 = vmatprep.mubr.bf16.mxu0 0
      %1753 = vmatmul.mubr.bf16.gmra.mrb[0].mxu0 %v1715
      %v1754 = vpop.f32.mrb[0].mxu0
      %v1755 = vadd.f32 %v1706, %v1754
      %v1756 = vpop.f32.mrb[0].mxu0
      %v1757 = vpop.f32.mrb[0].mxu0
      %v1758 = vadd.f32 %v1706, %v1757
      %v1759 = vpop.f32.mrb[0].mxu0
      %1760 = vmatprep.mubr.bf16.mxu0 0
      %1761 = vmatmul.mubr.bf16.gmra.mrb[0].mxu0 %v1718
      %v1762 = vpop.f32.mrb[0].mxu0
      %v1763 = vadd.f32 %v1706, %v1762
      %v1764 = vpop.f32.mrb[0].mxu0
      %v1765 = vpop.f32.mrb[0].mxu0
      %v1766 = vpop.f32.mrb[0].mxu0
      %1767 = vdwg.mxu0
      %1768 = vst [vmem:[%s496] sm:$0xff] %v1755
      %1769 = vst [vmem:[%s496 + $0x8] sm:$0xff] %v1758
      %1770 = vst [vmem:[%s496 + $0x10] sm:$0xff] %v1763
      %s1771 = smul.u32 3, %s26
      %p1772 = scmp.lt.s32.totalorder %s1771, 5
      %s1773 = scalar_select %p1772, %s1771, 5
      %s1774 = smul.addr %s1773, 8
      %s1775 = scalar_lea.vmem %s15, %s1774
      // Predicated region
      $region81: #{unet_forward.4} parent=79 // pred_check
        %p1776 = pneg %p364
      $region82: #{unet_forward.4} parent=79 // pred_check_branch
        %1778 = sbr.rel (%p1776) target = $region84
      $region83: #{unet_forward.4} parent=79 // pred_region
        %s1779 = smul.u32 3, %s26
      $region84: #{unet_forward.4} parent=79 // pred_fallthru
        _
    $region80: #{unet_forward.4} parent=5 // pred_fallthru
      _
    %p1780 = scmp.le.s32.totalorder 2, %s21
    // Predicated region
    $region85: #{unet_forward.4} parent=5 // pred_check
      %p1781 = pneg %p1780
    $region86: #{unet_forward.4} parent=5 // pred_check_branch
      %1783 = sbr.rel (%p1781) target = $region88
    $region87: #{unet_forward.4} parent=5 // pred_region
      %s1784 = ssub.s32 %s21, 2
      // Predicated region
      $region89: #{unet_forward.4} parent=87 // pred_check
        %p1785 = pneg %p370
      $region90: #{unet_forward.4} parent=87 // pred_check_branch
        %1787 = sbr.rel (%p1785) target = $region92
      $region91: #{unet_forward.4} parent=87 // pred_region
        %s1788 = smul.u32 3, %s27
        %p1789 = scmp.lt.s32.totalorder %s1788, 5
        %s1790 = scalar_select %p1789, %s1788, 5
        %s1791 = smul.addr %s1790, 8
        %s1792 = scalar_lea.vmem %s15, %s1791
      $region92: #{unet_forward.4} parent=87 // pred_fallthru
        _
    $region88: #{unet_forward.4} parent=5 // pred_fallthru
      _
  $region6: #{unet_forward.4} parent=0 // loop_footer
    %s25 = sadd.s32 1, %s21
  $region7: #{unet_forward.4} parent=0 // loop_footer_branch
    %20 = sbr.rel target = $region3
  $region8: #{unet_forward.4} parent=0 // loop_exit
    _

// kernel: unet_forward.5
$region0: #{unet_forward.5}
  #allocation0 [shape = 'u32[]', space=smem, size = 0x4, offset = 0x4, fixed_abs, tag = 'smem constant byte address 0x4 - core index']
  #allocation1 [shape = 'u32[144,128]{1,0:T(1,128)}', space=vmem, size = 0x12000, scoped, tag = 'internal scratch']
  %s0 = inlined_call_operand.vmem [shape: f32[96,128], index: 0, kind: input, shape index: {}]
  %s1 = inlined_call_operand.vmem [shape: f32[48,48], index: 1, kind: input, shape index: {}]
  %s2 = inlined_call_operand.vmem [shape: f32[48,48], index: 2, kind: input, shape index: {}]
  %s3 = inlined_call_operand.vmem [shape: f32[128,64], index: 3, kind: input, shape index: {}]
  %s4 = inlined_call_operand.vmem [shape: f32[1,64], index: 4, kind: input, shape index: {}]
  %s5 = inlined_call_operand.vmem [shape: f32[64,64], index: 5, kind: input, shape index: {}]
  %s6 = inlined_call_operand.vmem [shape: f32[1,64], index: 6, kind: input, shape index: {}]
  %s7 = inlined_call_operand.vmem [shape: f32[192,64], index: 7, kind: input, shape index: {}]
  %s8 = inlined_call_operand.vmem [shape: f32[1,64], index: 8, kind: input, shape index: {}]
  %s9 = inlined_call_operand.vmem [shape: f32[64,192], index: 9, kind: input, shape index: {}]
  %s10 = inlined_call_operand.vmem [shape: f32[1,192], index: 10, kind: input, shape index: {}]
  %s11 = inlined_call_operand.vmem [shape: f32[64,192], index: 11, kind: input, shape index: {}]
  %s12 = inlined_call_operand.vmem [shape: f32[1,192], index: 12, kind: input, shape index: {}]
  %s13 = inlined_call_operand.vmem [shape: f32[96,64], index: 13, kind: output, shape index: {}]
  %s14 = sld [smem:[#allocation0]]
  $region85: #{unet_forward.5} parent=0
    _
  %s16 = ssub.s32 1, %s14
  %s17 = scalar_select 0, %s16, %s14
  loop: start=0, step=1, limit=4
  $region2: #{unet_forward.5} parent=0 // loop_pre_header
    _
  $region3: #{unet_forward.5} parent=0 // loop_header
    %s19 = sphi 0, %s23
    %p20 = scmp.ge.s32.totalorder %s19, 4
    %s29 = sphi 0, %s31
    %s32 = sphi 0, %s29
    %s33 = sphi 0, %s32
    %s49 = sphi 0, %s33
    %s53 = sphi 0, %s53
    %s55 = sphi 0, %s53
    %s56 = sphi 0, %s55
    %s70 = sphi 0, %s56
    %s74 = sphi 0, %s74
    %s76 = sphi 0, %s74
    %s77 = sphi 0, %s76
    %s91 = sphi 0, %s77
    %s95 = sphi 0, %s95
    %s97 = sphi 0, %s95
    %s98 = sphi 0, %s97
    %s112 = sphi 0, %s98
    %s116 = sphi 0, %s116
    %s118 = sphi 0, %s116
    %s119 = sphi 0, %s118
    %s133 = sphi 0, %s119
    %s137 = sphi 0, %s137
    %s139 = sphi 0, %s137
    %s140 = sphi 0, %s139
    %s154 = sphi 0, %s140
    %s158 = sphi 0, %s158
    %s160 = sphi 0, %s158
    %s161 = sphi 0, %s160
    %s175 = sphi 0, %s161
    %s179 = sphi 0, %s179
    %s181 = sphi 0, %s179
    %s182 = sphi 0, %s181
    %s196 = sphi 0, %s182
    %s200 = sphi 0, %s200
    %s202 = sphi 0, %s200
    %s203 = sphi 0, %s202
    %s217 = sphi 0, %s203
    %s221 = sphi 0, %s221
    %s223 = sphi 0, %s221
    %s224 = sphi 0, %s223
    %s238 = sphi 0, %s224
    %s242 = sphi 0, %s242
    %s244 = sphi 0, %s242
    %s245 = sphi 0, %s244
    %s259 = sphi 0, %s245
    %s263 = sphi 0, %s263
    %s265 = sphi 0, %s263
    %s266 = sphi 0, %s265
    %s280 = sphi 0, %s266
    %s284 = sphi 0, %s284
    %s286 = sphi 0, %s284
    %s287 = sphi 0, %s286
    %s301 = sphi 0, %s287
    %s307 = sphi 0, %s309
    %s310 = sphi 0, %s307
    %s311 = sphi 0, %s310
    %s327 = sphi 0, %s311
  $region4: #{unet_forward.5} parent=0 // loop_header_branch
    %22 = sbr.rel (%p20) target = $region8
  $region5: #{unet_forward.5} parent=0 // loop_body
    %s24 = ssub.s32 %s19, 1
    %s25 = ssub.s32 %s19, 2
    %s26 = sadd.s32 %s19, 1
    %s27 = ssub.s32 %s19, %s26
    %p28 = scmp.eq.s32.totalorder %s27, 0
    %s30 = sadd.s32 %s29, 1
    %s31 = scalar_select %p28, %s29, %s30
    %p34 = pneg %p28
    %p35 = scmp.eq.s32.totalorder %s19, 1
    %p36 = por %p34, %p35
    %p37 = scmp.ne.s32.totalorder %s29, %s32
    %p38 = scmp.eq.s32.totalorder %s19, 0
    %p39 = por %p37, %p38
    %p40 = scmp.ne.s32.totalorder %s29, %s32
    %p41 = scmp.eq.s32.totalorder %s24, 1
    %p42 = por %p40, %p41
    %p43 = scmp.ne.s32.totalorder %s32, %s33
    %p44 = scmp.eq.s32.totalorder %s24, 0
    %p45 = por %p43, %p44
    %p46 = scmp.ne.s32.totalorder %s32, %s33
    %p47 = scmp.eq.s32.totalorder %s25, 1
    %p48 = por %p46, %p47
    %p50 = scmp.ne.s32.totalorder %s33, %s49
    %p51 = scmp.eq.s32.totalorder %s25, 0
    %p52 = por %p50, %p51
    %s54 = sadd.s32 %s53, 1
    %p57 = scmp.eq.s32.totalorder %s19, 1
    %p58 = scmp.ne.s32.totalorder %s53, %s55
    %p59 = scmp.eq.s32.totalorder %s19, 0
    %p60 = por %p58, %p59
    %p61 = scmp.ne.s32.totalorder %s53, %s55
    %p62 = scmp.eq.s32.totalorder %s24, 1
    %p63 = por %p61, %p62
    %p64 = scmp.ne.s32.totalorder %s55, %s56
    %p65 = scmp.eq.s32.totalorder %s24, 0
    %p66 = por %p64, %p65
    %p67 = scmp.ne.s32.totalorder %s55, %s56
    %p68 = scmp.eq.s32.totalorder %s25, 1
    %p69 = por %p67, %p68
    %p71 = scmp.ne.s32.totalorder %s56, %s70
    %p72 = scmp.eq.s32.totalorder %s25, 0
    %p73 = por %p71, %p72
    %s75 = sadd.s32 %s74, 1
    %p78 = scmp.eq.s32.totalorder %s19, 1
    %p79 = scmp.ne.s32.totalorder %s74, %s76
    %p80 = scmp.eq.s32.totalorder %s19, 0
    %p81 = por %p79, %p80
    %p82 = scmp.ne.s32.totalorder %s74, %s76
    %p83 = scmp.eq.s32.totalorder %s24, 1
    %p84 = por %p82, %p83
    %p85 = scmp.ne.s32.totalorder %s76, %s77
    %p86 = scmp.eq.s32.totalorder %s24, 0
    %p87 = por %p85, %p86
    %p88 = scmp.ne.s32.totalorder %s76, %s77
    %p89 = scmp.eq.s32.totalorder %s25, 1
    %p90 = por %p88, %p89
    %p92 = scmp.ne.s32.totalorder %s77, %s91
    %p93 = scmp.eq.s32.totalorder %s25, 0
    %p94 = por %p92, %p93
    %s96 = sadd.s32 %s95, 1
    %p99 = scmp.eq.s32.totalorder %s19, 1
    %p100 = scmp.ne.s32.totalorder %s95, %s97
    %p101 = scmp.eq.s32.totalorder %s19, 0
    %p102 = por %p100, %p101
    %p103 = scmp.ne.s32.totalorder %s95, %s97
    %p104 = scmp.eq.s32.totalorder %s24, 1
    %p105 = por %p103, %p104
    %p106 = scmp.ne.s32.totalorder %s97, %s98
    %p107 = scmp.eq.s32.totalorder %s24, 0
    %p108 = por %p106, %p107
    %p109 = scmp.ne.s32.totalorder %s97, %s98
    %p110 = scmp.eq.s32.totalorder %s25, 1
    %p111 = por %p109, %p110
    %p113 = scmp.ne.s32.totalorder %s98, %s112
    %p114 = scmp.eq.s32.totalorder %s25, 0
    %p115 = por %p113, %p114
    %s117 = sadd.s32 %s116, 1
    %p120 = scmp.eq.s32.totalorder %s19, 1
    %p121 = scmp.ne.s32.totalorder %s116, %s118
    %p122 = scmp.eq.s32.totalorder %s19, 0
    %p123 = por %p121, %p122
    %p124 = scmp.ne.s32.totalorder %s116, %s118
    %p125 = scmp.eq.s32.totalorder %s24, 1
    %p126 = por %p124, %p125
    %p127 = scmp.ne.s32.totalorder %s118, %s119
    %p128 = scmp.eq.s32.totalorder %s24, 0
    %p129 = por %p127, %p128
    %p130 = scmp.ne.s32.totalorder %s118, %s119
    %p131 = scmp.eq.s32.totalorder %s25, 1
    %p132 = por %p130, %p131
    %p134 = scmp.ne.s32.totalorder %s119, %s133
    %p135 = scmp.eq.s32.totalorder %s25, 0
    %p136 = por %p134, %p135
    %s138 = sadd.s32 %s137, 1
    %p141 = scmp.eq.s32.totalorder %s19, 1
    %p142 = scmp.ne.s32.totalorder %s137, %s139
    %p143 = scmp.eq.s32.totalorder %s19, 0
    %p144 = por %p142, %p143
    %p145 = scmp.ne.s32.totalorder %s137, %s139
    %p146 = scmp.eq.s32.totalorder %s24, 1
    %p147 = por %p145, %p146
    %p148 = scmp.ne.s32.totalorder %s139, %s140
    %p149 = scmp.eq.s32.totalorder %s24, 0
    %p150 = por %p148, %p149
    %p151 = scmp.ne.s32.totalorder %s139, %s140
    %p152 = scmp.eq.s32.totalorder %s25, 1
    %p153 = por %p151, %p152
    %p155 = scmp.ne.s32.totalorder %s140, %s154
    %p156 = scmp.eq.s32.totalorder %s25, 0
    %p157 = por %p155, %p156
    %s159 = sadd.s32 %s158, 1
    %p162 = scmp.eq.s32.totalorder %s19, 1
    %p163 = scmp.ne.s32.totalorder %s158, %s160
    %p164 = scmp.eq.s32.totalorder %s19, 0
    %p165 = por %p163, %p164
    %p166 = scmp.ne.s32.totalorder %s158, %s160
    %p167 = scmp.eq.s32.totalorder %s24, 1
    %p168 = por %p166, %p167
    %p169 = scmp.ne.s32.totalorder %s160, %s161
    %p170 = scmp.eq.s32.totalorder %s24, 0
    %p171 = por %p169, %p170
    %p172 = scmp.ne.s32.totalorder %s160, %s161
    %p173 = scmp.eq.s32.totalorder %s25, 1
    %p174 = por %p172, %p173
    %p176 = scmp.ne.s32.totalorder %s161, %s175
    %p177 = scmp.eq.s32.totalorder %s25, 0
    %p178 = por %p176, %p177
    %s180 = sadd.s32 %s179, 1
    %p183 = scmp.eq.s32.totalorder %s19, 1
    %p184 = scmp.ne.s32.totalorder %s179, %s181
    %p185 = scmp.eq.s32.totalorder %s19, 0
    %p186 = por %p184, %p185
    %p187 = scmp.ne.s32.totalorder %s179, %s181
    %p188 = scmp.eq.s32.totalorder %s24, 1
    %p189 = por %p187, %p188
    %p190 = scmp.ne.s32.totalorder %s181, %s182
    %p191 = scmp.eq.s32.totalorder %s24, 0
    %p192 = por %p190, %p191
    %p193 = scmp.ne.s32.totalorder %s181, %s182
    %p194 = scmp.eq.s32.totalorder %s25, 1
    %p195 = por %p193, %p194
    %p197 = scmp.ne.s32.totalorder %s182, %s196
    %p198 = scmp.eq.s32.totalorder %s25, 0
    %p199 = por %p197, %p198
    %s201 = sadd.s32 %s200, 1
    %p204 = scmp.eq.s32.totalorder %s19, 1
    %p205 = scmp.ne.s32.totalorder %s200, %s202
    %p206 = scmp.eq.s32.totalorder %s19, 0
    %p207 = por %p205, %p206
    %p208 = scmp.ne.s32.totalorder %s200, %s202
    %p209 = scmp.eq.s32.totalorder %s24, 1
    %p210 = por %p208, %p209
    %p211 = scmp.ne.s32.totalorder %s202, %s203
    %p212 = scmp.eq.s32.totalorder %s24, 0
    %p213 = por %p211, %p212
    %p214 = scmp.ne.s32.totalorder %s202, %s203
    %p215 = scmp.eq.s32.totalorder %s25, 1
    %p216 = por %p214, %p215
    %p218 = scmp.ne.s32.totalorder %s203, %s217
    %p219 = scmp.eq.s32.totalorder %s25, 0
    %p220 = por %p218, %p219
    %s222 = sadd.s32 %s221, 1
    %p225 = scmp.eq.s32.totalorder %s19, 1
    %p226 = scmp.ne.s32.totalorder %s221, %s223
    %p227 = scmp.eq.s32.totalorder %s19, 0
    %p228 = por %p226, %p227
    %p229 = scmp.ne.s32.totalorder %s221, %s223
    %p230 = scmp.eq.s32.totalorder %s24, 1
    %p231 = por %p229, %p230
    %p232 = scmp.ne.s32.totalorder %s223, %s224
    %p233 = scmp.eq.s32.totalorder %s24, 0
    %p234 = por %p232, %p233
    %p235 = scmp.ne.s32.totalorder %s223, %s224
    %p236 = scmp.eq.s32.totalorder %s25, 1
    %p237 = por %p235, %p236
    %p239 = scmp.ne.s32.totalorder %s224, %s238
    %p240 = scmp.eq.s32.totalorder %s25, 0
    %p241 = por %p239, %p240
    %s243 = sadd.s32 %s242, 1
    %p246 = scmp.eq.s32.totalorder %s19, 1
    %p247 = scmp.ne.s32.totalorder %s242, %s244
    %p248 = scmp.eq.s32.totalorder %s19, 0
    %p249 = por %p247, %p248
    %p250 = scmp.ne.s32.totalorder %s242, %s244
    %p251 = scmp.eq.s32.totalorder %s24, 1
    %p252 = por %p250, %p251
    %p253 = scmp.ne.s32.totalorder %s244, %s245
    %p254 = scmp.eq.s32.totalorder %s24, 0
    %p255 = por %p253, %p254
    %p256 = scmp.ne.s32.totalorder %s244, %s245
    %p257 = scmp.eq.s32.totalorder %s25, 1
    %p258 = por %p256, %p257
    %p260 = scmp.ne.s32.totalorder %s245, %s259
    %p261 = scmp.eq.s32.totalorder %s25, 0
    %p262 = por %p260, %p261
    %s264 = sadd.s32 %s263, 1
    %p267 = scmp.eq.s32.totalorder %s19, 1
    %p268 = scmp.ne.s32.totalorder %s263, %s265
    %p269 = scmp.eq.s32.totalorder %s19, 0
    %p270 = por %p268, %p269
    %p271 = scmp.ne.s32.totalorder %s263, %s265
    %p272 = scmp.eq.s32.totalorder %s24, 1
    %p273 = por %p271, %p272
    %p274 = scmp.ne.s32.totalorder %s265, %s266
    %p275 = scmp.eq.s32.totalorder %s24, 0
    %p276 = por %p274, %p275
    %p277 = scmp.ne.s32.totalorder %s265, %s266
    %p278 = scmp.eq.s32.totalorder %s25, 1
    %p279 = por %p277, %p278
    %p281 = scmp.ne.s32.totalorder %s266, %s280
    %p282 = scmp.eq.s32.totalorder %s25, 0
    %p283 = por %p281, %p282
    %s285 = sadd.s32 %s284, 1
    %p288 = scmp.eq.s32.totalorder %s19, 1
    %p289 = scmp.ne.s32.totalorder %s284, %s286
    %p290 = scmp.eq.s32.totalorder %s19, 0
    %p291 = por %p289, %p290
    %p292 = scmp.ne.s32.totalorder %s284, %s286
    %p293 = scmp.eq.s32.totalorder %s24, 1
    %p294 = por %p292, %p293
    %p295 = scmp.ne.s32.totalorder %s286, %s287
    %p296 = scmp.eq.s32.totalorder %s24, 0
    %p297 = por %p295, %p296
    %p298 = scmp.ne.s32.totalorder %s286, %s287
    %p299 = scmp.eq.s32.totalorder %s25, 1
    %p300 = por %p298, %p299
    %p302 = scmp.ne.s32.totalorder %s287, %s301
    %p303 = scmp.eq.s32.totalorder %s25, 0
    %p304 = por %p302, %p303
    %s305 = ssub.s32 %s19, %s26
    %p306 = scmp.eq.s32.totalorder %s305, 0
    %s308 = sadd.s32 %s307, 1
    %s309 = scalar_select %p306, %s307, %s308
    %p312 = pneg %p306
    %p313 = scmp.eq.s32.totalorder %s19, 1
    %p314 = por %p312, %p313
    %p315 = scmp.ne.s32.totalorder %s307, %s310
    %p316 = scmp.eq.s32.totalorder %s19, 0
    %p317 = por %p315, %p316
    %p318 = scmp.ne.s32.totalorder %s307, %s310
    %p319 = scmp.eq.s32.totalorder %s24, 1
    %p320 = por %p318, %p319
    %p321 = scmp.ne.s32.totalorder %s310, %s311
    %p322 = scmp.eq.s32.totalorder %s24, 0
    %p323 = por %p321, %p322
    %p324 = scmp.ne.s32.totalorder %s310, %s311
    %p325 = scmp.eq.s32.totalorder %s25, 1
    %p326 = por %p324, %p325
    %p328 = scmp.ne.s32.totalorder %s311, %s327
    %p329 = scmp.eq.s32.totalorder %s25, 0
    %p330 = por %p328, %p329
    %p331 = scmp.le.s32.totalorder 1, %s19
    %p332 = scmp.lt.s32.totalorder %s19, 3
    %p333 = pnand %p331, %p332
    %p334 = pneg %p333
    // Predicated region
    $region9: #{unet_forward.5} parent=5 // pred_check
      _
    $region10: #{unet_forward.5} parent=5 // pred_check_branch
      %336 = sbr.rel (%p333) target = $region12
    $region11: #{unet_forward.5} parent=5 // pred_region
      %s337 = ssub.s32 %s19, 1
      // Predicated region
      $region13: #{unet_forward.5} parent=11 // pred_check
        %p338 = pneg %p66
      $region14: #{unet_forward.5} parent=11 // pred_check_branch
        %340 = sbr.rel (%p338) target = $region16
      $region15: #{unet_forward.5} parent=11 // pred_region
        _
      $region16: #{unet_forward.5} parent=11 // pred_fallthru
        _
      // Predicated region
      $region17: #{unet_forward.5} parent=11 // pred_check
        %p341 = pneg %p87
      $region18: #{unet_forward.5} parent=11 // pred_check_branch
        %343 = sbr.rel (%p341) target = $region20
      $region19: #{unet_forward.5} parent=11 // pred_region
        _
      $region20: #{unet_forward.5} parent=11 // pred_fallthru
        _
      // Predicated region
      $region21: #{unet_forward.5} parent=11 // pred_check
        %p344 = pneg %p108
      $region22: #{unet_forward.5} parent=11 // pred_check_branch
        %346 = sbr.rel (%p344) target = $region24
      $region23: #{unet_forward.5} parent=11 // pred_region
        _
      $region24: #{unet_forward.5} parent=11 // pred_fallthru
        _
      // Predicated region
      $region25: #{unet_forward.5} parent=11 // pred_check
        %p347 = pneg %p129
      $region26: #{unet_forward.5} parent=11 // pred_check_branch
        %349 = sbr.rel (%p347) target = $region28
      $region27: #{unet_forward.5} parent=11 // pred_region
        _
      $region28: #{unet_forward.5} parent=11 // pred_fallthru
        _
      // Predicated region
      $region29: #{unet_forward.5} parent=11 // pred_check
        %p350 = pneg %p150
      $region30: #{unet_forward.5} parent=11 // pred_check_branch
        %352 = sbr.rel (%p350) target = $region32
      $region31: #{unet_forward.5} parent=11 // pred_region
        _
      $region32: #{unet_forward.5} parent=11 // pred_fallthru
        _
      // Predicated region
      $region33: #{unet_forward.5} parent=11 // pred_check
        %p353 = pneg %p171
      $region34: #{unet_forward.5} parent=11 // pred_check_branch
        %355 = sbr.rel (%p353) target = $region36
      $region35: #{unet_forward.5} parent=11 // pred_region
        _
      $region36: #{unet_forward.5} parent=11 // pred_fallthru
        _
      // Predicated region
      $region37: #{unet_forward.5} parent=11 // pred_check
        %p356 = pneg %p192
      $region38: #{unet_forward.5} parent=11 // pred_check_branch
        %358 = sbr.rel (%p356) target = $region40
      $region39: #{unet_forward.5} parent=11 // pred_region
        _
      $region40: #{unet_forward.5} parent=11 // pred_fallthru
        _
      // Predicated region
      $region41: #{unet_forward.5} parent=11 // pred_check
        %p359 = pneg %p213
      $region42: #{unet_forward.5} parent=11 // pred_check_branch
        %361 = sbr.rel (%p359) target = $region44
      $region43: #{unet_forward.5} parent=11 // pred_region
        _
      $region44: #{unet_forward.5} parent=11 // pred_fallthru
        _
      // Predicated region
      $region45: #{unet_forward.5} parent=11 // pred_check
        %p362 = pneg %p234
      $region46: #{unet_forward.5} parent=11 // pred_check_branch
        %364 = sbr.rel (%p362) target = $region48
      $region47: #{unet_forward.5} parent=11 // pred_region
        _
      $region48: #{unet_forward.5} parent=11 // pred_fallthru
        _
      // Predicated region
      $region49: #{unet_forward.5} parent=11 // pred_check
        %p365 = pneg %p255
      $region50: #{unet_forward.5} parent=11 // pred_check_branch
        %367 = sbr.rel (%p365) target = $region52
      $region51: #{unet_forward.5} parent=11 // pred_region
        _
      $region52: #{unet_forward.5} parent=11 // pred_fallthru
        _
      // Predicated region
      $region53: #{unet_forward.5} parent=11 // pred_check
        %p368 = pneg %p276
      $region54: #{unet_forward.5} parent=11 // pred_check_branch
        %370 = sbr.rel (%p368) target = $region56
      $region55: #{unet_forward.5} parent=11 // pred_region
        _
      $region56: #{unet_forward.5} parent=11 // pred_fallthru
        _
      // Predicated region
      $region57: #{unet_forward.5} parent=11 // pred_check
        %p371 = pneg %p297
      $region58: #{unet_forward.5} parent=11 // pred_check_branch
        %373 = sbr.rel (%p371) target = $region60
      $region59: #{unet_forward.5} parent=11 // pred_region
        _
      $region60: #{unet_forward.5} parent=11 // pred_fallthru
        _
    $region12: #{unet_forward.5} parent=5 // pred_fallthru
      _
    %p374 = scmp.lt.s32.totalorder %s19, 2
    // Predicated region
    $region61: #{unet_forward.5} parent=5 // pred_check
      %p375 = pneg %p374
    $region62: #{unet_forward.5} parent=5 // pred_check_branch
      %377 = sbr.rel (%p375) target = $region64
    $region63: #{unet_forward.5} parent=5 // pred_region
      // Predicated region
      $region65: #{unet_forward.5} parent=63 // pred_check
        %p378 = pneg %p39
      $region66: #{unet_forward.5} parent=63 // pred_check_branch
        %380 = sbr.rel (%p378) target = $region68
      $region67: #{unet_forward.5} parent=63 // pred_region
        %s381 = smul.u32 6, %s19
        %p382 = scmp.lt.s32.totalorder %s381, 11
        %s383 = scalar_select %p382, %s381, 11
        %s384 = smul.addr %s383, 8
        %s385 = scalar_lea.vmem %s0, %s384
        %s386 = smul.u32 6, %s19
      $region68: #{unet_forward.5} parent=63 // pred_fallthru
        _
    $region64: #{unet_forward.5} parent=5 // pred_fallthru
      _
    %p387 = scmp.le.s32.totalorder 1, %s19
    %p388 = scmp.lt.s32.totalorder %s19, 3
    %p389 = pnand %p387, %p388
    %p390 = pneg %p389
    // Predicated region
    $region69: #{unet_forward.5} parent=5 // pred_check
      _
    $region70: #{unet_forward.5} parent=5 // pred_check_branch
      %392 = sbr.rel (%p389) target = $region72
    $region71: #{unet_forward.5} parent=5 // pred_region
      %s393 = ssub.s32 %s19, 1
      %s394 = smul.u32 6, %s24
      %p395 = scmp.lt.s32.totalorder %s394, 11
      %s396 = scalar_select %p395, %s394, 11
      %s397 = smul.addr %s396, 8
      %s398 = scalar_lea.vmem %s0, %s397
      %p399 = pneg %p45
      %p400 = pneg %p42
      %p401 = pneg %p66
      %p402 = pneg %p63
      %p403 = pneg %p87
      %p404 = pneg %p84
      %p405 = pneg %p108
      %p406 = pneg %p105
      %p407 = pneg %p129
      %p408 = pneg %p126
      %p409 = pneg %p150
      %p410 = pneg %p147
      %p411 = pneg %p171
      %p412 = pneg %p168
      %p413 = pneg %p192
      %p414 = pneg %p189
      %p415 = pneg %p213
      %p416 = pneg %p210
      %p417 = pneg %p234
      %p418 = pneg %p231
      %p419 = pneg %p255
      %p420 = pneg %p252
      %p421 = pneg %p276
      %p422 = pneg %p273
      %p423 = pneg %p297
      %p424 = pneg %p294
      %p425 = pneg %p323
      %p426 = pneg %p320
      %s427 = smul.u32 6, %s24
      %p428 = scmp.lt.s32.totalorder %s427, 11
      %s429 = scalar_select %p428, %s427, 11
      %s430 = smul.addr %s429, 8
      %s431 = scalar_lea.vmem %s13, %s430
      %s432 = smul.u32 6, %s24
      %p433 = scmp.lt.s32.totalorder %s432, 11
      %s434 = scalar_select %p433, %s432, 11
      %s435 = smul.addr %s434, 8
      %s436 = scalar_lea.vmem %s0, %s435
      %s437 = smul.u32 6, %s24
      %s438 = smul.u32 6, %s24
      %p439 = scmp.lt.s32.totalorder %s438, 11
      %s440 = scalar_select %p439, %s438, 11
      %s441 = smul.addr %s440, 8
      %s442 = scalar_lea.vmem %s13, %s441
      %s443 = smul.u32 6, %s24
      %v445 = vld [vmem:[%s436] sm:$0xff]
      %v446 = vld [vmem:[%s436 + $0x8] sm:$0xff]
      %v447 = vld [vmem:[%s436 + $0x10] sm:$0xff]
      %v448 = vld [vmem:[%s436 + $0x18] sm:$0xff]
      %v449 = vld [vmem:[%s436 + $0x20] sm:$0xff]
      %v450 = vld [vmem:[%s436 + $0x28] sm:$0xff]
      %v451 = vld [vmem:[%s3] sm:$0xff]
      %v452 = vld [vmem:[%s3 + $0x8] sm:$0xff]
      %v453 = vld [vmem:[%s3 + $0x10] sm:$0xff]
      %v454 = vld [vmem:[%s3 + $0x18] sm:$0xff]
      %v455 = vld [vmem:[%s3 + $0x20] sm:$0xff]
      %v456 = vld [vmem:[%s3 + $0x28] sm:$0xff]
      %v457 = vld [vmem:[%s3 + $0x30] sm:$0xff]
      %v458 = vld [vmem:[%s3 + $0x38] sm:$0xff]
      %v459 = vld [vmem:[%s3 + $0x40] sm:$0xff]
      %v460 = vld [vmem:[%s3 + $0x48] sm:$0xff]
      %v461 = vld [vmem:[%s3 + $0x50] sm:$0xff]
      %v462 = vld [vmem:[%s3 + $0x58] sm:$0xff]
      %v463 = vld [vmem:[%s3 + $0x60] sm:$0xff]
      %v464 = vld [vmem:[%s3 + $0x68] sm:$0xff]
      %v465 = vld [vmem:[%s3 + $0x70] sm:$0xff]
      %v466 = vld [vmem:[%s3 + $0x78] sm:$0xff]
      %v467 = vpack.c.bf16 %v446, %v445
      %v468 = vpack.c.bf16 %v448, %v447
      %v469 = vpack.c.bf16 %v450, %v449
      %v470 = vpack.c.bf16 %v452, %v451
      %v471 = vpack.c.bf16 %v454, %v453
      %v472 = vpack.c.bf16 %v456, %v455
      %v473 = vpack.c.bf16 %v458, %v457
      %v474 = vpack.c.bf16 %v460, %v459
      %v475 = vpack.c.bf16 %v462, %v461
      %v476 = vpack.c.bf16 %v464, %v463
      %v477 = vpack.c.bf16 %v466, %v465
      %v478 = vld [vmem:[%s4] sm:$0x1]
      %v480 = vlaneseq
      %v481 = vshrl.u32 %v480, 7
      %v482 = vsub.s32 0, %v481
      %v483 = vrot.slane %v478, %v482
      %485 = vmatprep.subr.bf16.mxu0 0
      %486 = vmatpush1.bf16.msra.mxu0 %v470
      %487 = vmatprep.subr.bf16.mxu0 0
      %488 = vmatpush1.bf16.msra.mxu0 %v471
      %489 = vmatprep.subr.bf16.mxu0 0
      %490 = vmatpush1.bf16.msra.mxu0 %v472
      %491 = vmatprep.subr.bf16.mxu0 0
      %492 = vmatpush1.bf16.msra.mxu0 %v473
      %493 = vmatprep.subr.bf16.mxu0 0
      %494 = vmatpush1.bf16.msra.mxu0 %v474
      %495 = vmatprep.subr.bf16.mxu0 0
      %496 = vmatpush1.bf16.msra.mxu0 %v475
      %497 = vmatprep.subr.bf16.mxu0 0
      %498 = vmatpush1.bf16.msra.mxu0 %v476
      %499 = vmatprep.subr.bf16.mxu0 0
      %500 = vmatpush1.bf16.msra.mxu0 %v477
      %501 = vmatprep.subr.bf16.mxu0 0
      %502 = vmatpush1.bf16.msra.mxu0 0
      %503 = vmatprep.subr.bf16.mxu0 0
      %504 = vmatpush1.bf16.msra.mxu0 0
      %505 = vmatprep.subr.bf16.mxu0 0
      %506 = vmatpush1.bf16.msra.mxu0 0
      %507 = vmatprep.subr.bf16.mxu0 0
      %508 = vmatpush1.bf16.msra.mxu0 0
      %509 = vmatprep.subr.bf16.mxu0 0
      %510 = vmatpush1.bf16.msra.mxu0 0
      %511 = vmatprep.subr.bf16.mxu0 0
      %512 = vmatpush1.bf16.msra.mxu0 0
      %513 = vmatprep.subr.bf16.mxu0 0
      %514 = vmatpush1.bf16.msra.mxu0 0
      %515 = vmatprep.subr.bf16.mxu0 0
      %516 = vmatpush1.bf16.msra.mxu0 0
      %517 = vmatprep.mubr.bf16.mxu0 0
      %518 = vmatmul.mubr.bf16.gmra.mrb[0].mxu0 %v467
      %v519 = vpop.f32.mrb[0].mxu0
      %v520 = vadd.f32 %v483, %v519
      %v521 = vpop.f32.mrb[0].mxu0
      %v522 = vpop.f32.mrb[0].mxu0
      %v523 = vadd.f32 %v483, %v522
      %v524 = vpop.f32.mrb[0].mxu0
      %525 = vmatprep.mubr.bf16.mxu0 0
      %526 = vmatmul.mubr.bf16.gmra.mrb[0].mxu0 %v468
      %v527 = vpop.f32.mrb[0].mxu0
      %v528 = vadd.f32 %v483, %v527
      %v529 = vpop.f32.mrb[0].mxu0
      %v530 = vpop.f32.mrb[0].mxu0
      %v531 = vadd.f32 %v483, %v530
      %v532 = vpop.f32.mrb[0].mxu0
      %533 = vmatprep.mubr.bf16.mxu0 0
      %534 = vmatmul.mubr.bf16.gmra.mrb[0].mxu0 %v469
      %v535 = vpop.f32.mrb[0].mxu0
      %v536 = vadd.f32 %v483, %v535
      %v537 = vpop.f32.mrb[0].mxu0
      %v538 = vpop.f32.mrb[0].mxu0
      %v539 = vadd.f32 %v483, %v538
      %v540 = vpop.f32.mrb[0].mxu0
      %541 = vdwg.mxu0
      %v542 = vmax.f32 %v520, 0.0
      %v543 = vmax.f32 %v523, 0.0
      %v544 = vmax.f32 %v528, 0.0
      %v545 = vmax.f32 %v531, 0.0
      %v546 = vmax.f32 %v536, 0.0
      %v547 = vmax.f32 %v539, 0.0
      %v548 = vld [vmem:[%s5] sm:$0xff]
      %v549 = vld [vmem:[%s5 + $0x8] sm:$0xff]
      %v550 = vld [vmem:[%s5 + $0x10] sm:$0xff]
      %v551 = vld [vmem:[%s5 + $0x18] sm:$0xff]
      %v552 = vld [vmem:[%s5 + $0x20] sm:$0xff]
      %v553 = vld [vmem:[%s5 + $0x28] sm:$0xff]
      %v554 = vld [vmem:[%s5 + $0x30] sm:$0xff]
      %v555 = vld [vmem:[%s5 + $0x38] sm:$0xff]
      %v556 = vpack.c.bf16 %v543, %v542
      %v557 = vpack.c.bf16 %v545, %v544
      %v558 = vpack.c.bf16 %v547, %v546
      %v559 = vpack.c.bf16 %v549, %v548
      %v560 = vpack.c.bf16 %v551, %v550
      %v561 = vpack.c.bf16 %v553, %v552
      %v562 = vpack.c.bf16 %v555, %v554
      %v563 = vld [vmem:[%s6] sm:$0x1]
      %v565 = vlaneseq
      %v566 = vshrl.u32 %v565, 7
      %v567 = vsub.s32 0, %v566
      %v568 = vrot.slane %v563, %v567
      %vm570 = vcmask 523264
      %v572 = vsel %vm570, %v556, 0
      %v575 = vsel %vm570, %v557, 0
      %v578 = vsel %vm570, %v558, 0
      %580 = vmatprep.subr.bf16.mxu0 0
      %581 = vmatpush1.bf16.msra.mxu0 %v559
      %582 = vmatprep.subr.bf16.mxu0 0
      %583 = vmatpush1.bf16.msra.mxu0 %v560
      %584 = vmatprep.subr.bf16.mxu0 0
      %585 = vmatpush1.bf16.msra.mxu0 %v561
      %586 = vmatprep.subr.bf16.mxu0 0
      %587 = vmatpush1.bf16.msra.mxu0 %v562
      %588 = vmatprep.subr.bf16.mxu0 0
      %589 = vmatpush1.bf16.msra.mxu0 0
      %590 = vmatprep.subr.bf16.mxu0 0
      %591 = vmatpush1.bf16.msra.mxu0 0
      %592 = vmatprep.subr.bf16.mxu0 0
      %593 = vmatpush1.bf16.msra.mxu0 0
      %594 = vmatprep.subr.bf16.mxu0 0
      %595 = vmatpush1.bf16.msra.mxu0 0
      %596 = vmatprep.subr.bf16.mxu0 0
      %597 = vmatpush1.bf16.msra.mxu0 0
      %598 = vmatprep.subr.bf16.mxu0 0
      %599 = vmatpush1.bf16.msra.mxu0 0
      %600 = vmatprep.subr.bf16.mxu0 0
      %601 = vmatpush1.bf16.msra.mxu0 0
      %602 = vmatprep.subr.bf16.mxu0 0
      %603 = vmatpush1.bf16.msra.mxu0 0
      %604 = vmatprep.subr.bf16.mxu0 0
      %605 = vmatpush1.bf16.msra.mxu0 0
      %606 = vmatprep.subr.bf16.mxu0 0
      %607 = vmatpush1.bf16.msra.mxu0 0
      %608 = vmatprep.subr.bf16.mxu0 0
      %609 = vmatpush1.bf16.msra.mxu0 0
      %610 = vmatprep.subr.bf16.mxu0 0
      %611 = vmatpush1.bf16.msra.mxu0 0
      %612 = vmatprep.mubr.bf16.mxu0 0
      %613 = vmatmul.mubr.bf16.gmra.mrb[0].mxu0 %v572
      %v614 = vpop.f32.mrb[0].mxu0
      %v615 = vadd.f32 %v568, %v614
      %v616 = vpop.f32.mrb[0].mxu0
      %v617 = vpop.f32.mrb[0].mxu0
      %v618 = vadd.f32 %v568, %v617
      %v619 = vpop.f32.mrb[0].mxu0
      %620 = vmatprep.mubr.bf16.mxu0 0
      %621 = vmatmul.mubr.bf16.gmra.mrb[0].mxu0 %v575
      %v622 = vpop.f32.mrb[0].mxu0
      %v623 = vadd.f32 %v568, %v622
      %v624 = vpop.f32.mrb[0].mxu0
      %v625 = vpop.f32.mrb[0].mxu0
      %v626 = vadd.f32 %v568, %v625
      %v627 = vpop.f32.mrb[0].mxu0
      %628 = vmatprep.mubr.bf16.mxu0 0
      %629 = vmatmul.mubr.bf16.gmra.mrb[0].mxu0 %v578
      %v630 = vpop.f32.mrb[0].mxu0
      %v631 = vadd.f32 %v568, %v630
      %v632 = vpop.f32.mrb[0].mxu0
      %v633 = vpop.f32.mrb[0].mxu0
      %v634 = vadd.f32 %v568, %v633
      %v635 = vpop.f32.mrb[0].mxu0
      %636 = vdwg.mxu0
      %v637 = vld [vmem:[%s1] sm:$0xff]
      %v638 = vld [vmem:[%s1 + $0x8] sm:$0xff]
      %v639 = vld [vmem:[%s1 + $0x10] sm:$0xff]
      %v640 = vld [vmem:[%s1 + $0x18] sm:$0xff]
      %v641 = vld [vmem:[%s1 + $0x20] sm:$0xff]
      %v642 = vld [vmem:[%s1 + $0x28] sm:$0xff]
      %v643 = vpack.c.bf16 %v638, %v637
      %v644 = vpack.c.bf16 %v640, %v639
      %v645 = vpack.c.bf16 %v642, %v641
      %v646 = vld [vmem:[%s2] sm:$0xff]
      %v647 = vld [vmem:[%s2 + $0x8] sm:$0xff]
      %v648 = vld [vmem:[%s2 + $0x10] sm:$0xff]
      %v649 = vld [vmem:[%s2 + $0x18] sm:$0xff]
      %v650 = vld [vmem:[%s2 + $0x20] sm:$0xff]
      %v651 = vld [vmem:[%s2 + $0x28] sm:$0xff]
      %v652 = vpack.c.bf16 %v647, %v646
      %v653 = vpack.c.bf16 %v649, %v648
      %v654 = vpack.c.bf16 %v651, %v650
      %v655 = vld [vmem:[%s7] sm:$0xff]
      %v656 = vld [vmem:[%s7 + $0x8] sm:$0xff]
      %v657 = vld [vmem:[%s7 + $0x10] sm:$0xff]
      %v658 = vld [vmem:[%s7 + $0x18] sm:$0xff]
      %v659 = vld [vmem:[%s7 + $0x20] sm:$0xff]
      %v660 = vld [vmem:[%s7 + $0x28] sm:$0xff]
      %v661 = vld [vmem:[%s7 + $0x30] sm:$0xff]
      %v662 = vld [vmem:[%s7 + $0x38] sm:$0xff]
      %v663 = vld [vmem:[%s7 + $0x40] sm:$0xff]
      %v664 = vld [vmem:[%s7 + $0x48] sm:$0xff]
      %v665 = vld [vmem:[%s7 + $0x50] sm:$0xff]
      %v666 = vld [vmem:[%s7 + $0x58] sm:$0xff]
      %v667 = vld [vmem:[%s7 + $0x60] sm:$0xff]
      %v668 = vld [vmem:[%s7 + $0x68] sm:$0xff]
      %v669 = vld [vmem:[%s7 + $0x70] sm:$0xff]
      %v670 = vld [vmem:[%s7 + $0x78] sm:$0xff]
      %v671 = vld [vmem:[%s7 + $0x80] sm:$0xff]
      %v672 = vld [vmem:[%s7 + $0x88] sm:$0xff]
      %v673 = vld [vmem:[%s7 + $0x90] sm:$0xff]
      %v674 = vld [vmem:[%s7 + $0x98] sm:$0xff]
      %v675 = vld [vmem:[%s7 + $0xa0] sm:$0xff]
      %v676 = vld [vmem:[%s7 + $0xa8] sm:$0xff]
      %v677 = vld [vmem:[%s7 + $0xb0] sm:$0xff]
      %v678 = vld [vmem:[%s7 + $0xb8] sm:$0xff]
      %v679 = vpack.c.bf16 %v656, %v655
      %v680 = vpack.c.bf16 %v658, %v657
      %v681 = vpack.c.bf16 %v660, %v659
      %v682 = vpack.c.bf16 %v662, %v661
      %v683 = vpack.c.bf16 %v664, %v663
      %v684 = vpack.c.bf16 %v666, %v665
      %v685 = vpack.c.bf16 %v668, %v667
      %v686 = vpack.c.bf16 %v670, %v669
      %v687 = vpack.c.bf16 %v672, %v671
      %v688 = vpack.c.bf16 %v674, %v673
      %v689 = vpack.c.bf16 %v676, %v675
      %v690 = vpack.c.bf16 %v678, %v677
      %v691 = vld [vmem:[%s9] sm:$0xff]
      %v692 = vld [vmem:[%s9 + $0x8] sm:$0xff]
      %v693 = vld [vmem:[%s9 + $0x10] sm:$0xff]
      %v694 = vld [vmem:[%s9 + $0x18] sm:$0xff]
      %v695 = vld [vmem:[%s9 + $0x20] sm:$0xff]
      %v696 = vld [vmem:[%s9 + $0x28] sm:$0xff]
      %v697 = vld [vmem:[%s9 + $0x30] sm:$0xff]
      %v698 = vld [vmem:[%s9 + $0x38] sm:$0xff]
      %v699 = vld [vmem:[%s9 + $0x40] sm:$0xff]
      %v700 = vld [vmem:[%s9 + $0x48] sm:$0xff]
      %v701 = vld [vmem:[%s9 + $0x50] sm:$0xff]
      %v702 = vld [vmem:[%s9 + $0x58] sm:$0xff]
      %v703 = vld [vmem:[%s9 + $0x60] sm:$0xff]
      %v704 = vld [vmem:[%s9 + $0x68] sm:$0xff]
      %v705 = vld [vmem:[%s9 + $0x70] sm:$0xff]
      %v706 = vld [vmem:[%s9 + $0x78] sm:$0xff]
      %v707 = vpack.c.bf16 %v693, %v691
      %v708 = vpack.c.bf16 %v694, %v692
      %v709 = vpack.c.bf16 %v697, %v695
      %v710 = vpack.c.bf16 %v698, %v696
      %v711 = vpack.c.bf16 %v701, %v699
      %v712 = vpack.c.bf16 %v702, %v700
      %v713 = vpack.c.bf16 %v705, %v703
      %v714 = vpack.c.bf16 %v706, %v704
      %v715 = vld [vmem:[%s11] sm:$0xff]
      %v716 = vld [vmem:[%s11 + $0x8] sm:$0xff]
      %v717 = vld [vmem:[%s11 + $0x10] sm:$0xff]
      %v718 = vld [vmem:[%s11 + $0x18] sm:$0xff]
      %v719 = vld [vmem:[%s11 + $0x20] sm:$0xff]
      %v720 = vld [vmem:[%s11 + $0x28] sm:$0xff]
      %v721 = vld [vmem:[%s11 + $0x30] sm:$0xff]
      %v722 = vld [vmem:[%s11 + $0x38] sm:$0xff]
      %v723 = vld [vmem:[%s11 + $0x40] sm:$0xff]
      %v724 = vld [vmem:[%s11 + $0x48] sm:$0xff]
      %v725 = vld [vmem:[%s11 + $0x50] sm:$0xff]
      %v726 = vld [vmem:[%s11 + $0x58] sm:$0xff]
      %v727 = vld [vmem:[%s11 + $0x60] sm:$0xff]
      %v728 = vld [vmem:[%s11 + $0x68] sm:$0xff]
      %v729 = vld [vmem:[%s11 + $0x70] sm:$0xff]
      %v730 = vld [vmem:[%s11 + $0x78] sm:$0xff]
      %v731 = vpack.c.bf16 %v717, %v715
      %v732 = vpack.c.bf16 %v718, %v716
      %v733 = vpack.c.bf16 %v721, %v719
      %v734 = vpack.c.bf16 %v722, %v720
      %v735 = vpack.c.bf16 %v725, %v723
      %v736 = vpack.c.bf16 %v726, %v724
      %v737 = vpack.c.bf16 %v729, %v727
      %v738 = vpack.c.bf16 %v730, %v728
      %v739 = vld [vmem:[%s8] sm:$0x1]
      %v741 = vlaneseq
      %v742 = vshrl.u32 %v741, 7
      %v743 = vsub.s32 0, %v742
      %v744 = vrot.slane %v739, %v743
      %v746 = vld [vmem:[%s10] sm:$0x3]
      %v748 = vlaneseq
      %v749 = vshrl.u32 %v748, 7
      %v750 = vsub.s32 0, %v749
      %v751 = vrot.slane %v746, %v750
      %v752 = vlaneseq
      %v753 = vshrl.u32 %v752, 7
      %v754 = vsub.s32 1, %v753
      %v755 = vrot.slane %v746, %v754
      %v758 = vld [vmem:[%s12] sm:$0x3]
      %v760 = vlaneseq
      %v761 = vshrl.u32 %v760, 7
      %v762 = vsub.s32 0, %v761
      %v763 = vrot.slane %v758, %v762
      %v764 = vlaneseq
      %v765 = vshrl.u32 %v764, 7
      %v766 = vsub.s32 1, %v765
      %v767 = vrot.slane %v758, %v766
      %v770 = vpack.c.bf16 %v618, %v615
      %v771 = vpack.c.bf16 %v626, %v623
      %v772 = vpack.c.bf16 %v634, %v631
      %vm773 = vcmask 392192
      %v775 = vsel %vm773, %v643, 0
      %v778 = vsel %vm773, %v644, 0
      %v781 = vsel %vm773, %v645, 0
      %783 = vmatprep.subr.bf16.mxu0 0
      %784 = vmatpush1.bf16.msra.mxu0 %v770
      %785 = vmatprep.subr.bf16.mxu0 0
      %786 = vmatpush1.bf16.msra.mxu0 %v771
      %787 = vmatprep.subr.bf16.mxu0 0
      %788 = vmatpush1.bf16.msra.mxu0 %v772
      %789 = vmatprep.subr.bf16.mxu0 0
      %790 = vmatpush1.bf16.msra.mxu0 0
      %791 = vmatprep.subr.bf16.mxu0 0
      %792 = vmatpush1.bf16.msra.mxu0 0
      %793 = vmatprep.subr.bf16.mxu0 0
      %794 = vmatpush1.bf16.msra.mxu0 0
      %795 = vmatprep.subr.bf16.mxu0 0
      %796 = vmatpush1.bf16.msra.mxu0 0
      %797 = vmatprep.subr.bf16.mxu0 0
      %798 = vmatpush1.bf16.msra.mxu0 0
      %799 = vmatprep.subr.bf16.mxu0 0
      %800 = vmatpush1.bf16.msra.mxu0 0
      %801 = vmatprep.subr.bf16.mxu0 0
      %802 = vmatpush1.bf16.msra.mxu0 0
      %803 = vmatprep.subr.bf16.mxu0 0
      %804 = vmatpush1.bf16.msra.mxu0 0
      %805 = vmatprep.subr.bf16.mxu0 0
      %806 = vmatpush1.bf16.msra.mxu0 0
      %807 = vmatprep.subr.bf16.mxu0 0
      %808 = vmatpush1.bf16.msra.mxu0 0
      %809 = vmatprep.subr.bf16.mxu0 0
      %810 = vmatpush1.bf16.msra.mxu0 0
      %811 = vmatprep.subr.bf16.mxu0 0
      %812 = vmatpush1.bf16.msra.mxu0 0
      %813 = vmatprep.subr.bf16.mxu0 0
      %814 = vmatpush1.bf16.msra.mxu0 0
      %815 = vmatprep.mubr.bf16.mxu0 0
      %816 = vmatmul.mubr.bf16.gmra.mrb[0].mxu0 %v775
      %v817 = vpop.f32.mrb[0].mxu0
      %v818 = vadd.f32 0.0, %v817
      %v819 = vpop.f32.mrb[0].mxu0
      %v820 = vpop.f32.mrb[0].mxu0
      %v821 = vadd.f32 0.0, %v820
      %v822 = vpop.f32.mrb[0].mxu0
      %823 = vmatprep.mubr.bf16.mxu0 0
      %824 = vmatmul.mubr.bf16.gmra.mrb[0].mxu0 %v778
      %v825 = vpop.f32.mrb[0].mxu0
      %v826 = vadd.f32 0.0, %v825
      %v827 = vpop.f32.mrb[0].mxu0
      %v828 = vpop.f32.mrb[0].mxu0
      %v829 = vadd.f32 0.0, %v828
      %v830 = vpop.f32.mrb[0].mxu0
      %831 = vmatprep.mubr.bf16.mxu0 0
      %832 = vmatmul.mubr.bf16.gmra.mrb[0].mxu0 %v781
      %v833 = vpop.f32.mrb[0].mxu0
      %v834 = vadd.f32 0.0, %v833
      %v835 = vpop.f32.mrb[0].mxu0
      %v836 = vpop.f32.mrb[0].mxu0
      %v837 = vadd.f32 0.0, %v836
      %v838 = vpop.f32.mrb[0].mxu0
      %839 = vdwg.mxu0
      %v841 = vsel %vm773, %v652, 0
      %v844 = vsel %vm773, %v653, 0
      %v847 = vsel %vm773, %v654, 0
      %849 = vmatprep.subr.bf16.mxu0 0
      %850 = vmatpush1.bf16.msra.mxu0 %v770
      %851 = vmatprep.subr.bf16.mxu0 0
      %852 = vmatpush1.bf16.msra.mxu0 %v771
      %853 = vmatprep.subr.bf16.mxu0 0
      %854 = vmatpush1.bf16.msra.mxu0 %v772
      %855 = vmatprep.subr.bf16.mxu0 0
      %856 = vmatpush1.bf16.msra.mxu0 0
      %857 = vmatprep.subr.bf16.mxu0 0
      %858 = vmatpush1.bf16.msra.mxu0 0
      %859 = vmatprep.subr.bf16.mxu0 0
      %860 = vmatpush1.bf16.msra.mxu0 0
      %861 = vmatprep.subr.bf16.mxu0 0
      %862 = vmatpush1.bf16.msra.mxu0 0
      %863 = vmatprep.subr.bf16.mxu0 0
      %864 = vmatpush1.bf16.msra.mxu0 0
      %865 = vmatprep.subr.bf16.mxu0 0
      %866 = vmatpush1.bf16.msra.mxu0 0
      %867 = vmatprep.subr.bf16.mxu0 0
      %868 = vmatpush1.bf16.msra.mxu0 0
      %869 = vmatprep.subr.bf16.mxu0 0
      %870 = vmatpush1.bf16.msra.mxu0 0
      %871 = vmatprep.subr.bf16.mxu0 0
      %872 = vmatpush1.bf16.msra.mxu0 0
      %873 = vmatprep.subr.bf16.mxu0 0
      %874 = vmatpush1.bf16.msra.mxu0 0
      %875 = vmatprep.subr.bf16.mxu0 0
      %876 = vmatpush1.bf16.msra.mxu0 0
      %877 = vmatprep.subr.bf16.mxu0 0
      %878 = vmatpush1.bf16.msra.mxu0 0
      %879 = vmatprep.subr.bf16.mxu0 0
      %880 = vmatpush1.bf16.msra.mxu0 0
      %881 = vmatprep.mubr.bf16.mxu0 0
      %882 = vmatmul.mubr.bf16.gmra.mrb[0].mxu0 %v841
      %v883 = vpop.f32.mrb[0].mxu0
      %v884 = vadd.f32 0.0, %v883
      %v885 = vpop.f32.mrb[0].mxu0
      %v886 = vpop.f32.mrb[0].mxu0
      %v887 = vadd.f32 0.0, %v886
      %v888 = vpop.f32.mrb[0].mxu0
      %889 = vmatprep.mubr.bf16.mxu0 0
      %890 = vmatmul.mubr.bf16.gmra.mrb[0].mxu0 %v844
      %v891 = vpop.f32.mrb[0].mxu0
      %v892 = vadd.f32 0.0, %v891
      %v893 = vpop.f32.mrb[0].mxu0
      %v894 = vpop.f32.mrb[0].mxu0
      %v895 = vadd.f32 0.0, %v894
      %v896 = vpop.f32.mrb[0].mxu0
      %897 = vmatprep.mubr.bf16.mxu0 0
      %898 = vmatmul.mubr.bf16.gmra.mrb[0].mxu0 %v847
      %v899 = vpop.f32.mrb[0].mxu0
      %v900 = vadd.f32 0.0, %v899
      %v901 = vpop.f32.mrb[0].mxu0
      %v902 = vpop.f32.mrb[0].mxu0
      %v903 = vadd.f32 0.0, %v902
      %v904 = vpop.f32.mrb[0].mxu0
      %905 = vdwg.mxu0
      %v906 = vpack.c.bf16 %v821, %v818
      %v907 = vpack.c.bf16 %v829, %v826
      %v908 = vpack.c.bf16 %v837, %v834
      %v909 = vpack.c.bf16 %v887, %v884
      %v910 = vpack.c.bf16 %v895, %v892
      %v911 = vpack.c.bf16 %v903, %v900
      %v913 = vsel %vm570, %v909, 0
      %v916 = vsel %vm570, %v910, 0
      %v919 = vsel %vm570, %v911, 0
      %921 = vmatprep.subr.bf16.mxu0 0
      %922 = vmatpush1.bf16.msra.mxu0 %v683
      %923 = vmatprep.subr.bf16.mxu0 0
      %924 = vmatpush1.bf16.msra.mxu0 %v684
      %925 = vmatprep.subr.bf16.mxu0 0
      %926 = vmatpush1.bf16.msra.mxu0 %v685
      %927 = vmatprep.subr.bf16.mxu0 0
      %928 = vmatpush1.bf16.msra.mxu0 %v686
      %929 = vmatprep.subr.bf16.mxu0 0
      %930 = vmatpush1.bf16.msra.mxu0 0
      %931 = vmatprep.subr.bf16.mxu0 0
      %932 = vmatpush1.bf16.msra.mxu0 0
      %933 = vmatprep.subr.bf16.mxu0 0
      %934 = vmatpush1.bf16.msra.mxu0 0
      %935 = vmatprep.subr.bf16.mxu0 0
      %936 = vmatpush1.bf16.msra.mxu0 0
      %937 = vmatprep.subr.bf16.mxu0 0
      %938 = vmatpush1.bf16.msra.mxu0 0
      %939 = vmatprep.subr.bf16.mxu0 0
      %940 = vmatpush1.bf16.msra.mxu0 0
      %941 = vmatprep.subr.bf16.mxu0 0
      %942 = vmatpush1.bf16.msra.mxu0 0
      %943 = vmatprep.subr.bf16.mxu0 0
      %944 = vmatpush1.bf16.msra.mxu0 0
      %945 = vmatprep.subr.bf16.mxu0 0
      %946 = vmatpush1.bf16.msra.mxu0 0
      %947 = vmatprep.subr.bf16.mxu0 0
      %948 = vmatpush1.bf16.msra.mxu0 0
      %949 = vmatprep.subr.bf16.mxu0 0
      %950 = vmatpush1.bf16.msra.mxu0 0
      %951 = vmatprep.subr.bf16.mxu0 0
      %952 = vmatpush1.bf16.msra.mxu0 0
      %953 = vmatprep.mubr.bf16.mxu0 0
      %954 = vmatmul.mubr.bf16.gmra.mrb[0].mxu0 %v913
      %v955 = vpop.f32.mrb[0].mxu0
      %v956 = vadd.f32 0.0, %v955
      %v957 = vpop.f32.mrb[0].mxu0
      %v958 = vpop.f32.mrb[0].mxu0
      %v959 = vadd.f32 0.0, %v958
      %v960 = vpop.f32.mrb[0].mxu0
      %961 = vmatprep.mubr.bf16.mxu0 0
      %962 = vmatmul.mubr.bf16.gmra.mrb[0].mxu0 %v916
      %v963 = vpop.f32.mrb[0].mxu0
      %v964 = vadd.f32 0.0, %v963
      %v965 = vpop.f32.mrb[0].mxu0
      %v966 = vpop.f32.mrb[0].mxu0
      %v967 = vadd.f32 0.0, %v966
      %v968 = vpop.f32.mrb[0].mxu0
      %969 = vmatprep.mubr.bf16.mxu0 0
      %970 = vmatmul.mubr.bf16.gmra.mrb[0].mxu0 %v919
      %v971 = vpop.f32.mrb[0].mxu0
      %v972 = vadd.f32 0.0, %v971
      %v973 = vpop.f32.mrb[0].mxu0
      %v974 = vpop.f32.mrb[0].mxu0
      %v975 = vadd.f32 0.0, %v974
      %v976 = vpop.f32.mrb[0].mxu0
      %977 = vdwg.mxu0
      %v979 = vsel %vm570, %v906, 0
      %v982 = vsel %vm570, %v907, 0
      %v985 = vsel %vm570, %v908, 0
      %987 = vmatprep.subr.bf16.mxu0 0
      %988 = vmatpush1.bf16.msra.mxu0 %v679
      %989 = vmatprep.subr.bf16.mxu0 0
      %990 = vmatpush1.bf16.msra.mxu0 %v680
      %991 = vmatprep.subr.bf16.mxu0 0
      %992 = vmatpush1.bf16.msra.mxu0 %v681
      %993 = vmatprep.subr.bf16.mxu0 0
      %994 = vmatpush1.bf16.msra.mxu0 %v682
      %995 = vmatprep.subr.bf16.mxu0 0
      %996 = vmatpush1.bf16.msra.mxu0 0
      %997 = vmatprep.subr.bf16.mxu0 0
      %998 = vmatpush1.bf16.msra.mxu0 0
      %999 = vmatprep.subr.bf16.mxu0 0
      %1000 = vmatpush1.bf16.msra.mxu0 0
      %1001 = vmatprep.subr.bf16.mxu0 0
      %1002 = vmatpush1.bf16.msra.mxu0 0
      %1003 = vmatprep.subr.bf16.mxu0 0
      %1004 = vmatpush1.bf16.msra.mxu0 0
      %1005 = vmatprep.subr.bf16.mxu0 0
      %1006 = vmatpush1.bf16.msra.mxu0 0
      %1007 = vmatprep.subr.bf16.mxu0 0
      %1008 = vmatpush1.bf16.msra.mxu0 0
      %1009 = vmatprep.subr.bf16.mxu0 0
      %1010 = vmatpush1.bf16.msra.mxu0 0
      %1011 = vmatprep.subr.bf16.mxu0 0
      %1012 = vmatpush1.bf16.msra.mxu0 0
      %1013 = vmatprep.subr.bf16.mxu0 0
      %1014 = vmatpush1.bf16.msra.mxu0 0
      %1015 = vmatprep.subr.bf16.mxu0 0
      %1016 = vmatpush1.bf16.msra.mxu0 0
      %1017 = vmatprep.subr.bf16.mxu0 0
      %1018 = vmatpush1.bf16.msra.mxu0 0
      %1019 = vmatprep.mubr.bf16.mxu0 0
      %1020 = vmatmul.mubr.bf16.gmra.mrb[0].mxu0 %v979
      %v1021 = vpop.f32.mrb[0].mxu0
      %v1022 = vadd.f32 %v956, %v1021
      %v1023 = vpop.f32.mrb[0].mxu0
      %v1024 = vpop.f32.mrb[0].mxu0
      %v1025 = vadd.f32 %v959, %v1024
      %v1026 = vpop.f32.mrb[0].mxu0
      %1027 = vmatprep.mubr.bf16.mxu0 0
      %1028 = vmatmul.mubr.bf16.gmra.mrb[0].mxu0 %v982
      %v1029 = vpop.f32.mrb[0].mxu0
      %v1030 = vadd.f32 %v964, %v1029
      %v1031 = vpop.f32.mrb[0].mxu0
      %v1032 = vpop.f32.mrb[0].mxu0
      %v1033 = vadd.f32 %v967, %v1032
      %v1034 = vpop.f32.mrb[0].mxu0
      %1035 = vmatprep.mubr.bf16.mxu0 0
      %1036 = vmatmul.mubr.bf16.gmra.mrb[0].mxu0 %v985
      %v1037 = vpop.f32.mrb[0].mxu0
      %v1038 = vadd.f32 %v972, %v1037
      %v1039 = vpop.f32.mrb[0].mxu0
      %v1040 = vpop.f32.mrb[0].mxu0
      %v1041 = vadd.f32 %v975, %v1040
      %v1042 = vpop.f32.mrb[0].mxu0
      %1043 = vdwg.mxu0
      %v1045 = vsel %vm570, %v770, 0
      %v1048 = vsel %vm570, %v771, 0
      %v1051 = vsel %vm570, %v772, 0
      %1053 = vmatprep.subr.bf16.mxu0 0
      %1054 = vmatpush1.bf16.msra.mxu0 %v687
      %1055 = vmatprep.subr.bf16.mxu0 0
      %1056 = vmatpush1.bf16.msra.mxu0 %v688
      %1057 = vmatprep.subr.bf16.mxu0 0
      %1058 = vmatpush1.bf16.msra.mxu0 %v689
      %1059 = vmatprep.subr.bf16.mxu0 0
      %1060 = vmatpush1.bf16.msra.mxu0 %v690
      %1061 = vmatprep.subr.bf16.mxu0 0
      %1062 = vmatpush1.bf16.msra.mxu0 0
      %1063 = vmatprep.subr.bf16.mxu0 0
      %1064 = vmatpush1.bf16.msra.mxu0 0
      %1065 = vmatprep.subr.bf16.mxu0 0
      %1066 = vmatpush1.bf16.msra.mxu0 0
      %1067 = vmatprep.subr.bf16.mxu0 0
      %1068 = vmatpush1.bf16.msra.mxu0 0
      %1069 = vmatprep.subr.bf16.mxu0 0
      %1070 = vmatpush1.bf16.msra.mxu0 0
      %1071 = vmatprep.subr.bf16.mxu0 0
      %1072 = vmatpush1.bf16.msra.mxu0 0
      %1073 = vmatprep.subr.bf16.mxu0 0
      %1074 = vmatpush1.bf16.msra.mxu0 0
      %1075 = vmatprep.subr.bf16.mxu0 0
      %1076 = vmatpush1.bf16.msra.mxu0 0
      %1077 = vmatprep.subr.bf16.mxu0 0
      %1078 = vmatpush1.bf16.msra.mxu0 0
      %1079 = vmatprep.subr.bf16.mxu0 0
      %1080 = vmatpush1.bf16.msra.mxu0 0
      %1081 = vmatprep.subr.bf16.mxu0 0
      %1082 = vmatpush1.bf16.msra.mxu0 0
      %1083 = vmatprep.subr.bf16.mxu0 0
      %1084 = vmatpush1.bf16.msra.mxu0 0
      %1085 = vmatprep.mubr.bf16.mxu0 0
      %1086 = vmatmul.mubr.bf16.gmra.mrb[0].mxu0 %v1045
      %v1087 = vpop.f32.mrb[0].mxu0
      %v1088 = vadd.f32 0.0, %v1087
      %v1089 = vpop.f32.mrb[0].mxu0
      %v1090 = vpop.f32.mrb[0].mxu0
      %v1091 = vadd.f32 0.0, %v1090
      %v1092 = vpop.f32.mrb[0].mxu0
      %1093 = vmatprep.mubr.bf16.mxu0 0
      %1094 = vmatmul.mubr.bf16.gmra.mrb[0].mxu0 %v1048
      %v1095 = vpop.f32.mrb[0].mxu0
      %v1096 = vadd.f32 0.0, %v1095
      %v1097 = vpop.f32.mrb[0].mxu0
      %v1098 = vpop.f32.mrb[0].mxu0
      %v1099 = vadd.f32 0.0, %v1098
      %v1100 = vpop.f32.mrb[0].mxu0
      %1101 = vmatprep.mubr.bf16.mxu0 0
      %1102 = vmatmul.mubr.bf16.gmra.mrb[0].mxu0 %v1051
      %v1103 = vpop.f32.mrb[0].mxu0
      %v1104 = vadd.f32 0.0, %v1103
      %v1105 = vpop.f32.mrb[0].mxu0
      %v1106 = vpop.f32.mrb[0].mxu0
      %v1107 = vadd.f32 0.0, %v1106
      %v1108 = vpop.f32.mrb[0].mxu0
      %1109 = vdwg.mxu0
      %v1110 = vadd.f32 %v1022, %v1088
      %v1111 = vadd.f32 %v1025, %v1091
      %v1112 = vadd.f32 %v1030, %v1096
      %v1113 = vadd.f32 %v1033, %v1099
      %v1114 = vadd.f32 %v1038, %v1104
      %v1115 = vadd.f32 %v1041, %v1107
      %v1116 = vadd.f32 %v1110, %v744
      %v1117 = vadd.f32 %v1111, %v744
      %v1118 = vadd.f32 %v1112, %v744
      %v1119 = vadd.f32 %v1113, %v744
      %v1120 = vadd.f32 %v1114, %v744
      %v1121 = vadd.f32 %v1115, %v744
      %v1122 = vmax.f32 %v1116, 0.0
      %v1123 = vmax.f32 %v1117, 0.0
      %v1124 = vmax.f32 %v1118, 0.0
      %v1125 = vmax.f32 %v1119, 0.0
      %v1126 = vmax.f32 %v1120, 0.0
      %v1127 = vmax.f32 %v1121, 0.0
      %v1128 = vpack.c.bf16 %v1123, %v1122
      %v1129 = vpack.c.bf16 %v1125, %v1124
      %v1130 = vpack.c.bf16 %v1127, %v1126
      %v1132 = vsel %vm570, %v1128, 0
      %v1135 = vsel %vm570, %v1129, 0
      %v1138 = vsel %vm570, %v1130, 0
      %1140 = vmatprep.subr.bf16.mxu0 %v708
      %1141 = vmatpush1.bf16.msra.mxu0 %v707
      %1142 = vmatprep.subr.bf16.mxu0 %v710
      %1143 = vmatpush1.bf16.msra.mxu0 %v709
      %1144 = vmatprep.subr.bf16.mxu0 %v712
      %1145 = vmatpush1.bf16.msra.mxu0 %v711
      %1146 = vmatprep.subr.bf16.mxu0 %v714
      %1147 = vmatpush1.bf16.msra.mxu0 %v713
      %1148 = vmatprep.subr.bf16.mxu0 0
      %1149 = vmatpush1.bf16.msra.mxu0 0
      %1150 = vmatprep.subr.bf16.mxu0 0
      %1151 = vmatpush1.bf16.msra.mxu0 0
      %1152 = vmatprep.subr.bf16.mxu0 0
      %1153 = vmatpush1.bf16.msra.mxu0 0
      %1154 = vmatprep.subr.bf16.mxu0 0
      %1155 = vmatpush1.bf16.msra.mxu0 0
      %1156 = vmatprep.subr.bf16.mxu0 0
      %1157 = vmatpush1.bf16.msra.mxu0 0
      %1158 = vmatprep.subr.bf16.mxu0 0
      %1159 = vmatpush1.bf16.msra.mxu0 0
      %1160 = vmatprep.subr.bf16.mxu0 0
      %1161 = vmatpush1.bf16.msra.mxu0 0
      %1162 = vmatprep.subr.bf16.mxu0 0
      %1163 = vmatpush1.bf16.msra.mxu0 0
      %1164 = vmatprep.subr.bf16.mxu0 0
      %1165 = vmatpush1.bf16.msra.mxu0 0
      %1166 = vmatprep.subr.bf16.mxu0 0
      %1167 = vmatpush1.bf16.msra.mxu0 0
      %1168 = vmatprep.subr.bf16.mxu0 0
      %1169 = vmatpush1.bf16.msra.mxu0 0
      %1170 = vmatprep.subr.bf16.mxu0 0
      %1171 = vmatpush1.bf16.msra.mxu0 0
      %1172 = vmatprep.mubr.bf16.mxu0 0
      %1173 = vmatmul.mubr.bf16.gmra.mrb[0].mxu0 %v1132
      %v1174 = vpop.f32.mrb[0].mxu0
      %v1175 = vadd.f32 %v751, %v1174
      %v1176 = vpop.f32.mrb[0].mxu0
      %v1177 = vadd.f32 %v755, %v1176
      %v1178 = vpop.f32.mrb[0].mxu0
      %v1179 = vadd.f32 %v751, %v1178
      %v1180 = vpop.f32.mrb[0].mxu0
      %v1181 = vadd.f32 %v755, %v1180
      %1182 = vmatprep.mubr.bf16.mxu0 0
      %1183 = vmatmul.mubr.bf16.gmra.mrb[0].mxu0 %v1135
      %v1184 = vpop.f32.mrb[0].mxu0
      %v1185 = vadd.f32 %v751, %v1184
      %v1186 = vpop.f32.mrb[0].mxu0
      %v1187 = vadd.f32 %v755, %v1186
      %v1188 = vpop.f32.mrb[0].mxu0
      %v1189 = vadd.f32 %v751, %v1188
      %v1190 = vpop.f32.mrb[0].mxu0
      %v1191 = vadd.f32 %v755, %v1190
      %1192 = vmatprep.mubr.bf16.mxu0 0
      %1193 = vmatmul.mubr.bf16.gmra.mrb[0].mxu0 %v1138
      %v1194 = vpop.f32.mrb[0].mxu0
      %v1195 = vadd.f32 %v751, %v1194
      %v1196 = vpop.f32.mrb[0].mxu0
      %v1197 = vadd.f32 %v755, %v1196
      %v1198 = vpop.f32.mrb[0].mxu0
      %v1199 = vadd.f32 %v751, %v1198
      %v1200 = vpop.f32.mrb[0].mxu0
      %v1201 = vadd.f32 %v755, %v1200
      %1202 = vdwg.mxu0
      %1203 = vmatprep.subr.bf16.mxu0 %v732
      %1204 = vmatpush1.bf16.msra.mxu0 %v731
      %1205 = vmatprep.subr.bf16.mxu0 %v734
      %1206 = vmatpush1.bf16.msra.mxu0 %v733
      %1207 = vmatprep.subr.bf16.mxu0 %v736
      %1208 = vmatpush1.bf16.msra.mxu0 %v735
      %1209 = vmatprep.subr.bf16.mxu0 %v738
      %1210 = vmatpush1.bf16.msra.mxu0 %v737
      %1211 = vmatprep.subr.bf16.mxu0 0
      %1212 = vmatpush1.bf16.msra.mxu0 0
      %1213 = vmatprep.subr.bf16.mxu0 0
      %1214 = vmatpush1.bf16.msra.mxu0 0
      %1215 = vmatprep.subr.bf16.mxu0 0
      %1216 = vmatpush1.bf16.msra.mxu0 0
      %1217 = vmatprep.subr.bf16.mxu0 0
      %1218 = vmatpush1.bf16.msra.mxu0 0
      %1219 = vmatprep.subr.bf16.mxu0 0
      %1220 = vmatpush1.bf16.msra.mxu0 0
      %1221 = vmatprep.subr.bf16.mxu0 0
      %1222 = vmatpush1.bf16.msra.mxu0 0
      %1223 = vmatprep.subr.bf16.mxu0 0
      %1224 = vmatpush1.bf16.msra.mxu0 0
      %1225 = vmatprep.subr.bf16.mxu0 0
      %1226 = vmatpush1.bf16.msra.mxu0 0
      %1227 = vmatprep.subr.bf16.mxu0 0
      %1228 = vmatpush1.bf16.msra.mxu0 0
      %1229 = vmatprep.subr.bf16.mxu0 0
      %1230 = vmatpush1.bf16.msra.mxu0 0
      %1231 = vmatprep.subr.bf16.mxu0 0
      %1232 = vmatpush1.bf16.msra.mxu0 0
      %1233 = vmatprep.subr.bf16.mxu0 0
      %1234 = vmatpush1.bf16.msra.mxu0 0
      %1235 = vmatprep.mubr.bf16.mxu0 0
      %1236 = vmatmul.mubr.bf16.gmra.mrb[0].mxu0 %v1045
      %v1237 = vpop.f32.mrb[0].mxu0
      %v1238 = vadd.f32 %v763, %v1237
      %v1239 = vpop.f32.mrb[0].mxu0
      %v1240 = vadd.f32 %v767, %v1239
      %v1241 = vpop.f32.mrb[0].mxu0
      %v1242 = vadd.f32 %v763, %v1241
      %v1243 = vpop.f32.mrb[0].mxu0
      %v1244 = vadd.f32 %v767, %v1243
      %1245 = vmatprep.mubr.bf16.mxu0 0
      %1246 = vmatmul.mubr.bf16.gmra.mrb[0].mxu0 %v1048
      %v1247 = vpop.f32.mrb[0].mxu0
      %v1248 = vadd.f32 %v763, %v1247
      %v1249 = vpop.f32.mrb[0].mxu0
      %v1250 = vadd.f32 %v767, %v1249
      %v1251 = vpop.f32.mrb[0].mxu0
      %v1252 = vadd.f32 %v763, %v1251
      %v1253 = vpop.f32.mrb[0].mxu0
      %v1254 = vadd.f32 %v767, %v1253
      %1255 = vmatprep.mubr.bf16.mxu0 0
      %1256 = vmatmul.mubr.bf16.gmra.mrb[0].mxu0 %v1051
      %v1257 = vpop.f32.mrb[0].mxu0
      %v1258 = vadd.f32 %v763, %v1257
      %v1259 = vpop.f32.mrb[0].mxu0
      %v1260 = vadd.f32 %v767, %v1259
      %v1261 = vpop.f32.mrb[0].mxu0
      %v1262 = vadd.f32 %v763, %v1261
      %v1263 = vpop.f32.mrb[0].mxu0
      %v1264 = vadd.f32 %v767, %v1263
      %1265 = vdwg.mxu0
      %v1266 = vadd.f32 %v1175, %v1238
      %v1267 = vadd.f32 %v1179, %v1242
      %v1268 = vadd.f32 %v1185, %v1248
      %v1269 = vadd.f32 %v1189, %v1252
      %v1270 = vadd.f32 %v1195, %v1258
      %v1271 = vadd.f32 %v1199, %v1262
      %v1272 = vxor.u32 %v1266, 2147483648
      %v1273 = vxor.u32 %v1267, 2147483648
      %v1274 = vxor.u32 %v1268, 2147483648
      %v1275 = vxor.u32 %v1269, 2147483648
      %v1276 = vxor.u32 %v1270, 2147483648
      %v1277 = vxor.u32 %v1271, 2147483648
      %v1278 = vmul.f32 %v1272, 1.442695
      %v1279 = vpow.pop %v1278
      %v1280 = vmul.f32 %v1273, 1.442695
      %v1281 = vpow.pop %v1280
      %v1282 = vmul.f32 %v1274, 1.442695
      %v1283 = vpow.pop %v1282
      %v1284 = vmul.f32 %v1275, 1.442695
      %v1285 = vpow.pop %v1284
      %v1286 = vmul.f32 %v1276, 1.442695
      %v1287 = vpow.pop %v1286
      %v1288 = vmul.f32 %v1277, 1.442695
      %v1289 = vpow.pop %v1288
      %v1290 = vadd.f32 %v1279, 1.0
      %v1291 = vadd.f32 %v1281, 1.0
      %v1292 = vadd.f32 %v1283, 1.0
      %v1293 = vadd.f32 %v1285, 1.0
      %v1294 = vadd.f32 %v1287, 1.0
      %v1295 = vadd.f32 %v1289, 1.0
      %v1296 = vrcp.pop %v1290
      %v1297 = vmul.f32 1.0, %v1296
      %v1298 = vrcp.pop %v1291
      %v1299 = vmul.f32 1.0, %v1298
      %v1300 = vrcp.pop %v1292
      %v1301 = vmul.f32 1.0, %v1300
      %v1302 = vrcp.pop %v1293
      %v1303 = vmul.f32 1.0, %v1302
      %v1304 = vrcp.pop %v1294
      %v1305 = vmul.f32 1.0, %v1304
      %v1306 = vrcp.pop %v1295
      %v1307 = vmul.f32 1.0, %v1306
      %v1308 = vmul.f32 %v1297, %v1240
      %v1309 = vmul.f32 %v1299, %v1244
      %v1310 = vmul.f32 %v1301, %v1250
      %v1311 = vmul.f32 %v1303, %v1254
      %v1312 = vmul.f32 %v1305, %v1260
      %v1313 = vmul.f32 %v1307, %v1264
      %v1314 = vadd.f32 %v1177, %v1308
      %v1315 = vadd.f32 %v1181, %v1309
      %v1316 = vadd.f32 %v1187, %v1310
      %v1317 = vadd.f32 %v1191, %v1311
      %v1318 = vadd.f32 %v1197, %v1312
      %v1319 = vadd.f32 %v1201, %v1313
      %v1320 = vtanh.pop %v1314
      %v1321 = vtanh.pop %v1315
      %v1322 = vtanh.pop %v1316
      %v1323 = vtanh.pop %v1317
      %v1324 = vtanh.pop %v1318
      %v1325 = vtanh.pop %v1319
      %v1326 = vsub.f32 1.0, %v1297
      %v1327 = vsub.f32 1.0, %v1299
      %v1328 = vsub.f32 1.0, %v1301
      %v1329 = vsub.f32 1.0, %v1303
      %v1330 = vsub.f32 1.0, %v1305
      %v1331 = vsub.f32 1.0, %v1307
      %1338 = vrot.lane.b32.xlu0 %v1320, 64
      %v1339 = vpop.permute.xlu0 %1338
      %1340 = vrot.lane.b32.xlu0 %v1321, 64
      %v1341 = vpop.permute.xlu0 %1340
      %1342 = vrot.lane.b32.xlu0 %v1322, 64
      %v1343 = vpop.permute.xlu0 %1342
      %1344 = vrot.lane.b32.xlu0 %v1323, 64
      %v1345 = vpop.permute.xlu0 %1344
      %1346 = vrot.lane.b32.xlu0 %v1324, 64
      %v1347 = vpop.permute.xlu0 %1346
      %1348 = vrot.lane.b32.xlu0 %v1325, 64
      %v1349 = vpop.permute.xlu0 %1348
      %v1356 = vmul.f32 %v1326, %v1339
      %v1357 = vmul.f32 %v1327, %v1341
      %v1358 = vmul.f32 %v1328, %v1343
      %v1359 = vmul.f32 %v1329, %v1345
      %v1360 = vmul.f32 %v1330, %v1347
      %v1361 = vmul.f32 %v1331, %v1349
      %1368 = vrot.lane.b32.xlu0 %v615, 64
      %v1369 = vpop.permute.xlu0 %1368
      %1370 = vrot.lane.b32.xlu0 %v618, 64
      %v1371 = vpop.permute.xlu0 %1370
      %1372 = vrot.lane.b32.xlu0 %v623, 64
      %v1373 = vpop.permute.xlu0 %1372
      %1374 = vrot.lane.b32.xlu0 %v626, 64
      %v1375 = vpop.permute.xlu0 %1374
      %1376 = vrot.lane.b32.xlu0 %v631, 64
      %v1377 = vpop.permute.xlu0 %1376
      %1378 = vrot.lane.b32.xlu0 %v634, 64
      %v1379 = vpop.permute.xlu0 %1378
      %v1386 = vmul.f32 %v1297, %v1369
      %v1387 = vmul.f32 %v1299, %v1371
      %v1388 = vmul.f32 %v1301, %v1373
      %v1389 = vmul.f32 %v1303, %v1375
      %v1390 = vmul.f32 %v1305, %v1377
      %v1391 = vmul.f32 %v1307, %v1379
      %v1392 = vadd.f32 %v1356, %v1386
      %v1393 = vadd.f32 %v1357, %v1387
      %v1394 = vadd.f32 %v1358, %v1388
      %v1395 = vadd.f32 %v1359, %v1389
      %v1396 = vadd.f32 %v1360, %v1390
      %v1397 = vadd.f32 %v1361, %v1391
      %v1398 = vpack.c.bf16 %v1393, %v1392
      %v1399 = vpack.c.bf16 %v1395, %v1394
      %v1400 = vpack.c.bf16 %v1397, %v1396
      %1404 = vrot.lane.b32.xlu0 %v1398, 64
      %v1405 = vpop.permute.xlu0 %1404
      %1406 = vrot.lane.b32.xlu0 %v1399, 64
      %v1407 = vpop.permute.xlu0 %1406
      %1408 = vrot.lane.b32.xlu0 %v1400, 64
      %v1409 = vpop.permute.xlu0 %1408
      %1413 = vmatprep.subr.bf16.mxu0 0
      %1414 = vmatpush1.bf16.msra.mxu0 %v1405
      %1415 = vmatprep.subr.bf16.mxu0 0
      %1416 = vmatpush1.bf16.msra.mxu0 %v1407
      %1417 = vmatprep.subr.bf16.mxu0 0
      %1418 = vmatpush1.bf16.msra.mxu0 %v1409
      %1419 = vmatprep.subr.bf16.mxu0 0
      %1420 = vmatpush1.bf16.msra.mxu0 0
      %1421 = vmatprep.subr.bf16.mxu0 0
      %1422 = vmatpush1.bf16.msra.mxu0 0
      %1423 = vmatprep.subr.bf16.mxu0 0
      %1424 = vmatpush1.bf16.msra.mxu0 0
      %1425 = vmatprep.subr.bf16.mxu0 0
      %1426 = vmatpush1.bf16.msra.mxu0 0
      %1427 = vmatprep.subr.bf16.mxu0 0
      %1428 = vmatpush1.bf16.msra.mxu0 0
      %1429 = vmatprep.subr.bf16.mxu0 0
      %1430 = vmatpush1.bf16.msra.mxu0 0
      %1431 = vmatprep.subr.bf16.mxu0 0
      %1432 = vmatpush1.bf16.msra.mxu0 0
      %1433 = vmatprep.subr.bf16.mxu0 0
      %1434 = vmatpush1.bf16.msra.mxu0 0
      %1435 = vmatprep.subr.bf16.mxu0 0
      %1436 = vmatpush1.bf16.msra.mxu0 0
      %1437 = vmatprep.subr.bf16.mxu0 0
      %1438 = vmatpush1.bf16.msra.mxu0 0
      %1439 = vmatprep.subr.bf16.mxu0 0
      %1440 = vmatpush1.bf16.msra.mxu0 0
      %1441 = vmatprep.subr.bf16.mxu0 0
      %1442 = vmatpush1.bf16.msra.mxu0 0
      %1443 = vmatprep.subr.bf16.mxu0 0
      %1444 = vmatpush1.bf16.msra.mxu0 0
      %1445 = vmatprep.mubr.bf16.mxu0 0
      %1446 = vmatmul.mubr.bf16.gmra.mrb[0].mxu0 %v775
      %v1447 = vpop.f32.mrb[0].mxu0
      %v1448 = vadd.f32 0.0, %v1447
      %v1449 = vpop.f32.mrb[0].mxu0
      %v1450 = vpop.f32.mrb[0].mxu0
      %v1451 = vadd.f32 0.0, %v1450
      %v1452 = vpop.f32.mrb[0].mxu0
      %1453 = vmatprep.mubr.bf16.mxu0 0
      %1454 = vmatmul.mubr.bf16.gmra.mrb[0].mxu0 %v778
      %v1455 = vpop.f32.mrb[0].mxu0
      %v1456 = vadd.f32 0.0, %v1455
      %v1457 = vpop.f32.mrb[0].mxu0
      %v1458 = vpop.f32.mrb[0].mxu0
      %v1459 = vadd.f32 0.0, %v1458
      %v1460 = vpop.f32.mrb[0].mxu0
      %1461 = vmatprep.mubr.bf16.mxu0 0
      %1462 = vmatmul.mubr.bf16.gmra.mrb[0].mxu0 %v781
      %v1463 = vpop.f32.mrb[0].mxu0
      %v1464 = vadd.f32 0.0, %v1463
      %v1465 = vpop.f32.mrb[0].mxu0
      %v1466 = vpop.f32.mrb[0].mxu0
      %v1467 = vadd.f32 0.0, %v1466
      %v1468 = vpop.f32.mrb[0].mxu0
      %1469 = vdwg.mxu0
      %1470 = vmatprep.subr.bf16.mxu0 0
      %1471 = vmatpush1.bf16.msra.mxu0 %v1405
      %1472 = vmatprep.subr.bf16.mxu0 0
      %1473 = vmatpush1.bf16.msra.mxu0 %v1407
      %1474 = vmatprep.subr.bf16.mxu0 0
      %1475 = vmatpush1.bf16.msra.mxu0 %v1409
      %1476 = vmatprep.subr.bf16.mxu0 0
      %1477 = vmatpush1.bf16.msra.mxu0 0
      %1478 = vmatprep.subr.bf16.mxu0 0
      %1479 = vmatpush1.bf16.msra.mxu0 0
      %1480 = vmatprep.subr.bf16.mxu0 0
      %1481 = vmatpush1.bf16.msra.mxu0 0
      %1482 = vmatprep.subr.bf16.mxu0 0
      %1483 = vmatpush1.bf16.msra.mxu0 0
      %1484 = vmatprep.subr.bf16.mxu0 0
      %1485 = vmatpush1.bf16.msra.mxu0 0
      %1486 = vmatprep.subr.bf16.mxu0 0
      %1487 = vmatpush1.bf16.msra.mxu0 0
      %1488 = vmatprep.subr.bf16.mxu0 0
      %1489 = vmatpush1.bf16.msra.mxu0 0
      %1490 = vmatprep.subr.bf16.mxu0 0
      %1491 = vmatpush1.bf16.msra.mxu0 0
      %1492 = vmatprep.subr.bf16.mxu0 0
      %1493 = vmatpush1.bf16.msra.mxu0 0
      %1494 = vmatprep.subr.bf16.mxu0 0
      %1495 = vmatpush1.bf16.msra.mxu0 0
      %1496 = vmatprep.subr.bf16.mxu0 0
      %1497 = vmatpush1.bf16.msra.mxu0 0
      %1498 = vmatprep.subr.bf16.mxu0 0
      %1499 = vmatpush1.bf16.msra.mxu0 0
      %1500 = vmatprep.subr.bf16.mxu0 0
      %1501 = vmatpush1.bf16.msra.mxu0 0
      %1502 = vmatprep.mubr.bf16.mxu0 0
      %1503 = vmatmul.mubr.bf16.gmra.mrb[0].mxu0 %v841
      %v1504 = vpop.f32.mrb[0].mxu0
      %v1505 = vadd.f32 0.0, %v1504
      %v1506 = vpop.f32.mrb[0].mxu0
      %v1507 = vpop.f32.mrb[0].mxu0
      %v1508 = vadd.f32 0.0, %v1507
      %v1509 = vpop.f32.mrb[0].mxu0
      %1510 = vmatprep.mubr.bf16.mxu0 0
      %1511 = vmatmul.mubr.bf16.gmra.mrb[0].mxu0 %v844
      %v1512 = vpop.f32.mrb[0].mxu0
      %v1513 = vadd.f32 0.0, %v1512
      %v1514 = vpop.f32.mrb[0].mxu0
      %v1515 = vpop.f32.mrb[0].mxu0
      %v1516 = vadd.f32 0.0, %v1515
      %v1517 = vpop.f32.mrb[0].mxu0
      %1518 = vmatprep.mubr.bf16.mxu0 0
      %1519 = vmatmul.mubr.bf16.gmra.mrb[0].mxu0 %v847
      %v1520 = vpop.f32.mrb[0].mxu0
      %v1521 = vadd.f32 0.0, %v1520
      %v1522 = vpop.f32.mrb[0].mxu0
      %v1523 = vpop.f32.mrb[0].mxu0
      %v1524 = vadd.f32 0.0, %v1523
      %v1525 = vpop.f32.mrb[0].mxu0
      %1526 = vdwg.mxu0
      %v1527 = vpack.c.bf16 %v1451, %v1448
      %v1528 = vpack.c.bf16 %v1459, %v1456
      %v1529 = vpack.c.bf16 %v1467, %v1464
      %v1530 = vpack.c.bf16 %v1508, %v1505
      %v1531 = vpack.c.bf16 %v1516, %v1513
      %v1532 = vpack.c.bf16 %v1524, %v1521
      %v1534 = vsel %vm570, %v1530, 0
      %v1537 = vsel %vm570, %v1531, 0
      %v1540 = vsel %vm570, %v1532, 0
      %1542 = vmatprep.subr.bf16.mxu0 0
      %1543 = vmatpush1.bf16.msra.mxu0 %v683
      %1544 = vmatprep.subr.bf16.mxu0 0
      %1545 = vmatpush1.bf16.msra.mxu0 %v684
      %1546 = vmatprep.subr.bf16.mxu0 0
      %1547 = vmatpush1.bf16.msra.mxu0 %v685
      %1548 = vmatprep.subr.bf16.mxu0 0
      %1549 = vmatpush1.bf16.msra.mxu0 %v686
      %1550 = vmatprep.subr.bf16.mxu0 0
      %1551 = vmatpush1.bf16.msra.mxu0 0
      %1552 = vmatprep.subr.bf16.mxu0 0
      %1553 = vmatpush1.bf16.msra.mxu0 0
      %1554 = vmatprep.subr.bf16.mxu0 0
      %1555 = vmatpush1.bf16.msra.mxu0 0
      %1556 = vmatprep.subr.bf16.mxu0 0
      %1557 = vmatpush1.bf16.msra.mxu0 0
      %1558 = vmatprep.subr.bf16.mxu0 0
      %1559 = vmatpush1.bf16.msra.mxu0 0
      %1560 = vmatprep.subr.bf16.mxu0 0
      %1561 = vmatpush1.bf16.msra.mxu0 0
      %1562 = vmatprep.subr.bf16.mxu0 0
      %1563 = vmatpush1.bf16.msra.mxu0 0
      %1564 = vmatprep.subr.bf16.mxu0 0
      %1565 = vmatpush1.bf16.msra.mxu0 0
      %1566 = vmatprep.subr.bf16.mxu0 0
      %1567 = vmatpush1.bf16.msra.mxu0 0
      %1568 = vmatprep.subr.bf16.mxu0 0
      %1569 = vmatpush1.bf16.msra.mxu0 0
      %1570 = vmatprep.subr.bf16.mxu0 0
      %1571 = vmatpush1.bf16.msra.mxu0 0
      %1572 = vmatprep.subr.bf16.mxu0 0
      %1573 = vmatpush1.bf16.msra.mxu0 0
      %1574 = vmatprep.mubr.bf16.mxu0 0
      %1575 = vmatmul.mubr.bf16.gmra.mrb[0].mxu0 %v1534
      %v1576 = vpop.f32.mrb[0].mxu0
      %v1577 = vadd.f32 0.0, %v1576
      %v1578 = vpop.f32.mrb[0].mxu0
      %v1579 = vpop.f32.mrb[0].mxu0
      %v1580 = vadd.f32 0.0, %v1579
      %v1581 = vpop.f32.mrb[0].mxu0
      %1582 = vmatprep.mubr.bf16.mxu0 0
      %1583 = vmatmul.mubr.bf16.gmra.mrb[0].mxu0 %v1537
      %v1584 = vpop.f32.mrb[0].mxu0
      %v1585 = vadd.f32 0.0, %v1584
      %v1586 = vpop.f32.mrb[0].mxu0
      %v1587 = vpop.f32.mrb[0].mxu0
      %v1588 = vadd.f32 0.0, %v1587
      %v1589 = vpop.f32.mrb[0].mxu0
      %1590 = vmatprep.mubr.bf16.mxu0 0
      %1591 = vmatmul.mubr.bf16.gmra.mrb[0].mxu0 %v1540
      %v1592 = vpop.f32.mrb[0].mxu0
      %v1593 = vadd.f32 0.0, %v1592
      %v1594 = vpop.f32.mrb[0].mxu0
      %v1595 = vpop.f32.mrb[0].mxu0
      %v1596 = vadd.f32 0.0, %v1595
      %v1597 = vpop.f32.mrb[0].mxu0
      %1598 = vdwg.mxu0
      %v1600 = vsel %vm570, %v1527, 0
      %v1603 = vsel %vm570, %v1528, 0
      %v1606 = vsel %vm570, %v1529, 0
      %1608 = vmatprep.subr.bf16.mxu0 0
      %1609 = vmatpush1.bf16.msra.mxu0 %v679
      %1610 = vmatprep.subr.bf16.mxu0 0
      %1611 = vmatpush1.bf16.msra.mxu0 %v680
      %1612 = vmatprep.subr.bf16.mxu0 0
      %1613 = vmatpush1.bf16.msra.mxu0 %v681
      %1614 = vmatprep.subr.bf16.mxu0 0
      %1615 = vmatpush1.bf16.msra.mxu0 %v682
      %1616 = vmatprep.subr.bf16.mxu0 0
      %1617 = vmatpush1.bf16.msra.mxu0 0
      %1618 = vmatprep.subr.bf16.mxu0 0
      %1619 = vmatpush1.bf16.msra.mxu0 0
      %1620 = vmatprep.subr.bf16.mxu0 0
      %1621 = vmatpush1.bf16.msra.mxu0 0
      %1622 = vmatprep.subr.bf16.mxu0 0
      %1623 = vmatpush1.bf16.msra.mxu0 0
      %1624 = vmatprep.subr.bf16.mxu0 0
      %1625 = vmatpush1.bf16.msra.mxu0 0
      %1626 = vmatprep.subr.bf16.mxu0 0
      %1627 = vmatpush1.bf16.msra.mxu0 0
      %1628 = vmatprep.subr.bf16.mxu0 0
      %1629 = vmatpush1.bf16.msra.mxu0 0
      %1630 = vmatprep.subr.bf16.mxu0 0
      %1631 = vmatpush1.bf16.msra.mxu0 0
      %1632 = vmatprep.subr.bf16.mxu0 0
      %1633 = vmatpush1.bf16.msra.mxu0 0
      %1634 = vmatprep.subr.bf16.mxu0 0
      %1635 = vmatpush1.bf16.msra.mxu0 0
      %1636 = vmatprep.subr.bf16.mxu0 0
      %1637 = vmatpush1.bf16.msra.mxu0 0
      %1638 = vmatprep.subr.bf16.mxu0 0
      %1639 = vmatpush1.bf16.msra.mxu0 0
      %1640 = vmatprep.mubr.bf16.mxu0 0
      %1641 = vmatmul.mubr.bf16.gmra.mrb[0].mxu0 %v1600
      %v1642 = vpop.f32.mrb[0].mxu0
      %v1643 = vadd.f32 %v1577, %v1642
      %v1644 = vpop.f32.mrb[0].mxu0
      %v1645 = vpop.f32.mrb[0].mxu0
      %v1646 = vadd.f32 %v1580, %v1645
      %v1647 = vpop.f32.mrb[0].mxu0
      %1648 = vmatprep.mubr.bf16.mxu0 0
      %1649 = vmatmul.mubr.bf16.gmra.mrb[0].mxu0 %v1603
      %v1650 = vpop.f32.mrb[0].mxu0
      %v1651 = vadd.f32 %v1585, %v1650
      %v1652 = vpop.f32.mrb[0].mxu0
      %v1653 = vpop.f32.mrb[0].mxu0
      %v1654 = vadd.f32 %v1588, %v1653
      %v1655 = vpop.f32.mrb[0].mxu0
      %1656 = vmatprep.mubr.bf16.mxu0 0
      %1657 = vmatmul.mubr.bf16.gmra.mrb[0].mxu0 %v1606
      %v1658 = vpop.f32.mrb[0].mxu0
      %v1659 = vadd.f32 %v1593, %v1658
      %v1660 = vpop.f32.mrb[0].mxu0
      %v1661 = vpop.f32.mrb[0].mxu0
      %v1662 = vadd.f32 %v1596, %v1661
      %v1663 = vpop.f32.mrb[0].mxu0
      %1664 = vdwg.mxu0
      %v1666 = vsel %vm570, %v1405, 0
      %v1669 = vsel %vm570, %v1407, 0
      %v1672 = vsel %vm570, %v1409, 0
      %1674 = vmatprep.subr.bf16.mxu0 0
      %1675 = vmatpush1.bf16.msra.mxu0 %v687
      %1676 = vmatprep.subr.bf16.mxu0 0
      %1677 = vmatpush1.bf16.msra.mxu0 %v688
      %1678 = vmatprep.subr.bf16.mxu0 0
      %1679 = vmatpush1.bf16.msra.mxu0 %v689
      %1680 = vmatprep.subr.bf16.mxu0 0
      %1681 = vmatpush1.bf16.msra.mxu0 %v690
      %1682 = vmatprep.subr.bf16.mxu0 0
      %1683 = vmatpush1.bf16.msra.mxu0 0
      %1684 = vmatprep.subr.bf16.mxu0 0
      %1685 = vmatpush1.bf16.msra.mxu0 0
      %1686 = vmatprep.subr.bf16.mxu0 0
      %1687 = vmatpush1.bf16.msra.mxu0 0
      %1688 = vmatprep.subr.bf16.mxu0 0
      %1689 = vmatpush1.bf16.msra.mxu0 0
      %1690 = vmatprep.subr.bf16.mxu0 0
      %1691 = vmatpush1.bf16.msra.mxu0 0
      %1692 = vmatprep.subr.bf16.mxu0 0
      %1693 = vmatpush1.bf16.msra.mxu0 0
      %1694 = vmatprep.subr.bf16.mxu0 0
      %1695 = vmatpush1.bf16.msra.mxu0 0
      %1696 = vmatprep.subr.bf16.mxu0 0
      %1697 = vmatpush1.bf16.msra.mxu0 0
      %1698 = vmatprep.subr.bf16.mxu0 0
      %1699 = vmatpush1.bf16.msra.mxu0 0
      %1700 = vmatprep.subr.bf16.mxu0 0
      %1701 = vmatpush1.bf16.msra.mxu0 0
      %1702 = vmatprep.subr.bf16.mxu0 0
      %1703 = vmatpush1.bf16.msra.mxu0 0
      %1704 = vmatprep.subr.bf16.mxu0 0
      %1705 = vmatpush1.bf16.msra.mxu0 0
      %1706 = vmatprep.mubr.bf16.mxu0 0
      %1707 = vmatmul.mubr.bf16.gmra.mrb[0].mxu0 %v1666
      %v1708 = vpop.f32.mrb[0].mxu0
      %v1709 = vadd.f32 0.0, %v1708
      %v1710 = vpop.f32.mrb[0].mxu0
      %v1711 = vpop.f32.mrb[0].mxu0
      %v1712 = vadd.f32 0.0, %v1711
      %v1713 = vpop.f32.mrb[0].mxu0
      %1714 = vmatprep.mubr.bf16.mxu0 0
      %1715 = vmatmul.mubr.bf16.gmra.mrb[0].mxu0 %v1669
      %v1716 = vpop.f32.mrb[0].mxu0
      %v1717 = vadd.f32 0.0, %v1716
      %v1718 = vpop.f32.mrb[0].mxu0
      %v1719 = vpop.f32.mrb[0].mxu0
      %v1720 = vadd.f32 0.0, %v1719
      %v1721 = vpop.f32.mrb[0].mxu0
      %1722 = vmatprep.mubr.bf16.mxu0 0
      %1723 = vmatmul.mubr.bf16.gmra.mrb[0].mxu0 %v1672
      %v1724 = vpop.f32.mrb[0].mxu0
      %v1725 = vadd.f32 0.0, %v1724
      %v1726 = vpop.f32.mrb[0].mxu0
      %v1727 = vpop.f32.mrb[0].mxu0
      %v1728 = vadd.f32 0.0, %v1727
      %v1729 = vpop.f32.mrb[0].mxu0
      %1730 = vdwg.mxu0
      %v1731 = vadd.f32 %v1643, %v1709
      %v1732 = vadd.f32 %v1646, %v1712
      %v1733 = vadd.f32 %v1651, %v1717
      %v1734 = vadd.f32 %v1654, %v1720
      %v1735 = vadd.f32 %v1659, %v1725
      %v1736 = vadd.f32 %v1662, %v1728
      %v1737 = vadd.f32 %v1731, %v744
      %v1738 = vadd.f32 %v1732, %v744
      %v1739 = vadd.f32 %v1733, %v744
      %v1740 = vadd.f32 %v1734, %v744
      %v1741 = vadd.f32 %v1735, %v744
      %v1742 = vadd.f32 %v1736, %v744
      %v1743 = vmax.f32 %v1737, 0.0
      %v1744 = vmax.f32 %v1738, 0.0
      %v1745 = vmax.f32 %v1739, 0.0
      %v1746 = vmax.f32 %v1740, 0.0
      %v1747 = vmax.f32 %v1741, 0.0
      %v1748 = vmax.f32 %v1742, 0.0
      %v1749 = vpack.c.bf16 %v1744, %v1743
      %v1750 = vpack.c.bf16 %v1746, %v1745
      %v1751 = vpack.c.bf16 %v1748, %v1747
      %v1753 = vsel %vm570, %v1749, 0
      %v1756 = vsel %vm570, %v1750, 0
      %v1759 = vsel %vm570, %v1751, 0
      %1761 = vmatprep.subr.bf16.mxu0 %v708
      %1762 = vmatpush1.bf16.msra.mxu0 %v707
      %1763 = vmatprep.subr.bf16.mxu0 %v710
      %1764 = vmatpush1.bf16.msra.mxu0 %v709
      %1765 = vmatprep.subr.bf16.mxu0 %v712
      %1766 = vmatpush1.bf16.msra.mxu0 %v711
      %1767 = vmatprep.subr.bf16.mxu0 %v714
      %1768 = vmatpush1.bf16.msra.mxu0 %v713
      %1769 = vmatprep.subr.bf16.mxu0 0
      %1770 = vmatpush1.bf16.msra.mxu0 0
      %1771 = vmatprep.subr.bf16.mxu0 0
      %1772 = vmatpush1.bf16.msra.mxu0 0
      %1773 = vmatprep.subr.bf16.mxu0 0
      %1774 = vmatpush1.bf16.msra.mxu0 0
      %1775 = vmatprep.subr.bf16.mxu0 0
      %1776 = vmatpush1.bf16.msra.mxu0 0
      %1777 = vmatprep.subr.bf16.mxu0 0
      %1778 = vmatpush1.bf16.msra.mxu0 0
      %1779 = vmatprep.subr.bf16.mxu0 0
      %1780 = vmatpush1.bf16.msra.mxu0 0
      %1781 = vmatprep.subr.bf16.mxu0 0
      %1782 = vmatpush1.bf16.msra.mxu0 0
      %1783 = vmatprep.subr.bf16.mxu0 0
      %1784 = vmatpush1.bf16.msra.mxu0 0
      %1785 = vmatprep.subr.bf16.mxu0 0
      %1786 = vmatpush1.bf16.msra.mxu0 0
      %1787 = vmatprep.subr.bf16.mxu0 0
      %1788 = vmatpush1.bf16.msra.mxu0 0
      %1789 = vmatprep.subr.bf16.mxu0 0
      %1790 = vmatpush1.bf16.msra.mxu0 0
      %1791 = vmatprep.subr.bf16.mxu0 0
      %1792 = vmatpush1.bf16.msra.mxu0 0
      %1793 = vmatprep.mubr.bf16.mxu0 0
      %1794 = vmatmul.mubr.bf16.gmra.mrb[0].mxu0 %v1753
      %v1795 = vpop.f32.mrb[0].mxu0
      %v1796 = vadd.f32 %v751, %v1795
      %v1797 = vpop.f32.mrb[0].mxu0
      %v1798 = vadd.f32 %v755, %v1797
      %v1799 = vpop.f32.mrb[0].mxu0
      %v1800 = vadd.f32 %v751, %v1799
      %v1801 = vpop.f32.mrb[0].mxu0
      %v1802 = vadd.f32 %v755, %v1801
      %1803 = vmatprep.mubr.bf16.mxu0 0
      %1804 = vmatmul.mubr.bf16.gmra.mrb[0].mxu0 %v1756
      %v1805 = vpop.f32.mrb[0].mxu0
      %v1806 = vadd.f32 %v751, %v1805
      %v1807 = vpop.f32.mrb[0].mxu0
      %v1808 = vadd.f32 %v755, %v1807
      %v1809 = vpop.f32.mrb[0].mxu0
      %v1810 = vadd.f32 %v751, %v1809
      %v1811 = vpop.f32.mrb[0].mxu0
      %v1812 = vadd.f32 %v755, %v1811
      %1813 = vmatprep.mubr.bf16.mxu0 0
      %1814 = vmatmul.mubr.bf16.gmra.mrb[0].mxu0 %v1759
      %v1815 = vpop.f32.mrb[0].mxu0
      %v1816 = vadd.f32 %v751, %v1815
      %v1817 = vpop.f32.mrb[0].mxu0
      %v1818 = vadd.f32 %v755, %v1817
      %v1819 = vpop.f32.mrb[0].mxu0
      %v1820 = vadd.f32 %v751, %v1819
      %v1821 = vpop.f32.mrb[0].mxu0
      %v1822 = vadd.f32 %v755, %v1821
      %1823 = vdwg.mxu0
      %1824 = vmatprep.subr.bf16.mxu0 %v732
      %1825 = vmatpush1.bf16.msra.mxu0 %v731
      %1826 = vmatprep.subr.bf16.mxu0 %v734
      %1827 = vmatpush1.bf16.msra.mxu0 %v733
      %1828 = vmatprep.subr.bf16.mxu0 %v736
      %1829 = vmatpush1.bf16.msra.mxu0 %v735
      %1830 = vmatprep.subr.bf16.mxu0 %v738
      %1831 = vmatpush1.bf16.msra.mxu0 %v737
      %1832 = vmatprep.subr.bf16.mxu0 0
      %1833 = vmatpush1.bf16.msra.mxu0 0
      %1834 = vmatprep.subr.bf16.mxu0 0
      %1835 = vmatpush1.bf16.msra.mxu0 0
      %1836 = vmatprep.subr.bf16.mxu0 0
      %1837 = vmatpush1.bf16.msra.mxu0 0
      %1838 = vmatprep.subr.bf16.mxu0 0
      %1839 = vmatpush1.bf16.msra.mxu0 0
      %1840 = vmatprep.subr.bf16.mxu0 0
      %1841 = vmatpush1.bf16.msra.mxu0 0
      %1842 = vmatprep.subr.bf16.mxu0 0
      %1843 = vmatpush1.bf16.msra.mxu0 0
      %1844 = vmatprep.subr.bf16.mxu0 0
      %1845 = vmatpush1.bf16.msra.mxu0 0
      %1846 = vmatprep.subr.bf16.mxu0 0
      %1847 = vmatpush1.bf16.msra.mxu0 0
      %1848 = vmatprep.subr.bf16.mxu0 0
      %1849 = vmatpush1.bf16.msra.mxu0 0
      %1850 = vmatprep.subr.bf16.mxu0 0
      %1851 = vmatpush1.bf16.msra.mxu0 0
      %1852 = vmatprep.subr.bf16.mxu0 0
      %1853 = vmatpush1.bf16.msra.mxu0 0
      %1854 = vmatprep.subr.bf16.mxu0 0
      %1855 = vmatpush1.bf16.msra.mxu0 0
      %1856 = vmatprep.mubr.bf16.mxu0 0
      %1857 = vmatmul.mubr.bf16.gmra.mrb[0].mxu0 %v1666
      %v1858 = vpop.f32.mrb[0].mxu0
      %v1859 = vadd.f32 %v763, %v1858
      %v1860 = vpop.f32.mrb[0].mxu0
      %v1861 = vadd.f32 %v767, %v1860
      %v1862 = vpop.f32.mrb[0].mxu0
      %v1863 = vadd.f32 %v763, %v1862
      %v1864 = vpop.f32.mrb[0].mxu0
      %v1865 = vadd.f32 %v767, %v1864
      %1866 = vmatprep.mubr.bf16.mxu0 0
      %1867 = vmatmul.mubr.bf16.gmra.mrb[0].mxu0 %v1669
      %v1868 = vpop.f32.mrb[0].mxu0
      %v1869 = vadd.f32 %v763, %v1868
      %v1870 = vpop.f32.mrb[0].mxu0
      %v1871 = vadd.f32 %v767, %v1870
      %v1872 = vpop.f32.mrb[0].mxu0
      %v1873 = vadd.f32 %v763, %v1872
      %v1874 = vpop.f32.mrb[0].mxu0
      %v1875 = vadd.f32 %v767, %v1874
      %1876 = vmatprep.mubr.bf16.mxu0 0
      %1877 = vmatmul.mubr.bf16.gmra.mrb[0].mxu0 %v1672
      %v1878 = vpop.f32.mrb[0].mxu0
      %v1879 = vadd.f32 %v763, %v1878
      %v1880 = vpop.f32.mrb[0].mxu0
      %v1881 = vadd.f32 %v767, %v1880
      %v1882 = vpop.f32.mrb[0].mxu0
      %v1883 = vadd.f32 %v763, %v1882
      %v1884 = vpop.f32.mrb[0].mxu0
      %v1885 = vadd.f32 %v767, %v1884
      %1886 = vdwg.mxu0
      %v1887 = vadd.f32 %v1796, %v1859
      %v1888 = vadd.f32 %v1800, %v1863
      %v1889 = vadd.f32 %v1806, %v1869
      %v1890 = vadd.f32 %v1810, %v1873
      %v1891 = vadd.f32 %v1816, %v1879
      %v1892 = vadd.f32 %v1820, %v1883
      %v1893 = vxor.u32 %v1887, 2147483648
      %v1894 = vxor.u32 %v1888, 2147483648
      %v1895 = vxor.u32 %v1889, 2147483648
      %v1896 = vxor.u32 %v1890, 2147483648
      %v1897 = vxor.u32 %v1891, 2147483648
      %v1898 = vxor.u32 %v1892, 2147483648
      %v1899 = vmul.f32 %v1893, 1.442695
      %v1900 = vpow.pop %v1899
      %v1901 = vmul.f32 %v1894, 1.442695
      %v1902 = vpow.pop %v1901
      %v1903 = vmul.f32 %v1895, 1.442695
      %v1904 = vpow.pop %v1903
      %v1905 = vmul.f32 %v1896, 1.442695
      %v1906 = vpow.pop %v1905
      %v1907 = vmul.f32 %v1897, 1.442695
      %v1908 = vpow.pop %v1907
      %v1909 = vmul.f32 %v1898, 1.442695
      %v1910 = vpow.pop %v1909
      %v1911 = vadd.f32 %v1900, 1.0
      %v1912 = vadd.f32 %v1902, 1.0
      %v1913 = vadd.f32 %v1904, 1.0
      %v1914 = vadd.f32 %v1906, 1.0
      %v1915 = vadd.f32 %v1908, 1.0
      %v1916 = vadd.f32 %v1910, 1.0
      %v1917 = vrcp.pop %v1911
      %v1918 = vmul.f32 1.0, %v1917
      %v1919 = vrcp.pop %v1912
      %v1920 = vmul.f32 1.0, %v1919
      %v1921 = vrcp.pop %v1913
      %v1922 = vmul.f32 1.0, %v1921
      %v1923 = vrcp.pop %v1914
      %v1924 = vmul.f32 1.0, %v1923
      %v1925 = vrcp.pop %v1915
      %v1926 = vmul.f32 1.0, %v1925
      %v1927 = vrcp.pop %v1916
      %v1928 = vmul.f32 1.0, %v1927
      %v1929 = vmul.f32 %v1918, %v1861
      %v1930 = vmul.f32 %v1920, %v1865
      %v1931 = vmul.f32 %v1922, %v1871
      %v1932 = vmul.f32 %v1924, %v1875
      %v1933 = vmul.f32 %v1926, %v1881
      %v1934 = vmul.f32 %v1928, %v1885
      %v1935 = vadd.f32 %v1798, %v1929
      %v1936 = vadd.f32 %v1802, %v1930
      %v1937 = vadd.f32 %v1808, %v1931
      %v1938 = vadd.f32 %v1812, %v1932
      %v1939 = vadd.f32 %v1818, %v1933
      %v1940 = vadd.f32 %v1822, %v1934
      %v1941 = vtanh.pop %v1935
      %v1942 = vtanh.pop %v1936
      %v1943 = vtanh.pop %v1937
      %v1944 = vtanh.pop %v1938
      %v1945 = vtanh.pop %v1939
      %v1946 = vtanh.pop %v1940
      %v1947 = vsub.f32 1.0, %v1918
      %v1948 = vsub.f32 1.0, %v1920
      %v1949 = vsub.f32 1.0, %v1922
      %v1950 = vsub.f32 1.0, %v1924
      %v1951 = vsub.f32 1.0, %v1926
      %v1952 = vsub.f32 1.0, %v1928
      %1959 = vrot.lane.b32.xlu0 %v1941, 64
      %v1960 = vpop.permute.xlu0 %1959
      %1961 = vrot.lane.b32.xlu0 %v1942, 64
      %v1962 = vpop.permute.xlu0 %1961
      %1963 = vrot.lane.b32.xlu0 %v1943, 64
      %v1964 = vpop.permute.xlu0 %1963
      %1965 = vrot.lane.b32.xlu0 %v1944, 64
      %v1966 = vpop.permute.xlu0 %1965
      %1967 = vrot.lane.b32.xlu0 %v1945, 64
      %v1968 = vpop.permute.xlu0 %1967
      %1969 = vrot.lane.b32.xlu0 %v1946, 64
      %v1970 = vpop.permute.xlu0 %1969
      %v1977 = vmul.f32 %v1947, %v1960
      %v1978 = vmul.f32 %v1948, %v1962
      %v1979 = vmul.f32 %v1949, %v1964
      %v1980 = vmul.f32 %v1950, %v1966
      %v1981 = vmul.f32 %v1951, %v1968
      %v1982 = vmul.f32 %v1952, %v1970
      %v1983 = vmul.f32 %v1918, %v1392
      %v1984 = vmul.f32 %v1920, %v1393
      %v1985 = vmul.f32 %v1922, %v1394
      %v1986 = vmul.f32 %v1924, %v1395
      %v1987 = vmul.f32 %v1926, %v1396
      %v1988 = vmul.f32 %v1928, %v1397
      %v1989 = vadd.f32 %v1977, %v1983
      %v1990 = vadd.f32 %v1978, %v1984
      %v1991 = vadd.f32 %v1979, %v1985
      %v1992 = vadd.f32 %v1980, %v1986
      %v1993 = vadd.f32 %v1981, %v1987
      %v1994 = vadd.f32 %v1982, %v1988
      %2001 = vrot.lane.b32.xlu0 %v1989, 64
      %v2002 = vpop.permute.xlu0 %2001
      %2003 = vrot.lane.b32.xlu0 %v1990, 64
      %v2004 = vpop.permute.xlu0 %2003
      %2005 = vrot.lane.b32.xlu0 %v1991, 64
      %v2006 = vpop.permute.xlu0 %2005
      %2007 = vrot.lane.b32.xlu0 %v1992, 64
      %v2008 = vpop.permute.xlu0 %2007
      %2009 = vrot.lane.b32.xlu0 %v1993, 64
      %v2010 = vpop.permute.xlu0 %2009
      %2011 = vrot.lane.b32.xlu0 %v1994, 64
      %v2012 = vpop.permute.xlu0 %2011
      %2019 = vst.msk [vmem:[%s442] sm:$0xff] %vm570, %v2002
      %2020 = vst.msk [vmem:[%s442 + $0x8] sm:$0xff] %vm570, %v2004
      %2021 = vst.msk [vmem:[%s442 + $0x10] sm:$0xff] %vm570, %v2006
      %2022 = vst.msk [vmem:[%s442 + $0x18] sm:$0xff] %vm570, %v2008
      %2023 = vst.msk [vmem:[%s442 + $0x20] sm:$0xff] %vm570, %v2010
      %2024 = vst.msk [vmem:[%s442 + $0x28] sm:$0xff] %vm570, %v2012
      %s2025 = smul.u32 6, %s24
      %p2026 = scmp.lt.s32.totalorder %s2025, 11
      %s2027 = scalar_select %p2026, %s2025, 11
      %s2028 = smul.addr %s2027, 8
      %s2029 = scalar_lea.vmem %s13, %s2028
      // Predicated region
      $region73: #{unet_forward.5} parent=71 // pred_check
        %p2030 = pneg %p320
      $region74: #{unet_forward.5} parent=71 // pred_check_branch
        %2032 = sbr.rel (%p2030) target = $region76
      $region75: #{unet_forward.5} parent=71 // pred_region
        %s2033 = smul.u32 6, %s24
      $region76: #{unet_forward.5} parent=71 // pred_fallthru
        _
    $region72: #{unet_forward.5} parent=5 // pred_fallthru
      _
    %p2034 = scmp.le.s32.totalorder 2, %s19
    // Predicated region
    $region77: #{unet_forward.5} parent=5 // pred_check
      %p2035 = pneg %p2034
    $region78: #{unet_forward.5} parent=5 // pred_check_branch
      %2037 = sbr.rel (%p2035) target = $region80
    $region79: #{unet_forward.5} parent=5 // pred_region
      %s2038 = ssub.s32 %s19, 2
      // Predicated region
      $region81: #{unet_forward.5} parent=79 // pred_check
        %p2039 = pneg %p326
      $region82: #{unet_forward.5} parent=79 // pred_check_branch
        %2041 = sbr.rel (%p2039) target = $region84
      $region83: #{unet_forward.5} parent=79 // pred_region
        %s2042 = smul.u32 6, %s25
        %p2043 = scmp.lt.s32.totalorder %s2042, 11
        %s2044 = scalar_select %p2043, %s2042, 11
        %s2045 = smul.addr %s2044, 8
        %s2046 = scalar_lea.vmem %s13, %s2045
      $region84: #{unet_forward.5} parent=79 // pred_fallthru
        _
    $region80: #{unet_forward.5} parent=5 // pred_fallthru
      _
  $region6: #{unet_forward.5} parent=0 // loop_footer
    %s23 = sadd.s32 1, %s19
  $region7: #{unet_forward.5} parent=0 // loop_footer_branch
    %18 = sbr.rel target = $region3
  $region8: #{unet_forward.5} parent=0 // loop_exit
    _

</llo_original>
